<compile_context>
chip_gen: v7x
topology: tpu7x:2x2x1
jax: 0.10.0
libtpu: 0.0.40
codegen_flags: <defaults>
</compile_context>

<pallas_src>
import math

import numpy as np

import jax
import jax.numpy as jnp
from jax.experimental import pallas as pl
from jax.experimental.pallas import tpu as pltpu

# ----------------------------- config (small) --------------------------------
D_MODEL = 32          # d_model (divisible by 8 heads)
NUM_OBJECTIVES = 3
MAX_TASKS = 8         # T
MAX_RESOURCES = 8     # R (== T in this config; resource rows share the input slab rows)
TASK_FEAT = 16
RES_FEAT = 12
SYS_FEAT = 8
MAX_SEQ = 64          # TemporalAttention.max_sequence_length (>= T)
NUM_PRIORITY_LEVELS = 5
PRIO_PAD = 8          # priority table padded to 8 rows (sublane aligned)

# (short name, params key, num_heads) -- order fixed; shared by layout + pack + kernel
MHA_SPECS = [
    ("deadline", "deadline_attention", 8),
    ("level", "level_attention", 4),
    ("cross", "cross_level_attention", 8),
    ("self", "task_self_attention", 8),
    ("match", "matching_attention", 8),
    ("cont", "contention_attention", 4),
    ("action", "action_attention", 4),
]

# ---- runtime-input slab lanes: one (T, 64) f32 tile per state ----------------
IN_W = 64
IC_TF = 0      # 16 lanes: task features
IC_RF = 16     # 12 lanes: resource features (R == T rows)
IC_SYS = 28    # 8  lanes: system features (row 0 used)
IC_DL = 36     # 1  lane : deadlines
IC_PRIO = 37   # 8  lanes: priority-level one-hot
IC_AVAIL = 45  # 8  lanes: availability mask (0/1)
IC_TS = 53     # 1  lane : timestamp (broadcast to all rows)
# lanes 54..63: pad

# ---- lane-dense output slab: one (T, 128) f32 tile per state -----------------
SLAB_W = 128
C_ACT = 0          # 32: action_weights
C_FUSED = 32       # 32: fused_features
C_ASSIGN = 64      # 8 : assignment_logits
C_COMPAT = 72      # 8 : compatibility_scores
C_ATT_TEMP = 80    # 8 : temporal attention weights
C_ATT_LEVEL = 88   # 8 : hierarchical (level) weights
C_ATT_SELF = 96    # 8 : self-attention weights
C_ATT_ACTION = 104 # 8 : action attention weights
C_ATT_CONT = 112   # 8 : contention (task_resource) weights
C_PRIO_ADJ = 120   # 1 : priority_adjustments
C_VALUES = 121     # 3 : state_values (row 0 only); lanes 124..127 pad


# ----------------------------- weight-slab layout -----------------------------
def _build_layout():
    """Static layout: name -> (row_start, rows, cols).  Row starts are 8-aligned."""
    layout = {}
    row = [0]

    def add(name, r, c):
        layout[name] = (row[0], r, c)
        row[0] += -(-r // 8) * 8

    d = D_MODEL
    add("te_w", TASK_FEAT, d); add("te_b", 1, d); add("te_g", 1, d); add("te_be", 1, d)
    add("re_w", RES_FEAT, d); add("re_b", 1, d); add("re_g", 1, d); add("re_be", 1, d)
    add("se_w", SYS_FEAT, d); add("se_b", 1, d); add("se_g", 1, d); add("se_be", 1, d)
    add("tenc", MAX_TASKS, d)
    add("up_w", d, d); add("up_b", 1, d)
    add("ptab", PRIO_PAD, d)
    for short, _, _ in MHA_SPECS:
        add(short + "_wqkv", d, 3 * d); add(short + "_bqkv", 1, 3 * d)
        add(short + "_wo", d, d); add(short + "_bo", 1, d)
    add("c_w1t", d, d); add("c_w1r", d, d); add("c_b1", 1, d)
    add("c_w2", d, d // 2); add("c_b2", 1, d // 2)
    add("c_w3", d // 2, 1); add("c_b3", 1, 1)
    add("ph_w1", d, d // 2); add("ph_b1", 1, d // 2); add("ph_w2", d // 2, 1); add("ph_b2", 1, 1)
    add("ah_w1", d, d // 2); add("ah_b1", 1, d // 2)
    add("ah_w2", d // 2, MAX_RESOURCES); add("ah_b2", 1, MAX_RESOURCES)
    add("vh_w1", d, d // 2); add("vh_b1", 1, d // 2)
    add("vh_w2", d // 2, NUM_OBJECTIVES); add("vh_b2", 1, NUM_OBJECTIVES)
    for s in ("a", "b", "c", "d"):
        add("f_w1" + s, d, d)
    add("f_b1", 1, d); add("f_w2", d, d); add("f_b2", 1, d)
    # baked constants (block-diag masks, segment sums, head means, pair selectors)
    for h in (8, 4):
        add(f"bd_mask{h}", h * MAX_TASKS, d)
        add(f"seg_sum{h}", h * MAX_TASKS, h * MAX_TASKS)
        add(f"head_mean{h}", h * MAX_TASKS, MAX_TASKS)
    add("rsel", MAX_TASKS * MAX_RESOURCES, MAX_TASKS)
    add("csel", MAX_TASKS * MAX_RESOURCES, MAX_RESOURCES)
    add("rsel_t", MAX_TASKS, MAX_TASKS * MAX_RESOURCES)
    add("val_place", NUM_OBJECTIVES, 8)
    return layout, row[0]


W_LAYOUT, W_ROWS = _build_layout()


# ----------------------------- in-kernel helpers -----------------------------
def _ld(w_ref, name):
    """Static slice of the weight slab (lane offset 0, 8-aligned rows)."""
    r0, nr, nc = W_LAYOUT[name]
    return w_ref[r0:r0 + nr, 0:nc]


def _embed(x, w, b, g, be):
    """Linear -> ReLU -> LayerNorm (eps=1e-5, biased variance like nn.LayerNorm)."""
    y = jnp.dot(x, w, preferred_element_type=jnp.float32) + b
    y = jnp.maximum(y, 0.0)
    mu = jnp.mean(y, axis=-1, keepdims=True)
    var = jnp.mean((y - mu) ** 2, axis=-1, keepdims=True)
    return (y - mu) * jax.lax.rsqrt(var + 1e-5) * g + be


def _mha(w_ref, name, num_heads, q, kv=None, mask=None, need_out=True, need_weights=True):
    """Multi-head attention with all heads batched via block-diagonal K/V.

    wqkv = [Wq/sqrt(dk) | Wk | Wv] so the score scale is pre-folded.
    K_bd / V_bd are (H*lk, d) block-diagonal (head h occupies rows h*lk:(h+1)*lk and
    columns h*dk:(h+1)*dk), so scores for all heads come from ONE Q@K_bd^T push and the
    summed per-head contexts from ONE P@V_bd push.
    """
    d = D_MODEL
    wqkv = _ld(w_ref, name + "_wqkv")          # (d, 3d)
    bqkv = _ld(w_ref, name + "_bqkv")          # (1, 3d)
    if kv is None:                              # self-attention: one packed projection
        qkv = jnp.dot(q, wqkv, preferred_element_type=jnp.float32) + bqkv
        Q, K, V = qkv[:, :d], qkv[:, d:2 * d], qkv[:, 2 * d:]
    else:                                       # cross-attention
        Q = jnp.dot(q, wqkv[:, :d], preferred_element_type=jnp.float32) + bqkv[:, :d]
        kvp = jnp.dot(kv, wqkv[:, d:], preferred_element_type=jnp.float32) + bqkv[:, d:]
        K, V = kvp[:, :d], kvp[:, d:]

    H = num_heads
    sfx = str(H)
    bd_mask = _ld(w_ref, "bd_mask" + sfx)       # (H*lk, d) block-diagonal selector
    seg_sum = _ld(w_ref, "seg_sum" + sfx)       # (H*lk, H*lk) per-head column sums

    k_big = jnp.concatenate([K] * H, axis=0) * bd_mask      # (H*lk, d)
    v_big = jnp.concatenate([V] * H, axis=0) * bd_mask      # (H*lk, d)

    # one MXU push: column block h holds head h's (lq, lk) scores
    s = jax.lax.dot_general(Q, k_big, (((1,), (1,)), ((), ())),
                            preferred_element_type=jnp.float32)            # (lq, H*lk)
    if mask is not None:
        # masked_fill(mask == 0, -1e9); mask is a 0/1 float mask -> robust < 0.5 test
        s = jnp.where(jnp.concatenate([mask] * H, axis=1) < 0.5, -1e9, s)

    # segmented (per-head) softmax; row max >= per-head max keeps exp in [0, 1]
    m = jnp.max(s, axis=-1, keepdims=True)
    e = jnp.exp(s - m)
    denom = jnp.dot(e, seg_sum, preferred_element_type=jnp.float32)        # (lq, H*lk)
    p = e * pl.reciprocal(denom, approx=False)   # approx=True possible if tolerance allows

    out = None
    if need_out:
        ctx = jnp.dot(p, v_big, preferred_element_type=jnp.float32)        # (lq, d)
        out = (jnp.dot(ctx, _ld(w_ref, name + "_wo"),
                       preferred_element_type=jnp.float32) + _ld(w_ref, name + "_bo"))
    attw = None
    if need_weights:
        # mean over heads of the per-head softmax weights
        attw = jnp.dot(p, _ld(w_ref, "head_mean" + sfx),
                       preferred_element_type=jnp.float32)                 # (lq, lk)
    return out, attw


# ----------------------------- fused forward kernel --------------------------
def policy_fwd_kernel(x_ref, w_ref, out_ref):
    T, R, d = MAX_TASKS, MAX_RESOURCES, D_MODEL
    x = x_ref[...]                                                         # (T, IN_W)

    # ---- input embeddings: Linear -> ReLU -> LayerNorm ----
    task_emb = _embed(x[:, IC_TF:IC_TF + TASK_FEAT],
                      _ld(w_ref, "te_w"), _ld(w_ref, "te_b"),
                      _ld(w_ref, "te_g"), _ld(w_ref, "te_be"))             # (T, d)
    res_emb = _embed(x[:, IC_RF:IC_RF + RES_FEAT],
                     _ld(w_ref, "re_w"), _ld(w_ref, "re_b"),
                     _ld(w_ref, "re_g"), _ld(w_ref, "re_be"))              # (R, d)
    sys_emb = _embed(x[0:1, IC_SYS:IC_SYS + SYS_FEAT],
                     _ld(w_ref, "se_w"), _ld(w_ref, "se_b"),
                     _ld(w_ref, "se_g"), _ld(w_ref, "se_be"))              # (1, d)

    # ---- TemporalAttention ----
    dl = x[:, IC_DL:IC_DL + 1]
    ts = x[:, IC_TS:IC_TS + 1]
    urgency = jnp.exp(-(dl - ts) * (1.0 / 3600.0))                         # (T, 1)
    urg_enh = (task_emb + _ld(w_ref, "tenc")) * urgency
    temporal_out, temporal_w = _mha(w_ref, "deadline", 8, urg_enh)
    temporal_out = (jnp.dot(temporal_out, _ld(w_ref, "up_w"),
                            preferred_element_type=jnp.float32) + _ld(w_ref, "up_b"))

    # ---- HierarchicalAttention ----
    prio_emb = jnp.dot(x[:, IC_PRIO:IC_PRIO + PRIO_PAD], _ld(w_ref, "ptab"),
                       preferred_element_type=jnp.float32)                 # (T, d)
    prio_enh = temporal_out + prio_emb
    level_out, level_w = _mha(w_ref, "level", 4, prio_enh)
    sys_exp = jnp.broadcast_to(sys_emb, (T, d))
    hier_out, _ = _mha(w_ref, "cross", 8, level_out, kv=sys_exp, need_weights=False)
    # TODO(synk): HierarchicalAttention.priority_adjustment (sigmoid head) output is
    # discarded by the reference forward (overwritten by priority_adjustment_head), so
    # it is not computed.

    # ---- task self-attention ----
    self_out, self_w = _mha(w_ref, "self", 8, hier_out)

    # ---- TaskResourceAttention ----
    avail = x[:, IC_AVAIL:IC_AVAIL + R]                                    # (T, R)
    tr_out, _ = _mha(w_ref, "match", 8, self_out, kv=res_emb,
                     mask=avail, need_weights=False)

    # compatibility network: (task, resource) pairs via baked selection matmuls
    a_part = jnp.dot(self_out, _ld(w_ref, "c_w1t"), preferred_element_type=jnp.float32)
    b_part = jnp.dot(res_emb, _ld(w_ref, "c_w1r"), preferred_element_type=jnp.float32)
    h1 = jnp.maximum(
        jnp.dot(_ld(w_ref, "rsel"), a_part, preferred_element_type=jnp.float32)
        + jnp.dot(_ld(w_ref, "csel"), b_part, preferred_element_type=jnp.float32)
        + _ld(w_ref, "c_b1"), 0.0)                                         # (T*R, d)
    h2 = jnp.maximum(jnp.dot(h1, _ld(w_ref, "c_w2"), preferred_element_type=jnp.float32)
                     + _ld(w_ref, "c_b2"), 0.0)                            # (T*R, d/2)
    sig = jax.nn.sigmoid(jnp.dot(h2, _ld(w_ref, "c_w3"),
                                 preferred_element_type=jnp.float32)
                         + _ld(w_ref, "c_b3"))                             # (T*R, 1)
    compat = jnp.dot(_ld(w_ref, "rsel_t"), sig * _ld(w_ref, "csel"),
                     preferred_element_type=jnp.float32)                   # (T, R)

    _, cont_w = _mha(w_ref, "cont", 4, res_emb, need_out=False)            # (R, R)

    # ---- attention fusion (concat folded into 4 split W1 blocks) ----
    fh = jnp.maximum(
        jnp.dot(temporal_out, _ld(w_ref, "f_w1a"), preferred_element_type=jnp.float32)
        + jnp.dot(hier_out, _ld(w_ref, "f_w1b"), preferred_element_type=jnp.float32)
        + jnp.dot(self_out, _ld(w_ref, "f_w1c"), preferred_element_type=jnp.float32)
        + jnp.dot(tr_out, _ld(w_ref, "f_w1d"), preferred_element_type=jnp.float32)
        + _ld(w_ref, "f_b1"), 0.0)
    fused = jnp.tanh(jnp.dot(fh, _ld(w_ref, "f_w2"), preferred_element_type=jnp.float32)
                     + _ld(w_ref, "f_b2"))                                 # (T, d)

    # ---- heads ----
    ph = jnp.maximum(jnp.dot(fused, _ld(w_ref, "ph_w1"), preferred_element_type=jnp.float32)
                     + _ld(w_ref, "ph_b1"), 0.0)
    prio_adj = jnp.tanh(jnp.dot(ph, _ld(w_ref, "ph_w2"), preferred_element_type=jnp.float32)
                        + _ld(w_ref, "ph_b2"))                             # (T, 1)
    ah = jnp.maximum(jnp.dot(fused, _ld(w_ref, "ah_w1"), preferred_element_type=jnp.float32)
                     + _ld(w_ref, "ah_b1"), 0.0)
    assign = (jnp.dot(ah, _ld(w_ref, "ah_w2"), preferred_element_type=jnp.float32)
              + _ld(w_ref, "ah_b2"))                                       # (T, R)
    gmean = jnp.mean(fused, axis=0, keepdims=True)                         # (1, d)
    vh = jnp.maximum(jnp.dot(gmean, _ld(w_ref, "vh_w1"), preferred_element_type=jnp.float32)
                     + _ld(w_ref, "vh_b1"), 0.0)
    values = (jnp.dot(vh, _ld(w_ref, "vh_w2"), preferred_element_type=jnp.float32)
              + _ld(w_ref, "vh_b2"))                                       # (1, 3)
    action_out, action_w = _mha(w_ref, "action", 4, fused)

    # ---- assemble the full 128-lane row in vregs; ONE full-width store ----
    # last 8 lanes: lane 0 = priority adjustment, lanes 1..3 (row 0) = state values
    row0 = (jax.lax.broadcasted_iota(jnp.int32, (T, 1), 0) == 0).astype(jnp.float32)
    vals8 = row0 * jnp.dot(values, _ld(w_ref, "val_place"),
                           preferred_element_type=jnp.float32)             # (T, 8)
    lane8 = jax.lax.broadcasted_iota(jnp.int32, (T, 8), 1)
    tail = jnp.where(lane8 == 0, prio_adj, 0.0) + vals8                    # (T, 8)

    out_ref[...] = jnp.concatenate(
        [action_out, fused, assign, compat, temporal_w, level_w, self_w,
         action_w, cont_w, tail], axis=1)                                  # (T, 128)


# ----------------------------- parameters ------------------------------------
def _linear_params(key, fan_in, fan_out):
    kw, kb = jax.random.split(key)
    bound = 1.0 / math.sqrt(fan_in)
    return {"w": jax.random.uniform(kw, (fan_in, fan_out), jnp.float32, -bound, bound),
            "b": jax.random.uniform(kb, (1, fan_out), jnp.float32, -bound, bound)}


def _mha_params(key, d):
    ks = jax.random.split(key, 4)
    p = {}
    for name, kk in zip("qkvo", ks):
        lp = _linear_params(kk, d, d)
        p["w" + name] = lp["w"]
        p["b" + name] = lp["b"]
    return p


def init_params(key):
    keys = iter(jax.random.split(key, 64))
    nk = lambda: next(keys)
    d = D_MODEL

    def emb_block(fin):
        lp = _linear_params(nk(), fin, d)
        return {**lp,
                "gamma": jnp.ones((1, d), jnp.float32),
                "beta": jnp.zeros((1, d), jnp.float32)}

    def mlp2(fin, hid, fout):
        a = _linear_params(nk(), fin, hid)
        b = _linear_params(nk(), hid, fout)
        return {"w1": a["w"], "b1": a["b"], "w2": b["w"], "b2": b["b"]}

    params = {
        "task_embedding": emb_block(TASK_FEAT),
        "resource_embedding": emb_block(RES_FEAT),
        "system_embedding": emb_block(SYS_FEAT),
        "temporal_encoding": jnp.zeros((MAX_SEQ, d), jnp.float32),   # nn.Parameter zeros
        "urgency_projection": _linear_params(nk(), d, d),
        "priority_embeddings": jax.random.normal(nk(), (NUM_PRIORITY_LEVELS, d), jnp.float32),
    }
    for _, pname, _ in MHA_SPECS:
        params[pname] = _mha_params(nk(), d)
    c1 = _linear_params(nk(), 2 * d, d)
    c2 = _linear_params(nk(), d, d // 2)
    c3 = _linear_params(nk(), d // 2, 1)
    params["compatibility"] = {"w1": c1["w"], "b1": c1["b"], "w2": c2["w"], "b2": c2["b"],
                               "w3": c3["w"], "b3": c3["b"]}
    params["priority_adjustment_head"] = mlp2(d, d // 2, 1)
    params["assignment_head"] = mlp2(d, d // 2, MAX_RESOURCES)
    params["value_head"] = mlp2(d, d // 2, NUM_OBJECTIVES)
    params["attention_fusion"] = mlp2(4 * d, d, d)
    return params


def pack_params(params):
    """Pack every weight/bias + baked constants into one (W_ROWS, 128) f32 slab."""
    d, T, R = D_MODEL, MAX_TASKS, MAX_RESOURCES
    entries = {}

    def put(name, arr):
        entries[name] = np.asarray(arr, np.float32)

    te, re_, se = params["task_embedding"], params["resource_embedding"], params["system_embedding"]
    put("te_w", te["w"]); put("te_b", te["b"]); put("te_g", te["gamma"]); put("te_be", te["beta"])
    put("re_w", re_["w"]); put("re_b", re_["b"]); put("re_g", re_["gamma"]); put("re_be", re_["beta"])
    put("se_w", se["w"]); put("se_b", se["b"]); put("se_g", se["gamma"]); put("se_be", se["beta"])
    put("tenc", params["temporal_encoding"][:MAX_TASKS])
    up = params["urgency_projection"]
    put("up_w", up["w"]); put("up_b", up["b"])
    ptab = np.zeros((PRIO_PAD, d), np.float32)
    ptab[:NUM_PRIORITY_LEVELS] = np.asarray(params["priority_embeddings"])
    put("ptab", ptab)

    for short, pname, heads in MHA_SPECS:
        p = params[pname]
        scale = 1.0 / math.sqrt(d // heads)   # fold 1/sqrt(d_k) into Q weights/bias
        put(short + "_wqkv", np.concatenate(
            [np.asarray(p["wq"]) * scale, np.asarray(p["wk"]), np.asarray(p["wv"])], axis=1))
        put(short + "_bqkv", np.concatenate(
            [np.asarray(p["bq"]) * scale, np.asarray(p["bk"]), np.asarray(p["bv"])], axis=1))
        put(short + "_wo", p["wo"]); put(short + "_bo", p["bo"])

    cp = params["compatibility"]
    w1 = np.asarray(cp["w1"])
    put("c_w1t", w1[:d]); put("c_w1r", w1[d:]); put("c_b1", cp["b1"])
    put("c_w2", cp["w2"]); put("c_b2", cp["b2"]); put("c_w3", cp["w3"]); put("c_b3", cp["b3"])

    for pref, blk in (("ph", "priority_adjustment_head"), ("ah", "assignment_head"),
                      ("vh", "value_head")):
        pb = params[blk]
        put(pref + "_w1", pb["w1"]); put(pref + "_b1", pb["b1"])
        put(pref + "_w2", pb["w2"]); put(pref + "_b2", pb["b2"])

    fu = params["attention_fusion"]
    fw1 = np.asarray(fu["w1"])
    put("f_w1a", fw1[0:d]); put("f_w1b", fw1[d:2 * d])
    put("f_w1c", fw1[2 * d:3 * d]); put("f_w1d", fw1[3 * d:])
    put("f_b1", fu["b1"]); put("f_w2", fu["w2"]); put("f_b2", fu["b2"])

    # ---- baked constants ----
    for h in (8, 4):
        lk, dk = T, d // h
        r = np.arange(h * lk)
        put(f"bd_mask{h}", (r[:, None] // lk == np.arange(d)[None, :] // dk).astype(np.float32))
        put(f"seg_sum{h}", (r[:, None] // lk == r[None, :] // lk).astype(np.float32))
        put(f"head_mean{h}", ((r[:, None] % lk) == np.arange(lk)[None, :]).astype(np.float32) / h)
    p_ = np.arange(T * R)
    put("rsel", (p_[:, None] // R == np.arange(T)[None, :]).astype(np.float32))
    put("csel", (p_[:, None] % R == np.arange(R)[None, :]).astype(np.float32))
    put("rsel_t", (p_[None, :] // R == np.arange(T)[:, None]).astype(np.float32))
    vp = np.zeros((NUM_OBJECTIVES, 8), np.float32)
    vp[np.arange(NUM_OBJECTIVES), np.arange(NUM_OBJECTIVES) + 1] = 1.0
    put("val_place", vp)

    slab = np.zeros((W_ROWS, 128), np.float32)
    for name, (r0, nr, nc) in W_LAYOUT.items():
        arr = entries[name]
        if arr.ndim == 1:
            arr = arr[None, :]
        assert arr.shape == (nr, nc), (name, arr.shape, (nr, nc))
        slab[r0:r0 + nr, :nc] = arr
    return jnp.asarray(slab)


# ----------------------------- forward ---------------------------------------
@jax.jit
def _forward_jit(w_slab, task_features, resource_features, system_features,
                 deadlines, priority_levels, availability_mask, ts):
    B, T, R = task_features.shape[0], MAX_TASKS, MAX_RESOURCES

    # pack all runtime inputs into one small (B, T, 64) slab (1 input DMA per state)
    onehot = jax.nn.one_hot(priority_levels, PRIO_PAD, dtype=jnp.float32)      # (B, T, 8)
    sysb = jnp.broadcast_to(system_features[:, None, :], (B, T, SYS_FEAT))
    tsb = jnp.broadcast_to(ts.reshape(1, 1, 1).astype(jnp.float32), (B, T, 1))
    x = jnp.concatenate(
        [task_features,                                  # lanes 0:16
         resource_features,                              # lanes 16:28 (R == T rows)
         sysb,                                           # lanes 28:36
         deadlines[..., None],                           # lane  36
         onehot,                                         # lanes 37:45
         availability_mask,                              # lanes 45:53
         tsb,                                            # lane  53
         jnp.zeros((B, T, IN_W - (IC_TS + 1)), jnp.float32)], axis=-1)

    slab = pl.pallas_call(
        policy_fwd_kernel,
        grid=(B,),
        in_specs=[pl.BlockSpec((None, T, IN_W), lambda b: (b, 0, 0)),
                  pl.BlockSpec((W_ROWS, 128), lambda b: (0, 0))],   # resident weights
        out_specs=pl.BlockSpec((None, T, SLAB_W), lambda b: (b, 0, 0)),
        out_shape=jax.ShapeDtypeStruct((B, T, SLAB_W), jnp.float32),
        compiler_params=pltpu.CompilerParams(dimension_semantics=("parallel",)),
    )(x, w_slab)

    d = D_MODEL
    return {
        "priority_adjustments": slab[:, :, C_PRIO_ADJ:C_PRIO_ADJ + 1],          # (B, T, 1)
        "assignment_logits": slab[:, :, C_ASSIGN:C_ASSIGN + R],                 # (B, T, R)
        "state_values": slab[:, 0, C_VALUES:C_VALUES + NUM_OBJECTIVES],         # (B, 3)
        "compatibility_scores": slab[:, :, C_COMPAT:C_COMPAT + R],              # (B, T, R)
        "action_weights": slab[:, :, C_ACT:C_ACT + d],                          # (B, T, d)
        "attention_weights": {
            "temporal": slab[:, :, C_ATT_TEMP:C_ATT_TEMP + T],                  # (B, T, T)
            "hierarchical": slab[:, :, C_ATT_LEVEL:C_ATT_LEVEL + T],            # (B, T, T)
            "self_attention": slab[:, :, C_ATT_SELF:C_ATT_SELF + T],            # (B, T, T)
            "task_resource": slab[:, :R, C_ATT_CONT:C_ATT_CONT + R],            # (B, R, R)
            "action_attention": slab[:, :, C_ATT_ACTION:C_ATT_ACTION + T],      # (B, T, T)
        },
        "fused_features": slab[:, :, C_FUSED:C_FUSED + d],                      # (B, T, d)
    }


def attention_policy_forward(w_slab, task_features, resource_features, system_features,
                             deadlines, priority_levels, availability_mask, timestamp):
    ts = jnp.asarray(timestamp, jnp.float32)
    return _forward_jit(w_slab, task_features, resource_features, system_features,
                        deadlines, priority_levels, availability_mask, ts)


# ----------------------------- main -------------------------------------------
if __name__ == "__main__":
    key = jax.random.PRNGKey(0)
    kp, k1, k2, k3, k4, k5 = jax.random.split(key, 6)
    params = init_params(kp)
    w_slab = pack_params(params)

    # TODO(synk): SchedulingState -> feature tensors is host-side Python over dataclasses
    # in the reference; here the equivalent feature tensors are built directly.
    B = 2
    timestamp = 1000.0
    task_features = jax.random.normal(k1, (B, MAX_TASKS, TASK_FEAT), jnp.float32)
    resource_features = jax.random.normal(k2, (B, MAX_RESOURCES, RES_FEAT), jnp.float32)
    system_features = jax.random.normal(k3, (B, SYS_FEAT), jnp.float32)
    deadlines = timestamp + jax.random.uniform(k4, (B, MAX_TASKS), jnp.float32, 60.0, 7200.0)
    priority_levels = jax.random.randint(k5, (B, MAX_TASKS), 0, NUM_PRIORITY_LEVELS)
    # one unavailable resource (availability < 0.1 -> masked column)
    availability_mask = jnp.ones((B, MAX_TASKS, MAX_RESOURCES), jnp.float32)
    availability_mask = availability_mask.at[:, :, MAX_RESOURCES - 1].set(0.0)

    out = attention_policy_forward(w_slab, task_features, resource_features,
                                   system_features, deadlines, priority_levels,
                                   availability_mask, timestamp)
    jax.block_until_ready(out)
    print("KERNEL_OK")
</pallas_src>

<mosaic_0001>
module attributes {stable_mosaic.version = 11 : i64} {
  func.func @policy_fwd_kernel(%arg0: i32, %arg1: memref<1x8x64xf32, #tpu.memory_space<vmem>>, %arg2: memref<1664x128xf32, #tpu.memory_space<vmem>>, %arg3: memref<1x8x128xf32, #tpu.memory_space<vmem>>) attributes {dimension_semantics = [#tpu.dimension_semantics<parallel>], iteration_bounds = array<i64: 2>, scalar_prefetch = 0 : i64, scratch_operands = 0 : i64, tpu.core_type = #tpu.core_type<tc>, window_params = [{transform_indices = @transform_0, window_bounds = array<i64: 1, 8, 64>}, {pipeline_mode = #tpu.pipeline_mode<synchronous>, transform_indices = @transform_1, window_bounds = array<i64: 1664, 128>}, {transform_indices = @transform_2, window_bounds = array<i64: 1, 8, 128>}]} {
    %c0 = arith.constant 0 : index
    %c0_0 = arith.constant 0 : index
    %c0_1 = arith.constant 0 : index
    %0 = vector.load %arg1[%c0, %c0_0, %c0_1] : memref<1x8x64xf32, #tpu.memory_space<vmem>>, vector<1x8x64xf32>
    %1 = vector.shape_cast %0 : vector<1x8x64xf32> to vector<8x64xf32>
    %2 = vector.extract_strided_slice %1 {offsets = [0, 0], sizes = [8, 16], strides = [1, 1]} : vector<8x64xf32> to vector<8x16xf32>
    %c0_2 = arith.constant 0 : index
    %c0_3 = arith.constant 0 : index
    %3 = vector.load %arg2[%c0_2, %c0_3] : memref<1664x128xf32, #tpu.memory_space<vmem>>, vector<16x32xf32>
    %c16 = arith.constant 16 : index
    %c0_4 = arith.constant 0 : index
    %4 = vector.load %arg2[%c16, %c0_4] : memref<1664x128xf32, #tpu.memory_space<vmem>>, vector<1x32xf32>
    %c24 = arith.constant 24 : index
    %c0_5 = arith.constant 0 : index
    %5 = vector.load %arg2[%c24, %c0_5] : memref<1664x128xf32, #tpu.memory_space<vmem>>, vector<1x32xf32>
    %c32 = arith.constant 32 : index
    %c0_6 = arith.constant 0 : index
    %6 = vector.load %arg2[%c32, %c0_6] : memref<1664x128xf32, #tpu.memory_space<vmem>>, vector<1x32xf32>
    %cst = arith.constant dense<0.000000e+00> : vector<8x32xf32>
    %7 = tpu.matmul %2, %3, %cst {dimension_numbers = #tpu.dot_dimension_numbers<[1], [0], [0], [1], [0, 0, 1, 1], [], []>} : vector<8x16xf32>, vector<16x32xf32>, vector<8x32xf32> -> vector<8x32xf32>
    %8 = vector.broadcast %4 : vector<1x32xf32> to vector<8x32xf32>
    %9 = arith.addf %7, %8 : vector<8x32xf32>
    %cst_7 = arith.constant 0.000000e+00 : f32
    %10 = vector.broadcast %cst_7 : f32 to vector<8x32xf32>
    %11 = arith.maximumf %9, %10 : vector<8x32xf32>
    %cst_8 = arith.constant dense<0.000000e+00> : vector<8xf32>
    %12 = vector.multi_reduction <add>, %11, %cst_8 [1] : vector<8x32xf32> to vector<8xf32>
    %13 = vector.shape_cast %12 : vector<8xf32> to vector<8x1xf32>
    %cst_9 = arith.constant 3.200000e+01 : f32
    %14 = vector.broadcast %cst_9 : f32 to vector<8x1xf32>
    %15 = arith.divf %13, %14 : vector<8x1xf32>
    %16 = vector.broadcast %15 : vector<8x1xf32> to vector<8x32xf32>
    %17 = arith.subf %11, %16 : vector<8x32xf32>
    %18 = arith.mulf %17, %17 : vector<8x32xf32>
    %cst_10 = arith.constant dense<0.000000e+00> : vector<8xf32>
    %19 = vector.multi_reduction <add>, %18, %cst_10 [1] : vector<8x32xf32> to vector<8xf32>
    %20 = vector.shape_cast %19 : vector<8xf32> to vector<8x1xf32>
    %cst_11 = arith.constant 3.200000e+01 : f32
    %21 = vector.broadcast %cst_11 : f32 to vector<8x1xf32>
    %22 = arith.divf %20, %21 : vector<8x1xf32>
    %23 = vector.broadcast %15 : vector<8x1xf32> to vector<8x32xf32>
    %24 = arith.subf %11, %23 : vector<8x32xf32>
    %cst_12 = arith.constant 9.99999974E-6 : f32
    %25 = vector.broadcast %cst_12 : f32 to vector<8x1xf32>
    %26 = arith.addf %22, %25 : vector<8x1xf32>
    %27 = math.rsqrt %26 : vector<8x1xf32>
    %28 = vector.broadcast %27 : vector<8x1xf32> to vector<8x32xf32>
    %29 = arith.mulf %24, %28 : vector<8x32xf32>
    %30 = vector.broadcast %5 : vector<1x32xf32> to vector<8x32xf32>
    %31 = arith.mulf %29, %30 : vector<8x32xf32>
    %32 = vector.broadcast %6 : vector<1x32xf32> to vector<8x32xf32>
    %33 = arith.addf %31, %32 : vector<8x32xf32>
    %34 = vector.extract_strided_slice %1 {offsets = [0, 16], sizes = [8, 12], strides = [1, 1]} : vector<8x64xf32> to vector<8x12xf32>
    %c40 = arith.constant 40 : index
    %c0_13 = arith.constant 0 : index
    %35 = vector.load %arg2[%c40, %c0_13] : memref<1664x128xf32, #tpu.memory_space<vmem>>, vector<12x32xf32>
    %c56 = arith.constant 56 : index
    %c0_14 = arith.constant 0 : index
    %36 = vector.load %arg2[%c56, %c0_14] : memref<1664x128xf32, #tpu.memory_space<vmem>>, vector<1x32xf32>
    %c64 = arith.constant 64 : index
    %c0_15 = arith.constant 0 : index
    %37 = vector.load %arg2[%c64, %c0_15] : memref<1664x128xf32, #tpu.memory_space<vmem>>, vector<1x32xf32>
    %c72 = arith.constant 72 : index
    %c0_16 = arith.constant 0 : index
    %38 = vector.load %arg2[%c72, %c0_16] : memref<1664x128xf32, #tpu.memory_space<vmem>>, vector<1x32xf32>
    %cst_17 = arith.constant dense<0.000000e+00> : vector<8x32xf32>
    %39 = tpu.matmul %34, %35, %cst_17 {dimension_numbers = #tpu.dot_dimension_numbers<[1], [0], [0], [1], [0, 0, 1, 1], [], []>} : vector<8x12xf32>, vector<12x32xf32>, vector<8x32xf32> -> vector<8x32xf32>
    %40 = vector.broadcast %36 : vector<1x32xf32> to vector<8x32xf32>
    %41 = arith.addf %39, %40 : vector<8x32xf32>
    %cst_18 = arith.constant 0.000000e+00 : f32
    %42 = vector.broadcast %cst_18 : f32 to vector<8x32xf32>
    %43 = arith.maximumf %41, %42 : vector<8x32xf32>
    %cst_19 = arith.constant dense<0.000000e+00> : vector<8xf32>
    %44 = vector.multi_reduction <add>, %43, %cst_19 [1] : vector<8x32xf32> to vector<8xf32>
    %45 = vector.shape_cast %44 : vector<8xf32> to vector<8x1xf32>
    %cst_20 = arith.constant 3.200000e+01 : f32
    %46 = vector.broadcast %cst_20 : f32 to vector<8x1xf32>
    %47 = arith.divf %45, %46 : vector<8x1xf32>
    %48 = vector.broadcast %47 : vector<8x1xf32> to vector<8x32xf32>
    %49 = arith.subf %43, %48 : vector<8x32xf32>
    %50 = arith.mulf %49, %49 : vector<8x32xf32>
    %cst_21 = arith.constant dense<0.000000e+00> : vector<8xf32>
    %51 = vector.multi_reduction <add>, %50, %cst_21 [1] : vector<8x32xf32> to vector<8xf32>
    %52 = vector.shape_cast %51 : vector<8xf32> to vector<8x1xf32>
    %cst_22 = arith.constant 3.200000e+01 : f32
    %53 = vector.broadcast %cst_22 : f32 to vector<8x1xf32>
    %54 = arith.divf %52, %53 : vector<8x1xf32>
    %55 = vector.broadcast %47 : vector<8x1xf32> to vector<8x32xf32>
    %56 = arith.subf %43, %55 : vector<8x32xf32>
    %cst_23 = arith.constant 9.99999974E-6 : f32
    %57 = vector.broadcast %cst_23 : f32 to vector<8x1xf32>
    %58 = arith.addf %54, %57 : vector<8x1xf32>
    %59 = math.rsqrt %58 : vector<8x1xf32>
    %60 = vector.broadcast %59 : vector<8x1xf32> to vector<8x32xf32>
    %61 = arith.mulf %56, %60 : vector<8x32xf32>
    %62 = vector.broadcast %37 : vector<1x32xf32> to vector<8x32xf32>
    %63 = arith.mulf %61, %62 : vector<8x32xf32>
    %64 = vector.broadcast %38 : vector<1x32xf32> to vector<8x32xf32>
    %65 = arith.addf %63, %64 : vector<8x32xf32>
    %66 = vector.extract_strided_slice %1 {offsets = [0, 28], sizes = [1, 8], strides = [1, 1]} : vector<8x64xf32> to vector<1x8xf32>
    %c80 = arith.constant 80 : index
    %c0_24 = arith.constant 0 : index
    %67 = vector.load %arg2[%c80, %c0_24] : memref<1664x128xf32, #tpu.memory_space<vmem>>, vector<8x32xf32>
    %c88 = arith.constant 88 : index
    %c0_25 = arith.constant 0 : index
    %68 = vector.load %arg2[%c88, %c0_25] : memref<1664x128xf32, #tpu.memory_space<vmem>>, vector<1x32xf32>
    %c96 = arith.constant 96 : index
    %c0_26 = arith.constant 0 : index
    %69 = vector.load %arg2[%c96, %c0_26] : memref<1664x128xf32, #tpu.memory_space<vmem>>, vector<1x32xf32>
    %c104 = arith.constant 104 : index
    %c0_27 = arith.constant 0 : index
    %70 = vector.load %arg2[%c104, %c0_27] : memref<1664x128xf32, #tpu.memory_space<vmem>>, vector<1x32xf32>
    %cst_28 = arith.constant dense<0.000000e+00> : vector<1x32xf32>
    %71 = tpu.matmul %66, %67, %cst_28 {dimension_numbers = #tpu.dot_dimension_numbers<[1], [0], [0], [1], [0, 0, 1, 1], [], []>} : vector<1x8xf32>, vector<8x32xf32>, vector<1x32xf32> -> vector<1x32xf32>
    %72 = arith.addf %71, %68 : vector<1x32xf32>
    %cst_29 = arith.constant 0.000000e+00 : f32
    %73 = vector.broadcast %cst_29 : f32 to vector<1x32xf32>
    %74 = arith.maximumf %72, %73 : vector<1x32xf32>
    %cst_30 = arith.constant dense<0.000000e+00> : vector<1xf32>
    %75 = vector.multi_reduction <add>, %74, %cst_30 [1] : vector<1x32xf32> to vector<1xf32>
    %76 = vector.shape_cast %75 : vector<1xf32> to vector<1x1xf32>
    %cst_31 = arith.constant 3.200000e+01 : f32
    %77 = vector.broadcast %cst_31 : f32 to vector<1x1xf32>
    %78 = arith.divf %76, %77 : vector<1x1xf32>
    %79 = vector.broadcast %78 : vector<1x1xf32> to vector<1x32xf32>
    %80 = arith.subf %74, %79 : vector<1x32xf32>
    %81 = arith.mulf %80, %80 : vector<1x32xf32>
    %cst_32 = arith.constant dense<0.000000e+00> : vector<1xf32>
    %82 = vector.multi_reduction <add>, %81, %cst_32 [1] : vector<1x32xf32> to vector<1xf32>
    %83 = vector.shape_cast %82 : vector<1xf32> to vector<1x1xf32>
    %cst_33 = arith.constant 3.200000e+01 : f32
    %84 = vector.broadcast %cst_33 : f32 to vector<1x1xf32>
    %85 = arith.divf %83, %84 : vector<1x1xf32>
    %86 = vector.broadcast %78 : vector<1x1xf32> to vector<1x32xf32>
    %87 = arith.subf %74, %86 : vector<1x32xf32>
    %cst_34 = arith.constant 9.99999974E-6 : f32
    %88 = vector.broadcast %cst_34 : f32 to vector<1x1xf32>
    %89 = arith.addf %85, %88 : vector<1x1xf32>
    %90 = math.rsqrt %89 : vector<1x1xf32>
    %91 = vector.broadcast %90 : vector<1x1xf32> to vector<1x32xf32>
    %92 = arith.mulf %87, %91 : vector<1x32xf32>
    %93 = arith.mulf %92, %69 : vector<1x32xf32>
    %94 = arith.addf %93, %70 : vector<1x32xf32>
    %95 = vector.extract_strided_slice %1 {offsets = [0, 36], sizes = [8, 1], strides = [1, 1]} : vector<8x64xf32> to vector<8x1xf32>
    %96 = vector.extract_strided_slice %1 {offsets = [0, 53], sizes = [8, 1], strides = [1, 1]} : vector<8x64xf32> to vector<8x1xf32>
    %97 = arith.subf %95, %96 : vector<8x1xf32>
    %cst_35 = arith.constant 0.000000e+00 : f32
    %98 = vector.broadcast %cst_35 : f32 to vector<8x1xf32>
    %99 = arith.subf %98, %97 : vector<8x1xf32>
    %cst_36 = arith.constant 2.77777785E-4 : f32
    %100 = vector.broadcast %cst_36 : f32 to vector<8x1xf32>
    %101 = arith.mulf %99, %100 : vector<8x1xf32>
    %102 = math.exp %101 : vector<8x1xf32>
    %c112 = arith.constant 112 : index
    %c0_37 = arith.constant 0 : index
    %103 = vector.load %arg2[%c112, %c0_37] : memref<1664x128xf32, #tpu.memory_space<vmem>>, vector<8x32xf32>
    %104 = arith.addf %33, %103 : vector<8x32xf32>
    %105 = vector.broadcast %102 : vector<8x1xf32> to vector<8x32xf32>
    %106 = arith.mulf %104, %105 : vector<8x32xf32>
    %c168 = arith.constant 168 : index
    %c0_38 = arith.constant 0 : index
    %107 = vector.load %arg2[%c168, %c0_38] : memref<1664x128xf32, #tpu.memory_space<vmem>>, vector<32x96xf32>
    %c200 = arith.constant 200 : index
    %c0_39 = arith.constant 0 : index
    %108 = vector.load %arg2[%c200, %c0_39] : memref<1664x128xf32, #tpu.memory_space<vmem>>, vector<1x96xf32>
    %cst_40 = arith.constant dense<0.000000e+00> : vector<8x96xf32>
    %109 = tpu.matmul %106, %107, %cst_40 {dimension_numbers = #tpu.dot_dimension_numbers<[1], [0], [0], [1], [0, 0, 1, 1], [], []>} : vector<8x32xf32>, vector<32x96xf32>, vector<8x96xf32> -> vector<8x96xf32>
    %110 = vector.broadcast %108 : vector<1x96xf32> to vector<8x96xf32>
    %111 = arith.addf %109, %110 : vector<8x96xf32>
    %112 = vector.extract_strided_slice %111 {offsets = [0, 0], sizes = [8, 32], strides = [1, 1]} : vector<8x96xf32> to vector<8x32xf32>
    %113 = vector.extract_strided_slice %111 {offsets = [0, 32], sizes = [8, 32], strides = [1, 1]} : vector<8x96xf32> to vector<8x32xf32>
    %114 = vector.extract_strided_slice %111 {offsets = [0, 64], sizes = [8, 32], strides = [1, 1]} : vector<8x96xf32> to vector<8x32xf32>
    %c1232 = arith.constant 1232 : index
    %c0_41 = arith.constant 0 : index
    %115 = vector.load %arg2[%c1232, %c0_41] : memref<1664x128xf32, #tpu.memory_space<vmem>>, vector<64x32xf32>
    %c1296 = arith.constant 1296 : index
    %c0_42 = arith.constant 0 : index
    %116 = vector.load %arg2[%c1296, %c0_42] : memref<1664x128xf32, #tpu.memory_space<vmem>>, vector<64x64xf32>
    %117 = tpu.concatenate %113, %113, %113, %113, %113, %113, %113, %113 in 0 : vector<8x32xf32>, vector<8x32xf32>, vector<8x32xf32>, vector<8x32xf32>, vector<8x32xf32>, vector<8x32xf32>, vector<8x32xf32>, vector<8x32xf32> -> vector<64x32xf32>
    %118 = arith.mulf %117, %115 : vector<64x32xf32>
    %119 = tpu.concatenate %114, %114, %114, %114, %114, %114, %114, %114 in 0 : vector<8x32xf32>, vector<8x32xf32>, vector<8x32xf32>, vector<8x32xf32>, vector<8x32xf32>, vector<8x32xf32>, vector<8x32xf32>, vector<8x32xf32> -> vector<64x32xf32>
    %120 = arith.mulf %119, %115 : vector<64x32xf32>
    %cst_43 = arith.constant dense<0.000000e+00> : vector<8x64xf32>
    %121 = tpu.matmul %112, %118, %cst_43 {dimension_numbers = #tpu.dot_dimension_numbers<[1], [1], [0], [0], [0, 0, 1, 0], [], []>} : vector<8x32xf32>, vector<64x32xf32>, vector<8x64xf32> -> vector<8x64xf32>
    %cst_44 = arith.constant dense<0xFF800000> : vector<8xf32>
    %122 = vector.multi_reduction <maximumf>, %121, %cst_44 [1] : vector<8x64xf32> to vector<8xf32>
    %123 = vector.shape_cast %122 : vector<8xf32> to vector<8x1xf32>
    %124 = vector.broadcast %123 : vector<8x1xf32> to vector<8x64xf32>
    %125 = arith.subf %121, %124 : vector<8x64xf32>
    %126 = math.exp %125 : vector<8x64xf32>
    %cst_45 = arith.constant dense<0.000000e+00> : vector<8x64xf32>
    %127 = tpu.matmul %126, %116, %cst_45 {dimension_numbers = #tpu.dot_dimension_numbers<[1], [0], [0], [1], [0, 0, 1, 1], [], []>} : vector<8x64xf32>, vector<64x64xf32>, vector<8x64xf32> -> vector<8x64xf32>
    %128 = tpu.reciprocal %127 : vector<8x64xf32> -> vector<8x64xf32>
    %129 = arith.mulf %126, %128 : vector<8x64xf32>
    %cst_46 = arith.constant dense<0.000000e+00> : vector<8x32xf32>
    %130 = tpu.matmul %129, %120, %cst_46 {dimension_numbers = #tpu.dot_dimension_numbers<[1], [0], [0], [1], [0, 0, 1, 1], [], []>} : vector<8x64xf32>, vector<64x32xf32>, vector<8x32xf32> -> vector<8x32xf32>
    %c208 = arith.constant 208 : index
    %c0_47 = arith.constant 0 : index
    %131 = vector.load %arg2[%c208, %c0_47] : memref<1664x128xf32, #tpu.memory_space<vmem>>, vector<32x32xf32>
    %cst_48 = arith.constant dense<0.000000e+00> : vector<8x32xf32>
    %132 = tpu.matmul %130, %131, %cst_48 {dimension_numbers = #tpu.dot_dimension_numbers<[1], [0], [0], [1], [0, 0, 1, 1], [], []>} : vector<8x32xf32>, vector<32x32xf32>, vector<8x32xf32> -> vector<8x32xf32>
    %c240 = arith.constant 240 : index
    %c0_49 = arith.constant 0 : index
    %133 = vector.load %arg2[%c240, %c0_49] : memref<1664x128xf32, #tpu.memory_space<vmem>>, vector<1x32xf32>
    %134 = vector.broadcast %133 : vector<1x32xf32> to vector<8x32xf32>
    %135 = arith.addf %132, %134 : vector<8x32xf32>
    %c1360 = arith.constant 1360 : index
    %c0_50 = arith.constant 0 : index
    %136 = vector.load %arg2[%c1360, %c0_50] : memref<1664x128xf32, #tpu.memory_space<vmem>>, vector<64x8xf32>
    %cst_51 = arith.constant dense<0.000000e+00> : vector<8x8xf32>
    %137 = tpu.matmul %129, %136, %cst_51 {dimension_numbers = #tpu.dot_dimension_numbers<[1], [0], [0], [1], [0, 0, 1, 1], [], []>} : vector<8x64xf32>, vector<64x8xf32>, vector<8x8xf32> -> vector<8x8xf32>
    %c120 = arith.constant 120 : index
    %c0_52 = arith.constant 0 : index
    %138 = vector.load %arg2[%c120, %c0_52] : memref<1664x128xf32, #tpu.memory_space<vmem>>, vector<32x32xf32>
    %cst_53 = arith.constant dense<0.000000e+00> : vector<8x32xf32>
    %139 = tpu.matmul %135, %138, %cst_53 {dimension_numbers = #tpu.dot_dimension_numbers<[1], [0], [0], [1], [0, 0, 1, 1], [], []>} : vector<8x32xf32>, vector<32x32xf32>, vector<8x32xf32> -> vector<8x32xf32>
    %c152 = arith.constant 152 : index
    %c0_54 = arith.constant 0 : index
    %140 = vector.load %arg2[%c152, %c0_54] : memref<1664x128xf32, #tpu.memory_space<vmem>>, vector<1x32xf32>
    %141 = vector.broadcast %140 : vector<1x32xf32> to vector<8x32xf32>
    %142 = arith.addf %139, %141 : vector<8x32xf32>
    %143 = vector.extract_strided_slice %1 {offsets = [0, 37], sizes = [8, 8], strides = [1, 1]} : vector<8x64xf32> to vector<8x8xf32>
    %c160 = arith.constant 160 : index
    %c0_55 = arith.constant 0 : index
    %144 = vector.load %arg2[%c160, %c0_55] : memref<1664x128xf32, #tpu.memory_space<vmem>>, vector<8x32xf32>
    %cst_56 = arith.constant dense<0.000000e+00> : vector<8x32xf32>
    %145 = tpu.matmul %143, %144, %cst_56 {dimension_numbers = #tpu.dot_dimension_numbers<[1], [0], [0], [1], [0, 0, 1, 1], [], []>} : vector<8x8xf32>, vector<8x32xf32>, vector<8x32xf32> -> vector<8x32xf32>
    %146 = arith.addf %142, %145 : vector<8x32xf32>
    %c248 = arith.constant 248 : index
    %c0_57 = arith.constant 0 : index
    %147 = vector.load %arg2[%c248, %c0_57] : memref<1664x128xf32, #tpu.memory_space<vmem>>, vector<32x96xf32>
    %c280 = arith.constant 280 : index
    %c0_58 = arith.constant 0 : index
    %148 = vector.load %arg2[%c280, %c0_58] : memref<1664x128xf32, #tpu.memory_space<vmem>>, vector<1x96xf32>
    %cst_59 = arith.constant dense<0.000000e+00> : vector<8x96xf32>
    %149 = tpu.matmul %146, %147, %cst_59 {dimension_numbers = #tpu.dot_dimension_numbers<[1], [0], [0], [1], [0, 0, 1, 1], [], []>} : vector<8x32xf32>, vector<32x96xf32>, vector<8x96xf32> -> vector<8x96xf32>
    %150 = vector.broadcast %148 : vector<1x96xf32> to vector<8x96xf32>
    %151 = arith.addf %149, %150 : vector<8x96xf32>
    %152 = vector.extract_strided_slice %151 {offsets = [0, 0], sizes = [8, 32], strides = [1, 1]} : vector<8x96xf32> to vector<8x32xf32>
    %153 = vector.extract_strided_slice %151 {offsets = [0, 32], sizes = [8, 32], strides = [1, 1]} : vector<8x96xf32> to vector<8x32xf32>
    %154 = vector.extract_strided_slice %151 {offsets = [0, 64], sizes = [8, 32], strides = [1, 1]} : vector<8x96xf32> to vector<8x32xf32>
    %c1424 = arith.constant 1424 : index
    %c0_60 = arith.constant 0 : index
    %155 = vector.load %arg2[%c1424, %c0_60] : memref<1664x128xf32, #tpu.memory_space<vmem>>, vector<32x32xf32>
    %c1456 = arith.constant 1456 : index
    %c0_61 = arith.constant 0 : index
    %156 = vector.load %arg2[%c1456, %c0_61] : memref<1664x128xf32, #tpu.memory_space<vmem>>, vector<32x32xf32>
    %157 = tpu.concatenate %153, %153, %153, %153 in 0 : vector<8x32xf32>, vector<8x32xf32>, vector<8x32xf32>, vector<8x32xf32> -> vector<32x32xf32>
    %158 = arith.mulf %157, %155 : vector<32x32xf32>
    %159 = tpu.concatenate %154, %154, %154, %154 in 0 : vector<8x32xf32>, vector<8x32xf32>, vector<8x32xf32>, vector<8x32xf32> -> vector<32x32xf32>
    %160 = arith.mulf %159, %155 : vector<32x32xf32>
    %cst_62 = arith.constant dense<0.000000e+00> : vector<8x32xf32>
    %161 = tpu.matmul %152, %158, %cst_62 {dimension_numbers = #tpu.dot_dimension_numbers<[1], [1], [0], [0], [0, 0, 1, 0], [], []>} : vector<8x32xf32>, vector<32x32xf32>, vector<8x32xf32> -> vector<8x32xf32>
    %cst_63 = arith.constant dense<0xFF800000> : vector<8xf32>
    %162 = vector.multi_reduction <maximumf>, %161, %cst_63 [1] : vector<8x32xf32> to vector<8xf32>
    %163 = vector.shape_cast %162 : vector<8xf32> to vector<8x1xf32>
    %164 = vector.broadcast %163 : vector<8x1xf32> to vector<8x32xf32>
    %165 = arith.subf %161, %164 : vector<8x32xf32>
    %166 = math.exp %165 : vector<8x32xf32>
    %cst_64 = arith.constant dense<0.000000e+00> : vector<8x32xf32>
    %167 = tpu.matmul %166, %156, %cst_64 {dimension_numbers = #tpu.dot_dimension_numbers<[1], [0], [0], [1], [0, 0, 1, 1], [], []>} : vector<8x32xf32>, vector<32x32xf32>, vector<8x32xf32> -> vector<8x32xf32>
    %168 = tpu.reciprocal %167 : vector<8x32xf32> -> vector<8x32xf32>
    %169 = arith.mulf %166, %168 : vector<8x32xf32>
    %cst_65 = arith.constant dense<0.000000e+00> : vector<8x32xf32>
    %170 = tpu.matmul %169, %160, %cst_65 {dimension_numbers = #tpu.dot_dimension_numbers<[1], [0], [0], [1], [0, 0, 1, 1], [], []>} : vector<8x32xf32>, vector<32x32xf32>, vector<8x32xf32> -> vector<8x32xf32>
    %c288 = arith.constant 288 : index
    %c0_66 = arith.constant 0 : index
    %171 = vector.load %arg2[%c288, %c0_66] : memref<1664x128xf32, #tpu.memory_space<vmem>>, vector<32x32xf32>
    %cst_67 = arith.constant dense<0.000000e+00> : vector<8x32xf32>
    %172 = tpu.matmul %170, %171, %cst_67 {dimension_numbers = #tpu.dot_dimension_numbers<[1], [0], [0], [1], [0, 0, 1, 1], [], []>} : vector<8x32xf32>, vector<32x32xf32>, vector<8x32xf32> -> vector<8x32xf32>
    %c320 = arith.constant 320 : index
    %c0_68 = arith.constant 0 : index
    %173 = vector.load %arg2[%c320, %c0_68] : memref<1664x128xf32, #tpu.memory_space<vmem>>, vector<1x32xf32>
    %174 = vector.broadcast %173 : vector<1x32xf32> to vector<8x32xf32>
    %175 = arith.addf %172, %174 : vector<8x32xf32>
    %c1488 = arith.constant 1488 : index
    %c0_69 = arith.constant 0 : index
    %176 = vector.load %arg2[%c1488, %c0_69] : memref<1664x128xf32, #tpu.memory_space<vmem>>, vector<32x8xf32>
    %cst_70 = arith.constant dense<0.000000e+00> : vector<8x8xf32>
    %177 = tpu.matmul %169, %176, %cst_70 {dimension_numbers = #tpu.dot_dimension_numbers<[1], [0], [0], [1], [0, 0, 1, 1], [], []>} : vector<8x32xf32>, vector<32x8xf32>, vector<8x8xf32> -> vector<8x8xf32>
    %178 = vector.shape_cast %94 : vector<1x32xf32> to vector<1x32xf32>
    %179 = vector.broadcast %178 : vector<1x32xf32> to vector<8x32xf32>
    %c328 = arith.constant 328 : index
    %c0_71 = arith.constant 0 : index
    %180 = vector.load %arg2[%c328, %c0_71] : memref<1664x128xf32, #tpu.memory_space<vmem>>, vector<32x96xf32>
    %c360 = arith.constant 360 : index
    %c0_72 = arith.constant 0 : index
    %181 = vector.load %arg2[%c360, %c0_72] : memref<1664x128xf32, #tpu.memory_space<vmem>>, vector<1x96xf32>
    %182 = vector.extract_strided_slice %180 {offsets = [0, 0], sizes = [32, 32], strides = [1, 1]} : vector<32x96xf32> to vector<32x32xf32>
    %cst_73 = arith.constant dense<0.000000e+00> : vector<8x32xf32>
    %183 = tpu.matmul %175, %182, %cst_73 {dimension_numbers = #tpu.dot_dimension_numbers<[1], [0], [0], [1], [0, 0, 1, 1], [], []>} : vector<8x32xf32>, vector<32x32xf32>, vector<8x32xf32> -> vector<8x32xf32>
    %184 = vector.extract_strided_slice %181 {offsets = [0, 0], sizes = [1, 32], strides = [1, 1]} : vector<1x96xf32> to vector<1x32xf32>
    %185 = vector.broadcast %184 : vector<1x32xf32> to vector<8x32xf32>
    %186 = arith.addf %183, %185 : vector<8x32xf32>
    %187 = vector.extract_strided_slice %180 {offsets = [0, 32], sizes = [32, 64], strides = [1, 1]} : vector<32x96xf32> to vector<32x64xf32>
    %cst_74 = arith.constant dense<0.000000e+00> : vector<8x64xf32>
    %188 = tpu.matmul %179, %187, %cst_74 {dimension_numbers = #tpu.dot_dimension_numbers<[1], [0], [0], [1], [0, 0, 1, 1], [], []>} : vector<8x32xf32>, vector<32x64xf32>, vector<8x64xf32> -> vector<8x64xf32>
    %189 = vector.extract_strided_slice %181 {offsets = [0, 32], sizes = [1, 64], strides = [1, 1]} : vector<1x96xf32> to vector<1x64xf32>
    %190 = vector.broadcast %189 : vector<1x64xf32> to vector<8x64xf32>
    %191 = arith.addf %188, %190 : vector<8x64xf32>
    %192 = vector.extract_strided_slice %191 {offsets = [0, 0], sizes = [8, 32], strides = [1, 1]} : vector<8x64xf32> to vector<8x32xf32>
    %193 = vector.extract_strided_slice %191 {offsets = [0, 32], sizes = [8, 32], strides = [1, 1]} : vector<8x64xf32> to vector<8x32xf32>
    %c1232_75 = arith.constant 1232 : index
    %c0_76 = arith.constant 0 : index
    %194 = vector.load %arg2[%c1232_75, %c0_76] : memref<1664x128xf32, #tpu.memory_space<vmem>>, vector<64x32xf32>
    %c1296_77 = arith.constant 1296 : index
    %c0_78 = arith.constant 0 : index
    %195 = vector.load %arg2[%c1296_77, %c0_78] : memref<1664x128xf32, #tpu.memory_space<vmem>>, vector<64x64xf32>
    %196 = tpu.concatenate %192, %192, %192, %192, %192, %192, %192, %192 in 0 : vector<8x32xf32>, vector<8x32xf32>, vector<8x32xf32>, vector<8x32xf32>, vector<8x32xf32>, vector<8x32xf32>, vector<8x32xf32>, vector<8x32xf32> -> vector<64x32xf32>
    %197 = arith.mulf %196, %194 : vector<64x32xf32>
    %198 = tpu.concatenate %193, %193, %193, %193, %193, %193, %193, %193 in 0 : vector<8x32xf32>, vector<8x32xf32>, vector<8x32xf32>, vector<8x32xf32>, vector<8x32xf32>, vector<8x32xf32>, vector<8x32xf32>, vector<8x32xf32> -> vector<64x32xf32>
    %199 = arith.mulf %198, %194 : vector<64x32xf32>
    %cst_79 = arith.constant dense<0.000000e+00> : vector<8x64xf32>
    %200 = tpu.matmul %186, %197, %cst_79 {dimension_numbers = #tpu.dot_dimension_numbers<[1], [1], [0], [0], [0, 0, 1, 0], [], []>} : vector<8x32xf32>, vector<64x32xf32>, vector<8x64xf32> -> vector<8x64xf32>
    %cst_80 = arith.constant dense<0xFF800000> : vector<8xf32>
    %201 = vector.multi_reduction <maximumf>, %200, %cst_80 [1] : vector<8x64xf32> to vector<8xf32>
    %202 = vector.shape_cast %201 : vector<8xf32> to vector<8x1xf32>
    %203 = vector.broadcast %202 : vector<8x1xf32> to vector<8x64xf32>
    %204 = arith.subf %200, %203 : vector<8x64xf32>
    %205 = math.exp %204 : vector<8x64xf32>
    %cst_81 = arith.constant dense<0.000000e+00> : vector<8x64xf32>
    %206 = tpu.matmul %205, %195, %cst_81 {dimension_numbers = #tpu.dot_dimension_numbers<[1], [0], [0], [1], [0, 0, 1, 1], [], []>} : vector<8x64xf32>, vector<64x64xf32>, vector<8x64xf32> -> vector<8x64xf32>
    %207 = tpu.reciprocal %206 : vector<8x64xf32> -> vector<8x64xf32>
    %208 = arith.mulf %205, %207 : vector<8x64xf32>
    %cst_82 = arith.constant dense<0.000000e+00> : vector<8x32xf32>
    %209 = tpu.matmul %208, %199, %cst_82 {dimension_numbers = #tpu.dot_dimension_numbers<[1], [0], [0], [1], [0, 0, 1, 1], [], []>} : vector<8x64xf32>, vector<64x32xf32>, vector<8x32xf32> -> vector<8x32xf32>
    %c368 = arith.constant 368 : index
    %c0_83 = arith.constant 0 : index
    %210 = vector.load %arg2[%c368, %c0_83] : memref<1664x128xf32, #tpu.memory_space<vmem>>, vector<32x32xf32>
    %cst_84 = arith.constant dense<0.000000e+00> : vector<8x32xf32>
    %211 = tpu.matmul %209, %210, %cst_84 {dimension_numbers = #tpu.dot_dimension_numbers<[1], [0], [0], [1], [0, 0, 1, 1], [], []>} : vector<8x32xf32>, vector<32x32xf32>, vector<8x32xf32> -> vector<8x32xf32>
    %c400 = arith.constant 400 : index
    %c0_85 = arith.constant 0 : index
    %212 = vector.load %arg2[%c400, %c0_85] : memref<1664x128xf32, #tpu.memory_space<vmem>>, vector<1x32xf32>
    %213 = vector.broadcast %212 : vector<1x32xf32> to vector<8x32xf32>
    %214 = arith.addf %211, %213 : vector<8x32xf32>
    %c408 = arith.constant 408 : index
    %c0_86 = arith.constant 0 : index
    %215 = vector.load %arg2[%c408, %c0_86] : memref<1664x128xf32, #tpu.memory_space<vmem>>, vector<32x96xf32>
    %c440 = arith.constant 440 : index
    %c0_87 = arith.constant 0 : index
    %216 = vector.load %arg2[%c440, %c0_87] : memref<1664x128xf32, #tpu.memory_space<vmem>>, vector<1x96xf32>
    %cst_88 = arith.constant dense<0.000000e+00> : vector<8x96xf32>
    %217 = tpu.matmul %214, %215, %cst_88 {dimension_numbers = #tpu.dot_dimension_numbers<[1], [0], [0], [1], [0, 0, 1, 1], [], []>} : vector<8x32xf32>, vector<32x96xf32>, vector<8x96xf32> -> vector<8x96xf32>
    %218 = vector.broadcast %216 : vector<1x96xf32> to vector<8x96xf32>
    %219 = arith.addf %217, %218 : vector<8x96xf32>
    %220 = vector.extract_strided_slice %219 {offsets = [0, 0], sizes = [8, 32], strides = [1, 1]} : vector<8x96xf32> to vector<8x32xf32>
    %221 = vector.extract_strided_slice %219 {offsets = [0, 32], sizes = [8, 32], strides = [1, 1]} : vector<8x96xf32> to vector<8x32xf32>
    %222 = vector.extract_strided_slice %219 {offsets = [0, 64], sizes = [8, 32], strides = [1, 1]} : vector<8x96xf32> to vector<8x32xf32>
    %c1232_89 = arith.constant 1232 : index
    %c0_90 = arith.constant 0 : index
    %223 = vector.load %arg2[%c1232_89, %c0_90] : memref<1664x128xf32, #tpu.memory_space<vmem>>, vector<64x32xf32>
    %c1296_91 = arith.constant 1296 : index
    %c0_92 = arith.constant 0 : index
    %224 = vector.load %arg2[%c1296_91, %c0_92] : memref<1664x128xf32, #tpu.memory_space<vmem>>, vector<64x64xf32>
    %225 = tpu.concatenate %221, %221, %221, %221, %221, %221, %221, %221 in 0 : vector<8x32xf32>, vector<8x32xf32>, vector<8x32xf32>, vector<8x32xf32>, vector<8x32xf32>, vector<8x32xf32>, vector<8x32xf32>, vector<8x32xf32> -> vector<64x32xf32>
    %226 = arith.mulf %225, %223 : vector<64x32xf32>
    %227 = tpu.concatenate %222, %222, %222, %222, %222, %222, %222, %222 in 0 : vector<8x32xf32>, vector<8x32xf32>, vector<8x32xf32>, vector<8x32xf32>, vector<8x32xf32>, vector<8x32xf32>, vector<8x32xf32>, vector<8x32xf32> -> vector<64x32xf32>
    %228 = arith.mulf %227, %223 : vector<64x32xf32>
    %cst_93 = arith.constant dense<0.000000e+00> : vector<8x64xf32>
    %229 = tpu.matmul %220, %226, %cst_93 {dimension_numbers = #tpu.dot_dimension_numbers<[1], [1], [0], [0], [0, 0, 1, 0], [], []>} : vector<8x32xf32>, vector<64x32xf32>, vector<8x64xf32> -> vector<8x64xf32>
    %cst_94 = arith.constant dense<0xFF800000> : vector<8xf32>
    %230 = vector.multi_reduction <maximumf>, %229, %cst_94 [1] : vector<8x64xf32> to vector<8xf32>
    %231 = vector.shape_cast %230 : vector<8xf32> to vector<8x1xf32>
    %232 = vector.broadcast %231 : vector<8x1xf32> to vector<8x64xf32>
    %233 = arith.subf %229, %232 : vector<8x64xf32>
    %234 = math.exp %233 : vector<8x64xf32>
    %cst_95 = arith.constant dense<0.000000e+00> : vector<8x64xf32>
    %235 = tpu.matmul %234, %224, %cst_95 {dimension_numbers = #tpu.dot_dimension_numbers<[1], [0], [0], [1], [0, 0, 1, 1], [], []>} : vector<8x64xf32>, vector<64x64xf32>, vector<8x64xf32> -> vector<8x64xf32>
    %236 = tpu.reciprocal %235 : vector<8x64xf32> -> vector<8x64xf32>
    %237 = arith.mulf %234, %236 : vector<8x64xf32>
    %cst_96 = arith.constant dense<0.000000e+00> : vector<8x32xf32>
    %238 = tpu.matmul %237, %228, %cst_96 {dimension_numbers = #tpu.dot_dimension_numbers<[1], [0], [0], [1], [0, 0, 1, 1], [], []>} : vector<8x64xf32>, vector<64x32xf32>, vector<8x32xf32> -> vector<8x32xf32>
    %c448 = arith.constant 448 : index
    %c0_97 = arith.constant 0 : index
    %239 = vector.load %arg2[%c448, %c0_97] : memref<1664x128xf32, #tpu.memory_space<vmem>>, vector<32x32xf32>
    %cst_98 = arith.constant dense<0.000000e+00> : vector<8x32xf32>
    %240 = tpu.matmul %238, %239, %cst_98 {dimension_numbers = #tpu.dot_dimension_numbers<[1], [0], [0], [1], [0, 0, 1, 1], [], []>} : vector<8x32xf32>, vector<32x32xf32>, vector<8x32xf32> -> vector<8x32xf32>
    %c480 = arith.constant 480 : index
    %c0_99 = arith.constant 0 : index
    %241 = vector.load %arg2[%c480, %c0_99] : memref<1664x128xf32, #tpu.memory_space<vmem>>, vector<1x32xf32>
    %242 = vector.broadcast %241 : vector<1x32xf32> to vector<8x32xf32>
    %243 = arith.addf %240, %242 : vector<8x32xf32>
    %c1360_100 = arith.constant 1360 : index
    %c0_101 = arith.constant 0 : index
    %244 = vector.load %arg2[%c1360_100, %c0_101] : memref<1664x128xf32, #tpu.memory_space<vmem>>, vector<64x8xf32>
    %cst_102 = arith.constant dense<0.000000e+00> : vector<8x8xf32>
    %245 = tpu.matmul %237, %244, %cst_102 {dimension_numbers = #tpu.dot_dimension_numbers<[1], [0], [0], [1], [0, 0, 1, 1], [], []>} : vector<8x64xf32>, vector<64x8xf32>, vector<8x8xf32> -> vector<8x8xf32>
    %246 = vector.extract_strided_slice %1 {offsets = [0, 45], sizes = [8, 8], strides = [1, 1]} : vector<8x64xf32> to vector<8x8xf32>
    %c488 = arith.constant 488 : index
    %c0_103 = arith.constant 0 : index
    %247 = vector.load %arg2[%c488, %c0_103] : memref<1664x128xf32, #tpu.memory_space<vmem>>, vector<32x96xf32>
    %c520 = arith.constant 520 : index
    %c0_104 = arith.constant 0 : index
    %248 = vector.load %arg2[%c520, %c0_104] : memref<1664x128xf32, #tpu.memory_space<vmem>>, vector<1x96xf32>
    %249 = vector.extract_strided_slice %247 {offsets = [0, 0], sizes = [32, 32], strides = [1, 1]} : vector<32x96xf32> to vector<32x32xf32>
    %cst_105 = arith.constant dense<0.000000e+00> : vector<8x32xf32>
    %250 = tpu.matmul %243, %249, %cst_105 {dimension_numbers = #tpu.dot_dimension_numbers<[1], [0], [0], [1], [0, 0, 1, 1], [], []>} : vector<8x32xf32>, vector<32x32xf32>, vector<8x32xf32> -> vector<8x32xf32>
    %251 = vector.extract_strided_slice %248 {offsets = [0, 0], sizes = [1, 32], strides = [1, 1]} : vector<1x96xf32> to vector<1x32xf32>
    %252 = vector.broadcast %251 : vector<1x32xf32> to vector<8x32xf32>
    %253 = arith.addf %250, %252 : vector<8x32xf32>
    %254 = vector.extract_strided_slice %247 {offsets = [0, 32], sizes = [32, 64], strides = [1, 1]} : vector<32x96xf32> to vector<32x64xf32>
    %cst_106 = arith.constant dense<0.000000e+00> : vector<8x64xf32>
    %255 = tpu.matmul %65, %254, %cst_106 {dimension_numbers = #tpu.dot_dimension_numbers<[1], [0], [0], [1], [0, 0, 1, 1], [], []>} : vector<8x32xf32>, vector<32x64xf32>, vector<8x64xf32> -> vector<8x64xf32>
    %256 = vector.extract_strided_slice %248 {offsets = [0, 32], sizes = [1, 64], strides = [1, 1]} : vector<1x96xf32> to vector<1x64xf32>
    %257 = vector.broadcast %256 : vector<1x64xf32> to vector<8x64xf32>
    %258 = arith.addf %255, %257 : vector<8x64xf32>
    %259 = vector.extract_strided_slice %258 {offsets = [0, 0], sizes = [8, 32], strides = [1, 1]} : vector<8x64xf32> to vector<8x32xf32>
    %260 = vector.extract_strided_slice %258 {offsets = [0, 32], sizes = [8, 32], strides = [1, 1]} : vector<8x64xf32> to vector<8x32xf32>
    %c1232_107 = arith.constant 1232 : index
    %c0_108 = arith.constant 0 : index
    %261 = vector.load %arg2[%c1232_107, %c0_108] : memref<1664x128xf32, #tpu.memory_space<vmem>>, vector<64x32xf32>
    %c1296_109 = arith.constant 1296 : index
    %c0_110 = arith.constant 0 : index
    %262 = vector.load %arg2[%c1296_109, %c0_110] : memref<1664x128xf32, #tpu.memory_space<vmem>>, vector<64x64xf32>
    %263 = tpu.concatenate %259, %259, %259, %259, %259, %259, %259, %259 in 0 : vector<8x32xf32>, vector<8x32xf32>, vector<8x32xf32>, vector<8x32xf32>, vector<8x32xf32>, vector<8x32xf32>, vector<8x32xf32>, vector<8x32xf32> -> vector<64x32xf32>
    %264 = arith.mulf %263, %261 : vector<64x32xf32>
    %265 = tpu.concatenate %260, %260, %260, %260, %260, %260, %260, %260 in 0 : vector<8x32xf32>, vector<8x32xf32>, vector<8x32xf32>, vector<8x32xf32>, vector<8x32xf32>, vector<8x32xf32>, vector<8x32xf32>, vector<8x32xf32> -> vector<64x32xf32>
    %266 = arith.mulf %265, %261 : vector<64x32xf32>
    %cst_111 = arith.constant dense<0.000000e+00> : vector<8x64xf32>
    %267 = tpu.matmul %253, %264, %cst_111 {dimension_numbers = #tpu.dot_dimension_numbers<[1], [1], [0], [0], [0, 0, 1, 0], [], []>} : vector<8x32xf32>, vector<64x32xf32>, vector<8x64xf32> -> vector<8x64xf32>
    %268 = tpu.concatenate %246, %246, %246, %246, %246, %246, %246, %246 in 1 : vector<8x8xf32>, vector<8x8xf32>, vector<8x8xf32>, vector<8x8xf32>, vector<8x8xf32>, vector<8x8xf32>, vector<8x8xf32>, vector<8x8xf32> -> vector<8x64xf32>
    %cst_112 = arith.constant 5.000000e-01 : f32
    %269 = vector.broadcast %cst_112 : f32 to vector<8x64xf32>
    %270 = arith.cmpf olt, %268, %269 : vector<8x64xf32>
    %cst_113 = arith.constant -1.000000e+09 : f32
    %271 = vector.broadcast %cst_113 : f32 to vector<8x64xf32>
    %272 = arith.select %270, %271, %267 : vector<8x64xi1>, vector<8x64xf32>
    %cst_114 = arith.constant dense<0xFF800000> : vector<8xf32>
    %273 = vector.multi_reduction <maximumf>, %272, %cst_114 [1] : vector<8x64xf32> to vector<8xf32>
    %274 = vector.shape_cast %273 : vector<8xf32> to vector<8x1xf32>
    %275 = vector.broadcast %274 : vector<8x1xf32> to vector<8x64xf32>
    %276 = arith.subf %272, %275 : vector<8x64xf32>
    %277 = math.exp %276 : vector<8x64xf32>
    %cst_115 = arith.constant dense<0.000000e+00> : vector<8x64xf32>
    %278 = tpu.matmul %277, %262, %cst_115 {dimension_numbers = #tpu.dot_dimension_numbers<[1], [0], [0], [1], [0, 0, 1, 1], [], []>} : vector<8x64xf32>, vector<64x64xf32>, vector<8x64xf32> -> vector<8x64xf32>
    %279 = tpu.reciprocal %278 : vector<8x64xf32> -> vector<8x64xf32>
    %280 = arith.mulf %277, %279 : vector<8x64xf32>
    %cst_116 = arith.constant dense<0.000000e+00> : vector<8x32xf32>
    %281 = tpu.matmul %280, %266, %cst_116 {dimension_numbers = #tpu.dot_dimension_numbers<[1], [0], [0], [1], [0, 0, 1, 1], [], []>} : vector<8x64xf32>, vector<64x32xf32>, vector<8x32xf32> -> vector<8x32xf32>
    %c528 = arith.constant 528 : index
    %c0_117 = arith.constant 0 : index
    %282 = vector.load %arg2[%c528, %c0_117] : memref<1664x128xf32, #tpu.memory_space<vmem>>, vector<32x32xf32>
    %cst_118 = arith.constant dense<0.000000e+00> : vector<8x32xf32>
    %283 = tpu.matmul %281, %282, %cst_118 {dimension_numbers = #tpu.dot_dimension_numbers<[1], [0], [0], [1], [0, 0, 1, 1], [], []>} : vector<8x32xf32>, vector<32x32xf32>, vector<8x32xf32> -> vector<8x32xf32>
    %c560 = arith.constant 560 : index
    %c0_119 = arith.constant 0 : index
    %284 = vector.load %arg2[%c560, %c0_119] : memref<1664x128xf32, #tpu.memory_space<vmem>>, vector<1x32xf32>
    %285 = vector.broadcast %284 : vector<1x32xf32> to vector<8x32xf32>
    %286 = arith.addf %283, %285 : vector<8x32xf32>
    %c728 = arith.constant 728 : index
    %c0_120 = arith.constant 0 : index
    %287 = vector.load %arg2[%c728, %c0_120] : memref<1664x128xf32, #tpu.memory_space<vmem>>, vector<32x32xf32>
    %cst_121 = arith.constant dense<0.000000e+00> : vector<8x32xf32>
    %288 = tpu.matmul %243, %287, %cst_121 {dimension_numbers = #tpu.dot_dimension_numbers<[1], [0], [0], [1], [0, 0, 1, 1], [], []>} : vector<8x32xf32>, vector<32x32xf32>, vector<8x32xf32> -> vector<8x32xf32>
    %c760 = arith.constant 760 : index
    %c0_122 = arith.constant 0 : index
    %289 = vector.load %arg2[%c760, %c0_122] : memref<1664x128xf32, #tpu.memory_space<vmem>>, vector<32x32xf32>
    %cst_123 = arith.constant dense<0.000000e+00> : vector<8x32xf32>
    %290 = tpu.matmul %65, %289, %cst_123 {dimension_numbers = #tpu.dot_dimension_numbers<[1], [0], [0], [1], [0, 0, 1, 1], [], []>} : vector<8x32xf32>, vector<32x32xf32>, vector<8x32xf32> -> vector<8x32xf32>
    %c1520 = arith.constant 1520 : index
    %c0_124 = arith.constant 0 : index
    %291 = vector.load %arg2[%c1520, %c0_124] : memref<1664x128xf32, #tpu.memory_space<vmem>>, vector<64x8xf32>
    %cst_125 = arith.constant dense<0.000000e+00> : vector<64x32xf32>
    %292 = tpu.matmul %291, %288, %cst_125 {dimension_numbers = #tpu.dot_dimension_numbers<[1], [0], [0], [1], [0, 0, 1, 1], [], []>} : vector<64x8xf32>, vector<8x32xf32>, vector<64x32xf32> -> vector<64x32xf32>
    %c1584 = arith.constant 1584 : index
    %c0_126 = arith.constant 0 : index
    %293 = vector.load %arg2[%c1584, %c0_126] : memref<1664x128xf32, #tpu.memory_space<vmem>>, vector<64x8xf32>
    %cst_127 = arith.constant dense<0.000000e+00> : vector<64x32xf32>
    %294 = tpu.matmul %293, %290, %cst_127 {dimension_numbers = #tpu.dot_dimension_numbers<[1], [0], [0], [1], [0, 0, 1, 1], [], []>} : vector<64x8xf32>, vector<8x32xf32>, vector<64x32xf32> -> vector<64x32xf32>
    %295 = arith.addf %292, %294 : vector<64x32xf32>
    %c792 = arith.constant 792 : index
    %c0_128 = arith.constant 0 : index
    %296 = vector.load %arg2[%c792, %c0_128] : memref<1664x128xf32, #tpu.memory_space<vmem>>, vector<1x32xf32>
    %297 = vector.broadcast %296 : vector<1x32xf32> to vector<64x32xf32>
    %298 = arith.addf %295, %297 : vector<64x32xf32>
    %cst_129 = arith.constant 0.000000e+00 : f32
    %299 = vector.broadcast %cst_129 : f32 to vector<64x32xf32>
    %300 = arith.maximumf %298, %299 : vector<64x32xf32>
    %c800 = arith.constant 800 : index
    %c0_130 = arith.constant 0 : index
    %301 = vector.load %arg2[%c800, %c0_130] : memref<1664x128xf32, #tpu.memory_space<vmem>>, vector<32x16xf32>
    %cst_131 = arith.constant dense<0.000000e+00> : vector<64x16xf32>
    %302 = tpu.matmul %300, %301, %cst_131 {dimension_numbers = #tpu.dot_dimension_numbers<[1], [0], [0], [1], [0, 0, 1, 1], [], []>} : vector<64x32xf32>, vector<32x16xf32>, vector<64x16xf32> -> vector<64x16xf32>
    %c832 = arith.constant 832 : index
    %c0_132 = arith.constant 0 : index
    %303 = vector.load %arg2[%c832, %c0_132] : memref<1664x128xf32, #tpu.memory_space<vmem>>, vector<1x16xf32>
    %304 = vector.broadcast %303 : vector<1x16xf32> to vector<64x16xf32>
    %305 = arith.addf %302, %304 : vector<64x16xf32>
    %cst_133 = arith.constant 0.000000e+00 : f32
    %306 = vector.broadcast %cst_133 : f32 to vector<64x16xf32>
    %307 = arith.maximumf %305, %306 : vector<64x16xf32>
    %c840 = arith.constant 840 : index
    %c0_134 = arith.constant 0 : index
    %308 = vector.load %arg2[%c840, %c0_134] : memref<1664x128xf32, #tpu.memory_space<vmem>>, vector<16x1xf32>
    %cst_135 = arith.constant dense<0.000000e+00> : vector<64x1xf32>
    %309 = tpu.matmul %307, %308, %cst_135 {dimension_numbers = #tpu.dot_dimension_numbers<[1], [0], [0], [1], [0, 0, 1, 1], [], []>} : vector<64x16xf32>, vector<16x1xf32>, vector<64x1xf32> -> vector<64x1xf32>
    %c856 = arith.constant 856 : index
    %c0_136 = arith.constant 0 : index
    %310 = vector.load %arg2[%c856, %c0_136] : memref<1664x128xf32, #tpu.memory_space<vmem>>, vector<1x1xf32>
    %311 = vector.broadcast %310 : vector<1x1xf32> to vector<64x1xf32>
    %312 = arith.addf %309, %311 : vector<64x1xf32>
    %313 = arith.negf %312 : vector<64x1xf32>
    %314 = math.exp %313 : vector<64x1xf32>
    %cst_137 = arith.constant 1.000000e+00 : f32
    %315 = vector.broadcast %cst_137 : f32 to vector<64x1xf32>
    %316 = arith.addf %315, %314 : vector<64x1xf32>
    %317 = arith.divf %315, %316 : vector<64x1xf32>
    %c1648 = arith.constant 1648 : index
    %c0_138 = arith.constant 0 : index
    %318 = vector.load %arg2[%c1648, %c0_138] : memref<1664x128xf32, #tpu.memory_space<vmem>>, vector<8x64xf32>
    %c1584_139 = arith.constant 1584 : index
    %c0_140 = arith.constant 0 : index
    %319 = vector.load %arg2[%c1584_139, %c0_140] : memref<1664x128xf32, #tpu.memory_space<vmem>>, vector<64x8xf32>
    %320 = vector.broadcast %317 : vector<64x1xf32> to vector<64x8xf32>
    %321 = arith.mulf %320, %319 : vector<64x8xf32>
    %cst_141 = arith.constant dense<0.000000e+00> : vector<8x8xf32>
    %322 = tpu.matmul %318, %321, %cst_141 {dimension_numbers = #tpu.dot_dimension_numbers<[1], [0], [0], [1], [0, 0, 1, 1], [], []>} : vector<8x64xf32>, vector<64x8xf32>, vector<8x8xf32> -> vector<8x8xf32>
    %c568 = arith.constant 568 : index
    %c0_142 = arith.constant 0 : index
    %323 = vector.load %arg2[%c568, %c0_142] : memref<1664x128xf32, #tpu.memory_space<vmem>>, vector<32x96xf32>
    %c600 = arith.constant 600 : index
    %c0_143 = arith.constant 0 : index
    %324 = vector.load %arg2[%c600, %c0_143] : memref<1664x128xf32, #tpu.memory_space<vmem>>, vector<1x96xf32>
    %cst_144 = arith.constant dense<0.000000e+00> : vector<8x96xf32>
    %325 = tpu.matmul %65, %323, %cst_144 {dimension_numbers = #tpu.dot_dimension_numbers<[1], [0], [0], [1], [0, 0, 1, 1], [], []>} : vector<8x32xf32>, vector<32x96xf32>, vector<8x96xf32> -> vector<8x96xf32>
    %326 = vector.broadcast %324 : vector<1x96xf32> to vector<8x96xf32>
    %327 = arith.addf %325, %326 : vector<8x96xf32>
    %328 = vector.extract_strided_slice %327 {offsets = [0, 0], sizes = [8, 32], strides = [1, 1]} : vector<8x96xf32> to vector<8x32xf32>
    %329 = vector.extract_strided_slice %327 {offsets = [0, 32], sizes = [8, 32], strides = [1, 1]} : vector<8x96xf32> to vector<8x32xf32>
    %c1424_145 = arith.constant 1424 : index
    %c0_146 = arith.constant 0 : index
    %330 = vector.load %arg2[%c1424_145, %c0_146] : memref<1664x128xf32, #tpu.memory_space<vmem>>, vector<32x32xf32>
    %c1456_147 = arith.constant 1456 : index
    %c0_148 = arith.constant 0 : index
    %331 = vector.load %arg2[%c1456_147, %c0_148] : memref<1664x128xf32, #tpu.memory_space<vmem>>, vector<32x32xf32>
    %332 = tpu.concatenate %329, %329, %329, %329 in 0 : vector<8x32xf32>, vector<8x32xf32>, vector<8x32xf32>, vector<8x32xf32> -> vector<32x32xf32>
    %333 = arith.mulf %332, %330 : vector<32x32xf32>
    %cst_149 = arith.constant dense<0.000000e+00> : vector<8x32xf32>
    %334 = tpu.matmul %328, %333, %cst_149 {dimension_numbers = #tpu.dot_dimension_numbers<[1], [1], [0], [0], [0, 0, 1, 0], [], []>} : vector<8x32xf32>, vector<32x32xf32>, vector<8x32xf32> -> vector<8x32xf32>
    %cst_150 = arith.constant dense<0xFF800000> : vector<8xf32>
    %335 = vector.multi_reduction <maximumf>, %334, %cst_150 [1] : vector<8x32xf32> to vector<8xf32>
    %336 = vector.shape_cast %335 : vector<8xf32> to vector<8x1xf32>
    %337 = vector.broadcast %336 : vector<8x1xf32> to vector<8x32xf32>
    %338 = arith.subf %334, %337 : vector<8x32xf32>
    %339 = math.exp %338 : vector<8x32xf32>
    %cst_151 = arith.constant dense<0.000000e+00> : vector<8x32xf32>
    %340 = tpu.matmul %339, %331, %cst_151 {dimension_numbers = #tpu.dot_dimension_numbers<[1], [0], [0], [1], [0, 0, 1, 1], [], []>} : vector<8x32xf32>, vector<32x32xf32>, vector<8x32xf32> -> vector<8x32xf32>
    %341 = tpu.reciprocal %340 : vector<8x32xf32> -> vector<8x32xf32>
    %342 = arith.mulf %339, %341 : vector<8x32xf32>
    %c1488_152 = arith.constant 1488 : index
    %c0_153 = arith.constant 0 : index
    %343 = vector.load %arg2[%c1488_152, %c0_153] : memref<1664x128xf32, #tpu.memory_space<vmem>>, vector<32x8xf32>
    %cst_154 = arith.constant dense<0.000000e+00> : vector<8x8xf32>
    %344 = tpu.matmul %342, %343, %cst_154 {dimension_numbers = #tpu.dot_dimension_numbers<[1], [0], [0], [1], [0, 0, 1, 1], [], []>} : vector<8x32xf32>, vector<32x8xf32>, vector<8x8xf32> -> vector<8x8xf32>
    %c1056 = arith.constant 1056 : index
    %c0_155 = arith.constant 0 : index
    %345 = vector.load %arg2[%c1056, %c0_155] : memref<1664x128xf32, #tpu.memory_space<vmem>>, vector<32x32xf32>
    %cst_156 = arith.constant dense<0.000000e+00> : vector<8x32xf32>
    %346 = tpu.matmul %142, %345, %cst_156 {dimension_numbers = #tpu.dot_dimension_numbers<[1], [0], [0], [1], [0, 0, 1, 1], [], []>} : vector<8x32xf32>, vector<32x32xf32>, vector<8x32xf32> -> vector<8x32xf32>
    %c1088 = arith.constant 1088 : index
    %c0_157 = arith.constant 0 : index
    %347 = vector.load %arg2[%c1088, %c0_157] : memref<1664x128xf32, #tpu.memory_space<vmem>>, vector<32x32xf32>
    %cst_158 = arith.constant dense<0.000000e+00> : vector<8x32xf32>
    %348 = tpu.matmul %214, %347, %cst_158 {dimension_numbers = #tpu.dot_dimension_numbers<[1], [0], [0], [1], [0, 0, 1, 1], [], []>} : vector<8x32xf32>, vector<32x32xf32>, vector<8x32xf32> -> vector<8x32xf32>
    %349 = arith.addf %346, %348 : vector<8x32xf32>
    %c1120 = arith.constant 1120 : index
    %c0_159 = arith.constant 0 : index
    %350 = vector.load %arg2[%c1120, %c0_159] : memref<1664x128xf32, #tpu.memory_space<vmem>>, vector<32x32xf32>
    %cst_160 = arith.constant dense<0.000000e+00> : vector<8x32xf32>
    %351 = tpu.matmul %243, %350, %cst_160 {dimension_numbers = #tpu.dot_dimension_numbers<[1], [0], [0], [1], [0, 0, 1, 1], [], []>} : vector<8x32xf32>, vector<32x32xf32>, vector<8x32xf32> -> vector<8x32xf32>
    %352 = arith.addf %349, %351 : vector<8x32xf32>
    %c1152 = arith.constant 1152 : index
    %c0_161 = arith.constant 0 : index
    %353 = vector.load %arg2[%c1152, %c0_161] : memref<1664x128xf32, #tpu.memory_space<vmem>>, vector<32x32xf32>
    %cst_162 = arith.constant dense<0.000000e+00> : vector<8x32xf32>
    %354 = tpu.matmul %286, %353, %cst_162 {dimension_numbers = #tpu.dot_dimension_numbers<[1], [0], [0], [1], [0, 0, 1, 1], [], []>} : vector<8x32xf32>, vector<32x32xf32>, vector<8x32xf32> -> vector<8x32xf32>
    %355 = arith.addf %352, %354 : vector<8x32xf32>
    %c1184 = arith.constant 1184 : index
    %c0_163 = arith.constant 0 : index
    %356 = vector.load %arg2[%c1184, %c0_163] : memref<1664x128xf32, #tpu.memory_space<vmem>>, vector<1x32xf32>
    %357 = vector.broadcast %356 : vector<1x32xf32> to vector<8x32xf32>
    %358 = arith.addf %355, %357 : vector<8x32xf32>
    %cst_164 = arith.constant 0.000000e+00 : f32
    %359 = vector.broadcast %cst_164 : f32 to vector<8x32xf32>
    %360 = arith.maximumf %358, %359 : vector<8x32xf32>
    %c1192 = arith.constant 1192 : index
    %c0_165 = arith.constant 0 : index
    %361 = vector.load %arg2[%c1192, %c0_165] : memref<1664x128xf32, #tpu.memory_space<vmem>>, vector<32x32xf32>
    %cst_166 = arith.constant dense<0.000000e+00> : vector<8x32xf32>
    %362 = tpu.matmul %360, %361, %cst_166 {dimension_numbers = #tpu.dot_dimension_numbers<[1], [0], [0], [1], [0, 0, 1, 1], [], []>} : vector<8x32xf32>, vector<32x32xf32>, vector<8x32xf32> -> vector<8x32xf32>
    %c1224 = arith.constant 1224 : index
    %c0_167 = arith.constant 0 : index
    %363 = vector.load %arg2[%c1224, %c0_167] : memref<1664x128xf32, #tpu.memory_space<vmem>>, vector<1x32xf32>
    %364 = vector.broadcast %363 : vector<1x32xf32> to vector<8x32xf32>
    %365 = arith.addf %362, %364 : vector<8x32xf32>
    %366 = math.tanh %365 : vector<8x32xf32>
    %c864 = arith.constant 864 : index
    %c0_168 = arith.constant 0 : index
    %367 = vector.load %arg2[%c864, %c0_168] : memref<1664x128xf32, #tpu.memory_space<vmem>>, vector<32x16xf32>
    %cst_169 = arith.constant dense<0.000000e+00> : vector<8x16xf32>
    %368 = tpu.matmul %366, %367, %cst_169 {dimension_numbers = #tpu.dot_dimension_numbers<[1], [0], [0], [1], [0, 0, 1, 1], [], []>} : vector<8x32xf32>, vector<32x16xf32>, vector<8x16xf32> -> vector<8x16xf32>
    %c896 = arith.constant 896 : index
    %c0_170 = arith.constant 0 : index
    %369 = vector.load %arg2[%c896, %c0_170] : memref<1664x128xf32, #tpu.memory_space<vmem>>, vector<1x16xf32>
    %370 = vector.broadcast %369 : vector<1x16xf32> to vector<8x16xf32>
    %371 = arith.addf %368, %370 : vector<8x16xf32>
    %cst_171 = arith.constant 0.000000e+00 : f32
    %372 = vector.broadcast %cst_171 : f32 to vector<8x16xf32>
    %373 = arith.maximumf %371, %372 : vector<8x16xf32>
    %c904 = arith.constant 904 : index
    %c0_172 = arith.constant 0 : index
    %374 = vector.load %arg2[%c904, %c0_172] : memref<1664x128xf32, #tpu.memory_space<vmem>>, vector<16x1xf32>
    %cst_173 = arith.constant dense<0.000000e+00> : vector<8x1xf32>
    %375 = tpu.matmul %373, %374, %cst_173 {dimension_numbers = #tpu.dot_dimension_numbers<[1], [0], [0], [1], [0, 0, 1, 1], [], []>} : vector<8x16xf32>, vector<16x1xf32>, vector<8x1xf32> -> vector<8x1xf32>
    %c920 = arith.constant 920 : index
    %c0_174 = arith.constant 0 : index
    %376 = vector.load %arg2[%c920, %c0_174] : memref<1664x128xf32, #tpu.memory_space<vmem>>, vector<1x1xf32>
    %377 = vector.broadcast %376 : vector<1x1xf32> to vector<8x1xf32>
    %378 = arith.addf %375, %377 : vector<8x1xf32>
    %379 = math.tanh %378 : vector<8x1xf32>
    %c928 = arith.constant 928 : index
    %c0_175 = arith.constant 0 : index
    %380 = vector.load %arg2[%c928, %c0_175] : memref<1664x128xf32, #tpu.memory_space<vmem>>, vector<32x16xf32>
    %cst_176 = arith.constant dense<0.000000e+00> : vector<8x16xf32>
    %381 = tpu.matmul %366, %380, %cst_176 {dimension_numbers = #tpu.dot_dimension_numbers<[1], [0], [0], [1], [0, 0, 1, 1], [], []>} : vector<8x32xf32>, vector<32x16xf32>, vector<8x16xf32> -> vector<8x16xf32>
    %c960 = arith.constant 960 : index
    %c0_177 = arith.constant 0 : index
    %382 = vector.load %arg2[%c960, %c0_177] : memref<1664x128xf32, #tpu.memory_space<vmem>>, vector<1x16xf32>
    %383 = vector.broadcast %382 : vector<1x16xf32> to vector<8x16xf32>
    %384 = arith.addf %381, %383 : vector<8x16xf32>
    %cst_178 = arith.constant 0.000000e+00 : f32
    %385 = vector.broadcast %cst_178 : f32 to vector<8x16xf32>
    %386 = arith.maximumf %384, %385 : vector<8x16xf32>
    %c968 = arith.constant 968 : index
    %c0_179 = arith.constant 0 : index
    %387 = vector.load %arg2[%c968, %c0_179] : memref<1664x128xf32, #tpu.memory_space<vmem>>, vector<16x8xf32>
    %cst_180 = arith.constant dense<0.000000e+00> : vector<8x8xf32>
    %388 = tpu.matmul %386, %387, %cst_180 {dimension_numbers = #tpu.dot_dimension_numbers<[1], [0], [0], [1], [0, 0, 1, 1], [], []>} : vector<8x16xf32>, vector<16x8xf32>, vector<8x8xf32> -> vector<8x8xf32>
    %c984 = arith.constant 984 : index
    %c0_181 = arith.constant 0 : index
    %389 = vector.load %arg2[%c984, %c0_181] : memref<1664x128xf32, #tpu.memory_space<vmem>>, vector<1x8xf32>
    %390 = vector.broadcast %389 : vector<1x8xf32> to vector<8x8xf32>
    %391 = arith.addf %388, %390 : vector<8x8xf32>
    %cst_182 = arith.constant dense<0.000000e+00> : vector<32xf32>
    %392 = vector.multi_reduction <add>, %366, %cst_182 [0] : vector<8x32xf32> to vector<32xf32>
    %393 = vector.shape_cast %392 : vector<32xf32> to vector<1x32xf32>
    %cst_183 = arith.constant 8.000000e+00 : f32
    %394 = vector.broadcast %cst_183 : f32 to vector<1x32xf32>
    %395 = arith.divf %393, %394 : vector<1x32xf32>
    %c992 = arith.constant 992 : index
    %c0_184 = arith.constant 0 : index
    %396 = vector.load %arg2[%c992, %c0_184] : memref<1664x128xf32, #tpu.memory_space<vmem>>, vector<32x16xf32>
    %cst_185 = arith.constant dense<0.000000e+00> : vector<1x16xf32>
    %397 = tpu.matmul %395, %396, %cst_185 {dimension_numbers = #tpu.dot_dimension_numbers<[1], [0], [0], [1], [0, 0, 1, 1], [], []>} : vector<1x32xf32>, vector<32x16xf32>, vector<1x16xf32> -> vector<1x16xf32>
    %c1024 = arith.constant 1024 : index
    %c0_186 = arith.constant 0 : index
    %398 = vector.load %arg2[%c1024, %c0_186] : memref<1664x128xf32, #tpu.memory_space<vmem>>, vector<1x16xf32>
    %399 = arith.addf %397, %398 : vector<1x16xf32>
    %cst_187 = arith.constant 0.000000e+00 : f32
    %400 = vector.broadcast %cst_187 : f32 to vector<1x16xf32>
    %401 = arith.maximumf %399, %400 : vector<1x16xf32>
    %c1032 = arith.constant 1032 : index
    %c0_188 = arith.constant 0 : index
    %402 = vector.load %arg2[%c1032, %c0_188] : memref<1664x128xf32, #tpu.memory_space<vmem>>, vector<16x3xf32>
    %cst_189 = arith.constant dense<0.000000e+00> : vector<1x3xf32>
    %403 = tpu.matmul %401, %402, %cst_189 {dimension_numbers = #tpu.dot_dimension_numbers<[1], [0], [0], [1], [0, 0, 1, 1], [], []>} : vector<1x16xf32>, vector<16x3xf32>, vector<1x3xf32> -> vector<1x3xf32>
    %c1048 = arith.constant 1048 : index
    %c0_190 = arith.constant 0 : index
    %404 = vector.load %arg2[%c1048, %c0_190] : memref<1664x128xf32, #tpu.memory_space<vmem>>, vector<1x3xf32>
    %405 = arith.addf %403, %404 : vector<1x3xf32>
    %c648 = arith.constant 648 : index
    %c0_191 = arith.constant 0 : index
    %406 = vector.load %arg2[%c648, %c0_191] : memref<1664x128xf32, #tpu.memory_space<vmem>>, vector<32x96xf32>
    %c680 = arith.constant 680 : index
    %c0_192 = arith.constant 0 : index
    %407 = vector.load %arg2[%c680, %c0_192] : memref<1664x128xf32, #tpu.memory_space<vmem>>, vector<1x96xf32>
    %cst_193 = arith.constant dense<0.000000e+00> : vector<8x96xf32>
    %408 = tpu.matmul %366, %406, %cst_193 {dimension_numbers = #tpu.dot_dimension_numbers<[1], [0], [0], [1], [0, 0, 1, 1], [], []>} : vector<8x32xf32>, vector<32x96xf32>, vector<8x96xf32> -> vector<8x96xf32>
    %409 = vector.broadcast %407 : vector<1x96xf32> to vector<8x96xf32>
    %410 = arith.addf %408, %409 : vector<8x96xf32>
    %411 = vector.extract_strided_slice %410 {offsets = [0, 0], sizes = [8, 32], strides = [1, 1]} : vector<8x96xf32> to vector<8x32xf32>
    %412 = vector.extract_strided_slice %410 {offsets = [0, 32], sizes = [8, 32], strides = [1, 1]} : vector<8x96xf32> to vector<8x32xf32>
    %413 = vector.extract_strided_slice %410 {offsets = [0, 64], sizes = [8, 32], strides = [1, 1]} : vector<8x96xf32> to vector<8x32xf32>
    %c1424_194 = arith.constant 1424 : index
    %c0_195 = arith.constant 0 : index
    %414 = vector.load %arg2[%c1424_194, %c0_195] : memref<1664x128xf32, #tpu.memory_space<vmem>>, vector<32x32xf32>
    %c1456_196 = arith.constant 1456 : index
    %c0_197 = arith.constant 0 : index
    %415 = vector.load %arg2[%c1456_196, %c0_197] : memref<1664x128xf32, #tpu.memory_space<vmem>>, vector<32x32xf32>
    %416 = tpu.concatenate %412, %412, %412, %412 in 0 : vector<8x32xf32>, vector<8x32xf32>, vector<8x32xf32>, vector<8x32xf32> -> vector<32x32xf32>
    %417 = arith.mulf %416, %414 : vector<32x32xf32>
    %418 = tpu.concatenate %413, %413, %413, %413 in 0 : vector<8x32xf32>, vector<8x32xf32>, vector<8x32xf32>, vector<8x32xf32> -> vector<32x32xf32>
    %419 = arith.mulf %418, %414 : vector<32x32xf32>
    %cst_198 = arith.constant dense<0.000000e+00> : vector<8x32xf32>
    %420 = tpu.matmul %411, %417, %cst_198 {dimension_numbers = #tpu.dot_dimension_numbers<[1], [1], [0], [0], [0, 0, 1, 0], [], []>} : vector<8x32xf32>, vector<32x32xf32>, vector<8x32xf32> -> vector<8x32xf32>
    %cst_199 = arith.constant dense<0xFF800000> : vector<8xf32>
    %421 = vector.multi_reduction <maximumf>, %420, %cst_199 [1] : vector<8x32xf32> to vector<8xf32>
    %422 = vector.shape_cast %421 : vector<8xf32> to vector<8x1xf32>
    %423 = vector.broadcast %422 : vector<8x1xf32> to vector<8x32xf32>
    %424 = arith.subf %420, %423 : vector<8x32xf32>
    %425 = math.exp %424 : vector<8x32xf32>
    %cst_200 = arith.constant dense<0.000000e+00> : vector<8x32xf32>
    %426 = tpu.matmul %425, %415, %cst_200 {dimension_numbers = #tpu.dot_dimension_numbers<[1], [0], [0], [1], [0, 0, 1, 1], [], []>} : vector<8x32xf32>, vector<32x32xf32>, vector<8x32xf32> -> vector<8x32xf32>
    %427 = tpu.reciprocal %426 : vector<8x32xf32> -> vector<8x32xf32>
    %428 = arith.mulf %425, %427 : vector<8x32xf32>
    %cst_201 = arith.constant dense<0.000000e+00> : vector<8x32xf32>
    %429 = tpu.matmul %428, %419, %cst_201 {dimension_numbers = #tpu.dot_dimension_numbers<[1], [0], [0], [1], [0, 0, 1, 1], [], []>} : vector<8x32xf32>, vector<32x32xf32>, vector<8x32xf32> -> vector<8x32xf32>
    %c688 = arith.constant 688 : index
    %c0_202 = arith.constant 0 : index
    %430 = vector.load %arg2[%c688, %c0_202] : memref<1664x128xf32, #tpu.memory_space<vmem>>, vector<32x32xf32>
    %cst_203 = arith.constant dense<0.000000e+00> : vector<8x32xf32>
    %431 = tpu.matmul %429, %430, %cst_203 {dimension_numbers = #tpu.dot_dimension_numbers<[1], [0], [0], [1], [0, 0, 1, 1], [], []>} : vector<8x32xf32>, vector<32x32xf32>, vector<8x32xf32> -> vector<8x32xf32>
    %c720 = arith.constant 720 : index
    %c0_204 = arith.constant 0 : index
    %432 = vector.load %arg2[%c720, %c0_204] : memref<1664x128xf32, #tpu.memory_space<vmem>>, vector<1x32xf32>
    %433 = vector.broadcast %432 : vector<1x32xf32> to vector<8x32xf32>
    %434 = arith.addf %431, %433 : vector<8x32xf32>
    %c1488_205 = arith.constant 1488 : index
    %c0_206 = arith.constant 0 : index
    %435 = vector.load %arg2[%c1488_205, %c0_206] : memref<1664x128xf32, #tpu.memory_space<vmem>>, vector<32x8xf32>
    %cst_207 = arith.constant dense<0.000000e+00> : vector<8x8xf32>
    %436 = tpu.matmul %428, %435, %cst_207 {dimension_numbers = #tpu.dot_dimension_numbers<[1], [0], [0], [1], [0, 0, 1, 1], [], []>} : vector<8x32xf32>, vector<32x8xf32>, vector<8x8xf32> -> vector<8x8xf32>
    %437 = tpu.iota {dimensions = array<i32: 0>} : vector<8x1xi32>
    %c0_i32 = arith.constant 0 : i32
    %438 = vector.broadcast %c0_i32 : i32 to vector<8x1xi32>
    %439 = arith.cmpi eq, %437, %438 : vector<8x1xi32>
    %440 = arith.extui %439 : vector<8x1xi1> to vector<8x1xi32>
    %441 = arith.sitofp %440 : vector<8x1xi32> to vector<8x1xf32>
    %c1656 = arith.constant 1656 : index
    %c0_208 = arith.constant 0 : index
    %442 = vector.load %arg2[%c1656, %c0_208] : memref<1664x128xf32, #tpu.memory_space<vmem>>, vector<3x8xf32>
    %cst_209 = arith.constant dense<0.000000e+00> : vector<1x8xf32>
    %443 = tpu.matmul %405, %442, %cst_209 {dimension_numbers = #tpu.dot_dimension_numbers<[1], [0], [0], [1], [0, 0, 1, 1], [], []>} : vector<1x3xf32>, vector<3x8xf32>, vector<1x8xf32> -> vector<1x8xf32>
    %444 = vector.broadcast %441 : vector<8x1xf32> to vector<8x8xf32>
    %445 = vector.broadcast %443 : vector<1x8xf32> to vector<8x8xf32>
    %446 = arith.mulf %444, %445 : vector<8x8xf32>
    %447 = tpu.iota {dimensions = array<i32: 1>} : vector<8x8xi32>
    %c0_i32_210 = arith.constant 0 : i32
    %448 = vector.broadcast %c0_i32_210 : i32 to vector<8x8xi32>
    %449 = arith.cmpi eq, %447, %448 : vector<8x8xi32>
    %cst_211 = arith.constant 0.000000e+00 : f32
    %450 = vector.shape_cast %379 : vector<8x1xf32> to vector<8x1xf32>
    %451 = vector.broadcast %450 : vector<8x1xf32> to vector<8x8xf32>
    %452 = vector.broadcast %cst_211 : f32 to vector<8x8xf32>
    %453 = arith.select %449, %451, %452 : vector<8x8xi1>, vector<8x8xf32>
    %454 = arith.addf %453, %446 : vector<8x8xf32>
    %455 = tpu.concatenate %434, %366, %391, %322, %137, %177, %245, %436, %344, %454 in 1 : vector<8x32xf32>, vector<8x32xf32>, vector<8x8xf32>, vector<8x8xf32>, vector<8x8xf32>, vector<8x8xf32>, vector<8x8xf32>, vector<8x8xf32>, vector<8x8xf32>, vector<8x8xf32> -> vector<8x128xf32>
    %c0_212 = arith.constant 0 : index
    %c0_213 = arith.constant 0 : index
    %c0_214 = arith.constant 0 : index
    %456 = vector.load %arg3[%c0_212, %c0_213, %c0_214] : memref<1x8x128xf32, #tpu.memory_space<vmem>>, vector<1x8x128xf32>
    %457 = vector.shape_cast %456 : vector<1x8x128xf32> to vector<8x128xf32>
    %458 = vector.shape_cast %455 : vector<8x128xf32> to vector<1x8x128xf32>
    tpu.vector_store %arg3[%c0_212, %c0_213, %c0_214], %458 {strides = array<i32>} : memref<1x8x128xf32, #tpu.memory_space<vmem>>, vector<1x8x128xf32>,
    return
  }
  func.func @transform_0(%arg0: i32) -> (i32, i32, i32) {
    %c0_i32 = arith.constant 0 : i32
    %c0_i32_0 = arith.constant 0 : i32
    %c0_i32_1 = arith.constant 0 : i32
    return %arg0, %c0_i32, %c0_i32_0 : i32, i32, i32
  }
  func.func @transform_1(%arg0: i32) -> (i32, i32) {
    %c0_i32 = arith.constant 0 : i32
    %c0_i32_0 = arith.constant 0 : i32
    %c0_i32_1 = arith.constant 0 : i32
    return %c0_i32, %c0_i32_0 : i32, i32
  }
  func.func @transform_2(%arg0: i32) -> (i32, i32, i32) {
    %c0_i32 = arith.constant 0 : i32
    %c0_i32_0 = arith.constant 0 : i32
    %c0_i32_1 = arith.constant 0 : i32
    return %arg0, %c0_i32, %c0_i32_0 : i32, i32, i32
  }
}

</mosaic_0001>

<llo_original>
// kernel: _forward_jit.1
$region0: #{_forward_jit.1}
  #allocation0 [shape = 'u32[]', space=smem, size = 0x4, offset = 0x4, fixed_abs, tag = 'smem constant byte address 0x4 - core index']
  #allocation1 [shape = 'u32[144,128]{1,0:T(1,128)}', space=vmem, size = 0x12000, scoped, tag = 'internal scratch']
  %s0 = inlined_call_operand.vmem [shape: f32[2,8,64], index: 0, kind: input, shape index: {}]
  %s1 = inlined_call_operand.hbm [shape: f32[1664,128], index: 1, kind: input, shape index: {}]
  %s2 = inlined_call_operand.vmem [shape: f32[2,8,128], index: 2, kind: output, shape index: {}]
  %s3 = sld [smem:[#allocation0]]
  $region45: #{_forward_jit.1} parent=0
    _
  %s5 = ssub.s32 1, %s3
  %s6 = scalar_select 0, %s5, %s3
  $region1: #{_forward_jit.1} parent=0
    #allocation2 [shape = 'u8[851968]{0}', space=vmem, size = 0xd0000, scoped, tag = 'input window, operand 1, single buffered']
    #allocation3 [shape = 's32[2]{0}', space=sflag, size = 0x8, scoped, tag = 'scoped memory for _forward_jit.1']
    %7 = vsyncpa [#allocation3], 0
    loop: start=0, step=1, limit=4
    $region2: #{_forward_jit.1} parent=1 // loop_pre_header
      _
    $region3: #{_forward_jit.1} parent=1 // loop_header
      %s9 = sphi 0, %s13
      %p10 = scmp.ge.s32.totalorder %s9, 4
      %s19 = sphi 0, %s21
      %s22 = sphi 0, %s19
      %s23 = sphi 0, %s22
      %s39 = sphi 0, %s23
      %s43 = sphi 0, %s43
      %s45 = sphi 0, %s43
      %s46 = sphi 0, %s45
      %s60 = sphi 0, %s46
      %s66 = sphi 0, %s68
      %s69 = sphi 0, %s66
      %s70 = sphi 0, %s69
      %s86 = sphi 0, %s70
    $region4: #{_forward_jit.1} parent=1 // loop_header_branch
      %12 = sbr.rel (%p10) target = $region8
    $region5: #{_forward_jit.1} parent=1 // loop_body
      %s14 = ssub.s32 %s9, 1
      %s15 = ssub.s32 %s9, 2
      %s16 = sadd.s32 %s9, 1
      %s17 = ssub.s32 %s9, %s16
      %p18 = scmp.eq.s32.totalorder %s17, 0
      %s20 = sadd.s32 %s19, 1
      %s21 = scalar_select %p18, %s19, %s20
      %p24 = pneg %p18
      %p25 = scmp.eq.s32.totalorder %s9, 1
      %p26 = por %p24, %p25
      %p27 = scmp.ne.s32.totalorder %s19, %s22
      %p28 = scmp.eq.s32.totalorder %s9, 0
      %p29 = por %p27, %p28
      %p30 = scmp.ne.s32.totalorder %s19, %s22
      %p31 = scmp.eq.s32.totalorder %s14, 1
      %p32 = por %p30, %p31
      %p33 = scmp.ne.s32.totalorder %s22, %s23
      %p34 = scmp.eq.s32.totalorder %s14, 0
      %p35 = por %p33, %p34
      %p36 = scmp.ne.s32.totalorder %s22, %s23
      %p37 = scmp.eq.s32.totalorder %s15, 1
      %p38 = por %p36, %p37
      %p40 = scmp.ne.s32.totalorder %s23, %s39
      %p41 = scmp.eq.s32.totalorder %s15, 0
      %p42 = por %p40, %p41
      %s44 = sadd.s32 %s43, 1
      %p47 = scmp.eq.s32.totalorder %s9, 1
      %p48 = scmp.ne.s32.totalorder %s43, %s45
      %p49 = scmp.eq.s32.totalorder %s9, 0
      %p50 = por %p48, %p49
      %p51 = scmp.ne.s32.totalorder %s43, %s45
      %p52 = scmp.eq.s32.totalorder %s14, 1
      %p53 = por %p51, %p52
      %p54 = scmp.ne.s32.totalorder %s45, %s46
      %p55 = scmp.eq.s32.totalorder %s14, 0
      %p56 = por %p54, %p55
      %p57 = scmp.ne.s32.totalorder %s45, %s46
      %p58 = scmp.eq.s32.totalorder %s15, 1
      %p59 = por %p57, %p58
      %p61 = scmp.ne.s32.totalorder %s46, %s60
      %p62 = scmp.eq.s32.totalorder %s15, 0
      %p63 = por %p61, %p62
      %s64 = ssub.s32 %s9, %s16
      %p65 = scmp.eq.s32.totalorder %s64, 0
      %s67 = sadd.s32 %s66, 1
      %s68 = scalar_select %p65, %s66, %s67
      %p71 = pneg %p65
      %p72 = scmp.eq.s32.totalorder %s9, 1
      %p73 = por %p71, %p72
      %p74 = scmp.ne.s32.totalorder %s66, %s69
      %p75 = scmp.eq.s32.totalorder %s9, 0
      %p76 = por %p74, %p75
      %p77 = scmp.ne.s32.totalorder %s66, %s69
      %p78 = scmp.eq.s32.totalorder %s14, 1
      %p79 = por %p77, %p78
      %p80 = scmp.ne.s32.totalorder %s69, %s70
      %p81 = scmp.eq.s32.totalorder %s14, 0
      %p82 = por %p80, %p81
      %p83 = scmp.ne.s32.totalorder %s69, %s70
      %p84 = scmp.eq.s32.totalorder %s15, 1
      %p85 = por %p83, %p84
      %p87 = scmp.ne.s32.totalorder %s70, %s86
      %p88 = scmp.eq.s32.totalorder %s15, 0
      %p89 = por %p87, %p88
      %p90 = scmp.le.s32.totalorder 1, %s9
      %p91 = scmp.lt.s32.totalorder %s9, 3
      %p92 = pnand %p90, %p91
      %p93 = pneg %p92
      // Predicated region
      $region9: #{_forward_jit.1} parent=5 // pred_check
        _
      $region10: #{_forward_jit.1} parent=5 // pred_check_branch
        %95 = sbr.rel (%p92) target = $region12
      $region11: #{_forward_jit.1} parent=5 // pred_region
        %s96 = ssub.s32 %s9, 1
        // Predicated region
        $region13: #{_forward_jit.1} parent=11 // pred_check
          %p97 = pneg %p56
        $region14: #{_forward_jit.1} parent=11 // pred_check_branch
          %99 = sbr.rel (%p97) target = $region16
        $region15: #{_forward_jit.1} parent=11 // pred_region
          %s101 = ssub.s32 26624, 26624
          %102 = vsyncadd [#allocation3], %s101
          %s103 = sshll.u32 [#allocation2], 4
          %s104 = int_to_ptr.vmem [resolvable:$true] %s103
          %109 = dma.hbm_to_vmem [thread:$0]  %s1, 26624, %s104, [#allocation3], 128, 128, 8
        $region16: #{_forward_jit.1} parent=11 // pred_fallthru
          _
      $region12: #{_forward_jit.1} parent=5 // pred_fallthru
        _
      %p110 = scmp.lt.s32.totalorder %s9, 2
      // Predicated region
      $region17: #{_forward_jit.1} parent=5 // pred_check
        %p111 = pneg %p110
      $region18: #{_forward_jit.1} parent=5 // pred_check_branch
        %113 = sbr.rel (%p111) target = $region20
      $region19: #{_forward_jit.1} parent=5 // pred_region
        // Predicated region
        $region21: #{_forward_jit.1} parent=19 // pred_check
          %p114 = pneg %p29
        $region22: #{_forward_jit.1} parent=19 // pred_check_branch
          %116 = sbr.rel (%p114) target = $region24
        $region23: #{_forward_jit.1} parent=19 // pred_region
          %p117 = scmp.lt.s32.totalorder %s9, 1
          %s118 = scalar_select %p117, %s9, 1
          %s119 = smul.addr %s118, 8
          %s120 = scalar_lea.vmem %s0, %s119
        $region24: #{_forward_jit.1} parent=19 // pred_fallthru
          _
      $region20: #{_forward_jit.1} parent=5 // pred_fallthru
        _
      %p121 = scmp.le.s32.totalorder 1, %s9
      %p122 = scmp.lt.s32.totalorder %s9, 3
      %p123 = pnand %p121, %p122
      %p124 = pneg %p123
      // Predicated region
      $region25: #{_forward_jit.1} parent=5 // pred_check
        _
      $region26: #{_forward_jit.1} parent=5 // pred_check_branch
        %126 = sbr.rel (%p123) target = $region28
      $region27: #{_forward_jit.1} parent=5 // pred_region
        %s127 = ssub.s32 %s9, 1
        // Predicated region
        $region29: #{_forward_jit.1} parent=27 // pred_check
          %p128 = pneg %p56
        $region30: #{_forward_jit.1} parent=27 // pred_check_branch
          %130 = sbr.rel (%p128) target = $region32
        $region31: #{_forward_jit.1} parent=27 // pred_region
          %131 = dma.done [#allocation3], 26624
        $region32: #{_forward_jit.1} parent=27 // pred_fallthru
          _
        %p132 = scmp.lt.s32.totalorder %s14, 1
        %s133 = scalar_select %p132, %s14, 1
        %s134 = smul.addr %s133, 8
        %s135 = scalar_lea.vmem %s0, %s134
        %p136 = pneg %p35
        %p137 = pneg %p32
        %p138 = pneg %p56
        %p139 = pneg %p53
        %p140 = pneg %p82
        %p141 = pneg %p79
        %p142 = scmp.lt.s32.totalorder %s14, 1
        %s143 = scalar_select %p142, %s14, 1
        %s144 = smul.addr %s143, 8
        %s145 = scalar_lea.vmem %s2, %s144
        %p146 = scmp.lt.s32.totalorder %s14, 1
        %s147 = scalar_select %p146, %s14, 1
        %s148 = smul.addr %s147, 8
        %s149 = scalar_lea.vmem %s0, %s148
        %p150 = scmp.lt.s32.totalorder %s14, 1
        %s151 = scalar_select %p150, %s14, 1
        %s152 = smul.addr %s151, 8
        %s153 = scalar_lea.vmem %s2, %s152
        %v154 = vld [vmem:[%s149] sm:$0xff]
        %v155 = vld [vmem:[#allocation2] sm:$0xff]
        %v156 = vld [vmem:[#allocation2 + $0x8] sm:$0xff]
        %v157 = vld [vmem:[#allocation2 + $0x10] sm:$0x1]
        %v158 = vld [vmem:[#allocation2 + $0x18] sm:$0x1]
        %v159 = vld [vmem:[#allocation2 + $0x20] sm:$0x1]
        %v160 = vlaneseq
        %v161 = vshrl.u32 %v160, 7
        %v162 = vsub.s32 0, %v161
        %v163 = vrot.slane %v157, %v162
        %vm164 = vcmask 130048
        %v166 = vsel %vm164, %v154, 0
        %168 = vmatprep.subr.mxu0 0.0
        %169 = vmatpush1.msra.mxu0 %v155
        %170 = vmatprep.subr.mxu0 0.0
        %171 = vmatpush1.msra.mxu0 %v156
        %172 = vmatprep.subr.mxu0 0.0
        %173 = vmatpush1.msra.mxu0 0.0
        %174 = vmatprep.subr.mxu0 0.0
        %175 = vmatpush1.msra.mxu0 0.0
        %176 = vmatprep.subr.mxu0 0.0
        %177 = vmatpush1.msra.mxu0 0.0
        %178 = vmatprep.subr.mxu0 0.0
        %179 = vmatpush1.msra.mxu0 0.0
        %180 = vmatprep.subr.mxu0 0.0
        %181 = vmatpush1.msra.mxu0 0.0
        %182 = vmatprep.subr.mxu0 0.0
        %183 = vmatpush1.msra.mxu0 0.0
        %184 = vmatprep.subr.mxu0 0.0
        %185 = vmatpush1.msra.mxu0 0.0
        %186 = vmatprep.subr.mxu0 0.0
        %187 = vmatpush1.msra.mxu0 0.0
        %188 = vmatprep.subr.mxu0 0.0
        %189 = vmatpush1.msra.mxu0 0.0
        %190 = vmatprep.subr.mxu0 0.0
        %191 = vmatpush1.msra.mxu0 0.0
        %192 = vmatprep.subr.mxu0 0.0
        %193 = vmatpush1.msra.mxu0 0.0
        %194 = vmatprep.subr.mxu0 0.0
        %195 = vmatpush1.msra.mxu0 0.0
        %196 = vmatprep.subr.mxu0 0.0
        %197 = vmatpush1.msra.mxu0 0.0
        %198 = vmatprep.subr.mxu0 0.0
        %199 = vmatpush1.msra.mxu0 0.0
        %200 = vmatprep.subr.mxu0 0.0
        %201 = vmatpush1.msra.mxu0 0.0
        %202 = vmatprep.subr.mxu0 0.0
        %203 = vmatpush1.msra.mxu0 0.0
        %204 = vmatprep.subr.mxu0 0.0
        %205 = vmatpush1.msra.mxu0 0.0
        %206 = vmatprep.subr.mxu0 0.0
        %207 = vmatpush1.msra.mxu0 0.0
        %208 = vmatprep.subr.mxu0 0.0
        %209 = vmatpush1.msra.mxu0 0.0
        %210 = vmatprep.subr.mxu0 0.0
        %211 = vmatpush1.msra.mxu0 0.0
        %212 = vmatprep.subr.mxu0 0.0
        %213 = vmatpush1.msra.mxu0 0.0
        %214 = vmatprep.subr.mxu0 0.0
        %215 = vmatpush1.msra.mxu0 0.0
        %216 = vmatprep.subr.mxu0 0.0
        %217 = vmatpush1.msra.mxu0 0.0
        %218 = vmatprep.subr.mxu0 0.0
        %219 = vmatpush1.msra.mxu0 0.0
        %220 = vmatprep.subr.mxu0 0.0
        %221 = vmatpush1.msra.mxu0 0.0
        %222 = vmatprep.subr.mxu0 0.0
        %223 = vmatpush1.msra.mxu0 0.0
        %224 = vmatprep.subr.mxu0 0.0
        %225 = vmatpush1.msra.mxu0 0.0
        %226 = vmatprep.subr.mxu0 0.0
        %227 = vmatpush1.msra.mxu0 0.0
        %228 = vmatprep.subr.mxu0 0.0
        %229 = vmatpush1.msra.mxu0 0.0
        %230 = vmatprep.subr.mxu0 0.0
        %231 = vmatpush1.msra.mxu0 0.0
        %232 = vmatprep.mubr.f32.mxu0 0.0
        %233 = vmatmul.mubr.f32.gmra.mrb[0].mxu0 %v166
        %v234 = vpop.f32.mrb[0].mxu0
        %v235 = vadd.f32 %v163, %v234
        %v236 = vpop.f32.mrb[0].mxu0
        %237 = vdwg.mxu0
        %v238 = vmax.f32 %v235, 0.0
        %vm239 = vcmask 261120
        %v240 = vsel %vm239, %v238, 0.0
        %241 = vadd.xlane.f32.xlu0 %v240
        %v242 = vpop.xlane.xlu0 %241
        %v243 = vrcp.pop 32.0
        %v244 = vmul.f32 %v242, %v243
        %v245 = vsub.f32 %v238, %v244
        %v246 = vmul.f32 %v245, %v245
        %v247 = vsel %vm239, %v246, 0.0
        %248 = vadd.xlane.f32.xlu0 %v247
        %v249 = vpop.xlane.xlu0 %248
        %v250 = vmul.f32 %v249, %v243
        %v251 = vadd.f32 %v250, 1e-05
        %v252 = vrsqrt.pop %v251
        %v253 = vmul.f32 %v245, %v252
        %v254 = vlaneseq
        %v255 = vshrl.u32 %v254, 7
        %v256 = vsub.s32 0, %v255
        %v257 = vrot.slane %v158, %v256
        %v258 = vmul.f32 %v253, %v257
        %v259 = vlaneseq
        %v260 = vshrl.u32 %v259, 7
        %v261 = vsub.s32 0, %v260
        %v262 = vrot.slane %v159, %v261
        %v263 = vadd.f32 %v258, %v262
        %v264 = vld [vmem:[#allocation2 + $0x28] sm:$0xff]
        %v265 = vld [vmem:[#allocation2 + $0x30] sm:$0xf]
        %v266 = vld [vmem:[#allocation2 + $0x38] sm:$0x1]
        %v267 = vld [vmem:[#allocation2 + $0x40] sm:$0x1]
        %v268 = vld [vmem:[#allocation2 + $0x48] sm:$0x1]
        %v269 = vlaneseq
        %v270 = vshrl.u32 %v269, 7
        %v271 = vsub.s32 0, %v270
        %v272 = vrot.slane %v266, %v271
        %273 = vrot.lane.b32.xlu0 %v154, 112
        %v274 = vpop.permute.xlu0 %273
        %vm275 = vcmask 97280
        %v276 = vsel %vm275, %v274, 0
        %vm278 = vcmask 1043456
        %v280 = vsel %vm278, %v265, 0
        %282 = vmatprep.subr.mxu0 0.0
        %283 = vmatpush1.msra.mxu0 %v264
        %284 = vmatprep.subr.mxu0 0.0
        %285 = vmatpush1.msra.mxu0 %v280
        %286 = vmatprep.subr.mxu0 0.0
        %287 = vmatpush1.msra.mxu0 0.0
        %288 = vmatprep.subr.mxu0 0.0
        %289 = vmatpush1.msra.mxu0 0.0
        %290 = vmatprep.subr.mxu0 0.0
        %291 = vmatpush1.msra.mxu0 0.0
        %292 = vmatprep.subr.mxu0 0.0
        %293 = vmatpush1.msra.mxu0 0.0
        %294 = vmatprep.subr.mxu0 0.0
        %295 = vmatpush1.msra.mxu0 0.0
        %296 = vmatprep.subr.mxu0 0.0
        %297 = vmatpush1.msra.mxu0 0.0
        %298 = vmatprep.subr.mxu0 0.0
        %299 = vmatpush1.msra.mxu0 0.0
        %300 = vmatprep.subr.mxu0 0.0
        %301 = vmatpush1.msra.mxu0 0.0
        %302 = vmatprep.subr.mxu0 0.0
        %303 = vmatpush1.msra.mxu0 0.0
        %304 = vmatprep.subr.mxu0 0.0
        %305 = vmatpush1.msra.mxu0 0.0
        %306 = vmatprep.subr.mxu0 0.0
        %307 = vmatpush1.msra.mxu0 0.0
        %308 = vmatprep.subr.mxu0 0.0
        %309 = vmatpush1.msra.mxu0 0.0
        %310 = vmatprep.subr.mxu0 0.0
        %311 = vmatpush1.msra.mxu0 0.0
        %312 = vmatprep.subr.mxu0 0.0
        %313 = vmatpush1.msra.mxu0 0.0
        %314 = vmatprep.subr.mxu0 0.0
        %315 = vmatpush1.msra.mxu0 0.0
        %316 = vmatprep.subr.mxu0 0.0
        %317 = vmatpush1.msra.mxu0 0.0
        %318 = vmatprep.subr.mxu0 0.0
        %319 = vmatpush1.msra.mxu0 0.0
        %320 = vmatprep.subr.mxu0 0.0
        %321 = vmatpush1.msra.mxu0 0.0
        %322 = vmatprep.subr.mxu0 0.0
        %323 = vmatpush1.msra.mxu0 0.0
        %324 = vmatprep.subr.mxu0 0.0
        %325 = vmatpush1.msra.mxu0 0.0
        %326 = vmatprep.subr.mxu0 0.0
        %327 = vmatpush1.msra.mxu0 0.0
        %328 = vmatprep.subr.mxu0 0.0
        %329 = vmatpush1.msra.mxu0 0.0
        %330 = vmatprep.subr.mxu0 0.0
        %331 = vmatpush1.msra.mxu0 0.0
        %332 = vmatprep.subr.mxu0 0.0
        %333 = vmatpush1.msra.mxu0 0.0
        %334 = vmatprep.subr.mxu0 0.0
        %335 = vmatpush1.msra.mxu0 0.0
        %336 = vmatprep.subr.mxu0 0.0
        %337 = vmatpush1.msra.mxu0 0.0
        %338 = vmatprep.subr.mxu0 0.0
        %339 = vmatpush1.msra.mxu0 0.0
        %340 = vmatprep.subr.mxu0 0.0
        %341 = vmatpush1.msra.mxu0 0.0
        %342 = vmatprep.subr.mxu0 0.0
        %343 = vmatpush1.msra.mxu0 0.0
        %344 = vmatprep.subr.mxu0 0.0
        %345 = vmatpush1.msra.mxu0 0.0
        %346 = vmatprep.mubr.f32.mxu0 0.0
        %347 = vmatmul.mubr.f32.gmra.mrb[0].mxu0 %v276
        %v348 = vpop.f32.mrb[0].mxu0
        %v349 = vadd.f32 %v272, %v348
        %v350 = vpop.f32.mrb[0].mxu0
        %351 = vdwg.mxu0
        %v352 = vmax.f32 %v349, 0.0
        %v353 = vsel %vm239, %v352, 0.0
        %354 = vadd.xlane.f32.xlu0 %v353
        %v355 = vpop.xlane.xlu0 %354
        %v356 = vmul.f32 %v355, %v243
        %v357 = vsub.f32 %v352, %v356
        %v358 = vmul.f32 %v357, %v357
        %v359 = vsel %vm239, %v358, 0.0
        %360 = vadd.xlane.f32.xlu0 %v359
        %v361 = vpop.xlane.xlu0 %360
        %v362 = vmul.f32 %v361, %v243
        %v363 = vadd.f32 %v362, 1e-05
        %v364 = vrsqrt.pop %v363
        %v365 = vmul.f32 %v357, %v364
        %v366 = vlaneseq
        %v367 = vshrl.u32 %v366, 7
        %v368 = vsub.s32 0, %v367
        %v369 = vrot.slane %v267, %v368
        %v370 = vmul.f32 %v365, %v369
        %v371 = vlaneseq
        %v372 = vshrl.u32 %v371, 7
        %v373 = vsub.s32 0, %v372
        %v374 = vrot.slane %v268, %v373
        %v375 = vadd.f32 %v370, %v374
        %v376 = vld [vmem:[#allocation2 + $0x50] sm:$0xff]
        %v377 = vld [vmem:[#allocation2 + $0x58] sm:$0x1]
        %v378 = vld [vmem:[#allocation2 + $0x60] sm:$0x1]
        %v379 = vld [vmem:[#allocation2 + $0x68] sm:$0x1]
        %380 = vrot.lane.b32.xlu0 %v154, 100
        %v381 = vpop.permute.xlu0 %380
        %vm382 = vcmask 64512
        %v383 = vsel %vm382, %v381, 0
        %385 = vmatprep.subr.mxu0 0.0
        %386 = vmatpush1.msra.mxu0 %v376
        %387 = vmatprep.subr.mxu0 0.0
        %388 = vmatpush1.msra.mxu0 0.0
        %389 = vmatprep.subr.mxu0 0.0
        %390 = vmatpush1.msra.mxu0 0.0
        %391 = vmatprep.subr.mxu0 0.0
        %392 = vmatpush1.msra.mxu0 0.0
        %393 = vmatprep.subr.mxu0 0.0
        %394 = vmatpush1.msra.mxu0 0.0
        %395 = vmatprep.subr.mxu0 0.0
        %396 = vmatpush1.msra.mxu0 0.0
        %397 = vmatprep.subr.mxu0 0.0
        %398 = vmatpush1.msra.mxu0 0.0
        %399 = vmatprep.subr.mxu0 0.0
        %400 = vmatpush1.msra.mxu0 0.0
        %401 = vmatprep.subr.mxu0 0.0
        %402 = vmatpush1.msra.mxu0 0.0
        %403 = vmatprep.subr.mxu0 0.0
        %404 = vmatpush1.msra.mxu0 0.0
        %405 = vmatprep.subr.mxu0 0.0
        %406 = vmatpush1.msra.mxu0 0.0
        %407 = vmatprep.subr.mxu0 0.0
        %408 = vmatpush1.msra.mxu0 0.0
        %409 = vmatprep.subr.mxu0 0.0
        %410 = vmatpush1.msra.mxu0 0.0
        %411 = vmatprep.subr.mxu0 0.0
        %412 = vmatpush1.msra.mxu0 0.0
        %413 = vmatprep.subr.mxu0 0.0
        %414 = vmatpush1.msra.mxu0 0.0
        %415 = vmatprep.subr.mxu0 0.0
        %416 = vmatpush1.msra.mxu0 0.0
        %417 = vmatprep.subr.mxu0 0.0
        %418 = vmatpush1.msra.mxu0 0.0
        %419 = vmatprep.subr.mxu0 0.0
        %420 = vmatpush1.msra.mxu0 0.0
        %421 = vmatprep.subr.mxu0 0.0
        %422 = vmatpush1.msra.mxu0 0.0
        %423 = vmatprep.subr.mxu0 0.0
        %424 = vmatpush1.msra.mxu0 0.0
        %425 = vmatprep.subr.mxu0 0.0
        %426 = vmatpush1.msra.mxu0 0.0
        %427 = vmatprep.subr.mxu0 0.0
        %428 = vmatpush1.msra.mxu0 0.0
        %429 = vmatprep.subr.mxu0 0.0
        %430 = vmatpush1.msra.mxu0 0.0
        %431 = vmatprep.subr.mxu0 0.0
        %432 = vmatpush1.msra.mxu0 0.0
        %433 = vmatprep.subr.mxu0 0.0
        %434 = vmatpush1.msra.mxu0 0.0
        %435 = vmatprep.subr.mxu0 0.0
        %436 = vmatpush1.msra.mxu0 0.0
        %437 = vmatprep.subr.mxu0 0.0
        %438 = vmatpush1.msra.mxu0 0.0
        %439 = vmatprep.subr.mxu0 0.0
        %440 = vmatpush1.msra.mxu0 0.0
        %441 = vmatprep.subr.mxu0 0.0
        %442 = vmatpush1.msra.mxu0 0.0
        %443 = vmatprep.subr.mxu0 0.0
        %444 = vmatpush1.msra.mxu0 0.0
        %445 = vmatprep.subr.mxu0 0.0
        %446 = vmatpush1.msra.mxu0 0.0
        %447 = vmatprep.subr.mxu0 0.0
        %448 = vmatpush1.msra.mxu0 0.0
        %449 = vmatprep.mubr.f32.mxu0 0.0
        %450 = vmatmul.mubr.f32.gmra.mrb[0].mxu0 %v383
        %v451 = vpop.f32.mrb[0].mxu0
        %v452 = vadd.f32 %v377, %v451
        %v453 = vpop.f32.mrb[0].mxu0
        %454 = vdwg.mxu0
        %v455 = vmax.f32 %v452, 0.0
        %vm456 = vcmask 253952
        %v457 = vsel %vm456, %v455, 0.0
        %458 = vadd.xlane.f32.xlu0 %v457
        %v459 = vpop.xlane.xlu0 %458
        %v460 = vmul.f32 %v459, %v243
        %v461 = vsub.f32 %v455, %v460
        %v462 = vmul.f32 %v461, %v461
        %v463 = vsel %vm456, %v462, 0.0
        %464 = vadd.xlane.f32.xlu0 %v463
        %v465 = vpop.xlane.xlu0 %464
        %v466 = vmul.f32 %v465, %v243
        %v467 = vadd.f32 %v466, 1e-05
        %v468 = vrsqrt.pop %v467
        %v469 = vmul.f32 %v461, %v468
        %v470 = vmul.f32 %v469, %v378
        %v471 = vadd.f32 %v470, %v379
        %472 = vrot.lane.b32.xlu0 %v154, 111
        %v473 = vpop.permute.xlu0 %472
        %v475 = vsub.f32 %v154, %v473
        %v476 = vsub.f32 0.0, %v475
        %v477 = vmul.f32 %v476, 0.00027777778
        %v478 = vmul.f32 %v477, 1.442695
        %v479 = vpow.pop %v478
        %v480 = vld [vmem:[#allocation2 + $0x70] sm:$0xff]
        %v481 = vadd.f32 %v263, %v480
        %483 = vset.pattern.permute.xlu0 36
        %484 = vperm.xlu0 %483, %v479
        %v485 = vpop.permute.xlu0 %484
        %v487 = vmul.f32 %v481, %v485
        %v488 = vld [vmem:[#allocation2 + $0xa8] sm:$0xff]
        %v489 = vld [vmem:[#allocation2 + $0xb0] sm:$0xff]
        %v490 = vld [vmem:[#allocation2 + $0xb8] sm:$0xff]
        %v491 = vld [vmem:[#allocation2 + $0xc0] sm:$0xff]
        %v492 = vld [vmem:[#allocation2 + $0xc8] sm:$0x1]
        %v493 = vlaneseq
        %v494 = vshrl.u32 %v493, 7
        %v495 = vsub.s32 0, %v494
        %v496 = vrot.slane %v492, %v495
        %v498 = vsel %vm239, %v487, 0
        %500 = vmatprep.subr.mxu0 0.0
        %501 = vmatpush1.msra.mxu0 %v488
        %502 = vmatprep.subr.mxu0 0.0
        %503 = vmatpush1.msra.mxu0 %v489
        %504 = vmatprep.subr.mxu0 0.0
        %505 = vmatpush1.msra.mxu0 %v490
        %506 = vmatprep.subr.mxu0 0.0
        %507 = vmatpush1.msra.mxu0 %v491
        %508 = vmatprep.subr.mxu0 0.0
        %509 = vmatpush1.msra.mxu0 0.0
        %510 = vmatprep.subr.mxu0 0.0
        %511 = vmatpush1.msra.mxu0 0.0
        %512 = vmatprep.subr.mxu0 0.0
        %513 = vmatpush1.msra.mxu0 0.0
        %514 = vmatprep.subr.mxu0 0.0
        %515 = vmatpush1.msra.mxu0 0.0
        %516 = vmatprep.subr.mxu0 0.0
        %517 = vmatpush1.msra.mxu0 0.0
        %518 = vmatprep.subr.mxu0 0.0
        %519 = vmatpush1.msra.mxu0 0.0
        %520 = vmatprep.subr.mxu0 0.0
        %521 = vmatpush1.msra.mxu0 0.0
        %522 = vmatprep.subr.mxu0 0.0
        %523 = vmatpush1.msra.mxu0 0.0
        %524 = vmatprep.subr.mxu0 0.0
        %525 = vmatpush1.msra.mxu0 0.0
        %526 = vmatprep.subr.mxu0 0.0
        %527 = vmatpush1.msra.mxu0 0.0
        %528 = vmatprep.subr.mxu0 0.0
        %529 = vmatpush1.msra.mxu0 0.0
        %530 = vmatprep.subr.mxu0 0.0
        %531 = vmatpush1.msra.mxu0 0.0
        %532 = vmatprep.subr.mxu0 0.0
        %533 = vmatpush1.msra.mxu0 0.0
        %534 = vmatprep.subr.mxu0 0.0
        %535 = vmatpush1.msra.mxu0 0.0
        %536 = vmatprep.subr.mxu0 0.0
        %537 = vmatpush1.msra.mxu0 0.0
        %538 = vmatprep.subr.mxu0 0.0
        %539 = vmatpush1.msra.mxu0 0.0
        %540 = vmatprep.subr.mxu0 0.0
        %541 = vmatpush1.msra.mxu0 0.0
        %542 = vmatprep.subr.mxu0 0.0
        %543 = vmatpush1.msra.mxu0 0.0
        %544 = vmatprep.subr.mxu0 0.0
        %545 = vmatpush1.msra.mxu0 0.0
        %546 = vmatprep.subr.mxu0 0.0
        %547 = vmatpush1.msra.mxu0 0.0
        %548 = vmatprep.subr.mxu0 0.0
        %549 = vmatpush1.msra.mxu0 0.0
        %550 = vmatprep.subr.mxu0 0.0
        %551 = vmatpush1.msra.mxu0 0.0
        %552 = vmatprep.subr.mxu0 0.0
        %553 = vmatpush1.msra.mxu0 0.0
        %554 = vmatprep.subr.mxu0 0.0
        %555 = vmatpush1.msra.mxu0 0.0
        %556 = vmatprep.subr.mxu0 0.0
        %557 = vmatpush1.msra.mxu0 0.0
        %558 = vmatprep.subr.mxu0 0.0
        %559 = vmatpush1.msra.mxu0 0.0
        %560 = vmatprep.subr.mxu0 0.0
        %561 = vmatpush1.msra.mxu0 0.0
        %562 = vmatprep.subr.mxu0 0.0
        %563 = vmatpush1.msra.mxu0 0.0
        %564 = vmatprep.mubr.f32.mxu0 0.0
        %565 = vmatmul.mubr.f32.gmra.mrb[0].mxu0 %v498
        %v566 = vpop.f32.mrb[0].mxu0
        %v567 = vadd.f32 %v496, %v566
        %v568 = vpop.f32.mrb[0].mxu0
        %569 = vdwg.mxu0
        %v570 = vld [vmem:[#allocation2 + $0x4d0] sm:$0xff]
        %v571 = vld [vmem:[#allocation2 + $0x4d8] sm:$0xff]
        %v572 = vld [vmem:[#allocation2 + $0x4e0] sm:$0xff]
        %v573 = vld [vmem:[#allocation2 + $0x4e8] sm:$0xff]
        %v574 = vld [vmem:[#allocation2 + $0x4f0] sm:$0xff]
        %v575 = vld [vmem:[#allocation2 + $0x4f8] sm:$0xff]
        %v576 = vld [vmem:[#allocation2 + $0x500] sm:$0xff]
        %v577 = vld [vmem:[#allocation2 + $0x508] sm:$0xff]
        %v578 = vld [vmem:[#allocation2 + $0x510] sm:$0xff]
        %v579 = vld [vmem:[#allocation2 + $0x518] sm:$0xff]
        %v580 = vld [vmem:[#allocation2 + $0x520] sm:$0xff]
        %v581 = vld [vmem:[#allocation2 + $0x528] sm:$0xff]
        %v582 = vld [vmem:[#allocation2 + $0x530] sm:$0xff]
        %v583 = vld [vmem:[#allocation2 + $0x538] sm:$0xff]
        %v584 = vld [vmem:[#allocation2 + $0x540] sm:$0xff]
        %v585 = vld [vmem:[#allocation2 + $0x548] sm:$0xff]
        %594 = vrot.lane.b32.xlu0 %v570, 32
        %v595 = vpop.permute.xlu0 %594
        %596 = vrot.lane.b32.xlu0 %v571, 32
        %v597 = vpop.permute.xlu0 %596
        %598 = vrot.lane.b32.xlu0 %v572, 32
        %v599 = vpop.permute.xlu0 %598
        %600 = vrot.lane.b32.xlu0 %v573, 32
        %v601 = vpop.permute.xlu0 %600
        %602 = vrot.lane.b32.xlu0 %v574, 32
        %v603 = vpop.permute.xlu0 %602
        %604 = vrot.lane.b32.xlu0 %v575, 32
        %v605 = vpop.permute.xlu0 %604
        %606 = vrot.lane.b32.xlu0 %v576, 32
        %v607 = vpop.permute.xlu0 %606
        %608 = vrot.lane.b32.xlu0 %v577, 32
        %v609 = vpop.permute.xlu0 %608
        %v618 = vmul.f32 %v567, %v595
        %v619 = vmul.f32 %v567, %v597
        %v620 = vmul.f32 %v567, %v599
        %v621 = vmul.f32 %v567, %v601
        %v622 = vmul.f32 %v567, %v603
        %v623 = vmul.f32 %v567, %v605
        %v624 = vmul.f32 %v567, %v607
        %v625 = vmul.f32 %v567, %v609
        %626 = vrot.lane.b32.xlu0 %v570, 64
        %v627 = vpop.permute.xlu0 %626
        %628 = vrot.lane.b32.xlu0 %v571, 64
        %v629 = vpop.permute.xlu0 %628
        %630 = vrot.lane.b32.xlu0 %v572, 64
        %v631 = vpop.permute.xlu0 %630
        %632 = vrot.lane.b32.xlu0 %v573, 64
        %v633 = vpop.permute.xlu0 %632
        %634 = vrot.lane.b32.xlu0 %v574, 64
        %v635 = vpop.permute.xlu0 %634
        %636 = vrot.lane.b32.xlu0 %v575, 64
        %v637 = vpop.permute.xlu0 %636
        %638 = vrot.lane.b32.xlu0 %v576, 64
        %v639 = vpop.permute.xlu0 %638
        %640 = vrot.lane.b32.xlu0 %v577, 64
        %v641 = vpop.permute.xlu0 %640
        %v650 = vmul.f32 %v567, %v627
        %v651 = vmul.f32 %v567, %v629
        %v652 = vmul.f32 %v567, %v631
        %v653 = vmul.f32 %v567, %v633
        %v654 = vmul.f32 %v567, %v635
        %v655 = vmul.f32 %v567, %v637
        %v656 = vmul.f32 %v567, %v639
        %v657 = vmul.f32 %v567, %v641
        %666 = vrot.lane.b32.xlu0 %v618, 96
        %v667 = vpop.permute.xlu0 %666
        %668 = vrot.lane.b32.xlu0 %v619, 96
        %v669 = vpop.permute.xlu0 %668
        %670 = vrot.lane.b32.xlu0 %v620, 96
        %v671 = vpop.permute.xlu0 %670
        %672 = vrot.lane.b32.xlu0 %v621, 96
        %v673 = vpop.permute.xlu0 %672
        %674 = vrot.lane.b32.xlu0 %v622, 96
        %v675 = vpop.permute.xlu0 %674
        %676 = vrot.lane.b32.xlu0 %v623, 96
        %v677 = vpop.permute.xlu0 %676
        %678 = vrot.lane.b32.xlu0 %v624, 96
        %v679 = vpop.permute.xlu0 %678
        %680 = vrot.lane.b32.xlu0 %v625, 96
        %v681 = vpop.permute.xlu0 %680
        %v683 = vsel %vm239, %v567, 0
        %v685 = vsel %vm239, %v667, 0
        %v687 = vsel %vm239, %v669, 0
        %v689 = vsel %vm239, %v671, 0
        %v691 = vsel %vm239, %v673, 0
        %v693 = vsel %vm239, %v675, 0
        %v695 = vsel %vm239, %v677, 0
        %v697 = vsel %vm239, %v679, 0
        %v699 = vsel %vm239, %v681, 0
        %701 = vmatprep.subr.mxu0 0.0
        %702 = vmatpush1.xpose.msra.mxu0 %v685
        %703 = vmatprep.subr.mxu0 0.0
        %704 = vmatpush1.xpose.msra.mxu0 %v687
        %705 = vmatprep.subr.mxu0 0.0
        %706 = vmatpush1.xpose.msra.mxu0 %v689
        %707 = vmatprep.subr.mxu0 0.0
        %708 = vmatpush1.xpose.msra.mxu0 %v691
        %709 = vmatprep.subr.mxu0 0.0
        %710 = vmatpush1.xpose.msra.mxu0 %v693
        %711 = vmatprep.subr.mxu0 0.0
        %712 = vmatpush1.xpose.msra.mxu0 %v695
        %713 = vmatprep.subr.mxu0 0.0
        %714 = vmatpush1.xpose.msra.mxu0 %v697
        %715 = vmatprep.subr.mxu0 0.0
        %716 = vmatpush1.xpose.msra.mxu0 %v699
        %717 = vmatprep.subr.mxu0 0.0
        %718 = vmatpush1.xpose.msra.mxu0 0.0
        %719 = vmatprep.subr.mxu0 0.0
        %720 = vmatpush1.xpose.msra.mxu0 0.0
        %721 = vmatprep.subr.mxu0 0.0
        %722 = vmatpush1.xpose.msra.mxu0 0.0
        %723 = vmatprep.subr.mxu0 0.0
        %724 = vmatpush1.xpose.msra.mxu0 0.0
        %725 = vmatprep.subr.mxu0 0.0
        %726 = vmatpush1.xpose.msra.mxu0 0.0
        %727 = vmatprep.subr.mxu0 0.0
        %728 = vmatpush1.xpose.msra.mxu0 0.0
        %729 = vmatprep.subr.mxu0 0.0
        %730 = vmatpush1.xpose.msra.mxu0 0.0
        %731 = vmatprep.subr.mxu0 0.0
        %732 = vmatpush1.xpose.msra.mxu0 0.0
        %733 = vmatprep.subr.mxu0 0.0
        %734 = vmatpush1.xpose.msra.mxu0 0.0
        %735 = vmatprep.subr.mxu0 0.0
        %736 = vmatpush1.xpose.msra.mxu0 0.0
        %737 = vmatprep.subr.mxu0 0.0
        %738 = vmatpush1.xpose.msra.mxu0 0.0
        %739 = vmatprep.subr.mxu0 0.0
        %740 = vmatpush1.xpose.msra.mxu0 0.0
        %741 = vmatprep.subr.mxu0 0.0
        %742 = vmatpush1.xpose.msra.mxu0 0.0
        %743 = vmatprep.subr.mxu0 0.0
        %744 = vmatpush1.xpose.msra.mxu0 0.0
        %745 = vmatprep.subr.mxu0 0.0
        %746 = vmatpush1.xpose.msra.mxu0 0.0
        %747 = vmatprep.subr.mxu0 0.0
        %748 = vmatpush1.xpose.msra.mxu0 0.0
        %749 = vmatprep.subr.mxu0 0.0
        %750 = vmatpush1.xpose.msra.mxu0 0.0
        %751 = vmatprep.subr.mxu0 0.0
        %752 = vmatpush1.xpose.msra.mxu0 0.0
        %753 = vmatprep.subr.mxu0 0.0
        %754 = vmatpush1.xpose.msra.mxu0 0.0
        %755 = vmatprep.subr.mxu0 0.0
        %756 = vmatpush1.xpose.msra.mxu0 0.0
        %757 = vmatprep.subr.mxu0 0.0
        %758 = vmatpush1.xpose.msra.mxu0 0.0
        %759 = vmatprep.subr.mxu0 0.0
        %760 = vmatpush1.xpose.msra.mxu0 0.0
        %761 = vmatprep.subr.mxu0 0.0
        %762 = vmatpush1.xpose.msra.mxu0 0.0
        %763 = vmatprep.subr.mxu0 0.0
        %764 = vmatpush1.xpose.msra.mxu0 0.0
        %765 = vmatprep.mubr.f32.mxu0 0.0
        %766 = vmatmul.mubr.f32.gmra.mrb[0].mxu0 %v683
        %v767 = vpop.f32.mrb[0].mxu0
        %v768 = vadd.f32 0.0, %v767
        %v769 = vpop.f32.mrb[0].mxu0
        %770 = vdwg.mxu0
        %vm771 = vcmask 523264
        %v772 = vsel %vm771, %v768, -inf
        %773 = vmax.xlane.f32.xlu0 %v772
        %v774 = vpop.xlane.xlu0 %773
        %v775 = vsub.f32 %v768, %v774
        %v776 = vmul.f32 %v775, 1.442695
        %v777 = vpow.pop %v776
        %v779 = vsel %vm771, %v777, 0
        %781 = vmatprep.subr.mxu0 0.0
        %782 = vmatpush1.msra.mxu0 %v578
        %783 = vmatprep.subr.mxu0 0.0
        %784 = vmatpush1.msra.mxu0 %v579
        %785 = vmatprep.subr.mxu0 0.0
        %786 = vmatpush1.msra.mxu0 %v580
        %787 = vmatprep.subr.mxu0 0.0
        %788 = vmatpush1.msra.mxu0 %v581
        %789 = vmatprep.subr.mxu0 0.0
        %790 = vmatpush1.msra.mxu0 %v582
        %791 = vmatprep.subr.mxu0 0.0
        %792 = vmatpush1.msra.mxu0 %v583
        %793 = vmatprep.subr.mxu0 0.0
        %794 = vmatpush1.msra.mxu0 %v584
        %795 = vmatprep.subr.mxu0 0.0
        %796 = vmatpush1.msra.mxu0 %v585
        %797 = vmatprep.subr.mxu0 0.0
        %798 = vmatpush1.msra.mxu0 0.0
        %799 = vmatprep.subr.mxu0 0.0
        %800 = vmatpush1.msra.mxu0 0.0
        %801 = vmatprep.subr.mxu0 0.0
        %802 = vmatpush1.msra.mxu0 0.0
        %803 = vmatprep.subr.mxu0 0.0
        %804 = vmatpush1.msra.mxu0 0.0
        %805 = vmatprep.subr.mxu0 0.0
        %806 = vmatpush1.msra.mxu0 0.0
        %807 = vmatprep.subr.mxu0 0.0
        %808 = vmatpush1.msra.mxu0 0.0
        %809 = vmatprep.subr.mxu0 0.0
        %810 = vmatpush1.msra.mxu0 0.0
        %811 = vmatprep.subr.mxu0 0.0
        %812 = vmatpush1.msra.mxu0 0.0
        %813 = vmatprep.subr.mxu0 0.0
        %814 = vmatpush1.msra.mxu0 0.0
        %815 = vmatprep.subr.mxu0 0.0
        %816 = vmatpush1.msra.mxu0 0.0
        %817 = vmatprep.subr.mxu0 0.0
        %818 = vmatpush1.msra.mxu0 0.0
        %819 = vmatprep.subr.mxu0 0.0
        %820 = vmatpush1.msra.mxu0 0.0
        %821 = vmatprep.subr.mxu0 0.0
        %822 = vmatpush1.msra.mxu0 0.0
        %823 = vmatprep.subr.mxu0 0.0
        %824 = vmatpush1.msra.mxu0 0.0
        %825 = vmatprep.subr.mxu0 0.0
        %826 = vmatpush1.msra.mxu0 0.0
        %827 = vmatprep.subr.mxu0 0.0
        %828 = vmatpush1.msra.mxu0 0.0
        %829 = vmatprep.subr.mxu0 0.0
        %830 = vmatpush1.msra.mxu0 0.0
        %831 = vmatprep.subr.mxu0 0.0
        %832 = vmatpush1.msra.mxu0 0.0
        %833 = vmatprep.subr.mxu0 0.0
        %834 = vmatpush1.msra.mxu0 0.0
        %835 = vmatprep.subr.mxu0 0.0
        %836 = vmatpush1.msra.mxu0 0.0
        %837 = vmatprep.subr.mxu0 0.0
        %838 = vmatpush1.msra.mxu0 0.0
        %839 = vmatprep.subr.mxu0 0.0
        %840 = vmatpush1.msra.mxu0 0.0
        %841 = vmatprep.subr.mxu0 0.0
        %842 = vmatpush1.msra.mxu0 0.0
        %843 = vmatprep.subr.mxu0 0.0
        %844 = vmatpush1.msra.mxu0 0.0
        %845 = vmatprep.mubr.f32.mxu0 0.0
        %846 = vmatmul.mubr.f32.gmra.mrb[0].mxu0 %v779
        %v847 = vpop.f32.mrb[0].mxu0
        %v848 = vadd.f32 0.0, %v847
        %v849 = vpop.f32.mrb[0].mxu0
        %850 = vdwg.mxu0
        %v851 = vrcp.pop %v848
        %v852 = vmul.f32 %v777, %v851
        %861 = vrot.lane.b32.xlu0 %v650, 64
        %v862 = vpop.permute.xlu0 %861
        %863 = vrot.lane.b32.xlu0 %v651, 64
        %v864 = vpop.permute.xlu0 %863
        %865 = vrot.lane.b32.xlu0 %v652, 64
        %v866 = vpop.permute.xlu0 %865
        %867 = vrot.lane.b32.xlu0 %v653, 64
        %v868 = vpop.permute.xlu0 %867
        %869 = vrot.lane.b32.xlu0 %v654, 64
        %v870 = vpop.permute.xlu0 %869
        %871 = vrot.lane.b32.xlu0 %v655, 64
        %v872 = vpop.permute.xlu0 %871
        %873 = vrot.lane.b32.xlu0 %v656, 64
        %v874 = vpop.permute.xlu0 %873
        %875 = vrot.lane.b32.xlu0 %v657, 64
        %v876 = vpop.permute.xlu0 %875
        %v886 = vsel %vm771, %v852, 0
        %888 = vmatprep.subr.mxu0 0.0
        %889 = vmatpush1.msra.mxu0 %v862
        %890 = vmatprep.subr.mxu0 0.0
        %891 = vmatpush1.msra.mxu0 %v864
        %892 = vmatprep.subr.mxu0 0.0
        %893 = vmatpush1.msra.mxu0 %v866
        %894 = vmatprep.subr.mxu0 0.0
        %895 = vmatpush1.msra.mxu0 %v868
        %896 = vmatprep.subr.mxu0 0.0
        %897 = vmatpush1.msra.mxu0 %v870
        %898 = vmatprep.subr.mxu0 0.0
        %899 = vmatpush1.msra.mxu0 %v872
        %900 = vmatprep.subr.mxu0 0.0
        %901 = vmatpush1.msra.mxu0 %v874
        %902 = vmatprep.subr.mxu0 0.0
        %903 = vmatpush1.msra.mxu0 %v876
        %904 = vmatprep.subr.mxu0 0.0
        %905 = vmatpush1.msra.mxu0 0.0
        %906 = vmatprep.subr.mxu0 0.0
        %907 = vmatpush1.msra.mxu0 0.0
        %908 = vmatprep.subr.mxu0 0.0
        %909 = vmatpush1.msra.mxu0 0.0
        %910 = vmatprep.subr.mxu0 0.0
        %911 = vmatpush1.msra.mxu0 0.0
        %912 = vmatprep.subr.mxu0 0.0
        %913 = vmatpush1.msra.mxu0 0.0
        %914 = vmatprep.subr.mxu0 0.0
        %915 = vmatpush1.msra.mxu0 0.0
        %916 = vmatprep.subr.mxu0 0.0
        %917 = vmatpush1.msra.mxu0 0.0
        %918 = vmatprep.subr.mxu0 0.0
        %919 = vmatpush1.msra.mxu0 0.0
        %920 = vmatprep.subr.mxu0 0.0
        %921 = vmatpush1.msra.mxu0 0.0
        %922 = vmatprep.subr.mxu0 0.0
        %923 = vmatpush1.msra.mxu0 0.0
        %924 = vmatprep.subr.mxu0 0.0
        %925 = vmatpush1.msra.mxu0 0.0
        %926 = vmatprep.subr.mxu0 0.0
        %927 = vmatpush1.msra.mxu0 0.0
        %928 = vmatprep.subr.mxu0 0.0
        %929 = vmatpush1.msra.mxu0 0.0
        %930 = vmatprep.subr.mxu0 0.0
        %931 = vmatpush1.msra.mxu0 0.0
        %932 = vmatprep.subr.mxu0 0.0
        %933 = vmatpush1.msra.mxu0 0.0
        %934 = vmatprep.subr.mxu0 0.0
        %935 = vmatpush1.msra.mxu0 0.0
        %936 = vmatprep.subr.mxu0 0.0
        %937 = vmatpush1.msra.mxu0 0.0
        %938 = vmatprep.subr.mxu0 0.0
        %939 = vmatpush1.msra.mxu0 0.0
        %940 = vmatprep.subr.mxu0 0.0
        %941 = vmatpush1.msra.mxu0 0.0
        %942 = vmatprep.subr.mxu0 0.0
        %943 = vmatpush1.msra.mxu0 0.0
        %944 = vmatprep.subr.mxu0 0.0
        %945 = vmatpush1.msra.mxu0 0.0
        %946 = vmatprep.subr.mxu0 0.0
        %947 = vmatpush1.msra.mxu0 0.0
        %948 = vmatprep.subr.mxu0 0.0
        %949 = vmatpush1.msra.mxu0 0.0
        %950 = vmatprep.subr.mxu0 0.0
        %951 = vmatpush1.msra.mxu0 0.0
        %952 = vmatprep.mubr.f32.mxu0 0.0
        %953 = vmatmul.mubr.f32.gmra.mrb[0].mxu0 %v886
        %v954 = vpop.f32.mrb[0].mxu0
        %v955 = vadd.f32 0.0, %v954
        %v956 = vpop.f32.mrb[0].mxu0
        %957 = vdwg.mxu0
        %v958 = vld [vmem:[#allocation2 + $0xd0] sm:$0xff]
        %v959 = vld [vmem:[#allocation2 + $0xd8] sm:$0xff]
        %v960 = vld [vmem:[#allocation2 + $0xe0] sm:$0xff]
        %v961 = vld [vmem:[#allocation2 + $0xe8] sm:$0xff]
        %v962 = vld [vmem:[#allocation2 + $0xf0] sm:$0x1]
        %v963 = vlaneseq
        %v964 = vshrl.u32 %v963, 7
        %v965 = vsub.s32 0, %v964
        %v966 = vrot.slane %v962, %v965
        %v968 = vsel %vm239, %v955, 0
        %970 = vmatprep.subr.mxu0 0.0
        %971 = vmatpush1.msra.mxu0 %v958
        %972 = vmatprep.subr.mxu0 0.0
        %973 = vmatpush1.msra.mxu0 %v959
        %974 = vmatprep.subr.mxu0 0.0
        %975 = vmatpush1.msra.mxu0 %v960
        %976 = vmatprep.subr.mxu0 0.0
        %977 = vmatpush1.msra.mxu0 %v961
        %978 = vmatprep.subr.mxu0 0.0
        %979 = vmatpush1.msra.mxu0 0.0
        %980 = vmatprep.subr.mxu0 0.0
        %981 = vmatpush1.msra.mxu0 0.0
        %982 = vmatprep.subr.mxu0 0.0
        %983 = vmatpush1.msra.mxu0 0.0
        %984 = vmatprep.subr.mxu0 0.0
        %985 = vmatpush1.msra.mxu0 0.0
        %986 = vmatprep.subr.mxu0 0.0
        %987 = vmatpush1.msra.mxu0 0.0
        %988 = vmatprep.subr.mxu0 0.0
        %989 = vmatpush1.msra.mxu0 0.0
        %990 = vmatprep.subr.mxu0 0.0
        %991 = vmatpush1.msra.mxu0 0.0
        %992 = vmatprep.subr.mxu0 0.0
        %993 = vmatpush1.msra.mxu0 0.0
        %994 = vmatprep.subr.mxu0 0.0
        %995 = vmatpush1.msra.mxu0 0.0
        %996 = vmatprep.subr.mxu0 0.0
        %997 = vmatpush1.msra.mxu0 0.0
        %998 = vmatprep.subr.mxu0 0.0
        %999 = vmatpush1.msra.mxu0 0.0
        %1000 = vmatprep.subr.mxu0 0.0
        %1001 = vmatpush1.msra.mxu0 0.0
        %1002 = vmatprep.subr.mxu0 0.0
        %1003 = vmatpush1.msra.mxu0 0.0
        %1004 = vmatprep.subr.mxu0 0.0
        %1005 = vmatpush1.msra.mxu0 0.0
        %1006 = vmatprep.subr.mxu0 0.0
        %1007 = vmatpush1.msra.mxu0 0.0
        %1008 = vmatprep.subr.mxu0 0.0
        %1009 = vmatpush1.msra.mxu0 0.0
        %1010 = vmatprep.subr.mxu0 0.0
        %1011 = vmatpush1.msra.mxu0 0.0
        %1012 = vmatprep.subr.mxu0 0.0
        %1013 = vmatpush1.msra.mxu0 0.0
        %1014 = vmatprep.subr.mxu0 0.0
        %1015 = vmatpush1.msra.mxu0 0.0
        %1016 = vmatprep.subr.mxu0 0.0
        %1017 = vmatpush1.msra.mxu0 0.0
        %1018 = vmatprep.subr.mxu0 0.0
        %1019 = vmatpush1.msra.mxu0 0.0
        %1020 = vmatprep.subr.mxu0 0.0
        %1021 = vmatpush1.msra.mxu0 0.0
        %1022 = vmatprep.subr.mxu0 0.0
        %1023 = vmatpush1.msra.mxu0 0.0
        %1024 = vmatprep.subr.mxu0 0.0
        %1025 = vmatpush1.msra.mxu0 0.0
        %1026 = vmatprep.subr.mxu0 0.0
        %1027 = vmatpush1.msra.mxu0 0.0
        %1028 = vmatprep.subr.mxu0 0.0
        %1029 = vmatpush1.msra.mxu0 0.0
        %1030 = vmatprep.subr.mxu0 0.0
        %1031 = vmatpush1.msra.mxu0 0.0
        %1032 = vmatprep.subr.mxu0 0.0
        %1033 = vmatpush1.msra.mxu0 0.0
        %1034 = vmatprep.mubr.f32.mxu0 0.0
        %1035 = vmatmul.mubr.f32.gmra.mrb[0].mxu0 %v968
        %v1036 = vpop.f32.mrb[0].mxu0
        %v1037 = vadd.f32 %v966, %v1036
        %v1038 = vpop.f32.mrb[0].mxu0
        %1039 = vdwg.mxu0
        %v1040 = vld [vmem:[#allocation2 + $0x550] sm:$0xff]
        %v1041 = vld [vmem:[#allocation2 + $0x558] sm:$0xff]
        %v1042 = vld [vmem:[#allocation2 + $0x560] sm:$0xff]
        %v1043 = vld [vmem:[#allocation2 + $0x568] sm:$0xff]
        %v1044 = vld [vmem:[#allocation2 + $0x570] sm:$0xff]
        %v1045 = vld [vmem:[#allocation2 + $0x578] sm:$0xff]
        %v1046 = vld [vmem:[#allocation2 + $0x580] sm:$0xff]
        %v1047 = vld [vmem:[#allocation2 + $0x588] sm:$0xff]
        %1048 = vmatprep.subr.mxu0 0.0
        %1049 = vmatpush1.msra.mxu0 %v1040
        %1050 = vmatprep.subr.mxu0 0.0
        %1051 = vmatpush1.msra.mxu0 %v1041
        %1052 = vmatprep.subr.mxu0 0.0
        %1053 = vmatpush1.msra.mxu0 %v1042
        %1054 = vmatprep.subr.mxu0 0.0
        %1055 = vmatpush1.msra.mxu0 %v1043
        %1056 = vmatprep.subr.mxu0 0.0
        %1057 = vmatpush1.msra.mxu0 %v1044
        %1058 = vmatprep.subr.mxu0 0.0
        %1059 = vmatpush1.msra.mxu0 %v1045
        %1060 = vmatprep.subr.mxu0 0.0
        %1061 = vmatpush1.msra.mxu0 %v1046
        %1062 = vmatprep.subr.mxu0 0.0
        %1063 = vmatpush1.msra.mxu0 %v1047
        %1064 = vmatprep.subr.mxu0 0.0
        %1065 = vmatpush1.msra.mxu0 0.0
        %1066 = vmatprep.subr.mxu0 0.0
        %1067 = vmatpush1.msra.mxu0 0.0
        %1068 = vmatprep.subr.mxu0 0.0
        %1069 = vmatpush1.msra.mxu0 0.0
        %1070 = vmatprep.subr.mxu0 0.0
        %1071 = vmatpush1.msra.mxu0 0.0
        %1072 = vmatprep.subr.mxu0 0.0
        %1073 = vmatpush1.msra.mxu0 0.0
        %1074 = vmatprep.subr.mxu0 0.0
        %1075 = vmatpush1.msra.mxu0 0.0
        %1076 = vmatprep.subr.mxu0 0.0
        %1077 = vmatpush1.msra.mxu0 0.0
        %1078 = vmatprep.subr.mxu0 0.0
        %1079 = vmatpush1.msra.mxu0 0.0
        %1080 = vmatprep.subr.mxu0 0.0
        %1081 = vmatpush1.msra.mxu0 0.0
        %1082 = vmatprep.subr.mxu0 0.0
        %1083 = vmatpush1.msra.mxu0 0.0
        %1084 = vmatprep.subr.mxu0 0.0
        %1085 = vmatpush1.msra.mxu0 0.0
        %1086 = vmatprep.subr.mxu0 0.0
        %1087 = vmatpush1.msra.mxu0 0.0
        %1088 = vmatprep.subr.mxu0 0.0
        %1089 = vmatpush1.msra.mxu0 0.0
        %1090 = vmatprep.subr.mxu0 0.0
        %1091 = vmatpush1.msra.mxu0 0.0
        %1092 = vmatprep.subr.mxu0 0.0
        %1093 = vmatpush1.msra.mxu0 0.0
        %1094 = vmatprep.subr.mxu0 0.0
        %1095 = vmatpush1.msra.mxu0 0.0
        %1096 = vmatprep.subr.mxu0 0.0
        %1097 = vmatpush1.msra.mxu0 0.0
        %1098 = vmatprep.subr.mxu0 0.0
        %1099 = vmatpush1.msra.mxu0 0.0
        %1100 = vmatprep.subr.mxu0 0.0
        %1101 = vmatpush1.msra.mxu0 0.0
        %1102 = vmatprep.subr.mxu0 0.0
        %1103 = vmatpush1.msra.mxu0 0.0
        %1104 = vmatprep.subr.mxu0 0.0
        %1105 = vmatpush1.msra.mxu0 0.0
        %1106 = vmatprep.subr.mxu0 0.0
        %1107 = vmatpush1.msra.mxu0 0.0
        %1108 = vmatprep.subr.mxu0 0.0
        %1109 = vmatpush1.msra.mxu0 0.0
        %1110 = vmatprep.subr.mxu0 0.0
        %1111 = vmatpush1.msra.mxu0 0.0
        %1112 = vmatprep.mubr.f32.mxu0 0.0
        %1113 = vmatmul.mubr.f32.gmra.mrb[0].mxu0 %v886
        %v1114 = vpop.f32.mrb[0].mxu0
        %v1115 = vadd.f32 0.0, %v1114
        %v1116 = vpop.f32.mrb[0].mxu0
        %1117 = vdwg.mxu0
        %v1118 = vld [vmem:[#allocation2 + $0x78] sm:$0xff]
        %v1119 = vld [vmem:[#allocation2 + $0x80] sm:$0xff]
        %v1120 = vld [vmem:[#allocation2 + $0x88] sm:$0xff]
        %v1121 = vld [vmem:[#allocation2 + $0x90] sm:$0xff]
        %v1122 = vld [vmem:[#allocation2 + $0x98] sm:$0x1]
        %v1123 = vlaneseq
        %v1124 = vshrl.u32 %v1123, 7
        %v1125 = vsub.s32 0, %v1124
        %v1126 = vrot.slane %v1122, %v1125
        %v1128 = vsel %vm239, %v1037, 0
        %1130 = vmatprep.subr.mxu0 0.0
        %1131 = vmatpush1.msra.mxu0 %v1118
        %1132 = vmatprep.subr.mxu0 0.0
        %1133 = vmatpush1.msra.mxu0 %v1119
        %1134 = vmatprep.subr.mxu0 0.0
        %1135 = vmatpush1.msra.mxu0 %v1120
        %1136 = vmatprep.subr.mxu0 0.0
        %1137 = vmatpush1.msra.mxu0 %v1121
        %1138 = vmatprep.subr.mxu0 0.0
        %1139 = vmatpush1.msra.mxu0 0.0
        %1140 = vmatprep.subr.mxu0 0.0
        %1141 = vmatpush1.msra.mxu0 0.0
        %1142 = vmatprep.subr.mxu0 0.0
        %1143 = vmatpush1.msra.mxu0 0.0
        %1144 = vmatprep.subr.mxu0 0.0
        %1145 = vmatpush1.msra.mxu0 0.0
        %1146 = vmatprep.subr.mxu0 0.0
        %1147 = vmatpush1.msra.mxu0 0.0
        %1148 = vmatprep.subr.mxu0 0.0
        %1149 = vmatpush1.msra.mxu0 0.0
        %1150 = vmatprep.subr.mxu0 0.0
        %1151 = vmatpush1.msra.mxu0 0.0
        %1152 = vmatprep.subr.mxu0 0.0
        %1153 = vmatpush1.msra.mxu0 0.0
        %1154 = vmatprep.subr.mxu0 0.0
        %1155 = vmatpush1.msra.mxu0 0.0
        %1156 = vmatprep.subr.mxu0 0.0
        %1157 = vmatpush1.msra.mxu0 0.0
        %1158 = vmatprep.subr.mxu0 0.0
        %1159 = vmatpush1.msra.mxu0 0.0
        %1160 = vmatprep.subr.mxu0 0.0
        %1161 = vmatpush1.msra.mxu0 0.0
        %1162 = vmatprep.subr.mxu0 0.0
        %1163 = vmatpush1.msra.mxu0 0.0
        %1164 = vmatprep.subr.mxu0 0.0
        %1165 = vmatpush1.msra.mxu0 0.0
        %1166 = vmatprep.subr.mxu0 0.0
        %1167 = vmatpush1.msra.mxu0 0.0
        %1168 = vmatprep.subr.mxu0 0.0
        %1169 = vmatpush1.msra.mxu0 0.0
        %1170 = vmatprep.subr.mxu0 0.0
        %1171 = vmatpush1.msra.mxu0 0.0
        %1172 = vmatprep.subr.mxu0 0.0
        %1173 = vmatpush1.msra.mxu0 0.0
        %1174 = vmatprep.subr.mxu0 0.0
        %1175 = vmatpush1.msra.mxu0 0.0
        %1176 = vmatprep.subr.mxu0 0.0
        %1177 = vmatpush1.msra.mxu0 0.0
        %1178 = vmatprep.subr.mxu0 0.0
        %1179 = vmatpush1.msra.mxu0 0.0
        %1180 = vmatprep.subr.mxu0 0.0
        %1181 = vmatpush1.msra.mxu0 0.0
        %1182 = vmatprep.subr.mxu0 0.0
        %1183 = vmatpush1.msra.mxu0 0.0
        %1184 = vmatprep.subr.mxu0 0.0
        %1185 = vmatpush1.msra.mxu0 0.0
        %1186 = vmatprep.subr.mxu0 0.0
        %1187 = vmatpush1.msra.mxu0 0.0
        %1188 = vmatprep.subr.mxu0 0.0
        %1189 = vmatpush1.msra.mxu0 0.0
        %1190 = vmatprep.subr.mxu0 0.0
        %1191 = vmatpush1.msra.mxu0 0.0
        %1192 = vmatprep.subr.mxu0 0.0
        %1193 = vmatpush1.msra.mxu0 0.0
        %1194 = vmatprep.mubr.f32.mxu0 0.0
        %1195 = vmatmul.mubr.f32.gmra.mrb[0].mxu0 %v1128
        %v1196 = vpop.f32.mrb[0].mxu0
        %v1197 = vadd.f32 %v1126, %v1196
        %v1198 = vpop.f32.mrb[0].mxu0
        %1199 = vdwg.mxu0
        %v1200 = vld [vmem:[#allocation2 + $0xa0] sm:$0xff]
        %1201 = vrot.lane.b32.xlu0 %v154, 91
        %v1202 = vpop.permute.xlu0 %1201
        %v1203 = vsel %vm382, %v1202, 0
        %1205 = vmatprep.subr.mxu0 0.0
        %1206 = vmatpush1.msra.mxu0 %v1200
        %1207 = vmatprep.subr.mxu0 0.0
        %1208 = vmatpush1.msra.mxu0 0.0
        %1209 = vmatprep.subr.mxu0 0.0
        %1210 = vmatpush1.msra.mxu0 0.0
        %1211 = vmatprep.subr.mxu0 0.0
        %1212 = vmatpush1.msra.mxu0 0.0
        %1213 = vmatprep.subr.mxu0 0.0
        %1214 = vmatpush1.msra.mxu0 0.0
        %1215 = vmatprep.subr.mxu0 0.0
        %1216 = vmatpush1.msra.mxu0 0.0
        %1217 = vmatprep.subr.mxu0 0.0
        %1218 = vmatpush1.msra.mxu0 0.0
        %1219 = vmatprep.subr.mxu0 0.0
        %1220 = vmatpush1.msra.mxu0 0.0
        %1221 = vmatprep.subr.mxu0 0.0
        %1222 = vmatpush1.msra.mxu0 0.0
        %1223 = vmatprep.subr.mxu0 0.0
        %1224 = vmatpush1.msra.mxu0 0.0
        %1225 = vmatprep.subr.mxu0 0.0
        %1226 = vmatpush1.msra.mxu0 0.0
        %1227 = vmatprep.subr.mxu0 0.0
        %1228 = vmatpush1.msra.mxu0 0.0
        %1229 = vmatprep.subr.mxu0 0.0
        %1230 = vmatpush1.msra.mxu0 0.0
        %1231 = vmatprep.subr.mxu0 0.0
        %1232 = vmatpush1.msra.mxu0 0.0
        %1233 = vmatprep.subr.mxu0 0.0
        %1234 = vmatpush1.msra.mxu0 0.0
        %1235 = vmatprep.subr.mxu0 0.0
        %1236 = vmatpush1.msra.mxu0 0.0
        %1237 = vmatprep.subr.mxu0 0.0
        %1238 = vmatpush1.msra.mxu0 0.0
        %1239 = vmatprep.subr.mxu0 0.0
        %1240 = vmatpush1.msra.mxu0 0.0
        %1241 = vmatprep.subr.mxu0 0.0
        %1242 = vmatpush1.msra.mxu0 0.0
        %1243 = vmatprep.subr.mxu0 0.0
        %1244 = vmatpush1.msra.mxu0 0.0
        %1245 = vmatprep.subr.mxu0 0.0
        %1246 = vmatpush1.msra.mxu0 0.0
        %1247 = vmatprep.subr.mxu0 0.0
        %1248 = vmatpush1.msra.mxu0 0.0
        %1249 = vmatprep.subr.mxu0 0.0
        %1250 = vmatpush1.msra.mxu0 0.0
        %1251 = vmatprep.subr.mxu0 0.0
        %1252 = vmatpush1.msra.mxu0 0.0
        %1253 = vmatprep.subr.mxu0 0.0
        %1254 = vmatpush1.msra.mxu0 0.0
        %1255 = vmatprep.subr.mxu0 0.0
        %1256 = vmatpush1.msra.mxu0 0.0
        %1257 = vmatprep.subr.mxu0 0.0
        %1258 = vmatpush1.msra.mxu0 0.0
        %1259 = vmatprep.subr.mxu0 0.0
        %1260 = vmatpush1.msra.mxu0 0.0
        %1261 = vmatprep.subr.mxu0 0.0
        %1262 = vmatpush1.msra.mxu0 0.0
        %1263 = vmatprep.subr.mxu0 0.0
        %1264 = vmatpush1.msra.mxu0 0.0
        %1265 = vmatprep.subr.mxu0 0.0
        %1266 = vmatpush1.msra.mxu0 0.0
        %1267 = vmatprep.subr.mxu0 0.0
        %1268 = vmatpush1.msra.mxu0 0.0
        %1269 = vmatprep.mubr.f32.mxu0 0.0
        %1270 = vmatmul.mubr.f32.gmra.mrb[0].mxu0 %v1203
        %v1271 = vpop.f32.mrb[0].mxu0
        %v1272 = vadd.f32 0.0, %v1271
        %v1273 = vpop.f32.mrb[0].mxu0
        %1274 = vdwg.mxu0
        %v1275 = vadd.f32 %v1197, %v1272
        %v1276 = vld [vmem:[#allocation2 + $0xf8] sm:$0xff]
        %v1277 = vld [vmem:[#allocation2 + $0x100] sm:$0xff]
        %v1278 = vld [vmem:[#allocation2 + $0x108] sm:$0xff]
        %v1279 = vld [vmem:[#allocation2 + $0x110] sm:$0xff]
        %v1280 = vld [vmem:[#allocation2 + $0x118] sm:$0x1]
        %v1281 = vlaneseq
        %v1282 = vshrl.u32 %v1281, 7
        %v1283 = vsub.s32 0, %v1282
        %v1284 = vrot.slane %v1280, %v1283
        %v1286 = vsel %vm239, %v1275, 0
        %1288 = vmatprep.subr.mxu0 0.0
        %1289 = vmatpush1.msra.mxu0 %v1276
        %1290 = vmatprep.subr.mxu0 0.0
        %1291 = vmatpush1.msra.mxu0 %v1277
        %1292 = vmatprep.subr.mxu0 0.0
        %1293 = vmatpush1.msra.mxu0 %v1278
        %1294 = vmatprep.subr.mxu0 0.0
        %1295 = vmatpush1.msra.mxu0 %v1279
        %1296 = vmatprep.subr.mxu0 0.0
        %1297 = vmatpush1.msra.mxu0 0.0
        %1298 = vmatprep.subr.mxu0 0.0
        %1299 = vmatpush1.msra.mxu0 0.0
        %1300 = vmatprep.subr.mxu0 0.0
        %1301 = vmatpush1.msra.mxu0 0.0
        %1302 = vmatprep.subr.mxu0 0.0
        %1303 = vmatpush1.msra.mxu0 0.0
        %1304 = vmatprep.subr.mxu0 0.0
        %1305 = vmatpush1.msra.mxu0 0.0
        %1306 = vmatprep.subr.mxu0 0.0
        %1307 = vmatpush1.msra.mxu0 0.0
        %1308 = vmatprep.subr.mxu0 0.0
        %1309 = vmatpush1.msra.mxu0 0.0
        %1310 = vmatprep.subr.mxu0 0.0
        %1311 = vmatpush1.msra.mxu0 0.0
        %1312 = vmatprep.subr.mxu0 0.0
        %1313 = vmatpush1.msra.mxu0 0.0
        %1314 = vmatprep.subr.mxu0 0.0
        %1315 = vmatpush1.msra.mxu0 0.0
        %1316 = vmatprep.subr.mxu0 0.0
        %1317 = vmatpush1.msra.mxu0 0.0
        %1318 = vmatprep.subr.mxu0 0.0
        %1319 = vmatpush1.msra.mxu0 0.0
        %1320 = vmatprep.subr.mxu0 0.0
        %1321 = vmatpush1.msra.mxu0 0.0
        %1322 = vmatprep.subr.mxu0 0.0
        %1323 = vmatpush1.msra.mxu0 0.0
        %1324 = vmatprep.subr.mxu0 0.0
        %1325 = vmatpush1.msra.mxu0 0.0
        %1326 = vmatprep.subr.mxu0 0.0
        %1327 = vmatpush1.msra.mxu0 0.0
        %1328 = vmatprep.subr.mxu0 0.0
        %1329 = vmatpush1.msra.mxu0 0.0
        %1330 = vmatprep.subr.mxu0 0.0
        %1331 = vmatpush1.msra.mxu0 0.0
        %1332 = vmatprep.subr.mxu0 0.0
        %1333 = vmatpush1.msra.mxu0 0.0
        %1334 = vmatprep.subr.mxu0 0.0
        %1335 = vmatpush1.msra.mxu0 0.0
        %1336 = vmatprep.subr.mxu0 0.0
        %1337 = vmatpush1.msra.mxu0 0.0
        %1338 = vmatprep.subr.mxu0 0.0
        %1339 = vmatpush1.msra.mxu0 0.0
        %1340 = vmatprep.subr.mxu0 0.0
        %1341 = vmatpush1.msra.mxu0 0.0
        %1342 = vmatprep.subr.mxu0 0.0
        %1343 = vmatpush1.msra.mxu0 0.0
        %1344 = vmatprep.subr.mxu0 0.0
        %1345 = vmatpush1.msra.mxu0 0.0
        %1346 = vmatprep.subr.mxu0 0.0
        %1347 = vmatpush1.msra.mxu0 0.0
        %1348 = vmatprep.subr.mxu0 0.0
        %1349 = vmatpush1.msra.mxu0 0.0
        %1350 = vmatprep.subr.mxu0 0.0
        %1351 = vmatpush1.msra.mxu0 0.0
        %1352 = vmatprep.mubr.f32.mxu0 0.0
        %1353 = vmatmul.mubr.f32.gmra.mrb[0].mxu0 %v1286
        %v1354 = vpop.f32.mrb[0].mxu0
        %v1355 = vadd.f32 %v1284, %v1354
        %v1356 = vpop.f32.mrb[0].mxu0
        %1357 = vdwg.mxu0
        %v1358 = vld [vmem:[#allocation2 + $0x590] sm:$0xff]
        %v1359 = vld [vmem:[#allocation2 + $0x598] sm:$0xff]
        %v1360 = vld [vmem:[#allocation2 + $0x5a0] sm:$0xff]
        %v1361 = vld [vmem:[#allocation2 + $0x5a8] sm:$0xff]
        %v1362 = vld [vmem:[#allocation2 + $0x5b0] sm:$0xff]
        %v1363 = vld [vmem:[#allocation2 + $0x5b8] sm:$0xff]
        %v1364 = vld [vmem:[#allocation2 + $0x5c0] sm:$0xff]
        %v1365 = vld [vmem:[#allocation2 + $0x5c8] sm:$0xff]
        %1370 = vrot.lane.b32.xlu0 %v1358, 32
        %v1371 = vpop.permute.xlu0 %1370
        %1372 = vrot.lane.b32.xlu0 %v1359, 32
        %v1373 = vpop.permute.xlu0 %1372
        %1374 = vrot.lane.b32.xlu0 %v1360, 32
        %v1375 = vpop.permute.xlu0 %1374
        %1376 = vrot.lane.b32.xlu0 %v1361, 32
        %v1377 = vpop.permute.xlu0 %1376
        %v1382 = vmul.f32 %v1355, %v1371
        %v1383 = vmul.f32 %v1355, %v1373
        %v1384 = vmul.f32 %v1355, %v1375
        %v1385 = vmul.f32 %v1355, %v1377
        %1386 = vrot.lane.b32.xlu0 %v1358, 64
        %v1387 = vpop.permute.xlu0 %1386
        %1388 = vrot.lane.b32.xlu0 %v1359, 64
        %v1389 = vpop.permute.xlu0 %1388
        %1390 = vrot.lane.b32.xlu0 %v1360, 64
        %v1391 = vpop.permute.xlu0 %1390
        %1392 = vrot.lane.b32.xlu0 %v1361, 64
        %v1393 = vpop.permute.xlu0 %1392
        %v1398 = vmul.f32 %v1355, %v1387
        %v1399 = vmul.f32 %v1355, %v1389
        %v1400 = vmul.f32 %v1355, %v1391
        %v1401 = vmul.f32 %v1355, %v1393
        %1406 = vrot.lane.b32.xlu0 %v1382, 96
        %v1407 = vpop.permute.xlu0 %1406
        %1408 = vrot.lane.b32.xlu0 %v1383, 96
        %v1409 = vpop.permute.xlu0 %1408
        %1410 = vrot.lane.b32.xlu0 %v1384, 96
        %v1411 = vpop.permute.xlu0 %1410
        %1412 = vrot.lane.b32.xlu0 %v1385, 96
        %v1413 = vpop.permute.xlu0 %1412
        %v1415 = vsel %vm239, %v1355, 0
        %v1417 = vsel %vm239, %v1407, 0
        %v1419 = vsel %vm239, %v1409, 0
        %v1421 = vsel %vm239, %v1411, 0
        %v1423 = vsel %vm239, %v1413, 0
        %1425 = vmatprep.subr.mxu0 0.0
        %1426 = vmatpush1.xpose.msra.mxu0 %v1417
        %1427 = vmatprep.subr.mxu0 0.0
        %1428 = vmatpush1.xpose.msra.mxu0 %v1419
        %1429 = vmatprep.subr.mxu0 0.0
        %1430 = vmatpush1.xpose.msra.mxu0 %v1421
        %1431 = vmatprep.subr.mxu0 0.0
        %1432 = vmatpush1.xpose.msra.mxu0 %v1423
        %1433 = vmatprep.subr.mxu0 0.0
        %1434 = vmatpush1.xpose.msra.mxu0 0.0
        %1435 = vmatprep.subr.mxu0 0.0
        %1436 = vmatpush1.xpose.msra.mxu0 0.0
        %1437 = vmatprep.subr.mxu0 0.0
        %1438 = vmatpush1.xpose.msra.mxu0 0.0
        %1439 = vmatprep.subr.mxu0 0.0
        %1440 = vmatpush1.xpose.msra.mxu0 0.0
        %1441 = vmatprep.subr.mxu0 0.0
        %1442 = vmatpush1.xpose.msra.mxu0 0.0
        %1443 = vmatprep.subr.mxu0 0.0
        %1444 = vmatpush1.xpose.msra.mxu0 0.0
        %1445 = vmatprep.subr.mxu0 0.0
        %1446 = vmatpush1.xpose.msra.mxu0 0.0
        %1447 = vmatprep.subr.mxu0 0.0
        %1448 = vmatpush1.xpose.msra.mxu0 0.0
        %1449 = vmatprep.subr.mxu0 0.0
        %1450 = vmatpush1.xpose.msra.mxu0 0.0
        %1451 = vmatprep.subr.mxu0 0.0
        %1452 = vmatpush1.xpose.msra.mxu0 0.0
        %1453 = vmatprep.subr.mxu0 0.0
        %1454 = vmatpush1.xpose.msra.mxu0 0.0
        %1455 = vmatprep.subr.mxu0 0.0
        %1456 = vmatpush1.xpose.msra.mxu0 0.0
        %1457 = vmatprep.subr.mxu0 0.0
        %1458 = vmatpush1.xpose.msra.mxu0 0.0
        %1459 = vmatprep.subr.mxu0 0.0
        %1460 = vmatpush1.xpose.msra.mxu0 0.0
        %1461 = vmatprep.subr.mxu0 0.0
        %1462 = vmatpush1.xpose.msra.mxu0 0.0
        %1463 = vmatprep.subr.mxu0 0.0
        %1464 = vmatpush1.xpose.msra.mxu0 0.0
        %1465 = vmatprep.subr.mxu0 0.0
        %1466 = vmatpush1.xpose.msra.mxu0 0.0
        %1467 = vmatprep.subr.mxu0 0.0
        %1468 = vmatpush1.xpose.msra.mxu0 0.0
        %1469 = vmatprep.subr.mxu0 0.0
        %1470 = vmatpush1.xpose.msra.mxu0 0.0
        %1471 = vmatprep.subr.mxu0 0.0
        %1472 = vmatpush1.xpose.msra.mxu0 0.0
        %1473 = vmatprep.subr.mxu0 0.0
        %1474 = vmatpush1.xpose.msra.mxu0 0.0
        %1475 = vmatprep.subr.mxu0 0.0
        %1476 = vmatpush1.xpose.msra.mxu0 0.0
        %1477 = vmatprep.subr.mxu0 0.0
        %1478 = vmatpush1.xpose.msra.mxu0 0.0
        %1479 = vmatprep.subr.mxu0 0.0
        %1480 = vmatpush1.xpose.msra.mxu0 0.0
        %1481 = vmatprep.subr.mxu0 0.0
        %1482 = vmatpush1.xpose.msra.mxu0 0.0
        %1483 = vmatprep.subr.mxu0 0.0
        %1484 = vmatpush1.xpose.msra.mxu0 0.0
        %1485 = vmatprep.subr.mxu0 0.0
        %1486 = vmatpush1.xpose.msra.mxu0 0.0
        %1487 = vmatprep.subr.mxu0 0.0
        %1488 = vmatpush1.xpose.msra.mxu0 0.0
        %1489 = vmatprep.mubr.f32.mxu0 0.0
        %1490 = vmatmul.mubr.f32.gmra.mrb[0].mxu0 %v1415
        %v1491 = vpop.f32.mrb[0].mxu0
        %v1492 = vadd.f32 0.0, %v1491
        %v1493 = vpop.f32.mrb[0].mxu0
        %1494 = vdwg.mxu0
        %v1495 = vsel %vm239, %v1492, -inf
        %1496 = vmax.xlane.f32.xlu0 %v1495
        %v1497 = vpop.xlane.xlu0 %1496
        %v1498 = vsub.f32 %v1492, %v1497
        %v1499 = vmul.f32 %v1498, 1.442695
        %v1500 = vpow.pop %v1499
        %v1502 = vsel %vm239, %v1500, 0
        %1504 = vmatprep.subr.mxu0 0.0
        %1505 = vmatpush1.msra.mxu0 %v1362
        %1506 = vmatprep.subr.mxu0 0.0
        %1507 = vmatpush1.msra.mxu0 %v1363
        %1508 = vmatprep.subr.mxu0 0.0
        %1509 = vmatpush1.msra.mxu0 %v1364
        %1510 = vmatprep.subr.mxu0 0.0
        %1511 = vmatpush1.msra.mxu0 %v1365
        %1512 = vmatprep.subr.mxu0 0.0
        %1513 = vmatpush1.msra.mxu0 0.0
        %1514 = vmatprep.subr.mxu0 0.0
        %1515 = vmatpush1.msra.mxu0 0.0
        %1516 = vmatprep.subr.mxu0 0.0
        %1517 = vmatpush1.msra.mxu0 0.0
        %1518 = vmatprep.subr.mxu0 0.0
        %1519 = vmatpush1.msra.mxu0 0.0
        %1520 = vmatprep.subr.mxu0 0.0
        %1521 = vmatpush1.msra.mxu0 0.0
        %1522 = vmatprep.subr.mxu0 0.0
        %1523 = vmatpush1.msra.mxu0 0.0
        %1524 = vmatprep.subr.mxu0 0.0
        %1525 = vmatpush1.msra.mxu0 0.0
        %1526 = vmatprep.subr.mxu0 0.0
        %1527 = vmatpush1.msra.mxu0 0.0
        %1528 = vmatprep.subr.mxu0 0.0
        %1529 = vmatpush1.msra.mxu0 0.0
        %1530 = vmatprep.subr.mxu0 0.0
        %1531 = vmatpush1.msra.mxu0 0.0
        %1532 = vmatprep.subr.mxu0 0.0
        %1533 = vmatpush1.msra.mxu0 0.0
        %1534 = vmatprep.subr.mxu0 0.0
        %1535 = vmatpush1.msra.mxu0 0.0
        %1536 = vmatprep.subr.mxu0 0.0
        %1537 = vmatpush1.msra.mxu0 0.0
        %1538 = vmatprep.subr.mxu0 0.0
        %1539 = vmatpush1.msra.mxu0 0.0
        %1540 = vmatprep.subr.mxu0 0.0
        %1541 = vmatpush1.msra.mxu0 0.0
        %1542 = vmatprep.subr.mxu0 0.0
        %1543 = vmatpush1.msra.mxu0 0.0
        %1544 = vmatprep.subr.mxu0 0.0
        %1545 = vmatpush1.msra.mxu0 0.0
        %1546 = vmatprep.subr.mxu0 0.0
        %1547 = vmatpush1.msra.mxu0 0.0
        %1548 = vmatprep.subr.mxu0 0.0
        %1549 = vmatpush1.msra.mxu0 0.0
        %1550 = vmatprep.subr.mxu0 0.0
        %1551 = vmatpush1.msra.mxu0 0.0
        %1552 = vmatprep.subr.mxu0 0.0
        %1553 = vmatpush1.msra.mxu0 0.0
        %1554 = vmatprep.subr.mxu0 0.0
        %1555 = vmatpush1.msra.mxu0 0.0
        %1556 = vmatprep.subr.mxu0 0.0
        %1557 = vmatpush1.msra.mxu0 0.0
        %1558 = vmatprep.subr.mxu0 0.0
        %1559 = vmatpush1.msra.mxu0 0.0
        %1560 = vmatprep.subr.mxu0 0.0
        %1561 = vmatpush1.msra.mxu0 0.0
        %1562 = vmatprep.subr.mxu0 0.0
        %1563 = vmatpush1.msra.mxu0 0.0
        %1564 = vmatprep.subr.mxu0 0.0
        %1565 = vmatpush1.msra.mxu0 0.0
        %1566 = vmatprep.subr.mxu0 0.0
        %1567 = vmatpush1.msra.mxu0 0.0
        %1568 = vmatprep.mubr.f32.mxu0 0.0
        %1569 = vmatmul.mubr.f32.gmra.mrb[0].mxu0 %v1502
        %v1570 = vpop.f32.mrb[0].mxu0
        %v1571 = vadd.f32 0.0, %v1570
        %v1572 = vpop.f32.mrb[0].mxu0
        %1573 = vdwg.mxu0
        %v1574 = vrcp.pop %v1571
        %v1575 = vmul.f32 %v1500, %v1574
        %1580 = vrot.lane.b32.xlu0 %v1398, 64
        %v1581 = vpop.permute.xlu0 %1580
        %1582 = vrot.lane.b32.xlu0 %v1399, 64
        %v1583 = vpop.permute.xlu0 %1582
        %1584 = vrot.lane.b32.xlu0 %v1400, 64
        %v1585 = vpop.permute.xlu0 %1584
        %1586 = vrot.lane.b32.xlu0 %v1401, 64
        %v1587 = vpop.permute.xlu0 %1586
        %v1593 = vsel %vm239, %v1575, 0
        %1595 = vmatprep.subr.mxu0 0.0
        %1596 = vmatpush1.msra.mxu0 %v1581
        %1597 = vmatprep.subr.mxu0 0.0
        %1598 = vmatpush1.msra.mxu0 %v1583
        %1599 = vmatprep.subr.mxu0 0.0
        %1600 = vmatpush1.msra.mxu0 %v1585
        %1601 = vmatprep.subr.mxu0 0.0
        %1602 = vmatpush1.msra.mxu0 %v1587
        %1603 = vmatprep.subr.mxu0 0.0
        %1604 = vmatpush1.msra.mxu0 0.0
        %1605 = vmatprep.subr.mxu0 0.0
        %1606 = vmatpush1.msra.mxu0 0.0
        %1607 = vmatprep.subr.mxu0 0.0
        %1608 = vmatpush1.msra.mxu0 0.0
        %1609 = vmatprep.subr.mxu0 0.0
        %1610 = vmatpush1.msra.mxu0 0.0
        %1611 = vmatprep.subr.mxu0 0.0
        %1612 = vmatpush1.msra.mxu0 0.0
        %1613 = vmatprep.subr.mxu0 0.0
        %1614 = vmatpush1.msra.mxu0 0.0
        %1615 = vmatprep.subr.mxu0 0.0
        %1616 = vmatpush1.msra.mxu0 0.0
        %1617 = vmatprep.subr.mxu0 0.0
        %1618 = vmatpush1.msra.mxu0 0.0
        %1619 = vmatprep.subr.mxu0 0.0
        %1620 = vmatpush1.msra.mxu0 0.0
        %1621 = vmatprep.subr.mxu0 0.0
        %1622 = vmatpush1.msra.mxu0 0.0
        %1623 = vmatprep.subr.mxu0 0.0
        %1624 = vmatpush1.msra.mxu0 0.0
        %1625 = vmatprep.subr.mxu0 0.0
        %1626 = vmatpush1.msra.mxu0 0.0
        %1627 = vmatprep.subr.mxu0 0.0
        %1628 = vmatpush1.msra.mxu0 0.0
        %1629 = vmatprep.subr.mxu0 0.0
        %1630 = vmatpush1.msra.mxu0 0.0
        %1631 = vmatprep.subr.mxu0 0.0
        %1632 = vmatpush1.msra.mxu0 0.0
        %1633 = vmatprep.subr.mxu0 0.0
        %1634 = vmatpush1.msra.mxu0 0.0
        %1635 = vmatprep.subr.mxu0 0.0
        %1636 = vmatpush1.msra.mxu0 0.0
        %1637 = vmatprep.subr.mxu0 0.0
        %1638 = vmatpush1.msra.mxu0 0.0
        %1639 = vmatprep.subr.mxu0 0.0
        %1640 = vmatpush1.msra.mxu0 0.0
        %1641 = vmatprep.subr.mxu0 0.0
        %1642 = vmatpush1.msra.mxu0 0.0
        %1643 = vmatprep.subr.mxu0 0.0
        %1644 = vmatpush1.msra.mxu0 0.0
        %1645 = vmatprep.subr.mxu0 0.0
        %1646 = vmatpush1.msra.mxu0 0.0
        %1647 = vmatprep.subr.mxu0 0.0
        %1648 = vmatpush1.msra.mxu0 0.0
        %1649 = vmatprep.subr.mxu0 0.0
        %1650 = vmatpush1.msra.mxu0 0.0
        %1651 = vmatprep.subr.mxu0 0.0
        %1652 = vmatpush1.msra.mxu0 0.0
        %1653 = vmatprep.subr.mxu0 0.0
        %1654 = vmatpush1.msra.mxu0 0.0
        %1655 = vmatprep.subr.mxu0 0.0
        %1656 = vmatpush1.msra.mxu0 0.0
        %1657 = vmatprep.subr.mxu0 0.0
        %1658 = vmatpush1.msra.mxu0 0.0
        %1659 = vmatprep.mubr.f32.mxu0 0.0
        %1660 = vmatmul.mubr.f32.gmra.mrb[0].mxu0 %v1593
        %v1661 = vpop.f32.mrb[0].mxu0
        %v1662 = vadd.f32 0.0, %v1661
        %v1663 = vpop.f32.mrb[0].mxu0
        %1664 = vdwg.mxu0
        %v1665 = vld [vmem:[#allocation2 + $0x120] sm:$0xff]
        %v1666 = vld [vmem:[#allocation2 + $0x128] sm:$0xff]
        %v1667 = vld [vmem:[#allocation2 + $0x130] sm:$0xff]
        %v1668 = vld [vmem:[#allocation2 + $0x138] sm:$0xff]
        %v1669 = vld [vmem:[#allocation2 + $0x140] sm:$0x1]
        %v1670 = vlaneseq
        %v1671 = vshrl.u32 %v1670, 7
        %v1672 = vsub.s32 0, %v1671
        %v1673 = vrot.slane %v1669, %v1672
        %v1675 = vsel %vm239, %v1662, 0
        %1677 = vmatprep.subr.mxu0 0.0
        %1678 = vmatpush1.msra.mxu0 %v1665
        %1679 = vmatprep.subr.mxu0 0.0
        %1680 = vmatpush1.msra.mxu0 %v1666
        %1681 = vmatprep.subr.mxu0 0.0
        %1682 = vmatpush1.msra.mxu0 %v1667
        %1683 = vmatprep.subr.mxu0 0.0
        %1684 = vmatpush1.msra.mxu0 %v1668
        %1685 = vmatprep.subr.mxu0 0.0
        %1686 = vmatpush1.msra.mxu0 0.0
        %1687 = vmatprep.subr.mxu0 0.0
        %1688 = vmatpush1.msra.mxu0 0.0
        %1689 = vmatprep.subr.mxu0 0.0
        %1690 = vmatpush1.msra.mxu0 0.0
        %1691 = vmatprep.subr.mxu0 0.0
        %1692 = vmatpush1.msra.mxu0 0.0
        %1693 = vmatprep.subr.mxu0 0.0
        %1694 = vmatpush1.msra.mxu0 0.0
        %1695 = vmatprep.subr.mxu0 0.0
        %1696 = vmatpush1.msra.mxu0 0.0
        %1697 = vmatprep.subr.mxu0 0.0
        %1698 = vmatpush1.msra.mxu0 0.0
        %1699 = vmatprep.subr.mxu0 0.0
        %1700 = vmatpush1.msra.mxu0 0.0
        %1701 = vmatprep.subr.mxu0 0.0
        %1702 = vmatpush1.msra.mxu0 0.0
        %1703 = vmatprep.subr.mxu0 0.0
        %1704 = vmatpush1.msra.mxu0 0.0
        %1705 = vmatprep.subr.mxu0 0.0
        %1706 = vmatpush1.msra.mxu0 0.0
        %1707 = vmatprep.subr.mxu0 0.0
        %1708 = vmatpush1.msra.mxu0 0.0
        %1709 = vmatprep.subr.mxu0 0.0
        %1710 = vmatpush1.msra.mxu0 0.0
        %1711 = vmatprep.subr.mxu0 0.0
        %1712 = vmatpush1.msra.mxu0 0.0
        %1713 = vmatprep.subr.mxu0 0.0
        %1714 = vmatpush1.msra.mxu0 0.0
        %1715 = vmatprep.subr.mxu0 0.0
        %1716 = vmatpush1.msra.mxu0 0.0
        %1717 = vmatprep.subr.mxu0 0.0
        %1718 = vmatpush1.msra.mxu0 0.0
        %1719 = vmatprep.subr.mxu0 0.0
        %1720 = vmatpush1.msra.mxu0 0.0
        %1721 = vmatprep.subr.mxu0 0.0
        %1722 = vmatpush1.msra.mxu0 0.0
        %1723 = vmatprep.subr.mxu0 0.0
        %1724 = vmatpush1.msra.mxu0 0.0
        %1725 = vmatprep.subr.mxu0 0.0
        %1726 = vmatpush1.msra.mxu0 0.0
        %1727 = vmatprep.subr.mxu0 0.0
        %1728 = vmatpush1.msra.mxu0 0.0
        %1729 = vmatprep.subr.mxu0 0.0
        %1730 = vmatpush1.msra.mxu0 0.0
        %1731 = vmatprep.subr.mxu0 0.0
        %1732 = vmatpush1.msra.mxu0 0.0
        %1733 = vmatprep.subr.mxu0 0.0
        %1734 = vmatpush1.msra.mxu0 0.0
        %1735 = vmatprep.subr.mxu0 0.0
        %1736 = vmatpush1.msra.mxu0 0.0
        %1737 = vmatprep.subr.mxu0 0.0
        %1738 = vmatpush1.msra.mxu0 0.0
        %1739 = vmatprep.subr.mxu0 0.0
        %1740 = vmatpush1.msra.mxu0 0.0
        %1741 = vmatprep.mubr.f32.mxu0 0.0
        %1742 = vmatmul.mubr.f32.gmra.mrb[0].mxu0 %v1675
        %v1743 = vpop.f32.mrb[0].mxu0
        %v1744 = vadd.f32 %v1673, %v1743
        %v1745 = vpop.f32.mrb[0].mxu0
        %1746 = vdwg.mxu0
        %v1747 = vld [vmem:[#allocation2 + $0x5d0] sm:$0xff]
        %v1748 = vld [vmem:[#allocation2 + $0x5d8] sm:$0xff]
        %v1749 = vld [vmem:[#allocation2 + $0x5e0] sm:$0xff]
        %v1750 = vld [vmem:[#allocation2 + $0x5e8] sm:$0xff]
        %1751 = vmatprep.subr.mxu0 0.0
        %1752 = vmatpush1.msra.mxu0 %v1747
        %1753 = vmatprep.subr.mxu0 0.0
        %1754 = vmatpush1.msra.mxu0 %v1748
        %1755 = vmatprep.subr.mxu0 0.0
        %1756 = vmatpush1.msra.mxu0 %v1749
        %1757 = vmatprep.subr.mxu0 0.0
        %1758 = vmatpush1.msra.mxu0 %v1750
        %1759 = vmatprep.subr.mxu0 0.0
        %1760 = vmatpush1.msra.mxu0 0.0
        %1761 = vmatprep.subr.mxu0 0.0
        %1762 = vmatpush1.msra.mxu0 0.0
        %1763 = vmatprep.subr.mxu0 0.0
        %1764 = vmatpush1.msra.mxu0 0.0
        %1765 = vmatprep.subr.mxu0 0.0
        %1766 = vmatpush1.msra.mxu0 0.0
        %1767 = vmatprep.subr.mxu0 0.0
        %1768 = vmatpush1.msra.mxu0 0.0
        %1769 = vmatprep.subr.mxu0 0.0
        %1770 = vmatpush1.msra.mxu0 0.0
        %1771 = vmatprep.subr.mxu0 0.0
        %1772 = vmatpush1.msra.mxu0 0.0
        %1773 = vmatprep.subr.mxu0 0.0
        %1774 = vmatpush1.msra.mxu0 0.0
        %1775 = vmatprep.subr.mxu0 0.0
        %1776 = vmatpush1.msra.mxu0 0.0
        %1777 = vmatprep.subr.mxu0 0.0
        %1778 = vmatpush1.msra.mxu0 0.0
        %1779 = vmatprep.subr.mxu0 0.0
        %1780 = vmatpush1.msra.mxu0 0.0
        %1781 = vmatprep.subr.mxu0 0.0
        %1782 = vmatpush1.msra.mxu0 0.0
        %1783 = vmatprep.subr.mxu0 0.0
        %1784 = vmatpush1.msra.mxu0 0.0
        %1785 = vmatprep.subr.mxu0 0.0
        %1786 = vmatpush1.msra.mxu0 0.0
        %1787 = vmatprep.subr.mxu0 0.0
        %1788 = vmatpush1.msra.mxu0 0.0
        %1789 = vmatprep.subr.mxu0 0.0
        %1790 = vmatpush1.msra.mxu0 0.0
        %1791 = vmatprep.subr.mxu0 0.0
        %1792 = vmatpush1.msra.mxu0 0.0
        %1793 = vmatprep.subr.mxu0 0.0
        %1794 = vmatpush1.msra.mxu0 0.0
        %1795 = vmatprep.subr.mxu0 0.0
        %1796 = vmatpush1.msra.mxu0 0.0
        %1797 = vmatprep.subr.mxu0 0.0
        %1798 = vmatpush1.msra.mxu0 0.0
        %1799 = vmatprep.subr.mxu0 0.0
        %1800 = vmatpush1.msra.mxu0 0.0
        %1801 = vmatprep.subr.mxu0 0.0
        %1802 = vmatpush1.msra.mxu0 0.0
        %1803 = vmatprep.subr.mxu0 0.0
        %1804 = vmatpush1.msra.mxu0 0.0
        %1805 = vmatprep.subr.mxu0 0.0
        %1806 = vmatpush1.msra.mxu0 0.0
        %1807 = vmatprep.subr.mxu0 0.0
        %1808 = vmatpush1.msra.mxu0 0.0
        %1809 = vmatprep.subr.mxu0 0.0
        %1810 = vmatpush1.msra.mxu0 0.0
        %1811 = vmatprep.subr.mxu0 0.0
        %1812 = vmatpush1.msra.mxu0 0.0
        %1813 = vmatprep.subr.mxu0 0.0
        %1814 = vmatpush1.msra.mxu0 0.0
        %1815 = vmatprep.mubr.f32.mxu0 0.0
        %1816 = vmatmul.mubr.f32.gmra.mrb[0].mxu0 %v1593
        %v1817 = vpop.f32.mrb[0].mxu0
        %v1818 = vadd.f32 0.0, %v1817
        %v1819 = vpop.f32.mrb[0].mxu0
        %1820 = vdwg.mxu0
        %v1821 = vlaneseq
        %v1822 = vshrl.u32 %v1821, 7
        %v1823 = vsub.s32 0, %v1822
        %v1824 = vrot.slane %v471, %v1823
        %v1825 = vld [vmem:[#allocation2 + $0x148] sm:$0xff]
        %v1826 = vld [vmem:[#allocation2 + $0x150] sm:$0xff]
        %v1827 = vld [vmem:[#allocation2 + $0x158] sm:$0xff]
        %v1828 = vld [vmem:[#allocation2 + $0x160] sm:$0xff]
        %v1829 = vld [vmem:[#allocation2 + $0x168] sm:$0x1]
        %v1830 = vlaneseq
        %v1831 = vshrl.u32 %v1830, 7
        %v1832 = vsub.s32 0, %v1831
        %v1833 = vrot.slane %v1829, %v1832
        %v1835 = vsel %vm239, %v1744, 0
        %1837 = vmatprep.subr.mxu0 0.0
        %1838 = vmatpush1.msra.mxu0 %v1825
        %1839 = vmatprep.subr.mxu0 0.0
        %1840 = vmatpush1.msra.mxu0 %v1826
        %1841 = vmatprep.subr.mxu0 0.0
        %1842 = vmatpush1.msra.mxu0 %v1827
        %1843 = vmatprep.subr.mxu0 0.0
        %1844 = vmatpush1.msra.mxu0 %v1828
        %1845 = vmatprep.subr.mxu0 0.0
        %1846 = vmatpush1.msra.mxu0 0.0
        %1847 = vmatprep.subr.mxu0 0.0
        %1848 = vmatpush1.msra.mxu0 0.0
        %1849 = vmatprep.subr.mxu0 0.0
        %1850 = vmatpush1.msra.mxu0 0.0
        %1851 = vmatprep.subr.mxu0 0.0
        %1852 = vmatpush1.msra.mxu0 0.0
        %1853 = vmatprep.subr.mxu0 0.0
        %1854 = vmatpush1.msra.mxu0 0.0
        %1855 = vmatprep.subr.mxu0 0.0
        %1856 = vmatpush1.msra.mxu0 0.0
        %1857 = vmatprep.subr.mxu0 0.0
        %1858 = vmatpush1.msra.mxu0 0.0
        %1859 = vmatprep.subr.mxu0 0.0
        %1860 = vmatpush1.msra.mxu0 0.0
        %1861 = vmatprep.subr.mxu0 0.0
        %1862 = vmatpush1.msra.mxu0 0.0
        %1863 = vmatprep.subr.mxu0 0.0
        %1864 = vmatpush1.msra.mxu0 0.0
        %1865 = vmatprep.subr.mxu0 0.0
        %1866 = vmatpush1.msra.mxu0 0.0
        %1867 = vmatprep.subr.mxu0 0.0
        %1868 = vmatpush1.msra.mxu0 0.0
        %1869 = vmatprep.subr.mxu0 0.0
        %1870 = vmatpush1.msra.mxu0 0.0
        %1871 = vmatprep.subr.mxu0 0.0
        %1872 = vmatpush1.msra.mxu0 0.0
        %1873 = vmatprep.subr.mxu0 0.0
        %1874 = vmatpush1.msra.mxu0 0.0
        %1875 = vmatprep.subr.mxu0 0.0
        %1876 = vmatpush1.msra.mxu0 0.0
        %1877 = vmatprep.subr.mxu0 0.0
        %1878 = vmatpush1.msra.mxu0 0.0
        %1879 = vmatprep.subr.mxu0 0.0
        %1880 = vmatpush1.msra.mxu0 0.0
        %1881 = vmatprep.subr.mxu0 0.0
        %1882 = vmatpush1.msra.mxu0 0.0
        %1883 = vmatprep.subr.mxu0 0.0
        %1884 = vmatpush1.msra.mxu0 0.0
        %1885 = vmatprep.subr.mxu0 0.0
        %1886 = vmatpush1.msra.mxu0 0.0
        %1887 = vmatprep.subr.mxu0 0.0
        %1888 = vmatpush1.msra.mxu0 0.0
        %1889 = vmatprep.subr.mxu0 0.0
        %1890 = vmatpush1.msra.mxu0 0.0
        %1891 = vmatprep.subr.mxu0 0.0
        %1892 = vmatpush1.msra.mxu0 0.0
        %1893 = vmatprep.subr.mxu0 0.0
        %1894 = vmatpush1.msra.mxu0 0.0
        %1895 = vmatprep.subr.mxu0 0.0
        %1896 = vmatpush1.msra.mxu0 0.0
        %1897 = vmatprep.subr.mxu0 0.0
        %1898 = vmatpush1.msra.mxu0 0.0
        %1899 = vmatprep.subr.mxu0 0.0
        %1900 = vmatpush1.msra.mxu0 0.0
        %1901 = vmatprep.mubr.f32.mxu0 0.0
        %1902 = vmatmul.mubr.f32.gmra.mrb[0].mxu0 %v1835
        %v1903 = vpop.f32.mrb[0].mxu0
        %v1904 = vadd.f32 %v1833, %v1903
        %v1905 = vpop.f32.mrb[0].mxu0
        %1906 = vdwg.mxu0
        %1911 = vrot.lane.b32.xlu0 %v1825, 96
        %v1912 = vpop.permute.xlu0 %1911
        %1913 = vrot.lane.b32.xlu0 %v1826, 96
        %v1914 = vpop.permute.xlu0 %1913
        %1915 = vrot.lane.b32.xlu0 %v1827, 96
        %v1916 = vpop.permute.xlu0 %1915
        %1917 = vrot.lane.b32.xlu0 %v1828, 96
        %v1918 = vpop.permute.xlu0 %1917
        %1924 = vrot.lane.b32.xlu0 %v1833, 96
        %v1925 = vpop.permute.xlu0 %1924
        %v1928 = vsel %vm239, %v1824, 0
        %1930 = vmatprep.subr.mxu0 0.0
        %1931 = vmatpush1.msra.mxu0 %v1912
        %1932 = vmatprep.subr.mxu0 0.0
        %1933 = vmatpush1.msra.mxu0 %v1914
        %1934 = vmatprep.subr.mxu0 0.0
        %1935 = vmatpush1.msra.mxu0 %v1916
        %1936 = vmatprep.subr.mxu0 0.0
        %1937 = vmatpush1.msra.mxu0 %v1918
        %1938 = vmatprep.subr.mxu0 0.0
        %1939 = vmatpush1.msra.mxu0 0.0
        %1940 = vmatprep.subr.mxu0 0.0
        %1941 = vmatpush1.msra.mxu0 0.0
        %1942 = vmatprep.subr.mxu0 0.0
        %1943 = vmatpush1.msra.mxu0 0.0
        %1944 = vmatprep.subr.mxu0 0.0
        %1945 = vmatpush1.msra.mxu0 0.0
        %1946 = vmatprep.subr.mxu0 0.0
        %1947 = vmatpush1.msra.mxu0 0.0
        %1948 = vmatprep.subr.mxu0 0.0
        %1949 = vmatpush1.msra.mxu0 0.0
        %1950 = vmatprep.subr.mxu0 0.0
        %1951 = vmatpush1.msra.mxu0 0.0
        %1952 = vmatprep.subr.mxu0 0.0
        %1953 = vmatpush1.msra.mxu0 0.0
        %1954 = vmatprep.subr.mxu0 0.0
        %1955 = vmatpush1.msra.mxu0 0.0
        %1956 = vmatprep.subr.mxu0 0.0
        %1957 = vmatpush1.msra.mxu0 0.0
        %1958 = vmatprep.subr.mxu0 0.0
        %1959 = vmatpush1.msra.mxu0 0.0
        %1960 = vmatprep.subr.mxu0 0.0
        %1961 = vmatpush1.msra.mxu0 0.0
        %1962 = vmatprep.subr.mxu0 0.0
        %1963 = vmatpush1.msra.mxu0 0.0
        %1964 = vmatprep.subr.mxu0 0.0
        %1965 = vmatpush1.msra.mxu0 0.0
        %1966 = vmatprep.subr.mxu0 0.0
        %1967 = vmatpush1.msra.mxu0 0.0
        %1968 = vmatprep.subr.mxu0 0.0
        %1969 = vmatpush1.msra.mxu0 0.0
        %1970 = vmatprep.subr.mxu0 0.0
        %1971 = vmatpush1.msra.mxu0 0.0
        %1972 = vmatprep.subr.mxu0 0.0
        %1973 = vmatpush1.msra.mxu0 0.0
        %1974 = vmatprep.subr.mxu0 0.0
        %1975 = vmatpush1.msra.mxu0 0.0
        %1976 = vmatprep.subr.mxu0 0.0
        %1977 = vmatpush1.msra.mxu0 0.0
        %1978 = vmatprep.subr.mxu0 0.0
        %1979 = vmatpush1.msra.mxu0 0.0
        %1980 = vmatprep.subr.mxu0 0.0
        %1981 = vmatpush1.msra.mxu0 0.0
        %1982 = vmatprep.subr.mxu0 0.0
        %1983 = vmatpush1.msra.mxu0 0.0
        %1984 = vmatprep.subr.mxu0 0.0
        %1985 = vmatpush1.msra.mxu0 0.0
        %1986 = vmatprep.subr.mxu0 0.0
        %1987 = vmatpush1.msra.mxu0 0.0
        %1988 = vmatprep.subr.mxu0 0.0
        %1989 = vmatpush1.msra.mxu0 0.0
        %1990 = vmatprep.subr.mxu0 0.0
        %1991 = vmatpush1.msra.mxu0 0.0
        %1992 = vmatprep.subr.mxu0 0.0
        %1993 = vmatpush1.msra.mxu0 0.0
        %1994 = vmatprep.mubr.f32.mxu0 0.0
        %1995 = vmatmul.mubr.f32.gmra.mrb[0].mxu0 %v1928
        %v1996 = vpop.f32.mrb[0].mxu0
        %v1997 = vadd.f32 %v1925, %v1996
        %v1998 = vpop.f32.mrb[0].mxu0
        %1999 = vdwg.mxu0
        %v2000 = vmul.f32 %v1997, %v570
        %v2001 = vmul.f32 %v1997, %v571
        %v2002 = vmul.f32 %v1997, %v572
        %v2003 = vmul.f32 %v1997, %v573
        %v2004 = vmul.f32 %v1997, %v574
        %v2005 = vmul.f32 %v1997, %v575
        %v2006 = vmul.f32 %v1997, %v576
        %v2007 = vmul.f32 %v1997, %v577
        %v2008 = vmul.f32 %v1997, %v595
        %v2009 = vmul.f32 %v1997, %v597
        %v2010 = vmul.f32 %v1997, %v599
        %v2011 = vmul.f32 %v1997, %v601
        %v2012 = vmul.f32 %v1997, %v603
        %v2013 = vmul.f32 %v1997, %v605
        %v2014 = vmul.f32 %v1997, %v607
        %v2015 = vmul.f32 %v1997, %v609
        %v2017 = vsel %vm239, %v1904, 0
        %v2020 = vsel %vm239, %v2000, 0
        %v2023 = vsel %vm239, %v2001, 0
        %v2026 = vsel %vm239, %v2002, 0
        %v2029 = vsel %vm239, %v2003, 0
        %v2032 = vsel %vm239, %v2004, 0
        %v2035 = vsel %vm239, %v2005, 0
        %v2038 = vsel %vm239, %v2006, 0
        %v2041 = vsel %vm239, %v2007, 0
        %2043 = vmatprep.subr.mxu0 0.0
        %2044 = vmatpush1.xpose.msra.mxu0 %v2020
        %2045 = vmatprep.subr.mxu0 0.0
        %2046 = vmatpush1.xpose.msra.mxu0 %v2023
        %2047 = vmatprep.subr.mxu0 0.0
        %2048 = vmatpush1.xpose.msra.mxu0 %v2026
        %2049 = vmatprep.subr.mxu0 0.0
        %2050 = vmatpush1.xpose.msra.mxu0 %v2029
        %2051 = vmatprep.subr.mxu0 0.0
        %2052 = vmatpush1.xpose.msra.mxu0 %v2032
        %2053 = vmatprep.subr.mxu0 0.0
        %2054 = vmatpush1.xpose.msra.mxu0 %v2035
        %2055 = vmatprep.subr.mxu0 0.0
        %2056 = vmatpush1.xpose.msra.mxu0 %v2038
        %2057 = vmatprep.subr.mxu0 0.0
        %2058 = vmatpush1.xpose.msra.mxu0 %v2041
        %2059 = vmatprep.subr.mxu0 0.0
        %2060 = vmatpush1.xpose.msra.mxu0 0.0
        %2061 = vmatprep.subr.mxu0 0.0
        %2062 = vmatpush1.xpose.msra.mxu0 0.0
        %2063 = vmatprep.subr.mxu0 0.0
        %2064 = vmatpush1.xpose.msra.mxu0 0.0
        %2065 = vmatprep.subr.mxu0 0.0
        %2066 = vmatpush1.xpose.msra.mxu0 0.0
        %2067 = vmatprep.subr.mxu0 0.0
        %2068 = vmatpush1.xpose.msra.mxu0 0.0
        %2069 = vmatprep.subr.mxu0 0.0
        %2070 = vmatpush1.xpose.msra.mxu0 0.0
        %2071 = vmatprep.subr.mxu0 0.0
        %2072 = vmatpush1.xpose.msra.mxu0 0.0
        %2073 = vmatprep.subr.mxu0 0.0
        %2074 = vmatpush1.xpose.msra.mxu0 0.0
        %2075 = vmatprep.subr.mxu0 0.0
        %2076 = vmatpush1.xpose.msra.mxu0 0.0
        %2077 = vmatprep.subr.mxu0 0.0
        %2078 = vmatpush1.xpose.msra.mxu0 0.0
        %2079 = vmatprep.subr.mxu0 0.0
        %2080 = vmatpush1.xpose.msra.mxu0 0.0
        %2081 = vmatprep.subr.mxu0 0.0
        %2082 = vmatpush1.xpose.msra.mxu0 0.0
        %2083 = vmatprep.subr.mxu0 0.0
        %2084 = vmatpush1.xpose.msra.mxu0 0.0
        %2085 = vmatprep.subr.mxu0 0.0
        %2086 = vmatpush1.xpose.msra.mxu0 0.0
        %2087 = vmatprep.subr.mxu0 0.0
        %2088 = vmatpush1.xpose.msra.mxu0 0.0
        %2089 = vmatprep.subr.mxu0 0.0
        %2090 = vmatpush1.xpose.msra.mxu0 0.0
        %2091 = vmatprep.subr.mxu0 0.0
        %2092 = vmatpush1.xpose.msra.mxu0 0.0
        %2093 = vmatprep.subr.mxu0 0.0
        %2094 = vmatpush1.xpose.msra.mxu0 0.0
        %2095 = vmatprep.subr.mxu0 0.0
        %2096 = vmatpush1.xpose.msra.mxu0 0.0
        %2097 = vmatprep.subr.mxu0 0.0
        %2098 = vmatpush1.xpose.msra.mxu0 0.0
        %2099 = vmatprep.subr.mxu0 0.0
        %2100 = vmatpush1.xpose.msra.mxu0 0.0
        %2101 = vmatprep.subr.mxu0 0.0
        %2102 = vmatpush1.xpose.msra.mxu0 0.0
        %2103 = vmatprep.subr.mxu0 0.0
        %2104 = vmatpush1.xpose.msra.mxu0 0.0
        %2105 = vmatprep.subr.mxu0 0.0
        %2106 = vmatpush1.xpose.msra.mxu0 0.0
        %2107 = vmatprep.mubr.f32.mxu0 0.0
        %2108 = vmatmul.mubr.f32.gmra.mrb[0].mxu0 %v2017
        %v2109 = vpop.f32.mrb[0].mxu0
        %v2110 = vadd.f32 0.0, %v2109
        %v2111 = vpop.f32.mrb[0].mxu0
        %2112 = vdwg.mxu0
        %v2113 = vsel %vm771, %v2110, -inf
        %2114 = vmax.xlane.f32.xlu0 %v2113
        %v2115 = vpop.xlane.xlu0 %2114
        %v2116 = vsub.f32 %v2110, %v2115
        %v2117 = vmul.f32 %v2116, 1.442695
        %v2118 = vpow.pop %v2117
        %v2120 = vsel %vm771, %v2118, 0
        %2122 = vmatprep.subr.mxu0 0.0
        %2123 = vmatpush1.msra.mxu0 %v578
        %2124 = vmatprep.subr.mxu0 0.0
        %2125 = vmatpush1.msra.mxu0 %v579
        %2126 = vmatprep.subr.mxu0 0.0
        %2127 = vmatpush1.msra.mxu0 %v580
        %2128 = vmatprep.subr.mxu0 0.0
        %2129 = vmatpush1.msra.mxu0 %v581
        %2130 = vmatprep.subr.mxu0 0.0
        %2131 = vmatpush1.msra.mxu0 %v582
        %2132 = vmatprep.subr.mxu0 0.0
        %2133 = vmatpush1.msra.mxu0 %v583
        %2134 = vmatprep.subr.mxu0 0.0
        %2135 = vmatpush1.msra.mxu0 %v584
        %2136 = vmatprep.subr.mxu0 0.0
        %2137 = vmatpush1.msra.mxu0 %v585
        %2138 = vmatprep.subr.mxu0 0.0
        %2139 = vmatpush1.msra.mxu0 0.0
        %2140 = vmatprep.subr.mxu0 0.0
        %2141 = vmatpush1.msra.mxu0 0.0
        %2142 = vmatprep.subr.mxu0 0.0
        %2143 = vmatpush1.msra.mxu0 0.0
        %2144 = vmatprep.subr.mxu0 0.0
        %2145 = vmatpush1.msra.mxu0 0.0
        %2146 = vmatprep.subr.mxu0 0.0
        %2147 = vmatpush1.msra.mxu0 0.0
        %2148 = vmatprep.subr.mxu0 0.0
        %2149 = vmatpush1.msra.mxu0 0.0
        %2150 = vmatprep.subr.mxu0 0.0
        %2151 = vmatpush1.msra.mxu0 0.0
        %2152 = vmatprep.subr.mxu0 0.0
        %2153 = vmatpush1.msra.mxu0 0.0
        %2154 = vmatprep.subr.mxu0 0.0
        %2155 = vmatpush1.msra.mxu0 0.0
        %2156 = vmatprep.subr.mxu0 0.0
        %2157 = vmatpush1.msra.mxu0 0.0
        %2158 = vmatprep.subr.mxu0 0.0
        %2159 = vmatpush1.msra.mxu0 0.0
        %2160 = vmatprep.subr.mxu0 0.0
        %2161 = vmatpush1.msra.mxu0 0.0
        %2162 = vmatprep.subr.mxu0 0.0
        %2163 = vmatpush1.msra.mxu0 0.0
        %2164 = vmatprep.subr.mxu0 0.0
        %2165 = vmatpush1.msra.mxu0 0.0
        %2166 = vmatprep.subr.mxu0 0.0
        %2167 = vmatpush1.msra.mxu0 0.0
        %2168 = vmatprep.subr.mxu0 0.0
        %2169 = vmatpush1.msra.mxu0 0.0
        %2170 = vmatprep.subr.mxu0 0.0
        %2171 = vmatpush1.msra.mxu0 0.0
        %2172 = vmatprep.subr.mxu0 0.0
        %2173 = vmatpush1.msra.mxu0 0.0
        %2174 = vmatprep.subr.mxu0 0.0
        %2175 = vmatpush1.msra.mxu0 0.0
        %2176 = vmatprep.subr.mxu0 0.0
        %2177 = vmatpush1.msra.mxu0 0.0
        %2178 = vmatprep.subr.mxu0 0.0
        %2179 = vmatpush1.msra.mxu0 0.0
        %2180 = vmatprep.subr.mxu0 0.0
        %2181 = vmatpush1.msra.mxu0 0.0
        %2182 = vmatprep.subr.mxu0 0.0
        %2183 = vmatpush1.msra.mxu0 0.0
        %2184 = vmatprep.subr.mxu0 0.0
        %2185 = vmatpush1.msra.mxu0 0.0
        %2186 = vmatprep.mubr.f32.mxu0 0.0
        %2187 = vmatmul.mubr.f32.gmra.mrb[0].mxu0 %v2120
        %v2188 = vpop.f32.mrb[0].mxu0
        %v2189 = vadd.f32 0.0, %v2188
        %v2190 = vpop.f32.mrb[0].mxu0
        %2191 = vdwg.mxu0
        %v2192 = vrcp.pop %v2189
        %v2193 = vmul.f32 %v2118, %v2192
        %2202 = vrot.lane.b32.xlu0 %v2008, 96
        %v2203 = vpop.permute.xlu0 %2202
        %2204 = vrot.lane.b32.xlu0 %v2009, 96
        %v2205 = vpop.permute.xlu0 %2204
        %2206 = vrot.lane.b32.xlu0 %v2010, 96
        %v2207 = vpop.permute.xlu0 %2206
        %2208 = vrot.lane.b32.xlu0 %v2011, 96
        %v2209 = vpop.permute.xlu0 %2208
        %2210 = vrot.lane.b32.xlu0 %v2012, 96
        %v2211 = vpop.permute.xlu0 %2210
        %2212 = vrot.lane.b32.xlu0 %v2013, 96
        %v2213 = vpop.permute.xlu0 %2212
        %2214 = vrot.lane.b32.xlu0 %v2014, 96
        %v2215 = vpop.permute.xlu0 %2214
        %2216 = vrot.lane.b32.xlu0 %v2015, 96
        %v2217 = vpop.permute.xlu0 %2216
        %v2227 = vsel %vm771, %v2193, 0
        %2229 = vmatprep.subr.mxu0 0.0
        %2230 = vmatpush1.msra.mxu0 %v2203
        %2231 = vmatprep.subr.mxu0 0.0
        %2232 = vmatpush1.msra.mxu0 %v2205
        %2233 = vmatprep.subr.mxu0 0.0
        %2234 = vmatpush1.msra.mxu0 %v2207
        %2235 = vmatprep.subr.mxu0 0.0
        %2236 = vmatpush1.msra.mxu0 %v2209
        %2237 = vmatprep.subr.mxu0 0.0
        %2238 = vmatpush1.msra.mxu0 %v2211
        %2239 = vmatprep.subr.mxu0 0.0
        %2240 = vmatpush1.msra.mxu0 %v2213
        %2241 = vmatprep.subr.mxu0 0.0
        %2242 = vmatpush1.msra.mxu0 %v2215
        %2243 = vmatprep.subr.mxu0 0.0
        %2244 = vmatpush1.msra.mxu0 %v2217
        %2245 = vmatprep.subr.mxu0 0.0
        %2246 = vmatpush1.msra.mxu0 0.0
        %2247 = vmatprep.subr.mxu0 0.0
        %2248 = vmatpush1.msra.mxu0 0.0
        %2249 = vmatprep.subr.mxu0 0.0
        %2250 = vmatpush1.msra.mxu0 0.0
        %2251 = vmatprep.subr.mxu0 0.0
        %2252 = vmatpush1.msra.mxu0 0.0
        %2253 = vmatprep.subr.mxu0 0.0
        %2254 = vmatpush1.msra.mxu0 0.0
        %2255 = vmatprep.subr.mxu0 0.0
        %2256 = vmatpush1.msra.mxu0 0.0
        %2257 = vmatprep.subr.mxu0 0.0
        %2258 = vmatpush1.msra.mxu0 0.0
        %2259 = vmatprep.subr.mxu0 0.0
        %2260 = vmatpush1.msra.mxu0 0.0
        %2261 = vmatprep.subr.mxu0 0.0
        %2262 = vmatpush1.msra.mxu0 0.0
        %2263 = vmatprep.subr.mxu0 0.0
        %2264 = vmatpush1.msra.mxu0 0.0
        %2265 = vmatprep.subr.mxu0 0.0
        %2266 = vmatpush1.msra.mxu0 0.0
        %2267 = vmatprep.subr.mxu0 0.0
        %2268 = vmatpush1.msra.mxu0 0.0
        %2269 = vmatprep.subr.mxu0 0.0
        %2270 = vmatpush1.msra.mxu0 0.0
        %2271 = vmatprep.subr.mxu0 0.0
        %2272 = vmatpush1.msra.mxu0 0.0
        %2273 = vmatprep.subr.mxu0 0.0
        %2274 = vmatpush1.msra.mxu0 0.0
        %2275 = vmatprep.subr.mxu0 0.0
        %2276 = vmatpush1.msra.mxu0 0.0
        %2277 = vmatprep.subr.mxu0 0.0
        %2278 = vmatpush1.msra.mxu0 0.0
        %2279 = vmatprep.subr.mxu0 0.0
        %2280 = vmatpush1.msra.mxu0 0.0
        %2281 = vmatprep.subr.mxu0 0.0
        %2282 = vmatpush1.msra.mxu0 0.0
        %2283 = vmatprep.subr.mxu0 0.0
        %2284 = vmatpush1.msra.mxu0 0.0
        %2285 = vmatprep.subr.mxu0 0.0
        %2286 = vmatpush1.msra.mxu0 0.0
        %2287 = vmatprep.subr.mxu0 0.0
        %2288 = vmatpush1.msra.mxu0 0.0
        %2289 = vmatprep.subr.mxu0 0.0
        %2290 = vmatpush1.msra.mxu0 0.0
        %2291 = vmatprep.subr.mxu0 0.0
        %2292 = vmatpush1.msra.mxu0 0.0
        %2293 = vmatprep.mubr.f32.mxu0 0.0
        %2294 = vmatmul.mubr.f32.gmra.mrb[0].mxu0 %v2227
        %v2295 = vpop.f32.mrb[0].mxu0
        %v2296 = vadd.f32 0.0, %v2295
        %v2297 = vpop.f32.mrb[0].mxu0
        %2298 = vdwg.mxu0
        %v2299 = vld [vmem:[#allocation2 + $0x170] sm:$0xff]
        %v2300 = vld [vmem:[#allocation2 + $0x178] sm:$0xff]
        %v2301 = vld [vmem:[#allocation2 + $0x180] sm:$0xff]
        %v2302 = vld [vmem:[#allocation2 + $0x188] sm:$0xff]
        %v2303 = vld [vmem:[#allocation2 + $0x190] sm:$0x1]
        %v2304 = vlaneseq
        %v2305 = vshrl.u32 %v2304, 7
        %v2306 = vsub.s32 0, %v2305
        %v2307 = vrot.slane %v2303, %v2306
        %v2309 = vsel %vm239, %v2296, 0
        %2311 = vmatprep.subr.mxu0 0.0
        %2312 = vmatpush1.msra.mxu0 %v2299
        %2313 = vmatprep.subr.mxu0 0.0
        %2314 = vmatpush1.msra.mxu0 %v2300
        %2315 = vmatprep.subr.mxu0 0.0
        %2316 = vmatpush1.msra.mxu0 %v2301
        %2317 = vmatprep.subr.mxu0 0.0
        %2318 = vmatpush1.msra.mxu0 %v2302
        %2319 = vmatprep.subr.mxu0 0.0
        %2320 = vmatpush1.msra.mxu0 0.0
        %2321 = vmatprep.subr.mxu0 0.0
        %2322 = vmatpush1.msra.mxu0 0.0
        %2323 = vmatprep.subr.mxu0 0.0
        %2324 = vmatpush1.msra.mxu0 0.0
        %2325 = vmatprep.subr.mxu0 0.0
        %2326 = vmatpush1.msra.mxu0 0.0
        %2327 = vmatprep.subr.mxu0 0.0
        %2328 = vmatpush1.msra.mxu0 0.0
        %2329 = vmatprep.subr.mxu0 0.0
        %2330 = vmatpush1.msra.mxu0 0.0
        %2331 = vmatprep.subr.mxu0 0.0
        %2332 = vmatpush1.msra.mxu0 0.0
        %2333 = vmatprep.subr.mxu0 0.0
        %2334 = vmatpush1.msra.mxu0 0.0
        %2335 = vmatprep.subr.mxu0 0.0
        %2336 = vmatpush1.msra.mxu0 0.0
        %2337 = vmatprep.subr.mxu0 0.0
        %2338 = vmatpush1.msra.mxu0 0.0
        %2339 = vmatprep.subr.mxu0 0.0
        %2340 = vmatpush1.msra.mxu0 0.0
        %2341 = vmatprep.subr.mxu0 0.0
        %2342 = vmatpush1.msra.mxu0 0.0
        %2343 = vmatprep.subr.mxu0 0.0
        %2344 = vmatpush1.msra.mxu0 0.0
        %2345 = vmatprep.subr.mxu0 0.0
        %2346 = vmatpush1.msra.mxu0 0.0
        %2347 = vmatprep.subr.mxu0 0.0
        %2348 = vmatpush1.msra.mxu0 0.0
        %2349 = vmatprep.subr.mxu0 0.0
        %2350 = vmatpush1.msra.mxu0 0.0
        %2351 = vmatprep.subr.mxu0 0.0
        %2352 = vmatpush1.msra.mxu0 0.0
        %2353 = vmatprep.subr.mxu0 0.0
        %2354 = vmatpush1.msra.mxu0 0.0
        %2355 = vmatprep.subr.mxu0 0.0
        %2356 = vmatpush1.msra.mxu0 0.0
        %2357 = vmatprep.subr.mxu0 0.0
        %2358 = vmatpush1.msra.mxu0 0.0
        %2359 = vmatprep.subr.mxu0 0.0
        %2360 = vmatpush1.msra.mxu0 0.0
        %2361 = vmatprep.subr.mxu0 0.0
        %2362 = vmatpush1.msra.mxu0 0.0
        %2363 = vmatprep.subr.mxu0 0.0
        %2364 = vmatpush1.msra.mxu0 0.0
        %2365 = vmatprep.subr.mxu0 0.0
        %2366 = vmatpush1.msra.mxu0 0.0
        %2367 = vmatprep.subr.mxu0 0.0
        %2368 = vmatpush1.msra.mxu0 0.0
        %2369 = vmatprep.subr.mxu0 0.0
        %2370 = vmatpush1.msra.mxu0 0.0
        %2371 = vmatprep.subr.mxu0 0.0
        %2372 = vmatpush1.msra.mxu0 0.0
        %2373 = vmatprep.subr.mxu0 0.0
        %2374 = vmatpush1.msra.mxu0 0.0
        %2375 = vmatprep.mubr.f32.mxu0 0.0
        %2376 = vmatmul.mubr.f32.gmra.mrb[0].mxu0 %v2309
        %v2377 = vpop.f32.mrb[0].mxu0
        %v2378 = vadd.f32 %v2307, %v2377
        %v2379 = vpop.f32.mrb[0].mxu0
        %2380 = vdwg.mxu0
        %v2381 = vld [vmem:[#allocation2 + $0x198] sm:$0xff]
        %v2382 = vld [vmem:[#allocation2 + $0x1a0] sm:$0xff]
        %v2383 = vld [vmem:[#allocation2 + $0x1a8] sm:$0xff]
        %v2384 = vld [vmem:[#allocation2 + $0x1b0] sm:$0xff]
        %v2385 = vld [vmem:[#allocation2 + $0x1b8] sm:$0x1]
        %v2386 = vlaneseq
        %v2387 = vshrl.u32 %v2386, 7
        %v2388 = vsub.s32 0, %v2387
        %v2389 = vrot.slane %v2385, %v2388
        %v2391 = vsel %vm239, %v2378, 0
        %2393 = vmatprep.subr.mxu0 0.0
        %2394 = vmatpush1.msra.mxu0 %v2381
        %2395 = vmatprep.subr.mxu0 0.0
        %2396 = vmatpush1.msra.mxu0 %v2382
        %2397 = vmatprep.subr.mxu0 0.0
        %2398 = vmatpush1.msra.mxu0 %v2383
        %2399 = vmatprep.subr.mxu0 0.0
        %2400 = vmatpush1.msra.mxu0 %v2384
        %2401 = vmatprep.subr.mxu0 0.0
        %2402 = vmatpush1.msra.mxu0 0.0
        %2403 = vmatprep.subr.mxu0 0.0
        %2404 = vmatpush1.msra.mxu0 0.0
        %2405 = vmatprep.subr.mxu0 0.0
        %2406 = vmatpush1.msra.mxu0 0.0
        %2407 = vmatprep.subr.mxu0 0.0
        %2408 = vmatpush1.msra.mxu0 0.0
        %2409 = vmatprep.subr.mxu0 0.0
        %2410 = vmatpush1.msra.mxu0 0.0
        %2411 = vmatprep.subr.mxu0 0.0
        %2412 = vmatpush1.msra.mxu0 0.0
        %2413 = vmatprep.subr.mxu0 0.0
        %2414 = vmatpush1.msra.mxu0 0.0
        %2415 = vmatprep.subr.mxu0 0.0
        %2416 = vmatpush1.msra.mxu0 0.0
        %2417 = vmatprep.subr.mxu0 0.0
        %2418 = vmatpush1.msra.mxu0 0.0
        %2419 = vmatprep.subr.mxu0 0.0
        %2420 = vmatpush1.msra.mxu0 0.0
        %2421 = vmatprep.subr.mxu0 0.0
        %2422 = vmatpush1.msra.mxu0 0.0
        %2423 = vmatprep.subr.mxu0 0.0
        %2424 = vmatpush1.msra.mxu0 0.0
        %2425 = vmatprep.subr.mxu0 0.0
        %2426 = vmatpush1.msra.mxu0 0.0
        %2427 = vmatprep.subr.mxu0 0.0
        %2428 = vmatpush1.msra.mxu0 0.0
        %2429 = vmatprep.subr.mxu0 0.0
        %2430 = vmatpush1.msra.mxu0 0.0
        %2431 = vmatprep.subr.mxu0 0.0
        %2432 = vmatpush1.msra.mxu0 0.0
        %2433 = vmatprep.subr.mxu0 0.0
        %2434 = vmatpush1.msra.mxu0 0.0
        %2435 = vmatprep.subr.mxu0 0.0
        %2436 = vmatpush1.msra.mxu0 0.0
        %2437 = vmatprep.subr.mxu0 0.0
        %2438 = vmatpush1.msra.mxu0 0.0
        %2439 = vmatprep.subr.mxu0 0.0
        %2440 = vmatpush1.msra.mxu0 0.0
        %2441 = vmatprep.subr.mxu0 0.0
        %2442 = vmatpush1.msra.mxu0 0.0
        %2443 = vmatprep.subr.mxu0 0.0
        %2444 = vmatpush1.msra.mxu0 0.0
        %2445 = vmatprep.subr.mxu0 0.0
        %2446 = vmatpush1.msra.mxu0 0.0
        %2447 = vmatprep.subr.mxu0 0.0
        %2448 = vmatpush1.msra.mxu0 0.0
        %2449 = vmatprep.subr.mxu0 0.0
        %2450 = vmatpush1.msra.mxu0 0.0
        %2451 = vmatprep.subr.mxu0 0.0
        %2452 = vmatpush1.msra.mxu0 0.0
        %2453 = vmatprep.subr.mxu0 0.0
        %2454 = vmatpush1.msra.mxu0 0.0
        %2455 = vmatprep.subr.mxu0 0.0
        %2456 = vmatpush1.msra.mxu0 0.0
        %2457 = vmatprep.mubr.f32.mxu0 0.0
        %2458 = vmatmul.mubr.f32.gmra.mrb[0].mxu0 %v2391
        %v2459 = vpop.f32.mrb[0].mxu0
        %v2460 = vadd.f32 %v2389, %v2459
        %v2461 = vpop.f32.mrb[0].mxu0
        %2462 = vdwg.mxu0
        %v2463 = vmul.f32 %v2460, %v595
        %v2464 = vmul.f32 %v2460, %v597
        %v2465 = vmul.f32 %v2460, %v599
        %v2466 = vmul.f32 %v2460, %v601
        %v2467 = vmul.f32 %v2460, %v603
        %v2468 = vmul.f32 %v2460, %v605
        %v2469 = vmul.f32 %v2460, %v607
        %v2470 = vmul.f32 %v2460, %v609
        %v2471 = vmul.f32 %v2460, %v627
        %v2472 = vmul.f32 %v2460, %v629
        %v2473 = vmul.f32 %v2460, %v631
        %v2474 = vmul.f32 %v2460, %v633
        %v2475 = vmul.f32 %v2460, %v635
        %v2476 = vmul.f32 %v2460, %v637
        %v2477 = vmul.f32 %v2460, %v639
        %v2478 = vmul.f32 %v2460, %v641
        %2487 = vrot.lane.b32.xlu0 %v2463, 96
        %v2488 = vpop.permute.xlu0 %2487
        %2489 = vrot.lane.b32.xlu0 %v2464, 96
        %v2490 = vpop.permute.xlu0 %2489
        %2491 = vrot.lane.b32.xlu0 %v2465, 96
        %v2492 = vpop.permute.xlu0 %2491
        %2493 = vrot.lane.b32.xlu0 %v2466, 96
        %v2494 = vpop.permute.xlu0 %2493
        %2495 = vrot.lane.b32.xlu0 %v2467, 96
        %v2496 = vpop.permute.xlu0 %2495
        %2497 = vrot.lane.b32.xlu0 %v2468, 96
        %v2498 = vpop.permute.xlu0 %2497
        %2499 = vrot.lane.b32.xlu0 %v2469, 96
        %v2500 = vpop.permute.xlu0 %2499
        %2501 = vrot.lane.b32.xlu0 %v2470, 96
        %v2502 = vpop.permute.xlu0 %2501
        %v2504 = vsel %vm239, %v2460, 0
        %v2506 = vsel %vm239, %v2488, 0
        %v2508 = vsel %vm239, %v2490, 0
        %v2510 = vsel %vm239, %v2492, 0
        %v2512 = vsel %vm239, %v2494, 0
        %v2514 = vsel %vm239, %v2496, 0
        %v2516 = vsel %vm239, %v2498, 0
        %v2518 = vsel %vm239, %v2500, 0
        %v2520 = vsel %vm239, %v2502, 0
        %2522 = vmatprep.subr.mxu0 0.0
        %2523 = vmatpush1.xpose.msra.mxu0 %v2506
        %2524 = vmatprep.subr.mxu0 0.0
        %2525 = vmatpush1.xpose.msra.mxu0 %v2508
        %2526 = vmatprep.subr.mxu0 0.0
        %2527 = vmatpush1.xpose.msra.mxu0 %v2510
        %2528 = vmatprep.subr.mxu0 0.0
        %2529 = vmatpush1.xpose.msra.mxu0 %v2512
        %2530 = vmatprep.subr.mxu0 0.0
        %2531 = vmatpush1.xpose.msra.mxu0 %v2514
        %2532 = vmatprep.subr.mxu0 0.0
        %2533 = vmatpush1.xpose.msra.mxu0 %v2516
        %2534 = vmatprep.subr.mxu0 0.0
        %2535 = vmatpush1.xpose.msra.mxu0 %v2518
        %2536 = vmatprep.subr.mxu0 0.0
        %2537 = vmatpush1.xpose.msra.mxu0 %v2520
        %2538 = vmatprep.subr.mxu0 0.0
        %2539 = vmatpush1.xpose.msra.mxu0 0.0
        %2540 = vmatprep.subr.mxu0 0.0
        %2541 = vmatpush1.xpose.msra.mxu0 0.0
        %2542 = vmatprep.subr.mxu0 0.0
        %2543 = vmatpush1.xpose.msra.mxu0 0.0
        %2544 = vmatprep.subr.mxu0 0.0
        %2545 = vmatpush1.xpose.msra.mxu0 0.0
        %2546 = vmatprep.subr.mxu0 0.0
        %2547 = vmatpush1.xpose.msra.mxu0 0.0
        %2548 = vmatprep.subr.mxu0 0.0
        %2549 = vmatpush1.xpose.msra.mxu0 0.0
        %2550 = vmatprep.subr.mxu0 0.0
        %2551 = vmatpush1.xpose.msra.mxu0 0.0
        %2552 = vmatprep.subr.mxu0 0.0
        %2553 = vmatpush1.xpose.msra.mxu0 0.0
        %2554 = vmatprep.subr.mxu0 0.0
        %2555 = vmatpush1.xpose.msra.mxu0 0.0
        %2556 = vmatprep.subr.mxu0 0.0
        %2557 = vmatpush1.xpose.msra.mxu0 0.0
        %2558 = vmatprep.subr.mxu0 0.0
        %2559 = vmatpush1.xpose.msra.mxu0 0.0
        %2560 = vmatprep.subr.mxu0 0.0
        %2561 = vmatpush1.xpose.msra.mxu0 0.0
        %2562 = vmatprep.subr.mxu0 0.0
        %2563 = vmatpush1.xpose.msra.mxu0 0.0
        %2564 = vmatprep.subr.mxu0 0.0
        %2565 = vmatpush1.xpose.msra.mxu0 0.0
        %2566 = vmatprep.subr.mxu0 0.0
        %2567 = vmatpush1.xpose.msra.mxu0 0.0
        %2568 = vmatprep.subr.mxu0 0.0
        %2569 = vmatpush1.xpose.msra.mxu0 0.0
        %2570 = vmatprep.subr.mxu0 0.0
        %2571 = vmatpush1.xpose.msra.mxu0 0.0
        %2572 = vmatprep.subr.mxu0 0.0
        %2573 = vmatpush1.xpose.msra.mxu0 0.0
        %2574 = vmatprep.subr.mxu0 0.0
        %2575 = vmatpush1.xpose.msra.mxu0 0.0
        %2576 = vmatprep.subr.mxu0 0.0
        %2577 = vmatpush1.xpose.msra.mxu0 0.0
        %2578 = vmatprep.subr.mxu0 0.0
        %2579 = vmatpush1.xpose.msra.mxu0 0.0
        %2580 = vmatprep.subr.mxu0 0.0
        %2581 = vmatpush1.xpose.msra.mxu0 0.0
        %2582 = vmatprep.subr.mxu0 0.0
        %2583 = vmatpush1.xpose.msra.mxu0 0.0
        %2584 = vmatprep.subr.mxu0 0.0
        %2585 = vmatpush1.xpose.msra.mxu0 0.0
        %2586 = vmatprep.mubr.f32.mxu0 0.0
        %2587 = vmatmul.mubr.f32.gmra.mrb[0].mxu0 %v2504
        %v2588 = vpop.f32.mrb[0].mxu0
        %v2589 = vadd.f32 0.0, %v2588
        %v2590 = vpop.f32.mrb[0].mxu0
        %2591 = vdwg.mxu0
        %v2592 = vsel %vm771, %v2589, -inf
        %2593 = vmax.xlane.f32.xlu0 %v2592
        %v2594 = vpop.xlane.xlu0 %2593
        %v2595 = vsub.f32 %v2589, %v2594
        %v2596 = vmul.f32 %v2595, 1.442695
        %v2597 = vpow.pop %v2596
        %v2599 = vsel %vm771, %v2597, 0
        %2601 = vmatprep.subr.mxu0 0.0
        %2602 = vmatpush1.msra.mxu0 %v578
        %2603 = vmatprep.subr.mxu0 0.0
        %2604 = vmatpush1.msra.mxu0 %v579
        %2605 = vmatprep.subr.mxu0 0.0
        %2606 = vmatpush1.msra.mxu0 %v580
        %2607 = vmatprep.subr.mxu0 0.0
        %2608 = vmatpush1.msra.mxu0 %v581
        %2609 = vmatprep.subr.mxu0 0.0
        %2610 = vmatpush1.msra.mxu0 %v582
        %2611 = vmatprep.subr.mxu0 0.0
        %2612 = vmatpush1.msra.mxu0 %v583
        %2613 = vmatprep.subr.mxu0 0.0
        %2614 = vmatpush1.msra.mxu0 %v584
        %2615 = vmatprep.subr.mxu0 0.0
        %2616 = vmatpush1.msra.mxu0 %v585
        %2617 = vmatprep.subr.mxu0 0.0
        %2618 = vmatpush1.msra.mxu0 0.0
        %2619 = vmatprep.subr.mxu0 0.0
        %2620 = vmatpush1.msra.mxu0 0.0
        %2621 = vmatprep.subr.mxu0 0.0
        %2622 = vmatpush1.msra.mxu0 0.0
        %2623 = vmatprep.subr.mxu0 0.0
        %2624 = vmatpush1.msra.mxu0 0.0
        %2625 = vmatprep.subr.mxu0 0.0
        %2626 = vmatpush1.msra.mxu0 0.0
        %2627 = vmatprep.subr.mxu0 0.0
        %2628 = vmatpush1.msra.mxu0 0.0
        %2629 = vmatprep.subr.mxu0 0.0
        %2630 = vmatpush1.msra.mxu0 0.0
        %2631 = vmatprep.subr.mxu0 0.0
        %2632 = vmatpush1.msra.mxu0 0.0
        %2633 = vmatprep.subr.mxu0 0.0
        %2634 = vmatpush1.msra.mxu0 0.0
        %2635 = vmatprep.subr.mxu0 0.0
        %2636 = vmatpush1.msra.mxu0 0.0
        %2637 = vmatprep.subr.mxu0 0.0
        %2638 = vmatpush1.msra.mxu0 0.0
        %2639 = vmatprep.subr.mxu0 0.0
        %2640 = vmatpush1.msra.mxu0 0.0
        %2641 = vmatprep.subr.mxu0 0.0
        %2642 = vmatpush1.msra.mxu0 0.0
        %2643 = vmatprep.subr.mxu0 0.0
        %2644 = vmatpush1.msra.mxu0 0.0
        %2645 = vmatprep.subr.mxu0 0.0
        %2646 = vmatpush1.msra.mxu0 0.0
        %2647 = vmatprep.subr.mxu0 0.0
        %2648 = vmatpush1.msra.mxu0 0.0
        %2649 = vmatprep.subr.mxu0 0.0
        %2650 = vmatpush1.msra.mxu0 0.0
        %2651 = vmatprep.subr.mxu0 0.0
        %2652 = vmatpush1.msra.mxu0 0.0
        %2653 = vmatprep.subr.mxu0 0.0
        %2654 = vmatpush1.msra.mxu0 0.0
        %2655 = vmatprep.subr.mxu0 0.0
        %2656 = vmatpush1.msra.mxu0 0.0
        %2657 = vmatprep.subr.mxu0 0.0
        %2658 = vmatpush1.msra.mxu0 0.0
        %2659 = vmatprep.subr.mxu0 0.0
        %2660 = vmatpush1.msra.mxu0 0.0
        %2661 = vmatprep.subr.mxu0 0.0
        %2662 = vmatpush1.msra.mxu0 0.0
        %2663 = vmatprep.subr.mxu0 0.0
        %2664 = vmatpush1.msra.mxu0 0.0
        %2665 = vmatprep.mubr.f32.mxu0 0.0
        %2666 = vmatmul.mubr.f32.gmra.mrb[0].mxu0 %v2599
        %v2667 = vpop.f32.mrb[0].mxu0
        %v2668 = vadd.f32 0.0, %v2667
        %v2669 = vpop.f32.mrb[0].mxu0
        %2670 = vdwg.mxu0
        %v2671 = vrcp.pop %v2668
        %v2672 = vmul.f32 %v2597, %v2671
        %2681 = vrot.lane.b32.xlu0 %v2471, 64
        %v2682 = vpop.permute.xlu0 %2681
        %2683 = vrot.lane.b32.xlu0 %v2472, 64
        %v2684 = vpop.permute.xlu0 %2683
        %2685 = vrot.lane.b32.xlu0 %v2473, 64
        %v2686 = vpop.permute.xlu0 %2685
        %2687 = vrot.lane.b32.xlu0 %v2474, 64
        %v2688 = vpop.permute.xlu0 %2687
        %2689 = vrot.lane.b32.xlu0 %v2475, 64
        %v2690 = vpop.permute.xlu0 %2689
        %2691 = vrot.lane.b32.xlu0 %v2476, 64
        %v2692 = vpop.permute.xlu0 %2691
        %2693 = vrot.lane.b32.xlu0 %v2477, 64
        %v2694 = vpop.permute.xlu0 %2693
        %2695 = vrot.lane.b32.xlu0 %v2478, 64
        %v2696 = vpop.permute.xlu0 %2695
        %v2706 = vsel %vm771, %v2672, 0
        %2708 = vmatprep.subr.mxu0 0.0
        %2709 = vmatpush1.msra.mxu0 %v2682
        %2710 = vmatprep.subr.mxu0 0.0
        %2711 = vmatpush1.msra.mxu0 %v2684
        %2712 = vmatprep.subr.mxu0 0.0
        %2713 = vmatpush1.msra.mxu0 %v2686
        %2714 = vmatprep.subr.mxu0 0.0
        %2715 = vmatpush1.msra.mxu0 %v2688
        %2716 = vmatprep.subr.mxu0 0.0
        %2717 = vmatpush1.msra.mxu0 %v2690
        %2718 = vmatprep.subr.mxu0 0.0
        %2719 = vmatpush1.msra.mxu0 %v2692
        %2720 = vmatprep.subr.mxu0 0.0
        %2721 = vmatpush1.msra.mxu0 %v2694
        %2722 = vmatprep.subr.mxu0 0.0
        %2723 = vmatpush1.msra.mxu0 %v2696
        %2724 = vmatprep.subr.mxu0 0.0
        %2725 = vmatpush1.msra.mxu0 0.0
        %2726 = vmatprep.subr.mxu0 0.0
        %2727 = vmatpush1.msra.mxu0 0.0
        %2728 = vmatprep.subr.mxu0 0.0
        %2729 = vmatpush1.msra.mxu0 0.0
        %2730 = vmatprep.subr.mxu0 0.0
        %2731 = vmatpush1.msra.mxu0 0.0
        %2732 = vmatprep.subr.mxu0 0.0
        %2733 = vmatpush1.msra.mxu0 0.0
        %2734 = vmatprep.subr.mxu0 0.0
        %2735 = vmatpush1.msra.mxu0 0.0
        %2736 = vmatprep.subr.mxu0 0.0
        %2737 = vmatpush1.msra.mxu0 0.0
        %2738 = vmatprep.subr.mxu0 0.0
        %2739 = vmatpush1.msra.mxu0 0.0
        %2740 = vmatprep.subr.mxu0 0.0
        %2741 = vmatpush1.msra.mxu0 0.0
        %2742 = vmatprep.subr.mxu0 0.0
        %2743 = vmatpush1.msra.mxu0 0.0
        %2744 = vmatprep.subr.mxu0 0.0
        %2745 = vmatpush1.msra.mxu0 0.0
        %2746 = vmatprep.subr.mxu0 0.0
        %2747 = vmatpush1.msra.mxu0 0.0
        %2748 = vmatprep.subr.mxu0 0.0
        %2749 = vmatpush1.msra.mxu0 0.0
        %2750 = vmatprep.subr.mxu0 0.0
        %2751 = vmatpush1.msra.mxu0 0.0
        %2752 = vmatprep.subr.mxu0 0.0
        %2753 = vmatpush1.msra.mxu0 0.0
        %2754 = vmatprep.subr.mxu0 0.0
        %2755 = vmatpush1.msra.mxu0 0.0
        %2756 = vmatprep.subr.mxu0 0.0
        %2757 = vmatpush1.msra.mxu0 0.0
        %2758 = vmatprep.subr.mxu0 0.0
        %2759 = vmatpush1.msra.mxu0 0.0
        %2760 = vmatprep.subr.mxu0 0.0
        %2761 = vmatpush1.msra.mxu0 0.0
        %2762 = vmatprep.subr.mxu0 0.0
        %2763 = vmatpush1.msra.mxu0 0.0
        %2764 = vmatprep.subr.mxu0 0.0
        %2765 = vmatpush1.msra.mxu0 0.0
        %2766 = vmatprep.subr.mxu0 0.0
        %2767 = vmatpush1.msra.mxu0 0.0
        %2768 = vmatprep.subr.mxu0 0.0
        %2769 = vmatpush1.msra.mxu0 0.0
        %2770 = vmatprep.subr.mxu0 0.0
        %2771 = vmatpush1.msra.mxu0 0.0
        %2772 = vmatprep.mubr.f32.mxu0 0.0
        %2773 = vmatmul.mubr.f32.gmra.mrb[0].mxu0 %v2706
        %v2774 = vpop.f32.mrb[0].mxu0
        %v2775 = vadd.f32 0.0, %v2774
        %v2776 = vpop.f32.mrb[0].mxu0
        %2777 = vdwg.mxu0
        %v2778 = vld [vmem:[#allocation2 + $0x1c0] sm:$0xff]
        %v2779 = vld [vmem:[#allocation2 + $0x1c8] sm:$0xff]
        %v2780 = vld [vmem:[#allocation2 + $0x1d0] sm:$0xff]
        %v2781 = vld [vmem:[#allocation2 + $0x1d8] sm:$0xff]
        %v2782 = vld [vmem:[#allocation2 + $0x1e0] sm:$0x1]
        %v2783 = vlaneseq
        %v2784 = vshrl.u32 %v2783, 7
        %v2785 = vsub.s32 0, %v2784
        %v2786 = vrot.slane %v2782, %v2785
        %v2788 = vsel %vm239, %v2775, 0
        %2790 = vmatprep.subr.mxu0 0.0
        %2791 = vmatpush1.msra.mxu0 %v2778
        %2792 = vmatprep.subr.mxu0 0.0
        %2793 = vmatpush1.msra.mxu0 %v2779
        %2794 = vmatprep.subr.mxu0 0.0
        %2795 = vmatpush1.msra.mxu0 %v2780
        %2796 = vmatprep.subr.mxu0 0.0
        %2797 = vmatpush1.msra.mxu0 %v2781
        %2798 = vmatprep.subr.mxu0 0.0
        %2799 = vmatpush1.msra.mxu0 0.0
        %2800 = vmatprep.subr.mxu0 0.0
        %2801 = vmatpush1.msra.mxu0 0.0
        %2802 = vmatprep.subr.mxu0 0.0
        %2803 = vmatpush1.msra.mxu0 0.0
        %2804 = vmatprep.subr.mxu0 0.0
        %2805 = vmatpush1.msra.mxu0 0.0
        %2806 = vmatprep.subr.mxu0 0.0
        %2807 = vmatpush1.msra.mxu0 0.0
        %2808 = vmatprep.subr.mxu0 0.0
        %2809 = vmatpush1.msra.mxu0 0.0
        %2810 = vmatprep.subr.mxu0 0.0
        %2811 = vmatpush1.msra.mxu0 0.0
        %2812 = vmatprep.subr.mxu0 0.0
        %2813 = vmatpush1.msra.mxu0 0.0
        %2814 = vmatprep.subr.mxu0 0.0
        %2815 = vmatpush1.msra.mxu0 0.0
        %2816 = vmatprep.subr.mxu0 0.0
        %2817 = vmatpush1.msra.mxu0 0.0
        %2818 = vmatprep.subr.mxu0 0.0
        %2819 = vmatpush1.msra.mxu0 0.0
        %2820 = vmatprep.subr.mxu0 0.0
        %2821 = vmatpush1.msra.mxu0 0.0
        %2822 = vmatprep.subr.mxu0 0.0
        %2823 = vmatpush1.msra.mxu0 0.0
        %2824 = vmatprep.subr.mxu0 0.0
        %2825 = vmatpush1.msra.mxu0 0.0
        %2826 = vmatprep.subr.mxu0 0.0
        %2827 = vmatpush1.msra.mxu0 0.0
        %2828 = vmatprep.subr.mxu0 0.0
        %2829 = vmatpush1.msra.mxu0 0.0
        %2830 = vmatprep.subr.mxu0 0.0
        %2831 = vmatpush1.msra.mxu0 0.0
        %2832 = vmatprep.subr.mxu0 0.0
        %2833 = vmatpush1.msra.mxu0 0.0
        %2834 = vmatprep.subr.mxu0 0.0
        %2835 = vmatpush1.msra.mxu0 0.0
        %2836 = vmatprep.subr.mxu0 0.0
        %2837 = vmatpush1.msra.mxu0 0.0
        %2838 = vmatprep.subr.mxu0 0.0
        %2839 = vmatpush1.msra.mxu0 0.0
        %2840 = vmatprep.subr.mxu0 0.0
        %2841 = vmatpush1.msra.mxu0 0.0
        %2842 = vmatprep.subr.mxu0 0.0
        %2843 = vmatpush1.msra.mxu0 0.0
        %2844 = vmatprep.subr.mxu0 0.0
        %2845 = vmatpush1.msra.mxu0 0.0
        %2846 = vmatprep.subr.mxu0 0.0
        %2847 = vmatpush1.msra.mxu0 0.0
        %2848 = vmatprep.subr.mxu0 0.0
        %2849 = vmatpush1.msra.mxu0 0.0
        %2850 = vmatprep.subr.mxu0 0.0
        %2851 = vmatpush1.msra.mxu0 0.0
        %2852 = vmatprep.subr.mxu0 0.0
        %2853 = vmatpush1.msra.mxu0 0.0
        %2854 = vmatprep.mubr.f32.mxu0 0.0
        %2855 = vmatmul.mubr.f32.gmra.mrb[0].mxu0 %v2788
        %v2856 = vpop.f32.mrb[0].mxu0
        %v2857 = vadd.f32 %v2786, %v2856
        %v2858 = vpop.f32.mrb[0].mxu0
        %2859 = vdwg.mxu0
        %2860 = vmatprep.subr.mxu0 0.0
        %2861 = vmatpush1.msra.mxu0 %v1040
        %2862 = vmatprep.subr.mxu0 0.0
        %2863 = vmatpush1.msra.mxu0 %v1041
        %2864 = vmatprep.subr.mxu0 0.0
        %2865 = vmatpush1.msra.mxu0 %v1042
        %2866 = vmatprep.subr.mxu0 0.0
        %2867 = vmatpush1.msra.mxu0 %v1043
        %2868 = vmatprep.subr.mxu0 0.0
        %2869 = vmatpush1.msra.mxu0 %v1044
        %2870 = vmatprep.subr.mxu0 0.0
        %2871 = vmatpush1.msra.mxu0 %v1045
        %2872 = vmatprep.subr.mxu0 0.0
        %2873 = vmatpush1.msra.mxu0 %v1046
        %2874 = vmatprep.subr.mxu0 0.0
        %2875 = vmatpush1.msra.mxu0 %v1047
        %2876 = vmatprep.subr.mxu0 0.0
        %2877 = vmatpush1.msra.mxu0 0.0
        %2878 = vmatprep.subr.mxu0 0.0
        %2879 = vmatpush1.msra.mxu0 0.0
        %2880 = vmatprep.subr.mxu0 0.0
        %2881 = vmatpush1.msra.mxu0 0.0
        %2882 = vmatprep.subr.mxu0 0.0
        %2883 = vmatpush1.msra.mxu0 0.0
        %2884 = vmatprep.subr.mxu0 0.0
        %2885 = vmatpush1.msra.mxu0 0.0
        %2886 = vmatprep.subr.mxu0 0.0
        %2887 = vmatpush1.msra.mxu0 0.0
        %2888 = vmatprep.subr.mxu0 0.0
        %2889 = vmatpush1.msra.mxu0 0.0
        %2890 = vmatprep.subr.mxu0 0.0
        %2891 = vmatpush1.msra.mxu0 0.0
        %2892 = vmatprep.subr.mxu0 0.0
        %2893 = vmatpush1.msra.mxu0 0.0
        %2894 = vmatprep.subr.mxu0 0.0
        %2895 = vmatpush1.msra.mxu0 0.0
        %2896 = vmatprep.subr.mxu0 0.0
        %2897 = vmatpush1.msra.mxu0 0.0
        %2898 = vmatprep.subr.mxu0 0.0
        %2899 = vmatpush1.msra.mxu0 0.0
        %2900 = vmatprep.subr.mxu0 0.0
        %2901 = vmatpush1.msra.mxu0 0.0
        %2902 = vmatprep.subr.mxu0 0.0
        %2903 = vmatpush1.msra.mxu0 0.0
        %2904 = vmatprep.subr.mxu0 0.0
        %2905 = vmatpush1.msra.mxu0 0.0
        %2906 = vmatprep.subr.mxu0 0.0
        %2907 = vmatpush1.msra.mxu0 0.0
        %2908 = vmatprep.subr.mxu0 0.0
        %2909 = vmatpush1.msra.mxu0 0.0
        %2910 = vmatprep.subr.mxu0 0.0
        %2911 = vmatpush1.msra.mxu0 0.0
        %2912 = vmatprep.subr.mxu0 0.0
        %2913 = vmatpush1.msra.mxu0 0.0
        %2914 = vmatprep.subr.mxu0 0.0
        %2915 = vmatpush1.msra.mxu0 0.0
        %2916 = vmatprep.subr.mxu0 0.0
        %2917 = vmatpush1.msra.mxu0 0.0
        %2918 = vmatprep.subr.mxu0 0.0
        %2919 = vmatpush1.msra.mxu0 0.0
        %2920 = vmatprep.subr.mxu0 0.0
        %2921 = vmatpush1.msra.mxu0 0.0
        %2922 = vmatprep.subr.mxu0 0.0
        %2923 = vmatpush1.msra.mxu0 0.0
        %2924 = vmatprep.mubr.f32.mxu0 0.0
        %2925 = vmatmul.mubr.f32.gmra.mrb[0].mxu0 %v2706
        %v2926 = vpop.f32.mrb[0].mxu0
        %v2927 = vadd.f32 0.0, %v2926
        %v2928 = vpop.f32.mrb[0].mxu0
        %2929 = vdwg.mxu0
        %v2930 = vld [vmem:[#allocation2 + $0x1e8] sm:$0xff]
        %v2931 = vld [vmem:[#allocation2 + $0x1f0] sm:$0xff]
        %v2932 = vld [vmem:[#allocation2 + $0x1f8] sm:$0xff]
        %v2933 = vld [vmem:[#allocation2 + $0x200] sm:$0xff]
        %v2934 = vld [vmem:[#allocation2 + $0x208] sm:$0x1]
        %v2935 = vlaneseq
        %v2936 = vshrl.u32 %v2935, 7
        %v2937 = vsub.s32 0, %v2936
        %v2938 = vrot.slane %v2934, %v2937
        %v2940 = vsel %vm239, %v2857, 0
        %2942 = vmatprep.subr.mxu0 0.0
        %2943 = vmatpush1.msra.mxu0 %v2930
        %2944 = vmatprep.subr.mxu0 0.0
        %2945 = vmatpush1.msra.mxu0 %v2931
        %2946 = vmatprep.subr.mxu0 0.0
        %2947 = vmatpush1.msra.mxu0 %v2932
        %2948 = vmatprep.subr.mxu0 0.0
        %2949 = vmatpush1.msra.mxu0 %v2933
        %2950 = vmatprep.subr.mxu0 0.0
        %2951 = vmatpush1.msra.mxu0 0.0
        %2952 = vmatprep.subr.mxu0 0.0
        %2953 = vmatpush1.msra.mxu0 0.0
        %2954 = vmatprep.subr.mxu0 0.0
        %2955 = vmatpush1.msra.mxu0 0.0
        %2956 = vmatprep.subr.mxu0 0.0
        %2957 = vmatpush1.msra.mxu0 0.0
        %2958 = vmatprep.subr.mxu0 0.0
        %2959 = vmatpush1.msra.mxu0 0.0
        %2960 = vmatprep.subr.mxu0 0.0
        %2961 = vmatpush1.msra.mxu0 0.0
        %2962 = vmatprep.subr.mxu0 0.0
        %2963 = vmatpush1.msra.mxu0 0.0
        %2964 = vmatprep.subr.mxu0 0.0
        %2965 = vmatpush1.msra.mxu0 0.0
        %2966 = vmatprep.subr.mxu0 0.0
        %2967 = vmatpush1.msra.mxu0 0.0
        %2968 = vmatprep.subr.mxu0 0.0
        %2969 = vmatpush1.msra.mxu0 0.0
        %2970 = vmatprep.subr.mxu0 0.0
        %2971 = vmatpush1.msra.mxu0 0.0
        %2972 = vmatprep.subr.mxu0 0.0
        %2973 = vmatpush1.msra.mxu0 0.0
        %2974 = vmatprep.subr.mxu0 0.0
        %2975 = vmatpush1.msra.mxu0 0.0
        %2976 = vmatprep.subr.mxu0 0.0
        %2977 = vmatpush1.msra.mxu0 0.0
        %2978 = vmatprep.subr.mxu0 0.0
        %2979 = vmatpush1.msra.mxu0 0.0
        %2980 = vmatprep.subr.mxu0 0.0
        %2981 = vmatpush1.msra.mxu0 0.0
        %2982 = vmatprep.subr.mxu0 0.0
        %2983 = vmatpush1.msra.mxu0 0.0
        %2984 = vmatprep.subr.mxu0 0.0
        %2985 = vmatpush1.msra.mxu0 0.0
        %2986 = vmatprep.subr.mxu0 0.0
        %2987 = vmatpush1.msra.mxu0 0.0
        %2988 = vmatprep.subr.mxu0 0.0
        %2989 = vmatpush1.msra.mxu0 0.0
        %2990 = vmatprep.subr.mxu0 0.0
        %2991 = vmatpush1.msra.mxu0 0.0
        %2992 = vmatprep.subr.mxu0 0.0
        %2993 = vmatpush1.msra.mxu0 0.0
        %2994 = vmatprep.subr.mxu0 0.0
        %2995 = vmatpush1.msra.mxu0 0.0
        %2996 = vmatprep.subr.mxu0 0.0
        %2997 = vmatpush1.msra.mxu0 0.0
        %2998 = vmatprep.subr.mxu0 0.0
        %2999 = vmatpush1.msra.mxu0 0.0
        %3000 = vmatprep.subr.mxu0 0.0
        %3001 = vmatpush1.msra.mxu0 0.0
        %3002 = vmatprep.subr.mxu0 0.0
        %3003 = vmatpush1.msra.mxu0 0.0
        %3004 = vmatprep.subr.mxu0 0.0
        %3005 = vmatpush1.msra.mxu0 0.0
        %3006 = vmatprep.mubr.f32.mxu0 0.0
        %3007 = vmatmul.mubr.f32.gmra.mrb[0].mxu0 %v2940
        %v3008 = vpop.f32.mrb[0].mxu0
        %v3009 = vadd.f32 %v2938, %v3008
        %v3010 = vpop.f32.mrb[0].mxu0
        %3011 = vdwg.mxu0
        %3016 = vrot.lane.b32.xlu0 %v2930, 96
        %v3017 = vpop.permute.xlu0 %3016
        %3018 = vrot.lane.b32.xlu0 %v2931, 96
        %v3019 = vpop.permute.xlu0 %3018
        %3020 = vrot.lane.b32.xlu0 %v2932, 96
        %v3021 = vpop.permute.xlu0 %3020
        %3022 = vrot.lane.b32.xlu0 %v2933, 96
        %v3023 = vpop.permute.xlu0 %3022
        %3029 = vrot.lane.b32.xlu0 %v2938, 96
        %v3030 = vpop.permute.xlu0 %3029
        %v3033 = vsel %vm239, %v375, 0
        %3035 = vmatprep.subr.mxu0 0.0
        %3036 = vmatpush1.msra.mxu0 %v3017
        %3037 = vmatprep.subr.mxu0 0.0
        %3038 = vmatpush1.msra.mxu0 %v3019
        %3039 = vmatprep.subr.mxu0 0.0
        %3040 = vmatpush1.msra.mxu0 %v3021
        %3041 = vmatprep.subr.mxu0 0.0
        %3042 = vmatpush1.msra.mxu0 %v3023
        %3043 = vmatprep.subr.mxu0 0.0
        %3044 = vmatpush1.msra.mxu0 0.0
        %3045 = vmatprep.subr.mxu0 0.0
        %3046 = vmatpush1.msra.mxu0 0.0
        %3047 = vmatprep.subr.mxu0 0.0
        %3048 = vmatpush1.msra.mxu0 0.0
        %3049 = vmatprep.subr.mxu0 0.0
        %3050 = vmatpush1.msra.mxu0 0.0
        %3051 = vmatprep.subr.mxu0 0.0
        %3052 = vmatpush1.msra.mxu0 0.0
        %3053 = vmatprep.subr.mxu0 0.0
        %3054 = vmatpush1.msra.mxu0 0.0
        %3055 = vmatprep.subr.mxu0 0.0
        %3056 = vmatpush1.msra.mxu0 0.0
        %3057 = vmatprep.subr.mxu0 0.0
        %3058 = vmatpush1.msra.mxu0 0.0
        %3059 = vmatprep.subr.mxu0 0.0
        %3060 = vmatpush1.msra.mxu0 0.0
        %3061 = vmatprep.subr.mxu0 0.0
        %3062 = vmatpush1.msra.mxu0 0.0
        %3063 = vmatprep.subr.mxu0 0.0
        %3064 = vmatpush1.msra.mxu0 0.0
        %3065 = vmatprep.subr.mxu0 0.0
        %3066 = vmatpush1.msra.mxu0 0.0
        %3067 = vmatprep.subr.mxu0 0.0
        %3068 = vmatpush1.msra.mxu0 0.0
        %3069 = vmatprep.subr.mxu0 0.0
        %3070 = vmatpush1.msra.mxu0 0.0
        %3071 = vmatprep.subr.mxu0 0.0
        %3072 = vmatpush1.msra.mxu0 0.0
        %3073 = vmatprep.subr.mxu0 0.0
        %3074 = vmatpush1.msra.mxu0 0.0
        %3075 = vmatprep.subr.mxu0 0.0
        %3076 = vmatpush1.msra.mxu0 0.0
        %3077 = vmatprep.subr.mxu0 0.0
        %3078 = vmatpush1.msra.mxu0 0.0
        %3079 = vmatprep.subr.mxu0 0.0
        %3080 = vmatpush1.msra.mxu0 0.0
        %3081 = vmatprep.subr.mxu0 0.0
        %3082 = vmatpush1.msra.mxu0 0.0
        %3083 = vmatprep.subr.mxu0 0.0
        %3084 = vmatpush1.msra.mxu0 0.0
        %3085 = vmatprep.subr.mxu0 0.0
        %3086 = vmatpush1.msra.mxu0 0.0
        %3087 = vmatprep.subr.mxu0 0.0
        %3088 = vmatpush1.msra.mxu0 0.0
        %3089 = vmatprep.subr.mxu0 0.0
        %3090 = vmatpush1.msra.mxu0 0.0
        %3091 = vmatprep.subr.mxu0 0.0
        %3092 = vmatpush1.msra.mxu0 0.0
        %3093 = vmatprep.subr.mxu0 0.0
        %3094 = vmatpush1.msra.mxu0 0.0
        %3095 = vmatprep.subr.mxu0 0.0
        %3096 = vmatpush1.msra.mxu0 0.0
        %3097 = vmatprep.subr.mxu0 0.0
        %3098 = vmatpush1.msra.mxu0 0.0
        %3099 = vmatprep.mubr.f32.mxu0 0.0
        %3100 = vmatmul.mubr.f32.gmra.mrb[0].mxu0 %v3033
        %v3101 = vpop.f32.mrb[0].mxu0
        %v3102 = vadd.f32 %v3030, %v3101
        %v3103 = vpop.f32.mrb[0].mxu0
        %3104 = vdwg.mxu0
        %v3105 = vmul.f32 %v3102, %v570
        %v3106 = vmul.f32 %v3102, %v571
        %v3107 = vmul.f32 %v3102, %v572
        %v3108 = vmul.f32 %v3102, %v573
        %v3109 = vmul.f32 %v3102, %v574
        %v3110 = vmul.f32 %v3102, %v575
        %v3111 = vmul.f32 %v3102, %v576
        %v3112 = vmul.f32 %v3102, %v577
        %v3113 = vmul.f32 %v3102, %v595
        %v3114 = vmul.f32 %v3102, %v597
        %v3115 = vmul.f32 %v3102, %v599
        %v3116 = vmul.f32 %v3102, %v601
        %v3117 = vmul.f32 %v3102, %v603
        %v3118 = vmul.f32 %v3102, %v605
        %v3119 = vmul.f32 %v3102, %v607
        %v3120 = vmul.f32 %v3102, %v609
        %v3122 = vsel %vm239, %v3009, 0
        %v3125 = vsel %vm239, %v3105, 0
        %v3128 = vsel %vm239, %v3106, 0
        %v3131 = vsel %vm239, %v3107, 0
        %v3134 = vsel %vm239, %v3108, 0
        %v3137 = vsel %vm239, %v3109, 0
        %v3140 = vsel %vm239, %v3110, 0
        %v3143 = vsel %vm239, %v3111, 0
        %v3146 = vsel %vm239, %v3112, 0
        %3148 = vmatprep.subr.mxu0 0.0
        %3149 = vmatpush1.xpose.msra.mxu0 %v3125
        %3150 = vmatprep.subr.mxu0 0.0
        %3151 = vmatpush1.xpose.msra.mxu0 %v3128
        %3152 = vmatprep.subr.mxu0 0.0
        %3153 = vmatpush1.xpose.msra.mxu0 %v3131
        %3154 = vmatprep.subr.mxu0 0.0
        %3155 = vmatpush1.xpose.msra.mxu0 %v3134
        %3156 = vmatprep.subr.mxu0 0.0
        %3157 = vmatpush1.xpose.msra.mxu0 %v3137
        %3158 = vmatprep.subr.mxu0 0.0
        %3159 = vmatpush1.xpose.msra.mxu0 %v3140
        %3160 = vmatprep.subr.mxu0 0.0
        %3161 = vmatpush1.xpose.msra.mxu0 %v3143
        %3162 = vmatprep.subr.mxu0 0.0
        %3163 = vmatpush1.xpose.msra.mxu0 %v3146
        %3164 = vmatprep.subr.mxu0 0.0
        %3165 = vmatpush1.xpose.msra.mxu0 0.0
        %3166 = vmatprep.subr.mxu0 0.0
        %3167 = vmatpush1.xpose.msra.mxu0 0.0
        %3168 = vmatprep.subr.mxu0 0.0
        %3169 = vmatpush1.xpose.msra.mxu0 0.0
        %3170 = vmatprep.subr.mxu0 0.0
        %3171 = vmatpush1.xpose.msra.mxu0 0.0
        %3172 = vmatprep.subr.mxu0 0.0
        %3173 = vmatpush1.xpose.msra.mxu0 0.0
        %3174 = vmatprep.subr.mxu0 0.0
        %3175 = vmatpush1.xpose.msra.mxu0 0.0
        %3176 = vmatprep.subr.mxu0 0.0
        %3177 = vmatpush1.xpose.msra.mxu0 0.0
        %3178 = vmatprep.subr.mxu0 0.0
        %3179 = vmatpush1.xpose.msra.mxu0 0.0
        %3180 = vmatprep.subr.mxu0 0.0
        %3181 = vmatpush1.xpose.msra.mxu0 0.0
        %3182 = vmatprep.subr.mxu0 0.0
        %3183 = vmatpush1.xpose.msra.mxu0 0.0
        %3184 = vmatprep.subr.mxu0 0.0
        %3185 = vmatpush1.xpose.msra.mxu0 0.0
        %3186 = vmatprep.subr.mxu0 0.0
        %3187 = vmatpush1.xpose.msra.mxu0 0.0
        %3188 = vmatprep.subr.mxu0 0.0
        %3189 = vmatpush1.xpose.msra.mxu0 0.0
        %3190 = vmatprep.subr.mxu0 0.0
        %3191 = vmatpush1.xpose.msra.mxu0 0.0
        %3192 = vmatprep.subr.mxu0 0.0
        %3193 = vmatpush1.xpose.msra.mxu0 0.0
        %3194 = vmatprep.subr.mxu0 0.0
        %3195 = vmatpush1.xpose.msra.mxu0 0.0
        %3196 = vmatprep.subr.mxu0 0.0
        %3197 = vmatpush1.xpose.msra.mxu0 0.0
        %3198 = vmatprep.subr.mxu0 0.0
        %3199 = vmatpush1.xpose.msra.mxu0 0.0
        %3200 = vmatprep.subr.mxu0 0.0
        %3201 = vmatpush1.xpose.msra.mxu0 0.0
        %3202 = vmatprep.subr.mxu0 0.0
        %3203 = vmatpush1.xpose.msra.mxu0 0.0
        %3204 = vmatprep.subr.mxu0 0.0
        %3205 = vmatpush1.xpose.msra.mxu0 0.0
        %3206 = vmatprep.subr.mxu0 0.0
        %3207 = vmatpush1.xpose.msra.mxu0 0.0
        %3208 = vmatprep.subr.mxu0 0.0
        %3209 = vmatpush1.xpose.msra.mxu0 0.0
        %3210 = vmatprep.subr.mxu0 0.0
        %3211 = vmatpush1.xpose.msra.mxu0 0.0
        %3212 = vmatprep.mubr.f32.mxu0 0.0
        %3213 = vmatmul.mubr.f32.gmra.mrb[0].mxu0 %v3122
        %v3214 = vpop.f32.mrb[0].mxu0
        %v3215 = vadd.f32 0.0, %v3214
        %v3216 = vpop.f32.mrb[0].mxu0
        %3217 = vdwg.mxu0
        %3218 = vrot.lane.b32.xlu0 %v154, 83
        %v3219 = vpop.permute.xlu0 %3218
        %3222 = vrot.lane.b32.xlu0 %v154, 99
        %v3223 = vpop.permute.xlu0 %3222
        %3225 = vrot.lane.b32.xlu0 %v154, 107
        %v3226 = vpop.permute.xlu0 %3225
        %3228 = vrot.lane.b32.xlu0 %v154, 115
        %v3229 = vpop.permute.xlu0 %3228
        %3231 = vrot.lane.b32.xlu0 %v154, 123
        %v3232 = vpop.permute.xlu0 %3231
        %3234 = vrot.lane.b32.xlu0 %v154, 3
        %v3235 = vpop.permute.xlu0 %3234
        %3237 = vrot.lane.b32.xlu0 %v154, 11
        %v3238 = vpop.permute.xlu0 %3237
        %v3240 = vsel %vm382, %v3219, %v1202
        %v3241 = vsel %vm164, %v3240, %v3223
        %vm3242 = vcmask 195584
        %v3243 = vsel %vm3242, %v3241, %v3226
        %v3244 = vsel %vm239, %v3243, %v3229
        %vm3245 = vcmask 326656
        %v3246 = vsel %vm3245, %v3244, %v3232
        %vm3247 = vcmask 392192
        %v3248 = vsel %vm3247, %v3246, %v3235
        %vm3249 = vcmask 457728
        %v3250 = vsel %vm3249, %v3248, %v3238
        %vm3251 = vcmp.lt.f32.partialorder %v3250, 0.5
        %v3252 = vsel %vm3251, -1e+09, %v3215
        %v3253 = vsel %vm771, %v3252, -inf
        %3254 = vmax.xlane.f32.xlu0 %v3253
        %v3255 = vpop.xlane.xlu0 %3254
        %v3256 = vsub.f32 %v3252, %v3255
        %v3257 = vmul.f32 %v3256, 1.442695
        %v3258 = vpow.pop %v3257
        %v3260 = vsel %vm771, %v3258, 0
        %3262 = vmatprep.subr.mxu0 0.0
        %3263 = vmatpush1.msra.mxu0 %v578
        %3264 = vmatprep.subr.mxu0 0.0
        %3265 = vmatpush1.msra.mxu0 %v579
        %3266 = vmatprep.subr.mxu0 0.0
        %3267 = vmatpush1.msra.mxu0 %v580
        %3268 = vmatprep.subr.mxu0 0.0
        %3269 = vmatpush1.msra.mxu0 %v581
        %3270 = vmatprep.subr.mxu0 0.0
        %3271 = vmatpush1.msra.mxu0 %v582
        %3272 = vmatprep.subr.mxu0 0.0
        %3273 = vmatpush1.msra.mxu0 %v583
        %3274 = vmatprep.subr.mxu0 0.0
        %3275 = vmatpush1.msra.mxu0 %v584
        %3276 = vmatprep.subr.mxu0 0.0
        %3277 = vmatpush1.msra.mxu0 %v585
        %3278 = vmatprep.subr.mxu0 0.0
        %3279 = vmatpush1.msra.mxu0 0.0
        %3280 = vmatprep.subr.mxu0 0.0
        %3281 = vmatpush1.msra.mxu0 0.0
        %3282 = vmatprep.subr.mxu0 0.0
        %3283 = vmatpush1.msra.mxu0 0.0
        %3284 = vmatprep.subr.mxu0 0.0
        %3285 = vmatpush1.msra.mxu0 0.0
        %3286 = vmatprep.subr.mxu0 0.0
        %3287 = vmatpush1.msra.mxu0 0.0
        %3288 = vmatprep.subr.mxu0 0.0
        %3289 = vmatpush1.msra.mxu0 0.0
        %3290 = vmatprep.subr.mxu0 0.0
        %3291 = vmatpush1.msra.mxu0 0.0
        %3292 = vmatprep.subr.mxu0 0.0
        %3293 = vmatpush1.msra.mxu0 0.0
        %3294 = vmatprep.subr.mxu0 0.0
        %3295 = vmatpush1.msra.mxu0 0.0
        %3296 = vmatprep.subr.mxu0 0.0
        %3297 = vmatpush1.msra.mxu0 0.0
        %3298 = vmatprep.subr.mxu0 0.0
        %3299 = vmatpush1.msra.mxu0 0.0
        %3300 = vmatprep.subr.mxu0 0.0
        %3301 = vmatpush1.msra.mxu0 0.0
        %3302 = vmatprep.subr.mxu0 0.0
        %3303 = vmatpush1.msra.mxu0 0.0
        %3304 = vmatprep.subr.mxu0 0.0
        %3305 = vmatpush1.msra.mxu0 0.0
        %3306 = vmatprep.subr.mxu0 0.0
        %3307 = vmatpush1.msra.mxu0 0.0
        %3308 = vmatprep.subr.mxu0 0.0
        %3309 = vmatpush1.msra.mxu0 0.0
        %3310 = vmatprep.subr.mxu0 0.0
        %3311 = vmatpush1.msra.mxu0 0.0
        %3312 = vmatprep.subr.mxu0 0.0
        %3313 = vmatpush1.msra.mxu0 0.0
        %3314 = vmatprep.subr.mxu0 0.0
        %3315 = vmatpush1.msra.mxu0 0.0
        %3316 = vmatprep.subr.mxu0 0.0
        %3317 = vmatpush1.msra.mxu0 0.0
        %3318 = vmatprep.subr.mxu0 0.0
        %3319 = vmatpush1.msra.mxu0 0.0
        %3320 = vmatprep.subr.mxu0 0.0
        %3321 = vmatpush1.msra.mxu0 0.0
        %3322 = vmatprep.subr.mxu0 0.0
        %3323 = vmatpush1.msra.mxu0 0.0
        %3324 = vmatprep.subr.mxu0 0.0
        %3325 = vmatpush1.msra.mxu0 0.0
        %3326 = vmatprep.mubr.f32.mxu0 0.0
        %3327 = vmatmul.mubr.f32.gmra.mrb[0].mxu0 %v3260
        %v3328 = vpop.f32.mrb[0].mxu0
        %v3329 = vadd.f32 0.0, %v3328
        %v3330 = vpop.f32.mrb[0].mxu0
        %3331 = vdwg.mxu0
        %v3332 = vrcp.pop %v3329
        %v3333 = vmul.f32 %v3258, %v3332
        %3342 = vrot.lane.b32.xlu0 %v3113, 96
        %v3343 = vpop.permute.xlu0 %3342
        %3344 = vrot.lane.b32.xlu0 %v3114, 96
        %v3345 = vpop.permute.xlu0 %3344
        %3346 = vrot.lane.b32.xlu0 %v3115, 96
        %v3347 = vpop.permute.xlu0 %3346
        %3348 = vrot.lane.b32.xlu0 %v3116, 96
        %v3349 = vpop.permute.xlu0 %3348
        %3350 = vrot.lane.b32.xlu0 %v3117, 96
        %v3351 = vpop.permute.xlu0 %3350
        %3352 = vrot.lane.b32.xlu0 %v3118, 96
        %v3353 = vpop.permute.xlu0 %3352
        %3354 = vrot.lane.b32.xlu0 %v3119, 96
        %v3355 = vpop.permute.xlu0 %3354
        %3356 = vrot.lane.b32.xlu0 %v3120, 96
        %v3357 = vpop.permute.xlu0 %3356
        %v3367 = vsel %vm771, %v3333, 0
        %3369 = vmatprep.subr.mxu0 0.0
        %3370 = vmatpush1.msra.mxu0 %v3343
        %3371 = vmatprep.subr.mxu0 0.0
        %3372 = vmatpush1.msra.mxu0 %v3345
        %3373 = vmatprep.subr.mxu0 0.0
        %3374 = vmatpush1.msra.mxu0 %v3347
        %3375 = vmatprep.subr.mxu0 0.0
        %3376 = vmatpush1.msra.mxu0 %v3349
        %3377 = vmatprep.subr.mxu0 0.0
        %3378 = vmatpush1.msra.mxu0 %v3351
        %3379 = vmatprep.subr.mxu0 0.0
        %3380 = vmatpush1.msra.mxu0 %v3353
        %3381 = vmatprep.subr.mxu0 0.0
        %3382 = vmatpush1.msra.mxu0 %v3355
        %3383 = vmatprep.subr.mxu0 0.0
        %3384 = vmatpush1.msra.mxu0 %v3357
        %3385 = vmatprep.subr.mxu0 0.0
        %3386 = vmatpush1.msra.mxu0 0.0
        %3387 = vmatprep.subr.mxu0 0.0
        %3388 = vmatpush1.msra.mxu0 0.0
        %3389 = vmatprep.subr.mxu0 0.0
        %3390 = vmatpush1.msra.mxu0 0.0
        %3391 = vmatprep.subr.mxu0 0.0
        %3392 = vmatpush1.msra.mxu0 0.0
        %3393 = vmatprep.subr.mxu0 0.0
        %3394 = vmatpush1.msra.mxu0 0.0
        %3395 = vmatprep.subr.mxu0 0.0
        %3396 = vmatpush1.msra.mxu0 0.0
        %3397 = vmatprep.subr.mxu0 0.0
        %3398 = vmatpush1.msra.mxu0 0.0
        %3399 = vmatprep.subr.mxu0 0.0
        %3400 = vmatpush1.msra.mxu0 0.0
        %3401 = vmatprep.subr.mxu0 0.0
        %3402 = vmatpush1.msra.mxu0 0.0
        %3403 = vmatprep.subr.mxu0 0.0
        %3404 = vmatpush1.msra.mxu0 0.0
        %3405 = vmatprep.subr.mxu0 0.0
        %3406 = vmatpush1.msra.mxu0 0.0
        %3407 = vmatprep.subr.mxu0 0.0
        %3408 = vmatpush1.msra.mxu0 0.0
        %3409 = vmatprep.subr.mxu0 0.0
        %3410 = vmatpush1.msra.mxu0 0.0
        %3411 = vmatprep.subr.mxu0 0.0
        %3412 = vmatpush1.msra.mxu0 0.0
        %3413 = vmatprep.subr.mxu0 0.0
        %3414 = vmatpush1.msra.mxu0 0.0
        %3415 = vmatprep.subr.mxu0 0.0
        %3416 = vmatpush1.msra.mxu0 0.0
        %3417 = vmatprep.subr.mxu0 0.0
        %3418 = vmatpush1.msra.mxu0 0.0
        %3419 = vmatprep.subr.mxu0 0.0
        %3420 = vmatpush1.msra.mxu0 0.0
        %3421 = vmatprep.subr.mxu0 0.0
        %3422 = vmatpush1.msra.mxu0 0.0
        %3423 = vmatprep.subr.mxu0 0.0
        %3424 = vmatpush1.msra.mxu0 0.0
        %3425 = vmatprep.subr.mxu0 0.0
        %3426 = vmatpush1.msra.mxu0 0.0
        %3427 = vmatprep.subr.mxu0 0.0
        %3428 = vmatpush1.msra.mxu0 0.0
        %3429 = vmatprep.subr.mxu0 0.0
        %3430 = vmatpush1.msra.mxu0 0.0
        %3431 = vmatprep.subr.mxu0 0.0
        %3432 = vmatpush1.msra.mxu0 0.0
        %3433 = vmatprep.mubr.f32.mxu0 0.0
        %3434 = vmatmul.mubr.f32.gmra.mrb[0].mxu0 %v3367
        %v3435 = vpop.f32.mrb[0].mxu0
        %v3436 = vadd.f32 0.0, %v3435
        %v3437 = vpop.f32.mrb[0].mxu0
        %3438 = vdwg.mxu0
        %v3439 = vld [vmem:[#allocation2 + $0x210] sm:$0xff]
        %v3440 = vld [vmem:[#allocation2 + $0x218] sm:$0xff]
        %v3441 = vld [vmem:[#allocation2 + $0x220] sm:$0xff]
        %v3442 = vld [vmem:[#allocation2 + $0x228] sm:$0xff]
        %v3443 = vld [vmem:[#allocation2 + $0x230] sm:$0x1]
        %v3444 = vlaneseq
        %v3445 = vshrl.u32 %v3444, 7
        %v3446 = vsub.s32 0, %v3445
        %v3447 = vrot.slane %v3443, %v3446
        %v3449 = vsel %vm239, %v3436, 0
        %3451 = vmatprep.subr.mxu0 0.0
        %3452 = vmatpush1.msra.mxu0 %v3439
        %3453 = vmatprep.subr.mxu0 0.0
        %3454 = vmatpush1.msra.mxu0 %v3440
        %3455 = vmatprep.subr.mxu0 0.0
        %3456 = vmatpush1.msra.mxu0 %v3441
        %3457 = vmatprep.subr.mxu0 0.0
        %3458 = vmatpush1.msra.mxu0 %v3442
        %3459 = vmatprep.subr.mxu0 0.0
        %3460 = vmatpush1.msra.mxu0 0.0
        %3461 = vmatprep.subr.mxu0 0.0
        %3462 = vmatpush1.msra.mxu0 0.0
        %3463 = vmatprep.subr.mxu0 0.0
        %3464 = vmatpush1.msra.mxu0 0.0
        %3465 = vmatprep.subr.mxu0 0.0
        %3466 = vmatpush1.msra.mxu0 0.0
        %3467 = vmatprep.subr.mxu0 0.0
        %3468 = vmatpush1.msra.mxu0 0.0
        %3469 = vmatprep.subr.mxu0 0.0
        %3470 = vmatpush1.msra.mxu0 0.0
        %3471 = vmatprep.subr.mxu0 0.0
        %3472 = vmatpush1.msra.mxu0 0.0
        %3473 = vmatprep.subr.mxu0 0.0
        %3474 = vmatpush1.msra.mxu0 0.0
        %3475 = vmatprep.subr.mxu0 0.0
        %3476 = vmatpush1.msra.mxu0 0.0
        %3477 = vmatprep.subr.mxu0 0.0
        %3478 = vmatpush1.msra.mxu0 0.0
        %3479 = vmatprep.subr.mxu0 0.0
        %3480 = vmatpush1.msra.mxu0 0.0
        %3481 = vmatprep.subr.mxu0 0.0
        %3482 = vmatpush1.msra.mxu0 0.0
        %3483 = vmatprep.subr.mxu0 0.0
        %3484 = vmatpush1.msra.mxu0 0.0
        %3485 = vmatprep.subr.mxu0 0.0
        %3486 = vmatpush1.msra.mxu0 0.0
        %3487 = vmatprep.subr.mxu0 0.0
        %3488 = vmatpush1.msra.mxu0 0.0
        %3489 = vmatprep.subr.mxu0 0.0
        %3490 = vmatpush1.msra.mxu0 0.0
        %3491 = vmatprep.subr.mxu0 0.0
        %3492 = vmatpush1.msra.mxu0 0.0
        %3493 = vmatprep.subr.mxu0 0.0
        %3494 = vmatpush1.msra.mxu0 0.0
        %3495 = vmatprep.subr.mxu0 0.0
        %3496 = vmatpush1.msra.mxu0 0.0
        %3497 = vmatprep.subr.mxu0 0.0
        %3498 = vmatpush1.msra.mxu0 0.0
        %3499 = vmatprep.subr.mxu0 0.0
        %3500 = vmatpush1.msra.mxu0 0.0
        %3501 = vmatprep.subr.mxu0 0.0
        %3502 = vmatpush1.msra.mxu0 0.0
        %3503 = vmatprep.subr.mxu0 0.0
        %3504 = vmatpush1.msra.mxu0 0.0
        %3505 = vmatprep.subr.mxu0 0.0
        %3506 = vmatpush1.msra.mxu0 0.0
        %3507 = vmatprep.subr.mxu0 0.0
        %3508 = vmatpush1.msra.mxu0 0.0
        %3509 = vmatprep.subr.mxu0 0.0
        %3510 = vmatpush1.msra.mxu0 0.0
        %3511 = vmatprep.subr.mxu0 0.0
        %3512 = vmatpush1.msra.mxu0 0.0
        %3513 = vmatprep.subr.mxu0 0.0
        %3514 = vmatpush1.msra.mxu0 0.0
        %3515 = vmatprep.mubr.f32.mxu0 0.0
        %3516 = vmatmul.mubr.f32.gmra.mrb[0].mxu0 %v3449
        %v3517 = vpop.f32.mrb[0].mxu0
        %v3518 = vadd.f32 %v3447, %v3517
        %v3519 = vpop.f32.mrb[0].mxu0
        %3520 = vdwg.mxu0
        %v3521 = vld [vmem:[#allocation2 + $0x2d8] sm:$0xff]
        %v3522 = vld [vmem:[#allocation2 + $0x2e0] sm:$0xff]
        %v3523 = vld [vmem:[#allocation2 + $0x2e8] sm:$0xff]
        %v3524 = vld [vmem:[#allocation2 + $0x2f0] sm:$0xff]
        %3525 = vmatprep.subr.mxu0 0.0
        %3526 = vmatpush1.msra.mxu0 %v3521
        %3527 = vmatprep.subr.mxu0 0.0
        %3528 = vmatpush1.msra.mxu0 %v3522
        %3529 = vmatprep.subr.mxu0 0.0
        %3530 = vmatpush1.msra.mxu0 %v3523
        %3531 = vmatprep.subr.mxu0 0.0
        %3532 = vmatpush1.msra.mxu0 %v3524
        %3533 = vmatprep.subr.mxu0 0.0
        %3534 = vmatpush1.msra.mxu0 0.0
        %3535 = vmatprep.subr.mxu0 0.0
        %3536 = vmatpush1.msra.mxu0 0.0
        %3537 = vmatprep.subr.mxu0 0.0
        %3538 = vmatpush1.msra.mxu0 0.0
        %3539 = vmatprep.subr.mxu0 0.0
        %3540 = vmatpush1.msra.mxu0 0.0
        %3541 = vmatprep.subr.mxu0 0.0
        %3542 = vmatpush1.msra.mxu0 0.0
        %3543 = vmatprep.subr.mxu0 0.0
        %3544 = vmatpush1.msra.mxu0 0.0
        %3545 = vmatprep.subr.mxu0 0.0
        %3546 = vmatpush1.msra.mxu0 0.0
        %3547 = vmatprep.subr.mxu0 0.0
        %3548 = vmatpush1.msra.mxu0 0.0
        %3549 = vmatprep.subr.mxu0 0.0
        %3550 = vmatpush1.msra.mxu0 0.0
        %3551 = vmatprep.subr.mxu0 0.0
        %3552 = vmatpush1.msra.mxu0 0.0
        %3553 = vmatprep.subr.mxu0 0.0
        %3554 = vmatpush1.msra.mxu0 0.0
        %3555 = vmatprep.subr.mxu0 0.0
        %3556 = vmatpush1.msra.mxu0 0.0
        %3557 = vmatprep.subr.mxu0 0.0
        %3558 = vmatpush1.msra.mxu0 0.0
        %3559 = vmatprep.subr.mxu0 0.0
        %3560 = vmatpush1.msra.mxu0 0.0
        %3561 = vmatprep.subr.mxu0 0.0
        %3562 = vmatpush1.msra.mxu0 0.0
        %3563 = vmatprep.subr.mxu0 0.0
        %3564 = vmatpush1.msra.mxu0 0.0
        %3565 = vmatprep.subr.mxu0 0.0
        %3566 = vmatpush1.msra.mxu0 0.0
        %3567 = vmatprep.subr.mxu0 0.0
        %3568 = vmatpush1.msra.mxu0 0.0
        %3569 = vmatprep.subr.mxu0 0.0
        %3570 = vmatpush1.msra.mxu0 0.0
        %3571 = vmatprep.subr.mxu0 0.0
        %3572 = vmatpush1.msra.mxu0 0.0
        %3573 = vmatprep.subr.mxu0 0.0
        %3574 = vmatpush1.msra.mxu0 0.0
        %3575 = vmatprep.subr.mxu0 0.0
        %3576 = vmatpush1.msra.mxu0 0.0
        %3577 = vmatprep.subr.mxu0 0.0
        %3578 = vmatpush1.msra.mxu0 0.0
        %3579 = vmatprep.subr.mxu0 0.0
        %3580 = vmatpush1.msra.mxu0 0.0
        %3581 = vmatprep.subr.mxu0 0.0
        %3582 = vmatpush1.msra.mxu0 0.0
        %3583 = vmatprep.subr.mxu0 0.0
        %3584 = vmatpush1.msra.mxu0 0.0
        %3585 = vmatprep.subr.mxu0 0.0
        %3586 = vmatpush1.msra.mxu0 0.0
        %3587 = vmatprep.subr.mxu0 0.0
        %3588 = vmatpush1.msra.mxu0 0.0
        %3589 = vmatprep.mubr.f32.mxu0 0.0
        %3590 = vmatmul.mubr.f32.gmra.mrb[0].mxu0 %v2940
        %v3591 = vpop.f32.mrb[0].mxu0
        %v3592 = vadd.f32 0.0, %v3591
        %v3593 = vpop.f32.mrb[0].mxu0
        %3594 = vdwg.mxu0
        %v3595 = vld [vmem:[#allocation2 + $0x2f8] sm:$0xff]
        %v3596 = vld [vmem:[#allocation2 + $0x300] sm:$0xff]
        %v3597 = vld [vmem:[#allocation2 + $0x308] sm:$0xff]
        %v3598 = vld [vmem:[#allocation2 + $0x310] sm:$0xff]
        %3599 = vmatprep.subr.mxu0 0.0
        %3600 = vmatpush1.msra.mxu0 %v3595
        %3601 = vmatprep.subr.mxu0 0.0
        %3602 = vmatpush1.msra.mxu0 %v3596
        %3603 = vmatprep.subr.mxu0 0.0
        %3604 = vmatpush1.msra.mxu0 %v3597
        %3605 = vmatprep.subr.mxu0 0.0
        %3606 = vmatpush1.msra.mxu0 %v3598
        %3607 = vmatprep.subr.mxu0 0.0
        %3608 = vmatpush1.msra.mxu0 0.0
        %3609 = vmatprep.subr.mxu0 0.0
        %3610 = vmatpush1.msra.mxu0 0.0
        %3611 = vmatprep.subr.mxu0 0.0
        %3612 = vmatpush1.msra.mxu0 0.0
        %3613 = vmatprep.subr.mxu0 0.0
        %3614 = vmatpush1.msra.mxu0 0.0
        %3615 = vmatprep.subr.mxu0 0.0
        %3616 = vmatpush1.msra.mxu0 0.0
        %3617 = vmatprep.subr.mxu0 0.0
        %3618 = vmatpush1.msra.mxu0 0.0
        %3619 = vmatprep.subr.mxu0 0.0
        %3620 = vmatpush1.msra.mxu0 0.0
        %3621 = vmatprep.subr.mxu0 0.0
        %3622 = vmatpush1.msra.mxu0 0.0
        %3623 = vmatprep.subr.mxu0 0.0
        %3624 = vmatpush1.msra.mxu0 0.0
        %3625 = vmatprep.subr.mxu0 0.0
        %3626 = vmatpush1.msra.mxu0 0.0
        %3627 = vmatprep.subr.mxu0 0.0
        %3628 = vmatpush1.msra.mxu0 0.0
        %3629 = vmatprep.subr.mxu0 0.0
        %3630 = vmatpush1.msra.mxu0 0.0
        %3631 = vmatprep.subr.mxu0 0.0
        %3632 = vmatpush1.msra.mxu0 0.0
        %3633 = vmatprep.subr.mxu0 0.0
        %3634 = vmatpush1.msra.mxu0 0.0
        %3635 = vmatprep.subr.mxu0 0.0
        %3636 = vmatpush1.msra.mxu0 0.0
        %3637 = vmatprep.subr.mxu0 0.0
        %3638 = vmatpush1.msra.mxu0 0.0
        %3639 = vmatprep.subr.mxu0 0.0
        %3640 = vmatpush1.msra.mxu0 0.0
        %3641 = vmatprep.subr.mxu0 0.0
        %3642 = vmatpush1.msra.mxu0 0.0
        %3643 = vmatprep.subr.mxu0 0.0
        %3644 = vmatpush1.msra.mxu0 0.0
        %3645 = vmatprep.subr.mxu0 0.0
        %3646 = vmatpush1.msra.mxu0 0.0
        %3647 = vmatprep.subr.mxu0 0.0
        %3648 = vmatpush1.msra.mxu0 0.0
        %3649 = vmatprep.subr.mxu0 0.0
        %3650 = vmatpush1.msra.mxu0 0.0
        %3651 = vmatprep.subr.mxu0 0.0
        %3652 = vmatpush1.msra.mxu0 0.0
        %3653 = vmatprep.subr.mxu0 0.0
        %3654 = vmatpush1.msra.mxu0 0.0
        %3655 = vmatprep.subr.mxu0 0.0
        %3656 = vmatpush1.msra.mxu0 0.0
        %3657 = vmatprep.subr.mxu0 0.0
        %3658 = vmatpush1.msra.mxu0 0.0
        %3659 = vmatprep.subr.mxu0 0.0
        %3660 = vmatpush1.msra.mxu0 0.0
        %3661 = vmatprep.subr.mxu0 0.0
        %3662 = vmatpush1.msra.mxu0 0.0
        %3663 = vmatprep.mubr.f32.mxu0 0.0
        %3664 = vmatmul.mubr.f32.gmra.mrb[0].mxu0 %v3033
        %v3665 = vpop.f32.mrb[0].mxu0
        %v3666 = vadd.f32 0.0, %v3665
        %v3667 = vpop.f32.mrb[0].mxu0
        %3668 = vdwg.mxu0
        %v3669 = vld [vmem:[#allocation2 + $0x5f0] sm:$0xff]
        %v3670 = vld [vmem:[#allocation2 + $0x5f8] sm:$0xff]
        %v3671 = vld [vmem:[#allocation2 + $0x600] sm:$0xff]
        %v3672 = vld [vmem:[#allocation2 + $0x608] sm:$0xff]
        %v3673 = vld [vmem:[#allocation2 + $0x610] sm:$0xff]
        %v3674 = vld [vmem:[#allocation2 + $0x618] sm:$0xff]
        %v3675 = vld [vmem:[#allocation2 + $0x620] sm:$0xff]
        %v3676 = vld [vmem:[#allocation2 + $0x628] sm:$0xff]
        %v3677 = vld [vmem:[#allocation2 + $0x630] sm:$0xff]
        %v3678 = vld [vmem:[#allocation2 + $0x638] sm:$0xff]
        %v3679 = vld [vmem:[#allocation2 + $0x640] sm:$0xff]
        %v3680 = vld [vmem:[#allocation2 + $0x648] sm:$0xff]
        %v3681 = vld [vmem:[#allocation2 + $0x650] sm:$0xff]
        %v3682 = vld [vmem:[#allocation2 + $0x658] sm:$0xff]
        %v3683 = vld [vmem:[#allocation2 + $0x660] sm:$0xff]
        %v3684 = vld [vmem:[#allocation2 + $0x668] sm:$0xff]
        %v3686 = vsel %vm382, %v3677, 0
        %v3689 = vsel %vm382, %v3678, 0
        %v3692 = vsel %vm382, %v3679, 0
        %v3695 = vsel %vm382, %v3680, 0
        %v3698 = vsel %vm382, %v3681, 0
        %v3701 = vsel %vm382, %v3682, 0
        %v3704 = vsel %vm382, %v3683, 0
        %v3707 = vsel %vm382, %v3684, 0
        %3709 = vmatprep.subr.mxu0 0.0
        %3710 = vmatpush1.msra.mxu0 %v3666
        %3711 = vmatprep.subr.mxu0 0.0
        %3712 = vmatpush1.msra.mxu0 0.0
        %3713 = vmatprep.subr.mxu0 0.0
        %3714 = vmatpush1.msra.mxu0 0.0
        %3715 = vmatprep.subr.mxu0 0.0
        %3716 = vmatpush1.msra.mxu0 0.0
        %3717 = vmatprep.subr.mxu0 0.0
        %3718 = vmatpush1.msra.mxu0 0.0
        %3719 = vmatprep.subr.mxu0 0.0
        %3720 = vmatpush1.msra.mxu0 0.0
        %3721 = vmatprep.subr.mxu0 0.0
        %3722 = vmatpush1.msra.mxu0 0.0
        %3723 = vmatprep.subr.mxu0 0.0
        %3724 = vmatpush1.msra.mxu0 0.0
        %3725 = vmatprep.subr.mxu0 0.0
        %3726 = vmatpush1.msra.mxu0 0.0
        %3727 = vmatprep.subr.mxu0 0.0
        %3728 = vmatpush1.msra.mxu0 0.0
        %3729 = vmatprep.subr.mxu0 0.0
        %3730 = vmatpush1.msra.mxu0 0.0
        %3731 = vmatprep.subr.mxu0 0.0
        %3732 = vmatpush1.msra.mxu0 0.0
        %3733 = vmatprep.subr.mxu0 0.0
        %3734 = vmatpush1.msra.mxu0 0.0
        %3735 = vmatprep.subr.mxu0 0.0
        %3736 = vmatpush1.msra.mxu0 0.0
        %3737 = vmatprep.subr.mxu0 0.0
        %3738 = vmatpush1.msra.mxu0 0.0
        %3739 = vmatprep.subr.mxu0 0.0
        %3740 = vmatpush1.msra.mxu0 0.0
        %3741 = vmatprep.subr.mxu0 0.0
        %3742 = vmatpush1.msra.mxu0 0.0
        %3743 = vmatprep.subr.mxu0 0.0
        %3744 = vmatpush1.msra.mxu0 0.0
        %3745 = vmatprep.subr.mxu0 0.0
        %3746 = vmatpush1.msra.mxu0 0.0
        %3747 = vmatprep.subr.mxu0 0.0
        %3748 = vmatpush1.msra.mxu0 0.0
        %3749 = vmatprep.subr.mxu0 0.0
        %3750 = vmatpush1.msra.mxu0 0.0
        %3751 = vmatprep.subr.mxu0 0.0
        %3752 = vmatpush1.msra.mxu0 0.0
        %3753 = vmatprep.subr.mxu0 0.0
        %3754 = vmatpush1.msra.mxu0 0.0
        %3755 = vmatprep.subr.mxu0 0.0
        %3756 = vmatpush1.msra.mxu0 0.0
        %3757 = vmatprep.subr.mxu0 0.0
        %3758 = vmatpush1.msra.mxu0 0.0
        %3759 = vmatprep.subr.mxu0 0.0
        %3760 = vmatpush1.msra.mxu0 0.0
        %3761 = vmatprep.subr.mxu0 0.0
        %3762 = vmatpush1.msra.mxu0 0.0
        %3763 = vmatprep.subr.mxu0 0.0
        %3764 = vmatpush1.msra.mxu0 0.0
        %3765 = vmatprep.subr.mxu0 0.0
        %3766 = vmatpush1.msra.mxu0 0.0
        %3767 = vmatprep.subr.mxu0 0.0
        %3768 = vmatpush1.msra.mxu0 0.0
        %3769 = vmatprep.subr.mxu0 0.0
        %3770 = vmatpush1.msra.mxu0 0.0
        %3771 = vmatprep.subr.mxu0 0.0
        %3772 = vmatpush1.msra.mxu0 0.0
        %3773 = vmatprep.mubr.f32.mxu0 0.0
        %3774 = vmatmul.mubr.f32.gmra.mrb[0].mxu0 %v3686
        %v3775 = vpop.f32.mrb[0].mxu0
        %v3776 = vadd.f32 0.0, %v3775
        %v3777 = vpop.f32.mrb[0].mxu0
        %3778 = vmatprep.mubr.f32.mxu0 0.0
        %3779 = vmatmul.mubr.f32.gmra.mrb[0].mxu0 %v3689
        %v3780 = vpop.f32.mrb[0].mxu0
        %v3781 = vadd.f32 0.0, %v3780
        %v3782 = vpop.f32.mrb[0].mxu0
        %3783 = vmatprep.mubr.f32.mxu0 0.0
        %3784 = vmatmul.mubr.f32.gmra.mrb[0].mxu0 %v3692
        %v3785 = vpop.f32.mrb[0].mxu0
        %v3786 = vadd.f32 0.0, %v3785
        %v3787 = vpop.f32.mrb[0].mxu0
        %3788 = vmatprep.mubr.f32.mxu0 0.0
        %3789 = vmatmul.mubr.f32.gmra.mrb[0].mxu0 %v3695
        %v3790 = vpop.f32.mrb[0].mxu0
        %v3791 = vadd.f32 0.0, %v3790
        %v3792 = vpop.f32.mrb[0].mxu0
        %3793 = vmatprep.mubr.f32.mxu0 0.0
        %3794 = vmatmul.mubr.f32.gmra.mrb[0].mxu0 %v3698
        %v3795 = vpop.f32.mrb[0].mxu0
        %v3796 = vadd.f32 0.0, %v3795
        %v3797 = vpop.f32.mrb[0].mxu0
        %3798 = vmatprep.mubr.f32.mxu0 0.0
        %3799 = vmatmul.mubr.f32.gmra.mrb[0].mxu0 %v3701
        %v3800 = vpop.f32.mrb[0].mxu0
        %v3801 = vadd.f32 0.0, %v3800
        %v3802 = vpop.f32.mrb[0].mxu0
        %3803 = vmatprep.mubr.f32.mxu0 0.0
        %3804 = vmatmul.mubr.f32.gmra.mrb[0].mxu0 %v3704
        %v3805 = vpop.f32.mrb[0].mxu0
        %v3806 = vadd.f32 0.0, %v3805
        %v3807 = vpop.f32.mrb[0].mxu0
        %3808 = vmatprep.mubr.f32.mxu0 0.0
        %3809 = vmatmul.mubr.f32.gmra.mrb[0].mxu0 %v3707
        %v3810 = vpop.f32.mrb[0].mxu0
        %v3811 = vadd.f32 0.0, %v3810
        %v3812 = vpop.f32.mrb[0].mxu0
        %3813 = vdwg.mxu0
        %v3815 = vsel %vm382, %v3669, 0
        %v3818 = vsel %vm382, %v3670, 0
        %v3821 = vsel %vm382, %v3671, 0
        %v3824 = vsel %vm382, %v3672, 0
        %v3827 = vsel %vm382, %v3673, 0
        %v3830 = vsel %vm382, %v3674, 0
        %v3833 = vsel %vm382, %v3675, 0
        %v3836 = vsel %vm382, %v3676, 0
        %3838 = vmatprep.subr.mxu0 0.0
        %3839 = vmatpush1.msra.mxu0 %v3592
        %3840 = vmatprep.subr.mxu0 0.0
        %3841 = vmatpush1.msra.mxu0 0.0
        %3842 = vmatprep.subr.mxu0 0.0
        %3843 = vmatpush1.msra.mxu0 0.0
        %3844 = vmatprep.subr.mxu0 0.0
        %3845 = vmatpush1.msra.mxu0 0.0
        %3846 = vmatprep.subr.mxu0 0.0
        %3847 = vmatpush1.msra.mxu0 0.0
        %3848 = vmatprep.subr.mxu0 0.0
        %3849 = vmatpush1.msra.mxu0 0.0
        %3850 = vmatprep.subr.mxu0 0.0
        %3851 = vmatpush1.msra.mxu0 0.0
        %3852 = vmatprep.subr.mxu0 0.0
        %3853 = vmatpush1.msra.mxu0 0.0
        %3854 = vmatprep.subr.mxu0 0.0
        %3855 = vmatpush1.msra.mxu0 0.0
        %3856 = vmatprep.subr.mxu0 0.0
        %3857 = vmatpush1.msra.mxu0 0.0
        %3858 = vmatprep.subr.mxu0 0.0
        %3859 = vmatpush1.msra.mxu0 0.0
        %3860 = vmatprep.subr.mxu0 0.0
        %3861 = vmatpush1.msra.mxu0 0.0
        %3862 = vmatprep.subr.mxu0 0.0
        %3863 = vmatpush1.msra.mxu0 0.0
        %3864 = vmatprep.subr.mxu0 0.0
        %3865 = vmatpush1.msra.mxu0 0.0
        %3866 = vmatprep.subr.mxu0 0.0
        %3867 = vmatpush1.msra.mxu0 0.0
        %3868 = vmatprep.subr.mxu0 0.0
        %3869 = vmatpush1.msra.mxu0 0.0
        %3870 = vmatprep.subr.mxu0 0.0
        %3871 = vmatpush1.msra.mxu0 0.0
        %3872 = vmatprep.subr.mxu0 0.0
        %3873 = vmatpush1.msra.mxu0 0.0
        %3874 = vmatprep.subr.mxu0 0.0
        %3875 = vmatpush1.msra.mxu0 0.0
        %3876 = vmatprep.subr.mxu0 0.0
        %3877 = vmatpush1.msra.mxu0 0.0
        %3878 = vmatprep.subr.mxu0 0.0
        %3879 = vmatpush1.msra.mxu0 0.0
        %3880 = vmatprep.subr.mxu0 0.0
        %3881 = vmatpush1.msra.mxu0 0.0
        %3882 = vmatprep.subr.mxu0 0.0
        %3883 = vmatpush1.msra.mxu0 0.0
        %3884 = vmatprep.subr.mxu0 0.0
        %3885 = vmatpush1.msra.mxu0 0.0
        %3886 = vmatprep.subr.mxu0 0.0
        %3887 = vmatpush1.msra.mxu0 0.0
        %3888 = vmatprep.subr.mxu0 0.0
        %3889 = vmatpush1.msra.mxu0 0.0
        %3890 = vmatprep.subr.mxu0 0.0
        %3891 = vmatpush1.msra.mxu0 0.0
        %3892 = vmatprep.subr.mxu0 0.0
        %3893 = vmatpush1.msra.mxu0 0.0
        %3894 = vmatprep.subr.mxu0 0.0
        %3895 = vmatpush1.msra.mxu0 0.0
        %3896 = vmatprep.subr.mxu0 0.0
        %3897 = vmatpush1.msra.mxu0 0.0
        %3898 = vmatprep.subr.mxu0 0.0
        %3899 = vmatpush1.msra.mxu0 0.0
        %3900 = vmatprep.subr.mxu0 0.0
        %3901 = vmatpush1.msra.mxu0 0.0
        %3902 = vmatprep.mubr.f32.mxu0 0.0
        %3903 = vmatmul.mubr.f32.gmra.mrb[0].mxu0 %v3815
        %v3904 = vpop.f32.mrb[0].mxu0
        %v3905 = vadd.f32 %v3776, %v3904
        %v3906 = vpop.f32.mrb[0].mxu0
        %3907 = vmatprep.mubr.f32.mxu0 0.0
        %3908 = vmatmul.mubr.f32.gmra.mrb[0].mxu0 %v3818
        %v3909 = vpop.f32.mrb[0].mxu0
        %v3910 = vadd.f32 %v3781, %v3909
        %v3911 = vpop.f32.mrb[0].mxu0
        %3912 = vmatprep.mubr.f32.mxu0 0.0
        %3913 = vmatmul.mubr.f32.gmra.mrb[0].mxu0 %v3821
        %v3914 = vpop.f32.mrb[0].mxu0
        %v3915 = vadd.f32 %v3786, %v3914
        %v3916 = vpop.f32.mrb[0].mxu0
        %3917 = vmatprep.mubr.f32.mxu0 0.0
        %3918 = vmatmul.mubr.f32.gmra.mrb[0].mxu0 %v3824
        %v3919 = vpop.f32.mrb[0].mxu0
        %v3920 = vadd.f32 %v3791, %v3919
        %v3921 = vpop.f32.mrb[0].mxu0
        %3922 = vmatprep.mubr.f32.mxu0 0.0
        %3923 = vmatmul.mubr.f32.gmra.mrb[0].mxu0 %v3827
        %v3924 = vpop.f32.mrb[0].mxu0
        %v3925 = vadd.f32 %v3796, %v3924
        %v3926 = vpop.f32.mrb[0].mxu0
        %3927 = vmatprep.mubr.f32.mxu0 0.0
        %3928 = vmatmul.mubr.f32.gmra.mrb[0].mxu0 %v3830
        %v3929 = vpop.f32.mrb[0].mxu0
        %v3930 = vadd.f32 %v3801, %v3929
        %v3931 = vpop.f32.mrb[0].mxu0
        %3932 = vmatprep.mubr.f32.mxu0 0.0
        %3933 = vmatmul.mubr.f32.gmra.mrb[0].mxu0 %v3833
        %v3934 = vpop.f32.mrb[0].mxu0
        %v3935 = vadd.f32 %v3806, %v3934
        %v3936 = vpop.f32.mrb[0].mxu0
        %3937 = vmatprep.mubr.f32.mxu0 0.0
        %3938 = vmatmul.mubr.f32.gmra.mrb[0].mxu0 %v3836
        %v3939 = vpop.f32.mrb[0].mxu0
        %v3940 = vadd.f32 %v3811, %v3939
        %v3941 = vpop.f32.mrb[0].mxu0
        %3942 = vdwg.mxu0
        %v3943 = vld [vmem:[#allocation2 + $0x318] sm:$0x1]
        %v3944 = vlaneseq
        %v3945 = vshrl.u32 %v3944, 7
        %v3946 = vsub.s32 0, %v3945
        %v3947 = vrot.slane %v3943, %v3946
        %v3948 = vadd.f32 %v3905, %v3947
        %v3949 = vadd.f32 %v3910, %v3947
        %v3950 = vadd.f32 %v3915, %v3947
        %v3951 = vadd.f32 %v3920, %v3947
        %v3952 = vadd.f32 %v3925, %v3947
        %v3953 = vadd.f32 %v3930, %v3947
        %v3954 = vadd.f32 %v3935, %v3947
        %v3955 = vadd.f32 %v3940, %v3947
        %v3956 = vmax.f32 %v3948, 0.0
        %v3957 = vmax.f32 %v3949, 0.0
        %v3958 = vmax.f32 %v3950, 0.0
        %v3959 = vmax.f32 %v3951, 0.0
        %v3960 = vmax.f32 %v3952, 0.0
        %v3961 = vmax.f32 %v3953, 0.0
        %v3962 = vmax.f32 %v3954, 0.0
        %v3963 = vmax.f32 %v3955, 0.0
        %v3964 = vld [vmem:[#allocation2 + $0x320] sm:$0xff]
        %v3965 = vld [vmem:[#allocation2 + $0x328] sm:$0xff]
        %v3966 = vld [vmem:[#allocation2 + $0x330] sm:$0xff]
        %v3967 = vld [vmem:[#allocation2 + $0x338] sm:$0xff]
        %v3968 = vld [vmem:[#allocation2 + $0x340] sm:$0x1]
        %v3969 = vlaneseq
        %v3970 = vshrl.u32 %v3969, 7
        %v3971 = vsub.s32 0, %v3970
        %v3972 = vrot.slane %v3968, %v3971
        %v3974 = vsel %vm239, %v3956, 0
        %v3977 = vsel %vm239, %v3957, 0
        %v3980 = vsel %vm239, %v3958, 0
        %v3983 = vsel %vm239, %v3959, 0
        %v3986 = vsel %vm239, %v3960, 0
        %v3989 = vsel %vm239, %v3961, 0
        %v3992 = vsel %vm239, %v3962, 0
        %v3995 = vsel %vm239, %v3963, 0
        %3997 = vmatprep.subr.mxu0 0.0
        %3998 = vmatpush1.msra.mxu0 %v3964
        %3999 = vmatprep.subr.mxu0 0.0
        %4000 = vmatpush1.msra.mxu0 %v3965
        %4001 = vmatprep.subr.mxu0 0.0
        %4002 = vmatpush1.msra.mxu0 %v3966
        %4003 = vmatprep.subr.mxu0 0.0
        %4004 = vmatpush1.msra.mxu0 %v3967
        %4005 = vmatprep.subr.mxu0 0.0
        %4006 = vmatpush1.msra.mxu0 0.0
        %4007 = vmatprep.subr.mxu0 0.0
        %4008 = vmatpush1.msra.mxu0 0.0
        %4009 = vmatprep.subr.mxu0 0.0
        %4010 = vmatpush1.msra.mxu0 0.0
        %4011 = vmatprep.subr.mxu0 0.0
        %4012 = vmatpush1.msra.mxu0 0.0
        %4013 = vmatprep.subr.mxu0 0.0
        %4014 = vmatpush1.msra.mxu0 0.0
        %4015 = vmatprep.subr.mxu0 0.0
        %4016 = vmatpush1.msra.mxu0 0.0
        %4017 = vmatprep.subr.mxu0 0.0
        %4018 = vmatpush1.msra.mxu0 0.0
        %4019 = vmatprep.subr.mxu0 0.0
        %4020 = vmatpush1.msra.mxu0 0.0
        %4021 = vmatprep.subr.mxu0 0.0
        %4022 = vmatpush1.msra.mxu0 0.0
        %4023 = vmatprep.subr.mxu0 0.0
        %4024 = vmatpush1.msra.mxu0 0.0
        %4025 = vmatprep.subr.mxu0 0.0
        %4026 = vmatpush1.msra.mxu0 0.0
        %4027 = vmatprep.subr.mxu0 0.0
        %4028 = vmatpush1.msra.mxu0 0.0
        %4029 = vmatprep.subr.mxu0 0.0
        %4030 = vmatpush1.msra.mxu0 0.0
        %4031 = vmatprep.subr.mxu0 0.0
        %4032 = vmatpush1.msra.mxu0 0.0
        %4033 = vmatprep.subr.mxu0 0.0
        %4034 = vmatpush1.msra.mxu0 0.0
        %4035 = vmatprep.subr.mxu0 0.0
        %4036 = vmatpush1.msra.mxu0 0.0
        %4037 = vmatprep.subr.mxu0 0.0
        %4038 = vmatpush1.msra.mxu0 0.0
        %4039 = vmatprep.subr.mxu0 0.0
        %4040 = vmatpush1.msra.mxu0 0.0
        %4041 = vmatprep.subr.mxu0 0.0
        %4042 = vmatpush1.msra.mxu0 0.0
        %4043 = vmatprep.subr.mxu0 0.0
        %4044 = vmatpush1.msra.mxu0 0.0
        %4045 = vmatprep.subr.mxu0 0.0
        %4046 = vmatpush1.msra.mxu0 0.0
        %4047 = vmatprep.subr.mxu0 0.0
        %4048 = vmatpush1.msra.mxu0 0.0
        %4049 = vmatprep.subr.mxu0 0.0
        %4050 = vmatpush1.msra.mxu0 0.0
        %4051 = vmatprep.subr.mxu0 0.0
        %4052 = vmatpush1.msra.mxu0 0.0
        %4053 = vmatprep.subr.mxu0 0.0
        %4054 = vmatpush1.msra.mxu0 0.0
        %4055 = vmatprep.subr.mxu0 0.0
        %4056 = vmatpush1.msra.mxu0 0.0
        %4057 = vmatprep.subr.mxu0 0.0
        %4058 = vmatpush1.msra.mxu0 0.0
        %4059 = vmatprep.subr.mxu0 0.0
        %4060 = vmatpush1.msra.mxu0 0.0
        %4061 = vmatprep.mubr.f32.mxu0 0.0
        %4062 = vmatmul.mubr.f32.gmra.mrb[0].mxu0 %v3974
        %v4063 = vpop.f32.mrb[0].mxu0
        %v4064 = vadd.f32 %v3972, %v4063
        %v4065 = vpop.f32.mrb[0].mxu0
        %4066 = vmatprep.mubr.f32.mxu0 0.0
        %4067 = vmatmul.mubr.f32.gmra.mrb[0].mxu0 %v3977
        %v4068 = vpop.f32.mrb[0].mxu0
        %v4069 = vadd.f32 %v3972, %v4068
        %v4070 = vpop.f32.mrb[0].mxu0
        %4071 = vmatprep.mubr.f32.mxu0 0.0
        %4072 = vmatmul.mubr.f32.gmra.mrb[0].mxu0 %v3980
        %v4073 = vpop.f32.mrb[0].mxu0
        %v4074 = vadd.f32 %v3972, %v4073
        %v4075 = vpop.f32.mrb[0].mxu0
        %4076 = vmatprep.mubr.f32.mxu0 0.0
        %4077 = vmatmul.mubr.f32.gmra.mrb[0].mxu0 %v3983
        %v4078 = vpop.f32.mrb[0].mxu0
        %v4079 = vadd.f32 %v3972, %v4078
        %v4080 = vpop.f32.mrb[0].mxu0
        %4081 = vmatprep.mubr.f32.mxu0 0.0
        %4082 = vmatmul.mubr.f32.gmra.mrb[0].mxu0 %v3986
        %v4083 = vpop.f32.mrb[0].mxu0
        %v4084 = vadd.f32 %v3972, %v4083
        %v4085 = vpop.f32.mrb[0].mxu0
        %4086 = vmatprep.mubr.f32.mxu0 0.0
        %4087 = vmatmul.mubr.f32.gmra.mrb[0].mxu0 %v3989
        %v4088 = vpop.f32.mrb[0].mxu0
        %v4089 = vadd.f32 %v3972, %v4088
        %v4090 = vpop.f32.mrb[0].mxu0
        %4091 = vmatprep.mubr.f32.mxu0 0.0
        %4092 = vmatmul.mubr.f32.gmra.mrb[0].mxu0 %v3992
        %v4093 = vpop.f32.mrb[0].mxu0
        %v4094 = vadd.f32 %v3972, %v4093
        %v4095 = vpop.f32.mrb[0].mxu0
        %4096 = vmatprep.mubr.f32.mxu0 0.0
        %4097 = vmatmul.mubr.f32.gmra.mrb[0].mxu0 %v3995
        %v4098 = vpop.f32.mrb[0].mxu0
        %v4099 = vadd.f32 %v3972, %v4098
        %v4100 = vpop.f32.mrb[0].mxu0
        %4101 = vdwg.mxu0
        %v4102 = vmax.f32 %v4064, 0.0
        %v4103 = vmax.f32 %v4069, 0.0
        %v4104 = vmax.f32 %v4074, 0.0
        %v4105 = vmax.f32 %v4079, 0.0
        %v4106 = vmax.f32 %v4084, 0.0
        %v4107 = vmax.f32 %v4089, 0.0
        %v4108 = vmax.f32 %v4094, 0.0
        %v4109 = vmax.f32 %v4099, 0.0
        %v4110 = vld [vmem:[#allocation2 + $0x348] sm:$0xff]
        %v4111 = vld [vmem:[#allocation2 + $0x350] sm:$0xff]
        %v4112 = vld [vmem:[#allocation2 + $0x358] sm:$0x1]
        %v4113 = vlaneseq
        %v4114 = vshrl.u32 %v4113, 7
        %v4115 = vsub.s32 0, %v4114
        %v4116 = vrot.slane %v4112, %v4115
        %v4118 = vsel %vm164, %v4102, 0
        %v4121 = vsel %vm164, %v4103, 0
        %v4124 = vsel %vm164, %v4104, 0
        %v4127 = vsel %vm164, %v4105, 0
        %v4130 = vsel %vm164, %v4106, 0
        %v4133 = vsel %vm164, %v4107, 0
        %v4136 = vsel %vm164, %v4108, 0
        %v4139 = vsel %vm164, %v4109, 0
        %4141 = vmatprep.subr.mxu0 0.0
        %4142 = vmatpush1.msra.mxu0 %v4110
        %4143 = vmatprep.subr.mxu0 0.0
        %4144 = vmatpush1.msra.mxu0 %v4111
        %4145 = vmatprep.subr.mxu0 0.0
        %4146 = vmatpush1.msra.mxu0 0.0
        %4147 = vmatprep.subr.mxu0 0.0
        %4148 = vmatpush1.msra.mxu0 0.0
        %4149 = vmatprep.subr.mxu0 0.0
        %4150 = vmatpush1.msra.mxu0 0.0
        %4151 = vmatprep.subr.mxu0 0.0
        %4152 = vmatpush1.msra.mxu0 0.0
        %4153 = vmatprep.subr.mxu0 0.0
        %4154 = vmatpush1.msra.mxu0 0.0
        %4155 = vmatprep.subr.mxu0 0.0
        %4156 = vmatpush1.msra.mxu0 0.0
        %4157 = vmatprep.subr.mxu0 0.0
        %4158 = vmatpush1.msra.mxu0 0.0
        %4159 = vmatprep.subr.mxu0 0.0
        %4160 = vmatpush1.msra.mxu0 0.0
        %4161 = vmatprep.subr.mxu0 0.0
        %4162 = vmatpush1.msra.mxu0 0.0
        %4163 = vmatprep.subr.mxu0 0.0
        %4164 = vmatpush1.msra.mxu0 0.0
        %4165 = vmatprep.subr.mxu0 0.0
        %4166 = vmatpush1.msra.mxu0 0.0
        %4167 = vmatprep.subr.mxu0 0.0
        %4168 = vmatpush1.msra.mxu0 0.0
        %4169 = vmatprep.subr.mxu0 0.0
        %4170 = vmatpush1.msra.mxu0 0.0
        %4171 = vmatprep.subr.mxu0 0.0
        %4172 = vmatpush1.msra.mxu0 0.0
        %4173 = vmatprep.subr.mxu0 0.0
        %4174 = vmatpush1.msra.mxu0 0.0
        %4175 = vmatprep.subr.mxu0 0.0
        %4176 = vmatpush1.msra.mxu0 0.0
        %4177 = vmatprep.subr.mxu0 0.0
        %4178 = vmatpush1.msra.mxu0 0.0
        %4179 = vmatprep.subr.mxu0 0.0
        %4180 = vmatpush1.msra.mxu0 0.0
        %4181 = vmatprep.subr.mxu0 0.0
        %4182 = vmatpush1.msra.mxu0 0.0
        %4183 = vmatprep.subr.mxu0 0.0
        %4184 = vmatpush1.msra.mxu0 0.0
        %4185 = vmatprep.subr.mxu0 0.0
        %4186 = vmatpush1.msra.mxu0 0.0
        %4187 = vmatprep.subr.mxu0 0.0
        %4188 = vmatpush1.msra.mxu0 0.0
        %4189 = vmatprep.subr.mxu0 0.0
        %4190 = vmatpush1.msra.mxu0 0.0
        %4191 = vmatprep.subr.mxu0 0.0
        %4192 = vmatpush1.msra.mxu0 0.0
        %4193 = vmatprep.subr.mxu0 0.0
        %4194 = vmatpush1.msra.mxu0 0.0
        %4195 = vmatprep.subr.mxu0 0.0
        %4196 = vmatpush1.msra.mxu0 0.0
        %4197 = vmatprep.subr.mxu0 0.0
        %4198 = vmatpush1.msra.mxu0 0.0
        %4199 = vmatprep.subr.mxu0 0.0
        %4200 = vmatpush1.msra.mxu0 0.0
        %4201 = vmatprep.subr.mxu0 0.0
        %4202 = vmatpush1.msra.mxu0 0.0
        %4203 = vmatprep.subr.mxu0 0.0
        %4204 = vmatpush1.msra.mxu0 0.0
        %4205 = vmatprep.mubr.f32.mxu0 0.0
        %4206 = vmatmul.mubr.f32.gmra.mrb[0].mxu0 %v4118
        %v4207 = vpop.f32.mrb[0].mxu0
        %v4208 = vadd.f32 %v4116, %v4207
        %v4209 = vpop.f32.mrb[0].mxu0
        %4210 = vmatprep.mubr.f32.mxu0 0.0
        %4211 = vmatmul.mubr.f32.gmra.mrb[0].mxu0 %v4121
        %v4212 = vpop.f32.mrb[0].mxu0
        %v4213 = vadd.f32 %v4116, %v4212
        %v4214 = vpop.f32.mrb[0].mxu0
        %4215 = vmatprep.mubr.f32.mxu0 0.0
        %4216 = vmatmul.mubr.f32.gmra.mrb[0].mxu0 %v4124
        %v4217 = vpop.f32.mrb[0].mxu0
        %v4218 = vadd.f32 %v4116, %v4217
        %v4219 = vpop.f32.mrb[0].mxu0
        %4220 = vmatprep.mubr.f32.mxu0 0.0
        %4221 = vmatmul.mubr.f32.gmra.mrb[0].mxu0 %v4127
        %v4222 = vpop.f32.mrb[0].mxu0
        %v4223 = vadd.f32 %v4116, %v4222
        %v4224 = vpop.f32.mrb[0].mxu0
        %4225 = vmatprep.mubr.f32.mxu0 0.0
        %4226 = vmatmul.mubr.f32.gmra.mrb[0].mxu0 %v4130
        %v4227 = vpop.f32.mrb[0].mxu0
        %v4228 = vadd.f32 %v4116, %v4227
        %v4229 = vpop.f32.mrb[0].mxu0
        %4230 = vmatprep.mubr.f32.mxu0 0.0
        %4231 = vmatmul.mubr.f32.gmra.mrb[0].mxu0 %v4133
        %v4232 = vpop.f32.mrb[0].mxu0
        %v4233 = vadd.f32 %v4116, %v4232
        %v4234 = vpop.f32.mrb[0].mxu0
        %4235 = vmatprep.mubr.f32.mxu0 0.0
        %4236 = vmatmul.mubr.f32.gmra.mrb[0].mxu0 %v4136
        %v4237 = vpop.f32.mrb[0].mxu0
        %v4238 = vadd.f32 %v4116, %v4237
        %v4239 = vpop.f32.mrb[0].mxu0
        %4240 = vmatprep.mubr.f32.mxu0 0.0
        %4241 = vmatmul.mubr.f32.gmra.mrb[0].mxu0 %v4139
        %v4242 = vpop.f32.mrb[0].mxu0
        %v4243 = vadd.f32 %v4116, %v4242
        %v4244 = vpop.f32.mrb[0].mxu0
        %4245 = vdwg.mxu0
        %v4246 = vxor.u32 %v4208, 2147483648
        %v4247 = vxor.u32 %v4213, 2147483648
        %v4248 = vxor.u32 %v4218, 2147483648
        %v4249 = vxor.u32 %v4223, 2147483648
        %v4250 = vxor.u32 %v4228, 2147483648
        %v4251 = vxor.u32 %v4233, 2147483648
        %v4252 = vxor.u32 %v4238, 2147483648
        %v4253 = vxor.u32 %v4243, 2147483648
        %v4254 = vmul.f32 %v4246, 1.442695
        %v4255 = vpow.pop %v4254
        %v4256 = vmul.f32 %v4247, 1.442695
        %v4257 = vpow.pop %v4256
        %v4258 = vmul.f32 %v4248, 1.442695
        %v4259 = vpow.pop %v4258
        %v4260 = vmul.f32 %v4249, 1.442695
        %v4261 = vpow.pop %v4260
        %v4262 = vmul.f32 %v4250, 1.442695
        %v4263 = vpow.pop %v4262
        %v4264 = vmul.f32 %v4251, 1.442695
        %v4265 = vpow.pop %v4264
        %v4266 = vmul.f32 %v4252, 1.442695
        %v4267 = vpow.pop %v4266
        %v4268 = vmul.f32 %v4253, 1.442695
        %v4269 = vpow.pop %v4268
        %v4270 = vadd.f32 %v4255, 1.0
        %v4271 = vadd.f32 %v4257, 1.0
        %v4272 = vadd.f32 %v4259, 1.0
        %v4273 = vadd.f32 %v4261, 1.0
        %v4274 = vadd.f32 %v4263, 1.0
        %v4275 = vadd.f32 %v4265, 1.0
        %v4276 = vadd.f32 %v4267, 1.0
        %v4277 = vadd.f32 %v4269, 1.0
        %v4278 = vrcp.pop %v4270
        %v4279 = vmul.f32 1.0, %v4278
        %v4280 = vrcp.pop %v4271
        %v4281 = vmul.f32 1.0, %v4280
        %v4282 = vrcp.pop %v4272
        %v4283 = vmul.f32 1.0, %v4282
        %v4284 = vrcp.pop %v4273
        %v4285 = vmul.f32 1.0, %v4284
        %v4286 = vrcp.pop %v4274
        %v4287 = vmul.f32 1.0, %v4286
        %v4288 = vrcp.pop %v4275
        %v4289 = vmul.f32 1.0, %v4288
        %v4290 = vrcp.pop %v4276
        %v4291 = vmul.f32 1.0, %v4290
        %v4292 = vrcp.pop %v4277
        %v4293 = vmul.f32 1.0, %v4292
        %v4294 = vld [vmem:[#allocation2 + $0x670] sm:$0xff]
        %4296 = vset.pattern.permute.xlu0 0
        %4297 = vperm.xlu0 %4296, %v4279
        %v4298 = vpop.permute.xlu0 %4297
        %4301 = vset.pattern.permute.xlu0 0
        %4302 = vperm.xlu0 %4301, %v4281
        %v4303 = vpop.permute.xlu0 %4302
        %4306 = vset.pattern.permute.xlu0 0
        %4307 = vperm.xlu0 %4306, %v4283
        %v4308 = vpop.permute.xlu0 %4307
        %4311 = vset.pattern.permute.xlu0 0
        %4312 = vperm.xlu0 %4311, %v4285
        %v4313 = vpop.permute.xlu0 %4312
        %4316 = vset.pattern.permute.xlu0 0
        %4317 = vperm.xlu0 %4316, %v4287
        %v4318 = vpop.permute.xlu0 %4317
        %4321 = vset.pattern.permute.xlu0 0
        %4322 = vperm.xlu0 %4321, %v4289
        %v4323 = vpop.permute.xlu0 %4322
        %4326 = vset.pattern.permute.xlu0 0
        %4327 = vperm.xlu0 %4326, %v4291
        %v4328 = vpop.permute.xlu0 %4327
        %4331 = vset.pattern.permute.xlu0 0
        %4332 = vperm.xlu0 %4331, %v4293
        %v4333 = vpop.permute.xlu0 %4332
        %v4335 = vmul.f32 %v4298, %v3677
        %v4336 = vmul.f32 %v4303, %v3678
        %v4337 = vmul.f32 %v4308, %v3679
        %v4338 = vmul.f32 %v4313, %v3680
        %v4339 = vmul.f32 %v4318, %v3681
        %v4340 = vmul.f32 %v4323, %v3682
        %v4341 = vmul.f32 %v4328, %v3683
        %v4342 = vmul.f32 %v4333, %v3684
        %v4344 = vsel %vm771, %v4294, 0
        %4346 = vmatprep.subr.mxu0 0.0
        %4347 = vmatpush1.msra.mxu0 %v4335
        %4348 = vmatprep.subr.mxu0 0.0
        %4349 = vmatpush1.msra.mxu0 %v4336
        %4350 = vmatprep.subr.mxu0 0.0
        %4351 = vmatpush1.msra.mxu0 %v4337
        %4352 = vmatprep.subr.mxu0 0.0
        %4353 = vmatpush1.msra.mxu0 %v4338
        %4354 = vmatprep.subr.mxu0 0.0
        %4355 = vmatpush1.msra.mxu0 %v4339
        %4356 = vmatprep.subr.mxu0 0.0
        %4357 = vmatpush1.msra.mxu0 %v4340
        %4358 = vmatprep.subr.mxu0 0.0
        %4359 = vmatpush1.msra.mxu0 %v4341
        %4360 = vmatprep.subr.mxu0 0.0
        %4361 = vmatpush1.msra.mxu0 %v4342
        %4362 = vmatprep.subr.mxu0 0.0
        %4363 = vmatpush1.msra.mxu0 0.0
        %4364 = vmatprep.subr.mxu0 0.0
        %4365 = vmatpush1.msra.mxu0 0.0
        %4366 = vmatprep.subr.mxu0 0.0
        %4367 = vmatpush1.msra.mxu0 0.0
        %4368 = vmatprep.subr.mxu0 0.0
        %4369 = vmatpush1.msra.mxu0 0.0
        %4370 = vmatprep.subr.mxu0 0.0
        %4371 = vmatpush1.msra.mxu0 0.0
        %4372 = vmatprep.subr.mxu0 0.0
        %4373 = vmatpush1.msra.mxu0 0.0
        %4374 = vmatprep.subr.mxu0 0.0
        %4375 = vmatpush1.msra.mxu0 0.0
        %4376 = vmatprep.subr.mxu0 0.0
        %4377 = vmatpush1.msra.mxu0 0.0
        %4378 = vmatprep.subr.mxu0 0.0
        %4379 = vmatpush1.msra.mxu0 0.0
        %4380 = vmatprep.subr.mxu0 0.0
        %4381 = vmatpush1.msra.mxu0 0.0
        %4382 = vmatprep.subr.mxu0 0.0
        %4383 = vmatpush1.msra.mxu0 0.0
        %4384 = vmatprep.subr.mxu0 0.0
        %4385 = vmatpush1.msra.mxu0 0.0
        %4386 = vmatprep.subr.mxu0 0.0
        %4387 = vmatpush1.msra.mxu0 0.0
        %4388 = vmatprep.subr.mxu0 0.0
        %4389 = vmatpush1.msra.mxu0 0.0
        %4390 = vmatprep.subr.mxu0 0.0
        %4391 = vmatpush1.msra.mxu0 0.0
        %4392 = vmatprep.subr.mxu0 0.0
        %4393 = vmatpush1.msra.mxu0 0.0
        %4394 = vmatprep.subr.mxu0 0.0
        %4395 = vmatpush1.msra.mxu0 0.0
        %4396 = vmatprep.subr.mxu0 0.0
        %4397 = vmatpush1.msra.mxu0 0.0
        %4398 = vmatprep.subr.mxu0 0.0
        %4399 = vmatpush1.msra.mxu0 0.0
        %4400 = vmatprep.subr.mxu0 0.0
        %4401 = vmatpush1.msra.mxu0 0.0
        %4402 = vmatprep.subr.mxu0 0.0
        %4403 = vmatpush1.msra.mxu0 0.0
        %4404 = vmatprep.subr.mxu0 0.0
        %4405 = vmatpush1.msra.mxu0 0.0
        %4406 = vmatprep.subr.mxu0 0.0
        %4407 = vmatpush1.msra.mxu0 0.0
        %4408 = vmatprep.subr.mxu0 0.0
        %4409 = vmatpush1.msra.mxu0 0.0
        %4410 = vmatprep.mubr.f32.mxu0 0.0
        %4411 = vmatmul.mubr.f32.gmra.mrb[0].mxu0 %v4344
        %v4412 = vpop.f32.mrb[0].mxu0
        %v4413 = vadd.f32 0.0, %v4412
        %v4414 = vpop.f32.mrb[0].mxu0
        %4415 = vdwg.mxu0
        %v4416 = vld [vmem:[#allocation2 + $0x238] sm:$0xff]
        %v4417 = vld [vmem:[#allocation2 + $0x240] sm:$0xff]
        %v4418 = vld [vmem:[#allocation2 + $0x248] sm:$0xff]
        %v4419 = vld [vmem:[#allocation2 + $0x250] sm:$0xff]
        %v4420 = vld [vmem:[#allocation2 + $0x258] sm:$0x1]
        %v4421 = vlaneseq
        %v4422 = vshrl.u32 %v4421, 7
        %v4423 = vsub.s32 0, %v4422
        %v4424 = vrot.slane %v4420, %v4423
        %4425 = vmatprep.subr.mxu0 0.0
        %4426 = vmatpush1.msra.mxu0 %v4416
        %4427 = vmatprep.subr.mxu0 0.0
        %4428 = vmatpush1.msra.mxu0 %v4417
        %4429 = vmatprep.subr.mxu0 0.0
        %4430 = vmatpush1.msra.mxu0 %v4418
        %4431 = vmatprep.subr.mxu0 0.0
        %4432 = vmatpush1.msra.mxu0 %v4419
        %4433 = vmatprep.subr.mxu0 0.0
        %4434 = vmatpush1.msra.mxu0 0.0
        %4435 = vmatprep.subr.mxu0 0.0
        %4436 = vmatpush1.msra.mxu0 0.0
        %4437 = vmatprep.subr.mxu0 0.0
        %4438 = vmatpush1.msra.mxu0 0.0
        %4439 = vmatprep.subr.mxu0 0.0
        %4440 = vmatpush1.msra.mxu0 0.0
        %4441 = vmatprep.subr.mxu0 0.0
        %4442 = vmatpush1.msra.mxu0 0.0
        %4443 = vmatprep.subr.mxu0 0.0
        %4444 = vmatpush1.msra.mxu0 0.0
        %4445 = vmatprep.subr.mxu0 0.0
        %4446 = vmatpush1.msra.mxu0 0.0
        %4447 = vmatprep.subr.mxu0 0.0
        %4448 = vmatpush1.msra.mxu0 0.0
        %4449 = vmatprep.subr.mxu0 0.0
        %4450 = vmatpush1.msra.mxu0 0.0
        %4451 = vmatprep.subr.mxu0 0.0
        %4452 = vmatpush1.msra.mxu0 0.0
        %4453 = vmatprep.subr.mxu0 0.0
        %4454 = vmatpush1.msra.mxu0 0.0
        %4455 = vmatprep.subr.mxu0 0.0
        %4456 = vmatpush1.msra.mxu0 0.0
        %4457 = vmatprep.subr.mxu0 0.0
        %4458 = vmatpush1.msra.mxu0 0.0
        %4459 = vmatprep.subr.mxu0 0.0
        %4460 = vmatpush1.msra.mxu0 0.0
        %4461 = vmatprep.subr.mxu0 0.0
        %4462 = vmatpush1.msra.mxu0 0.0
        %4463 = vmatprep.subr.mxu0 0.0
        %4464 = vmatpush1.msra.mxu0 0.0
        %4465 = vmatprep.subr.mxu0 0.0
        %4466 = vmatpush1.msra.mxu0 0.0
        %4467 = vmatprep.subr.mxu0 0.0
        %4468 = vmatpush1.msra.mxu0 0.0
        %4469 = vmatprep.subr.mxu0 0.0
        %4470 = vmatpush1.msra.mxu0 0.0
        %4471 = vmatprep.subr.mxu0 0.0
        %4472 = vmatpush1.msra.mxu0 0.0
        %4473 = vmatprep.subr.mxu0 0.0
        %4474 = vmatpush1.msra.mxu0 0.0
        %4475 = vmatprep.subr.mxu0 0.0
        %4476 = vmatpush1.msra.mxu0 0.0
        %4477 = vmatprep.subr.mxu0 0.0
        %4478 = vmatpush1.msra.mxu0 0.0
        %4479 = vmatprep.subr.mxu0 0.0
        %4480 = vmatpush1.msra.mxu0 0.0
        %4481 = vmatprep.subr.mxu0 0.0
        %4482 = vmatpush1.msra.mxu0 0.0
        %4483 = vmatprep.subr.mxu0 0.0
        %4484 = vmatpush1.msra.mxu0 0.0
        %4485 = vmatprep.subr.mxu0 0.0
        %4486 = vmatpush1.msra.mxu0 0.0
        %4487 = vmatprep.subr.mxu0 0.0
        %4488 = vmatpush1.msra.mxu0 0.0
        %4489 = vmatprep.mubr.f32.mxu0 0.0
        %4490 = vmatmul.mubr.f32.gmra.mrb[0].mxu0 %v3033
        %v4491 = vpop.f32.mrb[0].mxu0
        %v4492 = vadd.f32 %v4424, %v4491
        %v4493 = vpop.f32.mrb[0].mxu0
        %4494 = vdwg.mxu0
        %v4495 = vmul.f32 %v4492, %v1371
        %v4496 = vmul.f32 %v4492, %v1373
        %v4497 = vmul.f32 %v4492, %v1375
        %v4498 = vmul.f32 %v4492, %v1377
        %4503 = vrot.lane.b32.xlu0 %v4495, 96
        %v4504 = vpop.permute.xlu0 %4503
        %4505 = vrot.lane.b32.xlu0 %v4496, 96
        %v4506 = vpop.permute.xlu0 %4505
        %4507 = vrot.lane.b32.xlu0 %v4497, 96
        %v4508 = vpop.permute.xlu0 %4507
        %4509 = vrot.lane.b32.xlu0 %v4498, 96
        %v4510 = vpop.permute.xlu0 %4509
        %v4512 = vsel %vm239, %v4492, 0
        %v4514 = vsel %vm239, %v4504, 0
        %v4516 = vsel %vm239, %v4506, 0
        %v4518 = vsel %vm239, %v4508, 0
        %v4520 = vsel %vm239, %v4510, 0
        %4522 = vmatprep.subr.mxu0 0.0
        %4523 = vmatpush1.xpose.msra.mxu0 %v4514
        %4524 = vmatprep.subr.mxu0 0.0
        %4525 = vmatpush1.xpose.msra.mxu0 %v4516
        %4526 = vmatprep.subr.mxu0 0.0
        %4527 = vmatpush1.xpose.msra.mxu0 %v4518
        %4528 = vmatprep.subr.mxu0 0.0
        %4529 = vmatpush1.xpose.msra.mxu0 %v4520
        %4530 = vmatprep.subr.mxu0 0.0
        %4531 = vmatpush1.xpose.msra.mxu0 0.0
        %4532 = vmatprep.subr.mxu0 0.0
        %4533 = vmatpush1.xpose.msra.mxu0 0.0
        %4534 = vmatprep.subr.mxu0 0.0
        %4535 = vmatpush1.xpose.msra.mxu0 0.0
        %4536 = vmatprep.subr.mxu0 0.0
        %4537 = vmatpush1.xpose.msra.mxu0 0.0
        %4538 = vmatprep.subr.mxu0 0.0
        %4539 = vmatpush1.xpose.msra.mxu0 0.0
        %4540 = vmatprep.subr.mxu0 0.0
        %4541 = vmatpush1.xpose.msra.mxu0 0.0
        %4542 = vmatprep.subr.mxu0 0.0
        %4543 = vmatpush1.xpose.msra.mxu0 0.0
        %4544 = vmatprep.subr.mxu0 0.0
        %4545 = vmatpush1.xpose.msra.mxu0 0.0
        %4546 = vmatprep.subr.mxu0 0.0
        %4547 = vmatpush1.xpose.msra.mxu0 0.0
        %4548 = vmatprep.subr.mxu0 0.0
        %4549 = vmatpush1.xpose.msra.mxu0 0.0
        %4550 = vmatprep.subr.mxu0 0.0
        %4551 = vmatpush1.xpose.msra.mxu0 0.0
        %4552 = vmatprep.subr.mxu0 0.0
        %4553 = vmatpush1.xpose.msra.mxu0 0.0
        %4554 = vmatprep.subr.mxu0 0.0
        %4555 = vmatpush1.xpose.msra.mxu0 0.0
        %4556 = vmatprep.subr.mxu0 0.0
        %4557 = vmatpush1.xpose.msra.mxu0 0.0
        %4558 = vmatprep.subr.mxu0 0.0
        %4559 = vmatpush1.xpose.msra.mxu0 0.0
        %4560 = vmatprep.subr.mxu0 0.0
        %4561 = vmatpush1.xpose.msra.mxu0 0.0
        %4562 = vmatprep.subr.mxu0 0.0
        %4563 = vmatpush1.xpose.msra.mxu0 0.0
        %4564 = vmatprep.subr.mxu0 0.0
        %4565 = vmatpush1.xpose.msra.mxu0 0.0
        %4566 = vmatprep.subr.mxu0 0.0
        %4567 = vmatpush1.xpose.msra.mxu0 0.0
        %4568 = vmatprep.subr.mxu0 0.0
        %4569 = vmatpush1.xpose.msra.mxu0 0.0
        %4570 = vmatprep.subr.mxu0 0.0
        %4571 = vmatpush1.xpose.msra.mxu0 0.0
        %4572 = vmatprep.subr.mxu0 0.0
        %4573 = vmatpush1.xpose.msra.mxu0 0.0
        %4574 = vmatprep.subr.mxu0 0.0
        %4575 = vmatpush1.xpose.msra.mxu0 0.0
        %4576 = vmatprep.subr.mxu0 0.0
        %4577 = vmatpush1.xpose.msra.mxu0 0.0
        %4578 = vmatprep.subr.mxu0 0.0
        %4579 = vmatpush1.xpose.msra.mxu0 0.0
        %4580 = vmatprep.subr.mxu0 0.0
        %4581 = vmatpush1.xpose.msra.mxu0 0.0
        %4582 = vmatprep.subr.mxu0 0.0
        %4583 = vmatpush1.xpose.msra.mxu0 0.0
        %4584 = vmatprep.subr.mxu0 0.0
        %4585 = vmatpush1.xpose.msra.mxu0 0.0
        %4586 = vmatprep.mubr.f32.mxu0 0.0
        %4587 = vmatmul.mubr.f32.gmra.mrb[0].mxu0 %v4512
        %v4588 = vpop.f32.mrb[0].mxu0
        %v4589 = vadd.f32 0.0, %v4588
        %v4590 = vpop.f32.mrb[0].mxu0
        %4591 = vdwg.mxu0
        %v4592 = vsel %vm239, %v4589, -inf
        %4593 = vmax.xlane.f32.xlu0 %v4592
        %v4594 = vpop.xlane.xlu0 %4593
        %v4595 = vsub.f32 %v4589, %v4594
        %v4596 = vmul.f32 %v4595, 1.442695
        %v4597 = vpow.pop %v4596
        %v4599 = vsel %vm239, %v4597, 0
        %4601 = vmatprep.subr.mxu0 0.0
        %4602 = vmatpush1.msra.mxu0 %v1362
        %4603 = vmatprep.subr.mxu0 0.0
        %4604 = vmatpush1.msra.mxu0 %v1363
        %4605 = vmatprep.subr.mxu0 0.0
        %4606 = vmatpush1.msra.mxu0 %v1364
        %4607 = vmatprep.subr.mxu0 0.0
        %4608 = vmatpush1.msra.mxu0 %v1365
        %4609 = vmatprep.subr.mxu0 0.0
        %4610 = vmatpush1.msra.mxu0 0.0
        %4611 = vmatprep.subr.mxu0 0.0
        %4612 = vmatpush1.msra.mxu0 0.0
        %4613 = vmatprep.subr.mxu0 0.0
        %4614 = vmatpush1.msra.mxu0 0.0
        %4615 = vmatprep.subr.mxu0 0.0
        %4616 = vmatpush1.msra.mxu0 0.0
        %4617 = vmatprep.subr.mxu0 0.0
        %4618 = vmatpush1.msra.mxu0 0.0
        %4619 = vmatprep.subr.mxu0 0.0
        %4620 = vmatpush1.msra.mxu0 0.0
        %4621 = vmatprep.subr.mxu0 0.0
        %4622 = vmatpush1.msra.mxu0 0.0
        %4623 = vmatprep.subr.mxu0 0.0
        %4624 = vmatpush1.msra.mxu0 0.0
        %4625 = vmatprep.subr.mxu0 0.0
        %4626 = vmatpush1.msra.mxu0 0.0
        %4627 = vmatprep.subr.mxu0 0.0
        %4628 = vmatpush1.msra.mxu0 0.0
        %4629 = vmatprep.subr.mxu0 0.0
        %4630 = vmatpush1.msra.mxu0 0.0
        %4631 = vmatprep.subr.mxu0 0.0
        %4632 = vmatpush1.msra.mxu0 0.0
        %4633 = vmatprep.subr.mxu0 0.0
        %4634 = vmatpush1.msra.mxu0 0.0
        %4635 = vmatprep.subr.mxu0 0.0
        %4636 = vmatpush1.msra.mxu0 0.0
        %4637 = vmatprep.subr.mxu0 0.0
        %4638 = vmatpush1.msra.mxu0 0.0
        %4639 = vmatprep.subr.mxu0 0.0
        %4640 = vmatpush1.msra.mxu0 0.0
        %4641 = vmatprep.subr.mxu0 0.0
        %4642 = vmatpush1.msra.mxu0 0.0
        %4643 = vmatprep.subr.mxu0 0.0
        %4644 = vmatpush1.msra.mxu0 0.0
        %4645 = vmatprep.subr.mxu0 0.0
        %4646 = vmatpush1.msra.mxu0 0.0
        %4647 = vmatprep.subr.mxu0 0.0
        %4648 = vmatpush1.msra.mxu0 0.0
        %4649 = vmatprep.subr.mxu0 0.0
        %4650 = vmatpush1.msra.mxu0 0.0
        %4651 = vmatprep.subr.mxu0 0.0
        %4652 = vmatpush1.msra.mxu0 0.0
        %4653 = vmatprep.subr.mxu0 0.0
        %4654 = vmatpush1.msra.mxu0 0.0
        %4655 = vmatprep.subr.mxu0 0.0
        %4656 = vmatpush1.msra.mxu0 0.0
        %4657 = vmatprep.subr.mxu0 0.0
        %4658 = vmatpush1.msra.mxu0 0.0
        %4659 = vmatprep.subr.mxu0 0.0
        %4660 = vmatpush1.msra.mxu0 0.0
        %4661 = vmatprep.subr.mxu0 0.0
        %4662 = vmatpush1.msra.mxu0 0.0
        %4663 = vmatprep.subr.mxu0 0.0
        %4664 = vmatpush1.msra.mxu0 0.0
        %4665 = vmatprep.mubr.f32.mxu0 0.0
        %4666 = vmatmul.mubr.f32.gmra.mrb[0].mxu0 %v4599
        %v4667 = vpop.f32.mrb[0].mxu0
        %v4668 = vadd.f32 0.0, %v4667
        %v4669 = vpop.f32.mrb[0].mxu0
        %4670 = vdwg.mxu0
        %v4671 = vrcp.pop %v4668
        %v4672 = vmul.f32 %v4597, %v4671
        %v4674 = vsel %vm239, %v4672, 0
        %4676 = vmatprep.subr.mxu0 0.0
        %4677 = vmatpush1.msra.mxu0 %v1747
        %4678 = vmatprep.subr.mxu0 0.0
        %4679 = vmatpush1.msra.mxu0 %v1748
        %4680 = vmatprep.subr.mxu0 0.0
        %4681 = vmatpush1.msra.mxu0 %v1749
        %4682 = vmatprep.subr.mxu0 0.0
        %4683 = vmatpush1.msra.mxu0 %v1750
        %4684 = vmatprep.subr.mxu0 0.0
        %4685 = vmatpush1.msra.mxu0 0.0
        %4686 = vmatprep.subr.mxu0 0.0
        %4687 = vmatpush1.msra.mxu0 0.0
        %4688 = vmatprep.subr.mxu0 0.0
        %4689 = vmatpush1.msra.mxu0 0.0
        %4690 = vmatprep.subr.mxu0 0.0
        %4691 = vmatpush1.msra.mxu0 0.0
        %4692 = vmatprep.subr.mxu0 0.0
        %4693 = vmatpush1.msra.mxu0 0.0
        %4694 = vmatprep.subr.mxu0 0.0
        %4695 = vmatpush1.msra.mxu0 0.0
        %4696 = vmatprep.subr.mxu0 0.0
        %4697 = vmatpush1.msra.mxu0 0.0
        %4698 = vmatprep.subr.mxu0 0.0
        %4699 = vmatpush1.msra.mxu0 0.0
        %4700 = vmatprep.subr.mxu0 0.0
        %4701 = vmatpush1.msra.mxu0 0.0
        %4702 = vmatprep.subr.mxu0 0.0
        %4703 = vmatpush1.msra.mxu0 0.0
        %4704 = vmatprep.subr.mxu0 0.0
        %4705 = vmatpush1.msra.mxu0 0.0
        %4706 = vmatprep.subr.mxu0 0.0
        %4707 = vmatpush1.msra.mxu0 0.0
        %4708 = vmatprep.subr.mxu0 0.0
        %4709 = vmatpush1.msra.mxu0 0.0
        %4710 = vmatprep.subr.mxu0 0.0
        %4711 = vmatpush1.msra.mxu0 0.0
        %4712 = vmatprep.subr.mxu0 0.0
        %4713 = vmatpush1.msra.mxu0 0.0
        %4714 = vmatprep.subr.mxu0 0.0
        %4715 = vmatpush1.msra.mxu0 0.0
        %4716 = vmatprep.subr.mxu0 0.0
        %4717 = vmatpush1.msra.mxu0 0.0
        %4718 = vmatprep.subr.mxu0 0.0
        %4719 = vmatpush1.msra.mxu0 0.0
        %4720 = vmatprep.subr.mxu0 0.0
        %4721 = vmatpush1.msra.mxu0 0.0
        %4722 = vmatprep.subr.mxu0 0.0
        %4723 = vmatpush1.msra.mxu0 0.0
        %4724 = vmatprep.subr.mxu0 0.0
        %4725 = vmatpush1.msra.mxu0 0.0
        %4726 = vmatprep.subr.mxu0 0.0
        %4727 = vmatpush1.msra.mxu0 0.0
        %4728 = vmatprep.subr.mxu0 0.0
        %4729 = vmatpush1.msra.mxu0 0.0
        %4730 = vmatprep.subr.mxu0 0.0
        %4731 = vmatpush1.msra.mxu0 0.0
        %4732 = vmatprep.subr.mxu0 0.0
        %4733 = vmatpush1.msra.mxu0 0.0
        %4734 = vmatprep.subr.mxu0 0.0
        %4735 = vmatpush1.msra.mxu0 0.0
        %4736 = vmatprep.subr.mxu0 0.0
        %4737 = vmatpush1.msra.mxu0 0.0
        %4738 = vmatprep.subr.mxu0 0.0
        %4739 = vmatpush1.msra.mxu0 0.0
        %4740 = vmatprep.mubr.f32.mxu0 0.0
        %4741 = vmatmul.mubr.f32.gmra.mrb[0].mxu0 %v4674
        %v4742 = vpop.f32.mrb[0].mxu0
        %v4743 = vadd.f32 0.0, %v4742
        %v4744 = vpop.f32.mrb[0].mxu0
        %4745 = vdwg.mxu0
        %v4746 = vld [vmem:[#allocation2 + $0x420] sm:$0xff]
        %v4747 = vld [vmem:[#allocation2 + $0x428] sm:$0xff]
        %v4748 = vld [vmem:[#allocation2 + $0x430] sm:$0xff]
        %v4749 = vld [vmem:[#allocation2 + $0x438] sm:$0xff]
        %v4750 = vld [vmem:[#allocation2 + $0x440] sm:$0xff]
        %v4751 = vld [vmem:[#allocation2 + $0x448] sm:$0xff]
        %v4752 = vld [vmem:[#allocation2 + $0x450] sm:$0xff]
        %v4753 = vld [vmem:[#allocation2 + $0x458] sm:$0xff]
        %4754 = vmatprep.subr.mxu0 0.0
        %4755 = vmatpush1.msra.mxu0 %v4750
        %4756 = vmatprep.subr.mxu0 0.0
        %4757 = vmatpush1.msra.mxu0 %v4751
        %4758 = vmatprep.subr.mxu0 0.0
        %4759 = vmatpush1.msra.mxu0 %v4752
        %4760 = vmatprep.subr.mxu0 0.0
        %4761 = vmatpush1.msra.mxu0 %v4753
        %4762 = vmatprep.subr.mxu0 0.0
        %4763 = vmatpush1.msra.mxu0 0.0
        %4764 = vmatprep.subr.mxu0 0.0
        %4765 = vmatpush1.msra.mxu0 0.0
        %4766 = vmatprep.subr.mxu0 0.0
        %4767 = vmatpush1.msra.mxu0 0.0
        %4768 = vmatprep.subr.mxu0 0.0
        %4769 = vmatpush1.msra.mxu0 0.0
        %4770 = vmatprep.subr.mxu0 0.0
        %4771 = vmatpush1.msra.mxu0 0.0
        %4772 = vmatprep.subr.mxu0 0.0
        %4773 = vmatpush1.msra.mxu0 0.0
        %4774 = vmatprep.subr.mxu0 0.0
        %4775 = vmatpush1.msra.mxu0 0.0
        %4776 = vmatprep.subr.mxu0 0.0
        %4777 = vmatpush1.msra.mxu0 0.0
        %4778 = vmatprep.subr.mxu0 0.0
        %4779 = vmatpush1.msra.mxu0 0.0
        %4780 = vmatprep.subr.mxu0 0.0
        %4781 = vmatpush1.msra.mxu0 0.0
        %4782 = vmatprep.subr.mxu0 0.0
        %4783 = vmatpush1.msra.mxu0 0.0
        %4784 = vmatprep.subr.mxu0 0.0
        %4785 = vmatpush1.msra.mxu0 0.0
        %4786 = vmatprep.subr.mxu0 0.0
        %4787 = vmatpush1.msra.mxu0 0.0
        %4788 = vmatprep.subr.mxu0 0.0
        %4789 = vmatpush1.msra.mxu0 0.0
        %4790 = vmatprep.subr.mxu0 0.0
        %4791 = vmatpush1.msra.mxu0 0.0
        %4792 = vmatprep.subr.mxu0 0.0
        %4793 = vmatpush1.msra.mxu0 0.0
        %4794 = vmatprep.subr.mxu0 0.0
        %4795 = vmatpush1.msra.mxu0 0.0
        %4796 = vmatprep.subr.mxu0 0.0
        %4797 = vmatpush1.msra.mxu0 0.0
        %4798 = vmatprep.subr.mxu0 0.0
        %4799 = vmatpush1.msra.mxu0 0.0
        %4800 = vmatprep.subr.mxu0 0.0
        %4801 = vmatpush1.msra.mxu0 0.0
        %4802 = vmatprep.subr.mxu0 0.0
        %4803 = vmatpush1.msra.mxu0 0.0
        %4804 = vmatprep.subr.mxu0 0.0
        %4805 = vmatpush1.msra.mxu0 0.0
        %4806 = vmatprep.subr.mxu0 0.0
        %4807 = vmatpush1.msra.mxu0 0.0
        %4808 = vmatprep.subr.mxu0 0.0
        %4809 = vmatpush1.msra.mxu0 0.0
        %4810 = vmatprep.subr.mxu0 0.0
        %4811 = vmatpush1.msra.mxu0 0.0
        %4812 = vmatprep.subr.mxu0 0.0
        %4813 = vmatpush1.msra.mxu0 0.0
        %4814 = vmatprep.subr.mxu0 0.0
        %4815 = vmatpush1.msra.mxu0 0.0
        %4816 = vmatprep.subr.mxu0 0.0
        %4817 = vmatpush1.msra.mxu0 0.0
        %4818 = vmatprep.mubr.f32.mxu0 0.0
        %4819 = vmatmul.mubr.f32.gmra.mrb[0].mxu0 %v2391
        %v4820 = vpop.f32.mrb[0].mxu0
        %v4821 = vadd.f32 0.0, %v4820
        %v4822 = vpop.f32.mrb[0].mxu0
        %4823 = vdwg.mxu0
        %v4825 = vsel %vm239, %v1197, 0
        %4827 = vmatprep.subr.mxu0 0.0
        %4828 = vmatpush1.msra.mxu0 %v4746
        %4829 = vmatprep.subr.mxu0 0.0
        %4830 = vmatpush1.msra.mxu0 %v4747
        %4831 = vmatprep.subr.mxu0 0.0
        %4832 = vmatpush1.msra.mxu0 %v4748
        %4833 = vmatprep.subr.mxu0 0.0
        %4834 = vmatpush1.msra.mxu0 %v4749
        %4835 = vmatprep.subr.mxu0 0.0
        %4836 = vmatpush1.msra.mxu0 0.0
        %4837 = vmatprep.subr.mxu0 0.0
        %4838 = vmatpush1.msra.mxu0 0.0
        %4839 = vmatprep.subr.mxu0 0.0
        %4840 = vmatpush1.msra.mxu0 0.0
        %4841 = vmatprep.subr.mxu0 0.0
        %4842 = vmatpush1.msra.mxu0 0.0
        %4843 = vmatprep.subr.mxu0 0.0
        %4844 = vmatpush1.msra.mxu0 0.0
        %4845 = vmatprep.subr.mxu0 0.0
        %4846 = vmatpush1.msra.mxu0 0.0
        %4847 = vmatprep.subr.mxu0 0.0
        %4848 = vmatpush1.msra.mxu0 0.0
        %4849 = vmatprep.subr.mxu0 0.0
        %4850 = vmatpush1.msra.mxu0 0.0
        %4851 = vmatprep.subr.mxu0 0.0
        %4852 = vmatpush1.msra.mxu0 0.0
        %4853 = vmatprep.subr.mxu0 0.0
        %4854 = vmatpush1.msra.mxu0 0.0
        %4855 = vmatprep.subr.mxu0 0.0
        %4856 = vmatpush1.msra.mxu0 0.0
        %4857 = vmatprep.subr.mxu0 0.0
        %4858 = vmatpush1.msra.mxu0 0.0
        %4859 = vmatprep.subr.mxu0 0.0
        %4860 = vmatpush1.msra.mxu0 0.0
        %4861 = vmatprep.subr.mxu0 0.0
        %4862 = vmatpush1.msra.mxu0 0.0
        %4863 = vmatprep.subr.mxu0 0.0
        %4864 = vmatpush1.msra.mxu0 0.0
        %4865 = vmatprep.subr.mxu0 0.0
        %4866 = vmatpush1.msra.mxu0 0.0
        %4867 = vmatprep.subr.mxu0 0.0
        %4868 = vmatpush1.msra.mxu0 0.0
        %4869 = vmatprep.subr.mxu0 0.0
        %4870 = vmatpush1.msra.mxu0 0.0
        %4871 = vmatprep.subr.mxu0 0.0
        %4872 = vmatpush1.msra.mxu0 0.0
        %4873 = vmatprep.subr.mxu0 0.0
        %4874 = vmatpush1.msra.mxu0 0.0
        %4875 = vmatprep.subr.mxu0 0.0
        %4876 = vmatpush1.msra.mxu0 0.0
        %4877 = vmatprep.subr.mxu0 0.0
        %4878 = vmatpush1.msra.mxu0 0.0
        %4879 = vmatprep.subr.mxu0 0.0
        %4880 = vmatpush1.msra.mxu0 0.0
        %4881 = vmatprep.subr.mxu0 0.0
        %4882 = vmatpush1.msra.mxu0 0.0
        %4883 = vmatprep.subr.mxu0 0.0
        %4884 = vmatpush1.msra.mxu0 0.0
        %4885 = vmatprep.subr.mxu0 0.0
        %4886 = vmatpush1.msra.mxu0 0.0
        %4887 = vmatprep.subr.mxu0 0.0
        %4888 = vmatpush1.msra.mxu0 0.0
        %4889 = vmatprep.subr.mxu0 0.0
        %4890 = vmatpush1.msra.mxu0 0.0
        %4891 = vmatprep.mubr.f32.mxu0 0.0
        %4892 = vmatmul.mubr.f32.gmra.mrb[0].mxu0 %v4825
        %v4893 = vpop.f32.mrb[0].mxu0
        %v4894 = vadd.f32 %v4821, %v4893
        %v4895 = vpop.f32.mrb[0].mxu0
        %4896 = vdwg.mxu0
        %v4897 = vld [vmem:[#allocation2 + $0x460] sm:$0xff]
        %v4898 = vld [vmem:[#allocation2 + $0x468] sm:$0xff]
        %v4899 = vld [vmem:[#allocation2 + $0x470] sm:$0xff]
        %v4900 = vld [vmem:[#allocation2 + $0x478] sm:$0xff]
        %4901 = vmatprep.subr.mxu0 0.0
        %4902 = vmatpush1.msra.mxu0 %v4897
        %4903 = vmatprep.subr.mxu0 0.0
        %4904 = vmatpush1.msra.mxu0 %v4898
        %4905 = vmatprep.subr.mxu0 0.0
        %4906 = vmatpush1.msra.mxu0 %v4899
        %4907 = vmatprep.subr.mxu0 0.0
        %4908 = vmatpush1.msra.mxu0 %v4900
        %4909 = vmatprep.subr.mxu0 0.0
        %4910 = vmatpush1.msra.mxu0 0.0
        %4911 = vmatprep.subr.mxu0 0.0
        %4912 = vmatpush1.msra.mxu0 0.0
        %4913 = vmatprep.subr.mxu0 0.0
        %4914 = vmatpush1.msra.mxu0 0.0
        %4915 = vmatprep.subr.mxu0 0.0
        %4916 = vmatpush1.msra.mxu0 0.0
        %4917 = vmatprep.subr.mxu0 0.0
        %4918 = vmatpush1.msra.mxu0 0.0
        %4919 = vmatprep.subr.mxu0 0.0
        %4920 = vmatpush1.msra.mxu0 0.0
        %4921 = vmatprep.subr.mxu0 0.0
        %4922 = vmatpush1.msra.mxu0 0.0
        %4923 = vmatprep.subr.mxu0 0.0
        %4924 = vmatpush1.msra.mxu0 0.0
        %4925 = vmatprep.subr.mxu0 0.0
        %4926 = vmatpush1.msra.mxu0 0.0
        %4927 = vmatprep.subr.mxu0 0.0
        %4928 = vmatpush1.msra.mxu0 0.0
        %4929 = vmatprep.subr.mxu0 0.0
        %4930 = vmatpush1.msra.mxu0 0.0
        %4931 = vmatprep.subr.mxu0 0.0
        %4932 = vmatpush1.msra.mxu0 0.0
        %4933 = vmatprep.subr.mxu0 0.0
        %4934 = vmatpush1.msra.mxu0 0.0
        %4935 = vmatprep.subr.mxu0 0.0
        %4936 = vmatpush1.msra.mxu0 0.0
        %4937 = vmatprep.subr.mxu0 0.0
        %4938 = vmatpush1.msra.mxu0 0.0
        %4939 = vmatprep.subr.mxu0 0.0
        %4940 = vmatpush1.msra.mxu0 0.0
        %4941 = vmatprep.subr.mxu0 0.0
        %4942 = vmatpush1.msra.mxu0 0.0
        %4943 = vmatprep.subr.mxu0 0.0
        %4944 = vmatpush1.msra.mxu0 0.0
        %4945 = vmatprep.subr.mxu0 0.0
        %4946 = vmatpush1.msra.mxu0 0.0
        %4947 = vmatprep.subr.mxu0 0.0
        %4948 = vmatpush1.msra.mxu0 0.0
        %4949 = vmatprep.subr.mxu0 0.0
        %4950 = vmatpush1.msra.mxu0 0.0
        %4951 = vmatprep.subr.mxu0 0.0
        %4952 = vmatpush1.msra.mxu0 0.0
        %4953 = vmatprep.subr.mxu0 0.0
        %4954 = vmatpush1.msra.mxu0 0.0
        %4955 = vmatprep.subr.mxu0 0.0
        %4956 = vmatpush1.msra.mxu0 0.0
        %4957 = vmatprep.subr.mxu0 0.0
        %4958 = vmatpush1.msra.mxu0 0.0
        %4959 = vmatprep.subr.mxu0 0.0
        %4960 = vmatpush1.msra.mxu0 0.0
        %4961 = vmatprep.subr.mxu0 0.0
        %4962 = vmatpush1.msra.mxu0 0.0
        %4963 = vmatprep.subr.mxu0 0.0
        %4964 = vmatpush1.msra.mxu0 0.0
        %4965 = vmatprep.mubr.f32.mxu0 0.0
        %4966 = vmatmul.mubr.f32.gmra.mrb[0].mxu0 %v2940
        %v4967 = vpop.f32.mrb[0].mxu0
        %v4968 = vadd.f32 0.0, %v4967
        %v4969 = vpop.f32.mrb[0].mxu0
        %4970 = vdwg.mxu0
        %v4971 = vadd.f32 %v4894, %v4968
        %v4972 = vld [vmem:[#allocation2 + $0x480] sm:$0xff]
        %v4973 = vld [vmem:[#allocation2 + $0x488] sm:$0xff]
        %v4974 = vld [vmem:[#allocation2 + $0x490] sm:$0xff]
        %v4975 = vld [vmem:[#allocation2 + $0x498] sm:$0xff]
        %v4977 = vsel %vm239, %v3518, 0
        %4979 = vmatprep.subr.mxu0 0.0
        %4980 = vmatpush1.msra.mxu0 %v4972
        %4981 = vmatprep.subr.mxu0 0.0
        %4982 = vmatpush1.msra.mxu0 %v4973
        %4983 = vmatprep.subr.mxu0 0.0
        %4984 = vmatpush1.msra.mxu0 %v4974
        %4985 = vmatprep.subr.mxu0 0.0
        %4986 = vmatpush1.msra.mxu0 %v4975
        %4987 = vmatprep.subr.mxu0 0.0
        %4988 = vmatpush1.msra.mxu0 0.0
        %4989 = vmatprep.subr.mxu0 0.0
        %4990 = vmatpush1.msra.mxu0 0.0
        %4991 = vmatprep.subr.mxu0 0.0
        %4992 = vmatpush1.msra.mxu0 0.0
        %4993 = vmatprep.subr.mxu0 0.0
        %4994 = vmatpush1.msra.mxu0 0.0
        %4995 = vmatprep.subr.mxu0 0.0
        %4996 = vmatpush1.msra.mxu0 0.0
        %4997 = vmatprep.subr.mxu0 0.0
        %4998 = vmatpush1.msra.mxu0 0.0
        %4999 = vmatprep.subr.mxu0 0.0
        %5000 = vmatpush1.msra.mxu0 0.0
        %5001 = vmatprep.subr.mxu0 0.0
        %5002 = vmatpush1.msra.mxu0 0.0
        %5003 = vmatprep.subr.mxu0 0.0
        %5004 = vmatpush1.msra.mxu0 0.0
        %5005 = vmatprep.subr.mxu0 0.0
        %5006 = vmatpush1.msra.mxu0 0.0
        %5007 = vmatprep.subr.mxu0 0.0
        %5008 = vmatpush1.msra.mxu0 0.0
        %5009 = vmatprep.subr.mxu0 0.0
        %5010 = vmatpush1.msra.mxu0 0.0
        %5011 = vmatprep.subr.mxu0 0.0
        %5012 = vmatpush1.msra.mxu0 0.0
        %5013 = vmatprep.subr.mxu0 0.0
        %5014 = vmatpush1.msra.mxu0 0.0
        %5015 = vmatprep.subr.mxu0 0.0
        %5016 = vmatpush1.msra.mxu0 0.0
        %5017 = vmatprep.subr.mxu0 0.0
        %5018 = vmatpush1.msra.mxu0 0.0
        %5019 = vmatprep.subr.mxu0 0.0
        %5020 = vmatpush1.msra.mxu0 0.0
        %5021 = vmatprep.subr.mxu0 0.0
        %5022 = vmatpush1.msra.mxu0 0.0
        %5023 = vmatprep.subr.mxu0 0.0
        %5024 = vmatpush1.msra.mxu0 0.0
        %5025 = vmatprep.subr.mxu0 0.0
        %5026 = vmatpush1.msra.mxu0 0.0
        %5027 = vmatprep.subr.mxu0 0.0
        %5028 = vmatpush1.msra.mxu0 0.0
        %5029 = vmatprep.subr.mxu0 0.0
        %5030 = vmatpush1.msra.mxu0 0.0
        %5031 = vmatprep.subr.mxu0 0.0
        %5032 = vmatpush1.msra.mxu0 0.0
        %5033 = vmatprep.subr.mxu0 0.0
        %5034 = vmatpush1.msra.mxu0 0.0
        %5035 = vmatprep.subr.mxu0 0.0
        %5036 = vmatpush1.msra.mxu0 0.0
        %5037 = vmatprep.subr.mxu0 0.0
        %5038 = vmatpush1.msra.mxu0 0.0
        %5039 = vmatprep.subr.mxu0 0.0
        %5040 = vmatpush1.msra.mxu0 0.0
        %5041 = vmatprep.subr.mxu0 0.0
        %5042 = vmatpush1.msra.mxu0 0.0
        %5043 = vmatprep.mubr.f32.mxu0 0.0
        %5044 = vmatmul.mubr.f32.gmra.mrb[0].mxu0 %v4977
        %v5045 = vpop.f32.mrb[0].mxu0
        %v5046 = vadd.f32 0.0, %v5045
        %v5047 = vpop.f32.mrb[0].mxu0
        %5048 = vdwg.mxu0
        %v5049 = vadd.f32 %v4971, %v5046
        %v5050 = vld [vmem:[#allocation2 + $0x4a0] sm:$0x1]
        %v5051 = vlaneseq
        %v5052 = vshrl.u32 %v5051, 7
        %v5053 = vsub.s32 0, %v5052
        %v5054 = vrot.slane %v5050, %v5053
        %v5055 = vadd.f32 %v5049, %v5054
        %v5056 = vmax.f32 %v5055, 0.0
        %v5057 = vld [vmem:[#allocation2 + $0x4a8] sm:$0xff]
        %v5058 = vld [vmem:[#allocation2 + $0x4b0] sm:$0xff]
        %v5059 = vld [vmem:[#allocation2 + $0x4b8] sm:$0xff]
        %v5060 = vld [vmem:[#allocation2 + $0x4c0] sm:$0xff]
        %v5061 = vld [vmem:[#allocation2 + $0x4c8] sm:$0x1]
        %v5062 = vlaneseq
        %v5063 = vshrl.u32 %v5062, 7
        %v5064 = vsub.s32 0, %v5063
        %v5065 = vrot.slane %v5061, %v5064
        %v5067 = vsel %vm239, %v5056, 0
        %5069 = vmatprep.subr.mxu0 0.0
        %5070 = vmatpush1.msra.mxu0 %v5057
        %5071 = vmatprep.subr.mxu0 0.0
        %5072 = vmatpush1.msra.mxu0 %v5058
        %5073 = vmatprep.subr.mxu0 0.0
        %5074 = vmatpush1.msra.mxu0 %v5059
        %5075 = vmatprep.subr.mxu0 0.0
        %5076 = vmatpush1.msra.mxu0 %v5060
        %5077 = vmatprep.subr.mxu0 0.0
        %5078 = vmatpush1.msra.mxu0 0.0
        %5079 = vmatprep.subr.mxu0 0.0
        %5080 = vmatpush1.msra.mxu0 0.0
        %5081 = vmatprep.subr.mxu0 0.0
        %5082 = vmatpush1.msra.mxu0 0.0
        %5083 = vmatprep.subr.mxu0 0.0
        %5084 = vmatpush1.msra.mxu0 0.0
        %5085 = vmatprep.subr.mxu0 0.0
        %5086 = vmatpush1.msra.mxu0 0.0
        %5087 = vmatprep.subr.mxu0 0.0
        %5088 = vmatpush1.msra.mxu0 0.0
        %5089 = vmatprep.subr.mxu0 0.0
        %5090 = vmatpush1.msra.mxu0 0.0
        %5091 = vmatprep.subr.mxu0 0.0
        %5092 = vmatpush1.msra.mxu0 0.0
        %5093 = vmatprep.subr.mxu0 0.0
        %5094 = vmatpush1.msra.mxu0 0.0
        %5095 = vmatprep.subr.mxu0 0.0
        %5096 = vmatpush1.msra.mxu0 0.0
        %5097 = vmatprep.subr.mxu0 0.0
        %5098 = vmatpush1.msra.mxu0 0.0
        %5099 = vmatprep.subr.mxu0 0.0
        %5100 = vmatpush1.msra.mxu0 0.0
        %5101 = vmatprep.subr.mxu0 0.0
        %5102 = vmatpush1.msra.mxu0 0.0
        %5103 = vmatprep.subr.mxu0 0.0
        %5104 = vmatpush1.msra.mxu0 0.0
        %5105 = vmatprep.subr.mxu0 0.0
        %5106 = vmatpush1.msra.mxu0 0.0
        %5107 = vmatprep.subr.mxu0 0.0
        %5108 = vmatpush1.msra.mxu0 0.0
        %5109 = vmatprep.subr.mxu0 0.0
        %5110 = vmatpush1.msra.mxu0 0.0
        %5111 = vmatprep.subr.mxu0 0.0
        %5112 = vmatpush1.msra.mxu0 0.0
        %5113 = vmatprep.subr.mxu0 0.0
        %5114 = vmatpush1.msra.mxu0 0.0
        %5115 = vmatprep.subr.mxu0 0.0
        %5116 = vmatpush1.msra.mxu0 0.0
        %5117 = vmatprep.subr.mxu0 0.0
        %5118 = vmatpush1.msra.mxu0 0.0
        %5119 = vmatprep.subr.mxu0 0.0
        %5120 = vmatpush1.msra.mxu0 0.0
        %5121 = vmatprep.subr.mxu0 0.0
        %5122 = vmatpush1.msra.mxu0 0.0
        %5123 = vmatprep.subr.mxu0 0.0
        %5124 = vmatpush1.msra.mxu0 0.0
        %5125 = vmatprep.subr.mxu0 0.0
        %5126 = vmatpush1.msra.mxu0 0.0
        %5127 = vmatprep.subr.mxu0 0.0
        %5128 = vmatpush1.msra.mxu0 0.0
        %5129 = vmatprep.subr.mxu0 0.0
        %5130 = vmatpush1.msra.mxu0 0.0
        %5131 = vmatprep.subr.mxu0 0.0
        %5132 = vmatpush1.msra.mxu0 0.0
        %5133 = vmatprep.mubr.f32.mxu0 0.0
        %5134 = vmatmul.mubr.f32.gmra.mrb[0].mxu0 %v5067
        %v5135 = vpop.f32.mrb[0].mxu0
        %v5136 = vadd.f32 %v5065, %v5135
        %v5137 = vpop.f32.mrb[0].mxu0
        %5138 = vdwg.mxu0
        %v5139 = vtanh.pop %v5136
        %v5140 = vld [vmem:[#allocation2 + $0x360] sm:$0xff]
        %v5141 = vld [vmem:[#allocation2 + $0x368] sm:$0xff]
        %v5142 = vld [vmem:[#allocation2 + $0x370] sm:$0xff]
        %v5143 = vld [vmem:[#allocation2 + $0x378] sm:$0xff]
        %v5144 = vld [vmem:[#allocation2 + $0x380] sm:$0x1]
        %v5145 = vlaneseq
        %v5146 = vshrl.u32 %v5145, 7
        %v5147 = vsub.s32 0, %v5146
        %v5148 = vrot.slane %v5144, %v5147
        %v5150 = vsel %vm239, %v5139, 0
        %5152 = vmatprep.subr.mxu0 0.0
        %5153 = vmatpush1.msra.mxu0 %v5140
        %5154 = vmatprep.subr.mxu0 0.0
        %5155 = vmatpush1.msra.mxu0 %v5141
        %5156 = vmatprep.subr.mxu0 0.0
        %5157 = vmatpush1.msra.mxu0 %v5142
        %5158 = vmatprep.subr.mxu0 0.0
        %5159 = vmatpush1.msra.mxu0 %v5143
        %5160 = vmatprep.subr.mxu0 0.0
        %5161 = vmatpush1.msra.mxu0 0.0
        %5162 = vmatprep.subr.mxu0 0.0
        %5163 = vmatpush1.msra.mxu0 0.0
        %5164 = vmatprep.subr.mxu0 0.0
        %5165 = vmatpush1.msra.mxu0 0.0
        %5166 = vmatprep.subr.mxu0 0.0
        %5167 = vmatpush1.msra.mxu0 0.0
        %5168 = vmatprep.subr.mxu0 0.0
        %5169 = vmatpush1.msra.mxu0 0.0
        %5170 = vmatprep.subr.mxu0 0.0
        %5171 = vmatpush1.msra.mxu0 0.0
        %5172 = vmatprep.subr.mxu0 0.0
        %5173 = vmatpush1.msra.mxu0 0.0
        %5174 = vmatprep.subr.mxu0 0.0
        %5175 = vmatpush1.msra.mxu0 0.0
        %5176 = vmatprep.subr.mxu0 0.0
        %5177 = vmatpush1.msra.mxu0 0.0
        %5178 = vmatprep.subr.mxu0 0.0
        %5179 = vmatpush1.msra.mxu0 0.0
        %5180 = vmatprep.subr.mxu0 0.0
        %5181 = vmatpush1.msra.mxu0 0.0
        %5182 = vmatprep.subr.mxu0 0.0
        %5183 = vmatpush1.msra.mxu0 0.0
        %5184 = vmatprep.subr.mxu0 0.0
        %5185 = vmatpush1.msra.mxu0 0.0
        %5186 = vmatprep.subr.mxu0 0.0
        %5187 = vmatpush1.msra.mxu0 0.0
        %5188 = vmatprep.subr.mxu0 0.0
        %5189 = vmatpush1.msra.mxu0 0.0
        %5190 = vmatprep.subr.mxu0 0.0
        %5191 = vmatpush1.msra.mxu0 0.0
        %5192 = vmatprep.subr.mxu0 0.0
        %5193 = vmatpush1.msra.mxu0 0.0
        %5194 = vmatprep.subr.mxu0 0.0
        %5195 = vmatpush1.msra.mxu0 0.0
        %5196 = vmatprep.subr.mxu0 0.0
        %5197 = vmatpush1.msra.mxu0 0.0
        %5198 = vmatprep.subr.mxu0 0.0
        %5199 = vmatpush1.msra.mxu0 0.0
        %5200 = vmatprep.subr.mxu0 0.0
        %5201 = vmatpush1.msra.mxu0 0.0
        %5202 = vmatprep.subr.mxu0 0.0
        %5203 = vmatpush1.msra.mxu0 0.0
        %5204 = vmatprep.subr.mxu0 0.0
        %5205 = vmatpush1.msra.mxu0 0.0
        %5206 = vmatprep.subr.mxu0 0.0
        %5207 = vmatpush1.msra.mxu0 0.0
        %5208 = vmatprep.subr.mxu0 0.0
        %5209 = vmatpush1.msra.mxu0 0.0
        %5210 = vmatprep.subr.mxu0 0.0
        %5211 = vmatpush1.msra.mxu0 0.0
        %5212 = vmatprep.subr.mxu0 0.0
        %5213 = vmatpush1.msra.mxu0 0.0
        %5214 = vmatprep.subr.mxu0 0.0
        %5215 = vmatpush1.msra.mxu0 0.0
        %5216 = vmatprep.mubr.f32.mxu0 0.0
        %5217 = vmatmul.mubr.f32.gmra.mrb[0].mxu0 %v5150
        %v5218 = vpop.f32.mrb[0].mxu0
        %v5219 = vadd.f32 %v5148, %v5218
        %v5220 = vpop.f32.mrb[0].mxu0
        %5221 = vdwg.mxu0
        %v5222 = vmax.f32 %v5219, 0.0
        %v5223 = vld [vmem:[#allocation2 + $0x388] sm:$0xff]
        %v5224 = vld [vmem:[#allocation2 + $0x390] sm:$0xff]
        %v5225 = vld [vmem:[#allocation2 + $0x398] sm:$0x1]
        %v5226 = vlaneseq
        %v5227 = vshrl.u32 %v5226, 7
        %v5228 = vsub.s32 0, %v5227
        %v5229 = vrot.slane %v5225, %v5228
        %v5231 = vsel %vm164, %v5222, 0
        %5233 = vmatprep.subr.mxu0 0.0
        %5234 = vmatpush1.msra.mxu0 %v5223
        %5235 = vmatprep.subr.mxu0 0.0
        %5236 = vmatpush1.msra.mxu0 %v5224
        %5237 = vmatprep.subr.mxu0 0.0
        %5238 = vmatpush1.msra.mxu0 0.0
        %5239 = vmatprep.subr.mxu0 0.0
        %5240 = vmatpush1.msra.mxu0 0.0
        %5241 = vmatprep.subr.mxu0 0.0
        %5242 = vmatpush1.msra.mxu0 0.0
        %5243 = vmatprep.subr.mxu0 0.0
        %5244 = vmatpush1.msra.mxu0 0.0
        %5245 = vmatprep.subr.mxu0 0.0
        %5246 = vmatpush1.msra.mxu0 0.0
        %5247 = vmatprep.subr.mxu0 0.0
        %5248 = vmatpush1.msra.mxu0 0.0
        %5249 = vmatprep.subr.mxu0 0.0
        %5250 = vmatpush1.msra.mxu0 0.0
        %5251 = vmatprep.subr.mxu0 0.0
        %5252 = vmatpush1.msra.mxu0 0.0
        %5253 = vmatprep.subr.mxu0 0.0
        %5254 = vmatpush1.msra.mxu0 0.0
        %5255 = vmatprep.subr.mxu0 0.0
        %5256 = vmatpush1.msra.mxu0 0.0
        %5257 = vmatprep.subr.mxu0 0.0
        %5258 = vmatpush1.msra.mxu0 0.0
        %5259 = vmatprep.subr.mxu0 0.0
        %5260 = vmatpush1.msra.mxu0 0.0
        %5261 = vmatprep.subr.mxu0 0.0
        %5262 = vmatpush1.msra.mxu0 0.0
        %5263 = vmatprep.subr.mxu0 0.0
        %5264 = vmatpush1.msra.mxu0 0.0
        %5265 = vmatprep.subr.mxu0 0.0
        %5266 = vmatpush1.msra.mxu0 0.0
        %5267 = vmatprep.subr.mxu0 0.0
        %5268 = vmatpush1.msra.mxu0 0.0
        %5269 = vmatprep.subr.mxu0 0.0
        %5270 = vmatpush1.msra.mxu0 0.0
        %5271 = vmatprep.subr.mxu0 0.0
        %5272 = vmatpush1.msra.mxu0 0.0
        %5273 = vmatprep.subr.mxu0 0.0
        %5274 = vmatpush1.msra.mxu0 0.0
        %5275 = vmatprep.subr.mxu0 0.0
        %5276 = vmatpush1.msra.mxu0 0.0
        %5277 = vmatprep.subr.mxu0 0.0
        %5278 = vmatpush1.msra.mxu0 0.0
        %5279 = vmatprep.subr.mxu0 0.0
        %5280 = vmatpush1.msra.mxu0 0.0
        %5281 = vmatprep.subr.mxu0 0.0
        %5282 = vmatpush1.msra.mxu0 0.0
        %5283 = vmatprep.subr.mxu0 0.0
        %5284 = vmatpush1.msra.mxu0 0.0
        %5285 = vmatprep.subr.mxu0 0.0
        %5286 = vmatpush1.msra.mxu0 0.0
        %5287 = vmatprep.subr.mxu0 0.0
        %5288 = vmatpush1.msra.mxu0 0.0
        %5289 = vmatprep.subr.mxu0 0.0
        %5290 = vmatpush1.msra.mxu0 0.0
        %5291 = vmatprep.subr.mxu0 0.0
        %5292 = vmatpush1.msra.mxu0 0.0
        %5293 = vmatprep.subr.mxu0 0.0
        %5294 = vmatpush1.msra.mxu0 0.0
        %5295 = vmatprep.subr.mxu0 0.0
        %5296 = vmatpush1.msra.mxu0 0.0
        %5297 = vmatprep.mubr.f32.mxu0 0.0
        %5298 = vmatmul.mubr.f32.gmra.mrb[0].mxu0 %v5231
        %v5299 = vpop.f32.mrb[0].mxu0
        %v5300 = vadd.f32 %v5229, %v5299
        %v5301 = vpop.f32.mrb[0].mxu0
        %5302 = vdwg.mxu0
        %v5303 = vtanh.pop %v5300
        %v5304 = vld [vmem:[#allocation2 + $0x3a0] sm:$0xff]
        %v5305 = vld [vmem:[#allocation2 + $0x3a8] sm:$0xff]
        %v5306 = vld [vmem:[#allocation2 + $0x3b0] sm:$0xff]
        %v5307 = vld [vmem:[#allocation2 + $0x3b8] sm:$0xff]
        %v5308 = vld [vmem:[#allocation2 + $0x3c0] sm:$0x1]
        %v5309 = vlaneseq
        %v5310 = vshrl.u32 %v5309, 7
        %v5311 = vsub.s32 0, %v5310
        %v5312 = vrot.slane %v5308, %v5311
        %5313 = vmatprep.subr.mxu0 0.0
        %5314 = vmatpush1.msra.mxu0 %v5304
        %5315 = vmatprep.subr.mxu0 0.0
        %5316 = vmatpush1.msra.mxu0 %v5305
        %5317 = vmatprep.subr.mxu0 0.0
        %5318 = vmatpush1.msra.mxu0 %v5306
        %5319 = vmatprep.subr.mxu0 0.0
        %5320 = vmatpush1.msra.mxu0 %v5307
        %5321 = vmatprep.subr.mxu0 0.0
        %5322 = vmatpush1.msra.mxu0 0.0
        %5323 = vmatprep.subr.mxu0 0.0
        %5324 = vmatpush1.msra.mxu0 0.0
        %5325 = vmatprep.subr.mxu0 0.0
        %5326 = vmatpush1.msra.mxu0 0.0
        %5327 = vmatprep.subr.mxu0 0.0
        %5328 = vmatpush1.msra.mxu0 0.0
        %5329 = vmatprep.subr.mxu0 0.0
        %5330 = vmatpush1.msra.mxu0 0.0
        %5331 = vmatprep.subr.mxu0 0.0
        %5332 = vmatpush1.msra.mxu0 0.0
        %5333 = vmatprep.subr.mxu0 0.0
        %5334 = vmatpush1.msra.mxu0 0.0
        %5335 = vmatprep.subr.mxu0 0.0
        %5336 = vmatpush1.msra.mxu0 0.0
        %5337 = vmatprep.subr.mxu0 0.0
        %5338 = vmatpush1.msra.mxu0 0.0
        %5339 = vmatprep.subr.mxu0 0.0
        %5340 = vmatpush1.msra.mxu0 0.0
        %5341 = vmatprep.subr.mxu0 0.0
        %5342 = vmatpush1.msra.mxu0 0.0
        %5343 = vmatprep.subr.mxu0 0.0
        %5344 = vmatpush1.msra.mxu0 0.0
        %5345 = vmatprep.subr.mxu0 0.0
        %5346 = vmatpush1.msra.mxu0 0.0
        %5347 = vmatprep.subr.mxu0 0.0
        %5348 = vmatpush1.msra.mxu0 0.0
        %5349 = vmatprep.subr.mxu0 0.0
        %5350 = vmatpush1.msra.mxu0 0.0
        %5351 = vmatprep.subr.mxu0 0.0
        %5352 = vmatpush1.msra.mxu0 0.0
        %5353 = vmatprep.subr.mxu0 0.0
        %5354 = vmatpush1.msra.mxu0 0.0
        %5355 = vmatprep.subr.mxu0 0.0
        %5356 = vmatpush1.msra.mxu0 0.0
        %5357 = vmatprep.subr.mxu0 0.0
        %5358 = vmatpush1.msra.mxu0 0.0
        %5359 = vmatprep.subr.mxu0 0.0
        %5360 = vmatpush1.msra.mxu0 0.0
        %5361 = vmatprep.subr.mxu0 0.0
        %5362 = vmatpush1.msra.mxu0 0.0
        %5363 = vmatprep.subr.mxu0 0.0
        %5364 = vmatpush1.msra.mxu0 0.0
        %5365 = vmatprep.subr.mxu0 0.0
        %5366 = vmatpush1.msra.mxu0 0.0
        %5367 = vmatprep.subr.mxu0 0.0
        %5368 = vmatpush1.msra.mxu0 0.0
        %5369 = vmatprep.subr.mxu0 0.0
        %5370 = vmatpush1.msra.mxu0 0.0
        %5371 = vmatprep.subr.mxu0 0.0
        %5372 = vmatpush1.msra.mxu0 0.0
        %5373 = vmatprep.subr.mxu0 0.0
        %5374 = vmatpush1.msra.mxu0 0.0
        %5375 = vmatprep.subr.mxu0 0.0
        %5376 = vmatpush1.msra.mxu0 0.0
        %5377 = vmatprep.mubr.f32.mxu0 0.0
        %5378 = vmatmul.mubr.f32.gmra.mrb[0].mxu0 %v5150
        %v5379 = vpop.f32.mrb[0].mxu0
        %v5380 = vadd.f32 %v5312, %v5379
        %v5381 = vpop.f32.mrb[0].mxu0
        %5382 = vdwg.mxu0
        %v5383 = vmax.f32 %v5380, 0.0
        %v5384 = vld [vmem:[#allocation2 + $0x3c8] sm:$0xff]
        %v5385 = vld [vmem:[#allocation2 + $0x3d0] sm:$0xff]
        %v5386 = vld [vmem:[#allocation2 + $0x3d8] sm:$0x1]
        %v5387 = vlaneseq
        %v5388 = vshrl.u32 %v5387, 7
        %v5389 = vsub.s32 0, %v5388
        %v5390 = vrot.slane %v5386, %v5389
        %v5392 = vsel %vm164, %v5383, 0
        %5394 = vmatprep.subr.mxu0 0.0
        %5395 = vmatpush1.msra.mxu0 %v5384
        %5396 = vmatprep.subr.mxu0 0.0
        %5397 = vmatpush1.msra.mxu0 %v5385
        %5398 = vmatprep.subr.mxu0 0.0
        %5399 = vmatpush1.msra.mxu0 0.0
        %5400 = vmatprep.subr.mxu0 0.0
        %5401 = vmatpush1.msra.mxu0 0.0
        %5402 = vmatprep.subr.mxu0 0.0
        %5403 = vmatpush1.msra.mxu0 0.0
        %5404 = vmatprep.subr.mxu0 0.0
        %5405 = vmatpush1.msra.mxu0 0.0
        %5406 = vmatprep.subr.mxu0 0.0
        %5407 = vmatpush1.msra.mxu0 0.0
        %5408 = vmatprep.subr.mxu0 0.0
        %5409 = vmatpush1.msra.mxu0 0.0
        %5410 = vmatprep.subr.mxu0 0.0
        %5411 = vmatpush1.msra.mxu0 0.0
        %5412 = vmatprep.subr.mxu0 0.0
        %5413 = vmatpush1.msra.mxu0 0.0
        %5414 = vmatprep.subr.mxu0 0.0
        %5415 = vmatpush1.msra.mxu0 0.0
        %5416 = vmatprep.subr.mxu0 0.0
        %5417 = vmatpush1.msra.mxu0 0.0
        %5418 = vmatprep.subr.mxu0 0.0
        %5419 = vmatpush1.msra.mxu0 0.0
        %5420 = vmatprep.subr.mxu0 0.0
        %5421 = vmatpush1.msra.mxu0 0.0
        %5422 = vmatprep.subr.mxu0 0.0
        %5423 = vmatpush1.msra.mxu0 0.0
        %5424 = vmatprep.subr.mxu0 0.0
        %5425 = vmatpush1.msra.mxu0 0.0
        %5426 = vmatprep.subr.mxu0 0.0
        %5427 = vmatpush1.msra.mxu0 0.0
        %5428 = vmatprep.subr.mxu0 0.0
        %5429 = vmatpush1.msra.mxu0 0.0
        %5430 = vmatprep.subr.mxu0 0.0
        %5431 = vmatpush1.msra.mxu0 0.0
        %5432 = vmatprep.subr.mxu0 0.0
        %5433 = vmatpush1.msra.mxu0 0.0
        %5434 = vmatprep.subr.mxu0 0.0
        %5435 = vmatpush1.msra.mxu0 0.0
        %5436 = vmatprep.subr.mxu0 0.0
        %5437 = vmatpush1.msra.mxu0 0.0
        %5438 = vmatprep.subr.mxu0 0.0
        %5439 = vmatpush1.msra.mxu0 0.0
        %5440 = vmatprep.subr.mxu0 0.0
        %5441 = vmatpush1.msra.mxu0 0.0
        %5442 = vmatprep.subr.mxu0 0.0
        %5443 = vmatpush1.msra.mxu0 0.0
        %5444 = vmatprep.subr.mxu0 0.0
        %5445 = vmatpush1.msra.mxu0 0.0
        %5446 = vmatprep.subr.mxu0 0.0
        %5447 = vmatpush1.msra.mxu0 0.0
        %5448 = vmatprep.subr.mxu0 0.0
        %5449 = vmatpush1.msra.mxu0 0.0
        %5450 = vmatprep.subr.mxu0 0.0
        %5451 = vmatpush1.msra.mxu0 0.0
        %5452 = vmatprep.subr.mxu0 0.0
        %5453 = vmatpush1.msra.mxu0 0.0
        %5454 = vmatprep.subr.mxu0 0.0
        %5455 = vmatpush1.msra.mxu0 0.0
        %5456 = vmatprep.subr.mxu0 0.0
        %5457 = vmatpush1.msra.mxu0 0.0
        %5458 = vmatprep.mubr.f32.mxu0 0.0
        %5459 = vmatmul.mubr.f32.gmra.mrb[0].mxu0 %v5392
        %v5460 = vpop.f32.mrb[0].mxu0
        %v5461 = vadd.f32 %v5390, %v5460
        %v5462 = vpop.f32.mrb[0].mxu0
        %5463 = vdwg.mxu0
        %v5464 = vsel %vm239, %v5139, 0.0
        %v5465 = vrot.slane %v5464, 4
        %v5466 = vadd.f32 %v5464, %v5465
        %v5467 = vrot.slane %v5466, 2
        %v5468 = vadd.f32 %v5466, %v5467
        %v5469 = vrot.slane %v5468, 1
        %v5470 = vadd.f32 %v5468, %v5469
        %v5471 = vrcp.pop 8.0
        %v5472 = vmul.f32 %v5470, %v5471
        %v5473 = vld [vmem:[#allocation2 + $0x3e0] sm:$0xff]
        %v5474 = vld [vmem:[#allocation2 + $0x3e8] sm:$0xff]
        %v5475 = vld [vmem:[#allocation2 + $0x3f0] sm:$0xff]
        %v5476 = vld [vmem:[#allocation2 + $0x3f8] sm:$0xff]
        %v5477 = vld [vmem:[#allocation2 + $0x400] sm:$0x1]
        %v5479 = vsel %vm239, %v5472, 0
        %5481 = vmatprep.subr.mxu0 0.0
        %5482 = vmatpush1.msra.mxu0 %v5473
        %5483 = vmatprep.subr.mxu0 0.0
        %5484 = vmatpush1.msra.mxu0 %v5474
        %5485 = vmatprep.subr.mxu0 0.0
        %5486 = vmatpush1.msra.mxu0 %v5475
        %5487 = vmatprep.subr.mxu0 0.0
        %5488 = vmatpush1.msra.mxu0 %v5476
        %5489 = vmatprep.subr.mxu0 0.0
        %5490 = vmatpush1.msra.mxu0 0.0
        %5491 = vmatprep.subr.mxu0 0.0
        %5492 = vmatpush1.msra.mxu0 0.0
        %5493 = vmatprep.subr.mxu0 0.0
        %5494 = vmatpush1.msra.mxu0 0.0
        %5495 = vmatprep.subr.mxu0 0.0
        %5496 = vmatpush1.msra.mxu0 0.0
        %5497 = vmatprep.subr.mxu0 0.0
        %5498 = vmatpush1.msra.mxu0 0.0
        %5499 = vmatprep.subr.mxu0 0.0
        %5500 = vmatpush1.msra.mxu0 0.0
        %5501 = vmatprep.subr.mxu0 0.0
        %5502 = vmatpush1.msra.mxu0 0.0
        %5503 = vmatprep.subr.mxu0 0.0
        %5504 = vmatpush1.msra.mxu0 0.0
        %5505 = vmatprep.subr.mxu0 0.0
        %5506 = vmatpush1.msra.mxu0 0.0
        %5507 = vmatprep.subr.mxu0 0.0
        %5508 = vmatpush1.msra.mxu0 0.0
        %5509 = vmatprep.subr.mxu0 0.0
        %5510 = vmatpush1.msra.mxu0 0.0
        %5511 = vmatprep.subr.mxu0 0.0
        %5512 = vmatpush1.msra.mxu0 0.0
        %5513 = vmatprep.subr.mxu0 0.0
        %5514 = vmatpush1.msra.mxu0 0.0
        %5515 = vmatprep.subr.mxu0 0.0
        %5516 = vmatpush1.msra.mxu0 0.0
        %5517 = vmatprep.subr.mxu0 0.0
        %5518 = vmatpush1.msra.mxu0 0.0
        %5519 = vmatprep.subr.mxu0 0.0
        %5520 = vmatpush1.msra.mxu0 0.0
        %5521 = vmatprep.subr.mxu0 0.0
        %5522 = vmatpush1.msra.mxu0 0.0
        %5523 = vmatprep.subr.mxu0 0.0
        %5524 = vmatpush1.msra.mxu0 0.0
        %5525 = vmatprep.subr.mxu0 0.0
        %5526 = vmatpush1.msra.mxu0 0.0
        %5527 = vmatprep.subr.mxu0 0.0
        %5528 = vmatpush1.msra.mxu0 0.0
        %5529 = vmatprep.subr.mxu0 0.0
        %5530 = vmatpush1.msra.mxu0 0.0
        %5531 = vmatprep.subr.mxu0 0.0
        %5532 = vmatpush1.msra.mxu0 0.0
        %5533 = vmatprep.subr.mxu0 0.0
        %5534 = vmatpush1.msra.mxu0 0.0
        %5535 = vmatprep.subr.mxu0 0.0
        %5536 = vmatpush1.msra.mxu0 0.0
        %5537 = vmatprep.subr.mxu0 0.0
        %5538 = vmatpush1.msra.mxu0 0.0
        %5539 = vmatprep.subr.mxu0 0.0
        %5540 = vmatpush1.msra.mxu0 0.0
        %5541 = vmatprep.subr.mxu0 0.0
        %5542 = vmatpush1.msra.mxu0 0.0
        %5543 = vmatprep.subr.mxu0 0.0
        %5544 = vmatpush1.msra.mxu0 0.0
        %5545 = vmatprep.mubr.f32.mxu0 0.0
        %5546 = vmatmul.mubr.f32.gmra.mrb[0].mxu0 %v5479
        %v5547 = vpop.f32.mrb[0].mxu0
        %v5548 = vadd.f32 %v5477, %v5547
        %v5549 = vpop.f32.mrb[0].mxu0
        %5550 = vdwg.mxu0
        %v5551 = vmax.f32 %v5548, 0.0
        %v5552 = vld [vmem:[#allocation2 + $0x408] sm:$0xff]
        %v5553 = vld [vmem:[#allocation2 + $0x410] sm:$0xff]
        %v5554 = vld [vmem:[#allocation2 + $0x418] sm:$0x1]
        %v5556 = vsel %vm164, %v5551, 0
        %5558 = vmatprep.subr.mxu0 0.0
        %5559 = vmatpush1.msra.mxu0 %v5552
        %5560 = vmatprep.subr.mxu0 0.0
        %5561 = vmatpush1.msra.mxu0 %v5553
        %5562 = vmatprep.subr.mxu0 0.0
        %5563 = vmatpush1.msra.mxu0 0.0
        %5564 = vmatprep.subr.mxu0 0.0
        %5565 = vmatpush1.msra.mxu0 0.0
        %5566 = vmatprep.subr.mxu0 0.0
        %5567 = vmatpush1.msra.mxu0 0.0
        %5568 = vmatprep.subr.mxu0 0.0
        %5569 = vmatpush1.msra.mxu0 0.0
        %5570 = vmatprep.subr.mxu0 0.0
        %5571 = vmatpush1.msra.mxu0 0.0
        %5572 = vmatprep.subr.mxu0 0.0
        %5573 = vmatpush1.msra.mxu0 0.0
        %5574 = vmatprep.subr.mxu0 0.0
        %5575 = vmatpush1.msra.mxu0 0.0
        %5576 = vmatprep.subr.mxu0 0.0
        %5577 = vmatpush1.msra.mxu0 0.0
        %5578 = vmatprep.subr.mxu0 0.0
        %5579 = vmatpush1.msra.mxu0 0.0
        %5580 = vmatprep.subr.mxu0 0.0
        %5581 = vmatpush1.msra.mxu0 0.0
        %5582 = vmatprep.subr.mxu0 0.0
        %5583 = vmatpush1.msra.mxu0 0.0
        %5584 = vmatprep.subr.mxu0 0.0
        %5585 = vmatpush1.msra.mxu0 0.0
        %5586 = vmatprep.subr.mxu0 0.0
        %5587 = vmatpush1.msra.mxu0 0.0
        %5588 = vmatprep.subr.mxu0 0.0
        %5589 = vmatpush1.msra.mxu0 0.0
        %5590 = vmatprep.subr.mxu0 0.0
        %5591 = vmatpush1.msra.mxu0 0.0
        %5592 = vmatprep.subr.mxu0 0.0
        %5593 = vmatpush1.msra.mxu0 0.0
        %5594 = vmatprep.subr.mxu0 0.0
        %5595 = vmatpush1.msra.mxu0 0.0
        %5596 = vmatprep.subr.mxu0 0.0
        %5597 = vmatpush1.msra.mxu0 0.0
        %5598 = vmatprep.subr.mxu0 0.0
        %5599 = vmatpush1.msra.mxu0 0.0
        %5600 = vmatprep.subr.mxu0 0.0
        %5601 = vmatpush1.msra.mxu0 0.0
        %5602 = vmatprep.subr.mxu0 0.0
        %5603 = vmatpush1.msra.mxu0 0.0
        %5604 = vmatprep.subr.mxu0 0.0
        %5605 = vmatpush1.msra.mxu0 0.0
        %5606 = vmatprep.subr.mxu0 0.0
        %5607 = vmatpush1.msra.mxu0 0.0
        %5608 = vmatprep.subr.mxu0 0.0
        %5609 = vmatpush1.msra.mxu0 0.0
        %5610 = vmatprep.subr.mxu0 0.0
        %5611 = vmatpush1.msra.mxu0 0.0
        %5612 = vmatprep.subr.mxu0 0.0
        %5613 = vmatpush1.msra.mxu0 0.0
        %5614 = vmatprep.subr.mxu0 0.0
        %5615 = vmatpush1.msra.mxu0 0.0
        %5616 = vmatprep.subr.mxu0 0.0
        %5617 = vmatpush1.msra.mxu0 0.0
        %5618 = vmatprep.subr.mxu0 0.0
        %5619 = vmatpush1.msra.mxu0 0.0
        %5620 = vmatprep.subr.mxu0 0.0
        %5621 = vmatpush1.msra.mxu0 0.0
        %5622 = vmatprep.mubr.f32.mxu0 0.0
        %5623 = vmatmul.mubr.f32.gmra.mrb[0].mxu0 %v5556
        %v5624 = vpop.f32.mrb[0].mxu0
        %v5625 = vadd.f32 %v5554, %v5624
        %v5626 = vpop.f32.mrb[0].mxu0
        %5627 = vdwg.mxu0
        %v5628 = vld [vmem:[#allocation2 + $0x288] sm:$0xff]
        %v5629 = vld [vmem:[#allocation2 + $0x290] sm:$0xff]
        %v5630 = vld [vmem:[#allocation2 + $0x298] sm:$0xff]
        %v5631 = vld [vmem:[#allocation2 + $0x2a0] sm:$0xff]
        %v5632 = vld [vmem:[#allocation2 + $0x2a8] sm:$0x1]
        %v5633 = vlaneseq
        %v5634 = vshrl.u32 %v5633, 7
        %v5635 = vsub.s32 0, %v5634
        %v5636 = vrot.slane %v5632, %v5635
        %5637 = vmatprep.subr.mxu0 0.0
        %5638 = vmatpush1.msra.mxu0 %v5628
        %5639 = vmatprep.subr.mxu0 0.0
        %5640 = vmatpush1.msra.mxu0 %v5629
        %5641 = vmatprep.subr.mxu0 0.0
        %5642 = vmatpush1.msra.mxu0 %v5630
        %5643 = vmatprep.subr.mxu0 0.0
        %5644 = vmatpush1.msra.mxu0 %v5631
        %5645 = vmatprep.subr.mxu0 0.0
        %5646 = vmatpush1.msra.mxu0 0.0
        %5647 = vmatprep.subr.mxu0 0.0
        %5648 = vmatpush1.msra.mxu0 0.0
        %5649 = vmatprep.subr.mxu0 0.0
        %5650 = vmatpush1.msra.mxu0 0.0
        %5651 = vmatprep.subr.mxu0 0.0
        %5652 = vmatpush1.msra.mxu0 0.0
        %5653 = vmatprep.subr.mxu0 0.0
        %5654 = vmatpush1.msra.mxu0 0.0
        %5655 = vmatprep.subr.mxu0 0.0
        %5656 = vmatpush1.msra.mxu0 0.0
        %5657 = vmatprep.subr.mxu0 0.0
        %5658 = vmatpush1.msra.mxu0 0.0
        %5659 = vmatprep.subr.mxu0 0.0
        %5660 = vmatpush1.msra.mxu0 0.0
        %5661 = vmatprep.subr.mxu0 0.0
        %5662 = vmatpush1.msra.mxu0 0.0
        %5663 = vmatprep.subr.mxu0 0.0
        %5664 = vmatpush1.msra.mxu0 0.0
        %5665 = vmatprep.subr.mxu0 0.0
        %5666 = vmatpush1.msra.mxu0 0.0
        %5667 = vmatprep.subr.mxu0 0.0
        %5668 = vmatpush1.msra.mxu0 0.0
        %5669 = vmatprep.subr.mxu0 0.0
        %5670 = vmatpush1.msra.mxu0 0.0
        %5671 = vmatprep.subr.mxu0 0.0
        %5672 = vmatpush1.msra.mxu0 0.0
        %5673 = vmatprep.subr.mxu0 0.0
        %5674 = vmatpush1.msra.mxu0 0.0
        %5675 = vmatprep.subr.mxu0 0.0
        %5676 = vmatpush1.msra.mxu0 0.0
        %5677 = vmatprep.subr.mxu0 0.0
        %5678 = vmatpush1.msra.mxu0 0.0
        %5679 = vmatprep.subr.mxu0 0.0
        %5680 = vmatpush1.msra.mxu0 0.0
        %5681 = vmatprep.subr.mxu0 0.0
        %5682 = vmatpush1.msra.mxu0 0.0
        %5683 = vmatprep.subr.mxu0 0.0
        %5684 = vmatpush1.msra.mxu0 0.0
        %5685 = vmatprep.subr.mxu0 0.0
        %5686 = vmatpush1.msra.mxu0 0.0
        %5687 = vmatprep.subr.mxu0 0.0
        %5688 = vmatpush1.msra.mxu0 0.0
        %5689 = vmatprep.subr.mxu0 0.0
        %5690 = vmatpush1.msra.mxu0 0.0
        %5691 = vmatprep.subr.mxu0 0.0
        %5692 = vmatpush1.msra.mxu0 0.0
        %5693 = vmatprep.subr.mxu0 0.0
        %5694 = vmatpush1.msra.mxu0 0.0
        %5695 = vmatprep.subr.mxu0 0.0
        %5696 = vmatpush1.msra.mxu0 0.0
        %5697 = vmatprep.subr.mxu0 0.0
        %5698 = vmatpush1.msra.mxu0 0.0
        %5699 = vmatprep.subr.mxu0 0.0
        %5700 = vmatpush1.msra.mxu0 0.0
        %5701 = vmatprep.mubr.f32.mxu0 0.0
        %5702 = vmatmul.mubr.f32.gmra.mrb[0].mxu0 %v5150
        %v5703 = vpop.f32.mrb[0].mxu0
        %v5704 = vadd.f32 %v5636, %v5703
        %v5705 = vpop.f32.mrb[0].mxu0
        %5706 = vdwg.mxu0
        %v5707 = vmul.f32 %v5704, %v1371
        %v5708 = vmul.f32 %v5704, %v1373
        %v5709 = vmul.f32 %v5704, %v1375
        %v5710 = vmul.f32 %v5704, %v1377
        %v5711 = vmul.f32 %v5704, %v1387
        %v5712 = vmul.f32 %v5704, %v1389
        %v5713 = vmul.f32 %v5704, %v1391
        %v5714 = vmul.f32 %v5704, %v1393
        %5719 = vrot.lane.b32.xlu0 %v5707, 96
        %v5720 = vpop.permute.xlu0 %5719
        %5721 = vrot.lane.b32.xlu0 %v5708, 96
        %v5722 = vpop.permute.xlu0 %5721
        %5723 = vrot.lane.b32.xlu0 %v5709, 96
        %v5724 = vpop.permute.xlu0 %5723
        %5725 = vrot.lane.b32.xlu0 %v5710, 96
        %v5726 = vpop.permute.xlu0 %5725
        %v5728 = vsel %vm239, %v5704, 0
        %v5730 = vsel %vm239, %v5720, 0
        %v5732 = vsel %vm239, %v5722, 0
        %v5734 = vsel %vm239, %v5724, 0
        %v5736 = vsel %vm239, %v5726, 0
        %5738 = vmatprep.subr.mxu0 0.0
        %5739 = vmatpush1.xpose.msra.mxu0 %v5730
        %5740 = vmatprep.subr.mxu0 0.0
        %5741 = vmatpush1.xpose.msra.mxu0 %v5732
        %5742 = vmatprep.subr.mxu0 0.0
        %5743 = vmatpush1.xpose.msra.mxu0 %v5734
        %5744 = vmatprep.subr.mxu0 0.0
        %5745 = vmatpush1.xpose.msra.mxu0 %v5736
        %5746 = vmatprep.subr.mxu0 0.0
        %5747 = vmatpush1.xpose.msra.mxu0 0.0
        %5748 = vmatprep.subr.mxu0 0.0
        %5749 = vmatpush1.xpose.msra.mxu0 0.0
        %5750 = vmatprep.subr.mxu0 0.0
        %5751 = vmatpush1.xpose.msra.mxu0 0.0
        %5752 = vmatprep.subr.mxu0 0.0
        %5753 = vmatpush1.xpose.msra.mxu0 0.0
        %5754 = vmatprep.subr.mxu0 0.0
        %5755 = vmatpush1.xpose.msra.mxu0 0.0
        %5756 = vmatprep.subr.mxu0 0.0
        %5757 = vmatpush1.xpose.msra.mxu0 0.0
        %5758 = vmatprep.subr.mxu0 0.0
        %5759 = vmatpush1.xpose.msra.mxu0 0.0
        %5760 = vmatprep.subr.mxu0 0.0
        %5761 = vmatpush1.xpose.msra.mxu0 0.0
        %5762 = vmatprep.subr.mxu0 0.0
        %5763 = vmatpush1.xpose.msra.mxu0 0.0
        %5764 = vmatprep.subr.mxu0 0.0
        %5765 = vmatpush1.xpose.msra.mxu0 0.0
        %5766 = vmatprep.subr.mxu0 0.0
        %5767 = vmatpush1.xpose.msra.mxu0 0.0
        %5768 = vmatprep.subr.mxu0 0.0
        %5769 = vmatpush1.xpose.msra.mxu0 0.0
        %5770 = vmatprep.subr.mxu0 0.0
        %5771 = vmatpush1.xpose.msra.mxu0 0.0
        %5772 = vmatprep.subr.mxu0 0.0
        %5773 = vmatpush1.xpose.msra.mxu0 0.0
        %5774 = vmatprep.subr.mxu0 0.0
        %5775 = vmatpush1.xpose.msra.mxu0 0.0
        %5776 = vmatprep.subr.mxu0 0.0
        %5777 = vmatpush1.xpose.msra.mxu0 0.0
        %5778 = vmatprep.subr.mxu0 0.0
        %5779 = vmatpush1.xpose.msra.mxu0 0.0
        %5780 = vmatprep.subr.mxu0 0.0
        %5781 = vmatpush1.xpose.msra.mxu0 0.0
        %5782 = vmatprep.subr.mxu0 0.0
        %5783 = vmatpush1.xpose.msra.mxu0 0.0
        %5784 = vmatprep.subr.mxu0 0.0
        %5785 = vmatpush1.xpose.msra.mxu0 0.0
        %5786 = vmatprep.subr.mxu0 0.0
        %5787 = vmatpush1.xpose.msra.mxu0 0.0
        %5788 = vmatprep.subr.mxu0 0.0
        %5789 = vmatpush1.xpose.msra.mxu0 0.0
        %5790 = vmatprep.subr.mxu0 0.0
        %5791 = vmatpush1.xpose.msra.mxu0 0.0
        %5792 = vmatprep.subr.mxu0 0.0
        %5793 = vmatpush1.xpose.msra.mxu0 0.0
        %5794 = vmatprep.subr.mxu0 0.0
        %5795 = vmatpush1.xpose.msra.mxu0 0.0
        %5796 = vmatprep.subr.mxu0 0.0
        %5797 = vmatpush1.xpose.msra.mxu0 0.0
        %5798 = vmatprep.subr.mxu0 0.0
        %5799 = vmatpush1.xpose.msra.mxu0 0.0
        %5800 = vmatprep.subr.mxu0 0.0
        %5801 = vmatpush1.xpose.msra.mxu0 0.0
        %5802 = vmatprep.mubr.f32.mxu0 0.0
        %5803 = vmatmul.mubr.f32.gmra.mrb[0].mxu0 %v5728
        %v5804 = vpop.f32.mrb[0].mxu0
        %v5805 = vadd.f32 0.0, %v5804
        %v5806 = vpop.f32.mrb[0].mxu0
        %5807 = vdwg.mxu0
        %v5808 = vsel %vm239, %v5805, -inf
        %5809 = vmax.xlane.f32.xlu0 %v5808
        %v5810 = vpop.xlane.xlu0 %5809
        %v5811 = vsub.f32 %v5805, %v5810
        %v5812 = vmul.f32 %v5811, 1.442695
        %v5813 = vpow.pop %v5812
        %v5815 = vsel %vm239, %v5813, 0
        %5817 = vmatprep.subr.mxu0 0.0
        %5818 = vmatpush1.msra.mxu0 %v1362
        %5819 = vmatprep.subr.mxu0 0.0
        %5820 = vmatpush1.msra.mxu0 %v1363
        %5821 = vmatprep.subr.mxu0 0.0
        %5822 = vmatpush1.msra.mxu0 %v1364
        %5823 = vmatprep.subr.mxu0 0.0
        %5824 = vmatpush1.msra.mxu0 %v1365
        %5825 = vmatprep.subr.mxu0 0.0
        %5826 = vmatpush1.msra.mxu0 0.0
        %5827 = vmatprep.subr.mxu0 0.0
        %5828 = vmatpush1.msra.mxu0 0.0
        %5829 = vmatprep.subr.mxu0 0.0
        %5830 = vmatpush1.msra.mxu0 0.0
        %5831 = vmatprep.subr.mxu0 0.0
        %5832 = vmatpush1.msra.mxu0 0.0
        %5833 = vmatprep.subr.mxu0 0.0
        %5834 = vmatpush1.msra.mxu0 0.0
        %5835 = vmatprep.subr.mxu0 0.0
        %5836 = vmatpush1.msra.mxu0 0.0
        %5837 = vmatprep.subr.mxu0 0.0
        %5838 = vmatpush1.msra.mxu0 0.0
        %5839 = vmatprep.subr.mxu0 0.0
        %5840 = vmatpush1.msra.mxu0 0.0
        %5841 = vmatprep.subr.mxu0 0.0
        %5842 = vmatpush1.msra.mxu0 0.0
        %5843 = vmatprep.subr.mxu0 0.0
        %5844 = vmatpush1.msra.mxu0 0.0
        %5845 = vmatprep.subr.mxu0 0.0
        %5846 = vmatpush1.msra.mxu0 0.0
        %5847 = vmatprep.subr.mxu0 0.0
        %5848 = vmatpush1.msra.mxu0 0.0
        %5849 = vmatprep.subr.mxu0 0.0
        %5850 = vmatpush1.msra.mxu0 0.0
        %5851 = vmatprep.subr.mxu0 0.0
        %5852 = vmatpush1.msra.mxu0 0.0
        %5853 = vmatprep.subr.mxu0 0.0
        %5854 = vmatpush1.msra.mxu0 0.0
        %5855 = vmatprep.subr.mxu0 0.0
        %5856 = vmatpush1.msra.mxu0 0.0
        %5857 = vmatprep.subr.mxu0 0.0
        %5858 = vmatpush1.msra.mxu0 0.0
        %5859 = vmatprep.subr.mxu0 0.0
        %5860 = vmatpush1.msra.mxu0 0.0
        %5861 = vmatprep.subr.mxu0 0.0
        %5862 = vmatpush1.msra.mxu0 0.0
        %5863 = vmatprep.subr.mxu0 0.0
        %5864 = vmatpush1.msra.mxu0 0.0
        %5865 = vmatprep.subr.mxu0 0.0
        %5866 = vmatpush1.msra.mxu0 0.0
        %5867 = vmatprep.subr.mxu0 0.0
        %5868 = vmatpush1.msra.mxu0 0.0
        %5869 = vmatprep.subr.mxu0 0.0
        %5870 = vmatpush1.msra.mxu0 0.0
        %5871 = vmatprep.subr.mxu0 0.0
        %5872 = vmatpush1.msra.mxu0 0.0
        %5873 = vmatprep.subr.mxu0 0.0
        %5874 = vmatpush1.msra.mxu0 0.0
        %5875 = vmatprep.subr.mxu0 0.0
        %5876 = vmatpush1.msra.mxu0 0.0
        %5877 = vmatprep.subr.mxu0 0.0
        %5878 = vmatpush1.msra.mxu0 0.0
        %5879 = vmatprep.subr.mxu0 0.0
        %5880 = vmatpush1.msra.mxu0 0.0
        %5881 = vmatprep.mubr.f32.mxu0 0.0
        %5882 = vmatmul.mubr.f32.gmra.mrb[0].mxu0 %v5815
        %v5883 = vpop.f32.mrb[0].mxu0
        %v5884 = vadd.f32 0.0, %v5883
        %v5885 = vpop.f32.mrb[0].mxu0
        %5886 = vdwg.mxu0
        %v5887 = vrcp.pop %v5884
        %v5888 = vmul.f32 %v5813, %v5887
        %5893 = vrot.lane.b32.xlu0 %v5711, 64
        %v5894 = vpop.permute.xlu0 %5893
        %5895 = vrot.lane.b32.xlu0 %v5712, 64
        %v5896 = vpop.permute.xlu0 %5895
        %5897 = vrot.lane.b32.xlu0 %v5713, 64
        %v5898 = vpop.permute.xlu0 %5897
        %5899 = vrot.lane.b32.xlu0 %v5714, 64
        %v5900 = vpop.permute.xlu0 %5899
        %v5906 = vsel %vm239, %v5888, 0
        %5908 = vmatprep.subr.mxu0 0.0
        %5909 = vmatpush1.msra.mxu0 %v5894
        %5910 = vmatprep.subr.mxu0 0.0
        %5911 = vmatpush1.msra.mxu0 %v5896
        %5912 = vmatprep.subr.mxu0 0.0
        %5913 = vmatpush1.msra.mxu0 %v5898
        %5914 = vmatprep.subr.mxu0 0.0
        %5915 = vmatpush1.msra.mxu0 %v5900
        %5916 = vmatprep.subr.mxu0 0.0
        %5917 = vmatpush1.msra.mxu0 0.0
        %5918 = vmatprep.subr.mxu0 0.0
        %5919 = vmatpush1.msra.mxu0 0.0
        %5920 = vmatprep.subr.mxu0 0.0
        %5921 = vmatpush1.msra.mxu0 0.0
        %5922 = vmatprep.subr.mxu0 0.0
        %5923 = vmatpush1.msra.mxu0 0.0
        %5924 = vmatprep.subr.mxu0 0.0
        %5925 = vmatpush1.msra.mxu0 0.0
        %5926 = vmatprep.subr.mxu0 0.0
        %5927 = vmatpush1.msra.mxu0 0.0
        %5928 = vmatprep.subr.mxu0 0.0
        %5929 = vmatpush1.msra.mxu0 0.0
        %5930 = vmatprep.subr.mxu0 0.0
        %5931 = vmatpush1.msra.mxu0 0.0
        %5932 = vmatprep.subr.mxu0 0.0
        %5933 = vmatpush1.msra.mxu0 0.0
        %5934 = vmatprep.subr.mxu0 0.0
        %5935 = vmatpush1.msra.mxu0 0.0
        %5936 = vmatprep.subr.mxu0 0.0
        %5937 = vmatpush1.msra.mxu0 0.0
        %5938 = vmatprep.subr.mxu0 0.0
        %5939 = vmatpush1.msra.mxu0 0.0
        %5940 = vmatprep.subr.mxu0 0.0
        %5941 = vmatpush1.msra.mxu0 0.0
        %5942 = vmatprep.subr.mxu0 0.0
        %5943 = vmatpush1.msra.mxu0 0.0
        %5944 = vmatprep.subr.mxu0 0.0
        %5945 = vmatpush1.msra.mxu0 0.0
        %5946 = vmatprep.subr.mxu0 0.0
        %5947 = vmatpush1.msra.mxu0 0.0
        %5948 = vmatprep.subr.mxu0 0.0
        %5949 = vmatpush1.msra.mxu0 0.0
        %5950 = vmatprep.subr.mxu0 0.0
        %5951 = vmatpush1.msra.mxu0 0.0
        %5952 = vmatprep.subr.mxu0 0.0
        %5953 = vmatpush1.msra.mxu0 0.0
        %5954 = vmatprep.subr.mxu0 0.0
        %5955 = vmatpush1.msra.mxu0 0.0
        %5956 = vmatprep.subr.mxu0 0.0
        %5957 = vmatpush1.msra.mxu0 0.0
        %5958 = vmatprep.subr.mxu0 0.0
        %5959 = vmatpush1.msra.mxu0 0.0
        %5960 = vmatprep.subr.mxu0 0.0
        %5961 = vmatpush1.msra.mxu0 0.0
        %5962 = vmatprep.subr.mxu0 0.0
        %5963 = vmatpush1.msra.mxu0 0.0
        %5964 = vmatprep.subr.mxu0 0.0
        %5965 = vmatpush1.msra.mxu0 0.0
        %5966 = vmatprep.subr.mxu0 0.0
        %5967 = vmatpush1.msra.mxu0 0.0
        %5968 = vmatprep.subr.mxu0 0.0
        %5969 = vmatpush1.msra.mxu0 0.0
        %5970 = vmatprep.subr.mxu0 0.0
        %5971 = vmatpush1.msra.mxu0 0.0
        %5972 = vmatprep.mubr.f32.mxu0 0.0
        %5973 = vmatmul.mubr.f32.gmra.mrb[0].mxu0 %v5906
        %v5974 = vpop.f32.mrb[0].mxu0
        %v5975 = vadd.f32 0.0, %v5974
        %v5976 = vpop.f32.mrb[0].mxu0
        %5977 = vdwg.mxu0
        %v5978 = vld [vmem:[#allocation2 + $0x2b0] sm:$0xff]
        %v5979 = vld [vmem:[#allocation2 + $0x2b8] sm:$0xff]
        %v5980 = vld [vmem:[#allocation2 + $0x2c0] sm:$0xff]
        %v5981 = vld [vmem:[#allocation2 + $0x2c8] sm:$0xff]
        %v5982 = vld [vmem:[#allocation2 + $0x2d0] sm:$0x1]
        %v5983 = vlaneseq
        %v5984 = vshrl.u32 %v5983, 7
        %v5985 = vsub.s32 0, %v5984
        %v5986 = vrot.slane %v5982, %v5985
        %v5988 = vsel %vm239, %v5975, 0
        %5990 = vmatprep.subr.mxu0 0.0
        %5991 = vmatpush1.msra.mxu0 %v5978
        %5992 = vmatprep.subr.mxu0 0.0
        %5993 = vmatpush1.msra.mxu0 %v5979
        %5994 = vmatprep.subr.mxu0 0.0
        %5995 = vmatpush1.msra.mxu0 %v5980
        %5996 = vmatprep.subr.mxu0 0.0
        %5997 = vmatpush1.msra.mxu0 %v5981
        %5998 = vmatprep.subr.mxu0 0.0
        %5999 = vmatpush1.msra.mxu0 0.0
        %6000 = vmatprep.subr.mxu0 0.0
        %6001 = vmatpush1.msra.mxu0 0.0
        %6002 = vmatprep.subr.mxu0 0.0
        %6003 = vmatpush1.msra.mxu0 0.0
        %6004 = vmatprep.subr.mxu0 0.0
        %6005 = vmatpush1.msra.mxu0 0.0
        %6006 = vmatprep.subr.mxu0 0.0
        %6007 = vmatpush1.msra.mxu0 0.0
        %6008 = vmatprep.subr.mxu0 0.0
        %6009 = vmatpush1.msra.mxu0 0.0
        %6010 = vmatprep.subr.mxu0 0.0
        %6011 = vmatpush1.msra.mxu0 0.0
        %6012 = vmatprep.subr.mxu0 0.0
        %6013 = vmatpush1.msra.mxu0 0.0
        %6014 = vmatprep.subr.mxu0 0.0
        %6015 = vmatpush1.msra.mxu0 0.0
        %6016 = vmatprep.subr.mxu0 0.0
        %6017 = vmatpush1.msra.mxu0 0.0
        %6018 = vmatprep.subr.mxu0 0.0
        %6019 = vmatpush1.msra.mxu0 0.0
        %6020 = vmatprep.subr.mxu0 0.0
        %6021 = vmatpush1.msra.mxu0 0.0
        %6022 = vmatprep.subr.mxu0 0.0
        %6023 = vmatpush1.msra.mxu0 0.0
        %6024 = vmatprep.subr.mxu0 0.0
        %6025 = vmatpush1.msra.mxu0 0.0
        %6026 = vmatprep.subr.mxu0 0.0
        %6027 = vmatpush1.msra.mxu0 0.0
        %6028 = vmatprep.subr.mxu0 0.0
        %6029 = vmatpush1.msra.mxu0 0.0
        %6030 = vmatprep.subr.mxu0 0.0
        %6031 = vmatpush1.msra.mxu0 0.0
        %6032 = vmatprep.subr.mxu0 0.0
        %6033 = vmatpush1.msra.mxu0 0.0
        %6034 = vmatprep.subr.mxu0 0.0
        %6035 = vmatpush1.msra.mxu0 0.0
        %6036 = vmatprep.subr.mxu0 0.0
        %6037 = vmatpush1.msra.mxu0 0.0
        %6038 = vmatprep.subr.mxu0 0.0
        %6039 = vmatpush1.msra.mxu0 0.0
        %6040 = vmatprep.subr.mxu0 0.0
        %6041 = vmatpush1.msra.mxu0 0.0
        %6042 = vmatprep.subr.mxu0 0.0
        %6043 = vmatpush1.msra.mxu0 0.0
        %6044 = vmatprep.subr.mxu0 0.0
        %6045 = vmatpush1.msra.mxu0 0.0
        %6046 = vmatprep.subr.mxu0 0.0
        %6047 = vmatpush1.msra.mxu0 0.0
        %6048 = vmatprep.subr.mxu0 0.0
        %6049 = vmatpush1.msra.mxu0 0.0
        %6050 = vmatprep.subr.mxu0 0.0
        %6051 = vmatpush1.msra.mxu0 0.0
        %6052 = vmatprep.subr.mxu0 0.0
        %6053 = vmatpush1.msra.mxu0 0.0
        %6054 = vmatprep.mubr.f32.mxu0 0.0
        %6055 = vmatmul.mubr.f32.gmra.mrb[0].mxu0 %v5988
        %v6056 = vpop.f32.mrb[0].mxu0
        %v6057 = vadd.f32 %v5986, %v6056
        %v6058 = vpop.f32.mrb[0].mxu0
        %6059 = vdwg.mxu0
        %6060 = vmatprep.subr.mxu0 0.0
        %6061 = vmatpush1.msra.mxu0 %v1747
        %6062 = vmatprep.subr.mxu0 0.0
        %6063 = vmatpush1.msra.mxu0 %v1748
        %6064 = vmatprep.subr.mxu0 0.0
        %6065 = vmatpush1.msra.mxu0 %v1749
        %6066 = vmatprep.subr.mxu0 0.0
        %6067 = vmatpush1.msra.mxu0 %v1750
        %6068 = vmatprep.subr.mxu0 0.0
        %6069 = vmatpush1.msra.mxu0 0.0
        %6070 = vmatprep.subr.mxu0 0.0
        %6071 = vmatpush1.msra.mxu0 0.0
        %6072 = vmatprep.subr.mxu0 0.0
        %6073 = vmatpush1.msra.mxu0 0.0
        %6074 = vmatprep.subr.mxu0 0.0
        %6075 = vmatpush1.msra.mxu0 0.0
        %6076 = vmatprep.subr.mxu0 0.0
        %6077 = vmatpush1.msra.mxu0 0.0
        %6078 = vmatprep.subr.mxu0 0.0
        %6079 = vmatpush1.msra.mxu0 0.0
        %6080 = vmatprep.subr.mxu0 0.0
        %6081 = vmatpush1.msra.mxu0 0.0
        %6082 = vmatprep.subr.mxu0 0.0
        %6083 = vmatpush1.msra.mxu0 0.0
        %6084 = vmatprep.subr.mxu0 0.0
        %6085 = vmatpush1.msra.mxu0 0.0
        %6086 = vmatprep.subr.mxu0 0.0
        %6087 = vmatpush1.msra.mxu0 0.0
        %6088 = vmatprep.subr.mxu0 0.0
        %6089 = vmatpush1.msra.mxu0 0.0
        %6090 = vmatprep.subr.mxu0 0.0
        %6091 = vmatpush1.msra.mxu0 0.0
        %6092 = vmatprep.subr.mxu0 0.0
        %6093 = vmatpush1.msra.mxu0 0.0
        %6094 = vmatprep.subr.mxu0 0.0
        %6095 = vmatpush1.msra.mxu0 0.0
        %6096 = vmatprep.subr.mxu0 0.0
        %6097 = vmatpush1.msra.mxu0 0.0
        %6098 = vmatprep.subr.mxu0 0.0
        %6099 = vmatpush1.msra.mxu0 0.0
        %6100 = vmatprep.subr.mxu0 0.0
        %6101 = vmatpush1.msra.mxu0 0.0
        %6102 = vmatprep.subr.mxu0 0.0
        %6103 = vmatpush1.msra.mxu0 0.0
        %6104 = vmatprep.subr.mxu0 0.0
        %6105 = vmatpush1.msra.mxu0 0.0
        %6106 = vmatprep.subr.mxu0 0.0
        %6107 = vmatpush1.msra.mxu0 0.0
        %6108 = vmatprep.subr.mxu0 0.0
        %6109 = vmatpush1.msra.mxu0 0.0
        %6110 = vmatprep.subr.mxu0 0.0
        %6111 = vmatpush1.msra.mxu0 0.0
        %6112 = vmatprep.subr.mxu0 0.0
        %6113 = vmatpush1.msra.mxu0 0.0
        %6114 = vmatprep.subr.mxu0 0.0
        %6115 = vmatpush1.msra.mxu0 0.0
        %6116 = vmatprep.subr.mxu0 0.0
        %6117 = vmatpush1.msra.mxu0 0.0
        %6118 = vmatprep.subr.mxu0 0.0
        %6119 = vmatpush1.msra.mxu0 0.0
        %6120 = vmatprep.subr.mxu0 0.0
        %6121 = vmatpush1.msra.mxu0 0.0
        %6122 = vmatprep.subr.mxu0 0.0
        %6123 = vmatpush1.msra.mxu0 0.0
        %6124 = vmatprep.mubr.f32.mxu0 0.0
        %6125 = vmatmul.mubr.f32.gmra.mrb[0].mxu0 %v5906
        %v6126 = vpop.f32.mrb[0].mxu0
        %v6127 = vadd.f32 0.0, %v6126
        %v6128 = vpop.f32.mrb[0].mxu0
        %6129 = vdwg.mxu0
        %v6130 = vlaneseq
        %v6131 = vshrl.u32 %v6130, 7
        %vm6132 = vcmp.eq.s32.totalorder %v6131, 0
        %v6133 = vsel %vm6132, 1, 0
        %v6134 = vcvt.s32.f32 %v6133
        %v6135 = vld [vmem:[#allocation2 + $0x678] sm:$0x7]
        %vm6136 = vcmask 23552
        %v6138 = vsel %vm6136, %v5625, 0
        %vm6140 = vcmask 1042432
        %v6142 = vsel %vm6140, %v6135, 0
        %6144 = vmatprep.subr.mxu0 0.0
        %6145 = vmatpush1.msra.mxu0 %v6142
        %6146 = vmatprep.subr.mxu0 0.0
        %6147 = vmatpush1.msra.mxu0 0.0
        %6148 = vmatprep.subr.mxu0 0.0
        %6149 = vmatpush1.msra.mxu0 0.0
        %6150 = vmatprep.subr.mxu0 0.0
        %6151 = vmatpush1.msra.mxu0 0.0
        %6152 = vmatprep.subr.mxu0 0.0
        %6153 = vmatpush1.msra.mxu0 0.0
        %6154 = vmatprep.subr.mxu0 0.0
        %6155 = vmatpush1.msra.mxu0 0.0
        %6156 = vmatprep.subr.mxu0 0.0
        %6157 = vmatpush1.msra.mxu0 0.0
        %6158 = vmatprep.subr.mxu0 0.0
        %6159 = vmatpush1.msra.mxu0 0.0
        %6160 = vmatprep.subr.mxu0 0.0
        %6161 = vmatpush1.msra.mxu0 0.0
        %6162 = vmatprep.subr.mxu0 0.0
        %6163 = vmatpush1.msra.mxu0 0.0
        %6164 = vmatprep.subr.mxu0 0.0
        %6165 = vmatpush1.msra.mxu0 0.0
        %6166 = vmatprep.subr.mxu0 0.0
        %6167 = vmatpush1.msra.mxu0 0.0
        %6168 = vmatprep.subr.mxu0 0.0
        %6169 = vmatpush1.msra.mxu0 0.0
        %6170 = vmatprep.subr.mxu0 0.0
        %6171 = vmatpush1.msra.mxu0 0.0
        %6172 = vmatprep.subr.mxu0 0.0
        %6173 = vmatpush1.msra.mxu0 0.0
        %6174 = vmatprep.subr.mxu0 0.0
        %6175 = vmatpush1.msra.mxu0 0.0
        %6176 = vmatprep.subr.mxu0 0.0
        %6177 = vmatpush1.msra.mxu0 0.0
        %6178 = vmatprep.subr.mxu0 0.0
        %6179 = vmatpush1.msra.mxu0 0.0
        %6180 = vmatprep.subr.mxu0 0.0
        %6181 = vmatpush1.msra.mxu0 0.0
        %6182 = vmatprep.subr.mxu0 0.0
        %6183 = vmatpush1.msra.mxu0 0.0
        %6184 = vmatprep.subr.mxu0 0.0
        %6185 = vmatpush1.msra.mxu0 0.0
        %6186 = vmatprep.subr.mxu0 0.0
        %6187 = vmatpush1.msra.mxu0 0.0
        %6188 = vmatprep.subr.mxu0 0.0
        %6189 = vmatpush1.msra.mxu0 0.0
        %6190 = vmatprep.subr.mxu0 0.0
        %6191 = vmatpush1.msra.mxu0 0.0
        %6192 = vmatprep.subr.mxu0 0.0
        %6193 = vmatpush1.msra.mxu0 0.0
        %6194 = vmatprep.subr.mxu0 0.0
        %6195 = vmatpush1.msra.mxu0 0.0
        %6196 = vmatprep.subr.mxu0 0.0
        %6197 = vmatpush1.msra.mxu0 0.0
        %6198 = vmatprep.subr.mxu0 0.0
        %6199 = vmatpush1.msra.mxu0 0.0
        %6200 = vmatprep.subr.mxu0 0.0
        %6201 = vmatpush1.msra.mxu0 0.0
        %6202 = vmatprep.subr.mxu0 0.0
        %6203 = vmatpush1.msra.mxu0 0.0
        %6204 = vmatprep.subr.mxu0 0.0
        %6205 = vmatpush1.msra.mxu0 0.0
        %6206 = vmatprep.subr.mxu0 0.0
        %6207 = vmatpush1.msra.mxu0 0.0
        %6208 = vmatprep.mubr.f32.mxu0 0.0
        %6209 = vmatmul.mubr.f32.gmra.mrb[0].mxu0 %v6138
        %v6210 = vpop.f32.mrb[0].mxu0
        %v6211 = vadd.f32 0.0, %v6210
        %v6212 = vpop.f32.mrb[0].mxu0
        %6213 = vdwg.mxu0
        %v6214 = vlaneseq
        %v6215 = vshrl.u32 %v6214, 7
        %v6216 = vsub.s32 0, %v6215
        %v6217 = vrot.slane %v6211, %v6216
        %v6218 = vmul.f32 %v6134, %v6217
        %v6219 = vlaneseq
        %v6220 = vand.u32 %v6219, 127
        %vm6221 = vcmp.eq.s32.totalorder %v6220, 0
        %6223 = vset.pattern.permute.xlu0 0
        %6224 = vperm.xlu0 %6223, %v5303
        %v6225 = vpop.permute.xlu0 %6224
        %v6227 = vsel %vm6221, %v6225, 0.0
        %v6228 = vadd.f32 %v6227, %v6218
        %6229 = vrot.lane.b32.xlu0 %v5139, 32
        %v6230 = vpop.permute.xlu0 %6229
        %6233 = vrot.lane.b32.xlu0 %v5461, 64
        %v6234 = vpop.permute.xlu0 %6233
        %6237 = vrot.lane.b32.xlu0 %v4413, 72
        %v6238 = vpop.permute.xlu0 %6237
        %6241 = vrot.lane.b32.xlu0 %v1115, 80
        %v6242 = vpop.permute.xlu0 %6241
        %6245 = vrot.lane.b32.xlu0 %v1818, 88
        %v6246 = vpop.permute.xlu0 %6245
        %6249 = vrot.lane.b32.xlu0 %v2927, 96
        %v6250 = vpop.permute.xlu0 %6249
        %6253 = vrot.lane.b32.xlu0 %v6127, 104
        %v6254 = vpop.permute.xlu0 %6253
        %6257 = vrot.lane.b32.xlu0 %v4743, 112
        %v6258 = vpop.permute.xlu0 %6257
        %6261 = vrot.lane.b32.xlu0 %v6228, 120
        %v6262 = vpop.permute.xlu0 %6261
        %v6264 = vsel %vm239, %v6057, %v6230
        %v6265 = vsel %vm771, %v6264, %v6234
        %vm6266 = vcmask 588800
        %v6267 = vsel %vm6266, %v6265, %v6238
        %vm6268 = vcmask 654336
        %v6269 = vsel %vm6268, %v6267, %v6242
        %vm6270 = vcmask 719872
        %v6271 = vsel %vm6270, %v6269, %v6246
        %vm6272 = vcmask 785408
        %v6273 = vsel %vm6272, %v6271, %v6250
        %vm6274 = vcmask 850944
        %v6275 = vsel %vm6274, %v6273, %v6254
        %vm6276 = vcmask 916480
        %v6277 = vsel %vm6276, %v6275, %v6258
        %vm6278 = vcmask 982016
        %v6279 = vsel %vm6278, %v6277, %v6262
        %6280 = vst [vmem:[%s153] sm:$0xff] %v6279
        %p6281 = scmp.lt.s32.totalorder %s14, 1
        %s6282 = scalar_select %p6281, %s14, 1
        %s6283 = smul.addr %s6282, 8
        %s6284 = scalar_lea.vmem %s2, %s6283
        // Predicated region
        $region33: #{_forward_jit.1} parent=27 // pred_check
          %p6285 = pneg %p79
        $region34: #{_forward_jit.1} parent=27 // pred_check_branch
          %6287 = sbr.rel (%p6285) target = $region36
        $region35: #{_forward_jit.1} parent=27 // pred_region
          _
        $region36: #{_forward_jit.1} parent=27 // pred_fallthru
          _
      $region28: #{_forward_jit.1} parent=5 // pred_fallthru
        _
      %p6288 = scmp.le.s32.totalorder 2, %s9
      // Predicated region
      $region37: #{_forward_jit.1} parent=5 // pred_check
        %p6289 = pneg %p6288
      $region38: #{_forward_jit.1} parent=5 // pred_check_branch
        %6291 = sbr.rel (%p6289) target = $region40
      $region39: #{_forward_jit.1} parent=5 // pred_region
        %s6292 = ssub.s32 %s9, 2
        // Predicated region
        $region41: #{_forward_jit.1} parent=39 // pred_check
          %p6293 = pneg %p85
        $region42: #{_forward_jit.1} parent=39 // pred_check_branch
          %6295 = sbr.rel (%p6293) target = $region44
        $region43: #{_forward_jit.1} parent=39 // pred_region
          %p6296 = scmp.lt.s32.totalorder %s15, 1
          %s6297 = scalar_select %p6296, %s15, 1
          %s6298 = smul.addr %s6297, 8
          %s6299 = scalar_lea.vmem %s2, %s6298
        $region44: #{_forward_jit.1} parent=39 // pred_fallthru
          _
      $region40: #{_forward_jit.1} parent=5 // pred_fallthru
        _
    $region6: #{_forward_jit.1} parent=1 // loop_footer
      %s13 = sadd.s32 1, %s9
    $region7: #{_forward_jit.1} parent=1 // loop_footer_branch
      %8 = sbr.rel target = $region3
    $region8: #{_forward_jit.1} parent=1 // loop_exit
      _
    %6300 = vsyncpa [#allocation3], 1
    %s6301 = scalar_lea.sflag [#allocation3], 1
    %6302 = vsyncpa %s6301, 1

</llo_original>
